<compile_context>
chip_gen: v7x
topology: tpu7x:2x2x1
jax: 0.10.0
libtpu: 0.0.40
codegen_flags: <defaults>
</compile_context>

<pallas_src>
import functools

import numpy as np
import jax
import jax.numpy as jnp
from jax import lax
from jax.experimental import pallas as pl
from jax.experimental.pallas import tpu as pltpu


# MXU operand dtype (weights stored in this dtype).  Accumulation, layernorm,
# softmax, RoPE and residuals stay fp32.  Set to jnp.float32 for bit-closer
# numerics to an fp32 reference.
MM_DTYPE = jnp.bfloat16


# ----------------------- generic tiled matmul (embed) ------------------------

def _matmul_kernel(x_ref, w_ref, b_ref, o_ref, acc_ref, *, mm_dtype):
    @pl.when(pl.program_id(2) == 0)
    def _():
        acc_ref[...] = jnp.zeros_like(acc_ref)

    acc_ref[...] += jnp.dot(x_ref[...].astype(mm_dtype),
                            w_ref[...].astype(mm_dtype),
                            preferred_element_type=jnp.float32)

    @pl.when(pl.program_id(2) == pl.num_programs(2) - 1)
    def _():
        o_ref[...] = (acc_ref[...]
                      + b_ref[...].astype(jnp.float32)).astype(o_ref.dtype)


def linear(x, w, b, *, mm_dtype=MM_DTYPE, tm=256, tn=512, tk=512):
    """x: (M, K) @ w: (K, N) + b -> (M, N) fp32. Tiled, K-accumulating matmul."""
    M, K = x.shape
    N = w.shape[1]
    # fall back to whole-dim blocks when the dim is small / not divisible
    tm = M if (M <= tm or M % tm) else tm
    tn = N if (N <= tn or N % tn) else tn
    tk = K if (K <= tk or K % tk) else tk
    grid = (M // tm, N // tn, K // tk)
    return pl.pallas_call(
        functools.partial(_matmul_kernel, mm_dtype=mm_dtype),
        grid=grid,
        in_specs=[
            pl.BlockSpec((tm, tk), lambda i, j, k: (i, k)),
            pl.BlockSpec((tk, tn), lambda i, j, k: (k, j)),
            pl.BlockSpec((1, tn), lambda i, j, k: (0, j)),
        ],
        out_specs=pl.BlockSpec((tm, tn), lambda i, j, k: (i, j)),
        out_shape=jax.ShapeDtypeStruct((M, N), jnp.float32),
        scratch_shapes=[pltpu.VMEM((tm, tn), jnp.float32)],
        compiler_params=pltpu.CompilerParams(
            dimension_semantics=("parallel", "parallel", "arbitrary")),
    )(x, w, b.reshape(1, N))


# ------------------------------- layernorm -----------------------------------

def _layernorm_kernel(x_ref, g_ref, b_ref, o_ref, *, eps):
    x = x_ref[...].astype(jnp.float32)
    mu = jnp.mean(x, axis=-1, keepdims=True)
    xc = x - mu
    var = jnp.mean(xc * xc, axis=-1, keepdims=True)     # biased var (torch LN)
    y = xc * lax.rsqrt(var + eps)
    o_ref[...] = (y * g_ref[...].astype(jnp.float32)
                  + b_ref[...].astype(jnp.float32)).astype(o_ref.dtype)


def layernorm(x2d, g, b, *, eps=1e-6, tm=512):
    M, C = x2d.shape
    tm = M if (M <= tm or M % tm) else tm
    return pl.pallas_call(
        functools.partial(_layernorm_kernel, eps=eps),
        grid=(M // tm,),
        in_specs=[
            pl.BlockSpec((tm, C), lambda i: (i, 0)),
            pl.BlockSpec((1, C), lambda i: (0, 0)),
            pl.BlockSpec((1, C), lambda i: (0, 0)),
        ],
        out_specs=pl.BlockSpec((tm, C), lambda i: (i, 0)),
        out_shape=jax.ShapeDtypeStruct((M, C), jnp.float32),
        compiler_params=pltpu.CompilerParams(dimension_semantics=("parallel",)),
    )(x2d, g.reshape(1, C), b.reshape(1, C))


# ------------------- fused decoder block (both streams) ----------------------

def _block_main_kernel(
    x_ref, mem_ref, cos_ref, sin_ref, rot_ref,
    ln_ref,
    swq_ref, swk_ref, swv_ref, sbq_ref, sbk_ref, sbv_ref, swo_ref, sbo_ref,
    cwq_ref, cwk_ref, cwv_ref, cbq_ref, cbk_ref, cbv_ref, cwo_ref, cbo_ref,
    w1_ref, b1_ref,
    xmid_ref, h_ref,
    *, num_heads, batch, scale, eps, mm_dtype,
):
    f32 = jnp.float32
    x = x_ref[0].astype(f32)        # (BN, C)  this stream's tokens
    mem = mem_ref[0].astype(f32)    # (BN, C)  other stream's (pre-layer) tokens
    cos = cos_ref[...]              # (BN, C)
    sin = sin_ref[...]              # (BN, C)
    rot = rot_ref[...]              # (C, C)   block-diag +/-1 "rotate_half"
    lnp = ln_ref[0].astype(f32)     # (8, C)   [ln1_g,ln1_b,ln2_g,ln2_b,ln3_g,ln3_b,lny_g,lny_b]

    BN = x.shape[0]
    N = BN // batch                 # tokens per image (static)

    def ln(t, gi, bi):
        mu = jnp.mean(t, axis=-1, keepdims=True)
        tc = t - mu
        var = jnp.mean(tc * tc, axis=-1, keepdims=True)
        return tc * lax.rsqrt(var + eps) * lnp[gi:gi + 1] + lnp[bi:bi + 1]

    def dense(t, w_ref, b_ref):
        y = jnp.dot(t.astype(mm_dtype), w_ref[0].astype(mm_dtype),
                    preferred_element_type=f32)
        return y + b_ref[0].astype(f32)

    def rope(t):
        # exact +/- permutation realized as one small fp32 MXU matmul
        r = jnp.dot(t, rot, preferred_element_type=f32)
        return t * cos + r * sin

    def attention(q, k, v, wo_ref, bo_ref):
        # q is pre-scaled by `scale`.  Per-image / per-head small matmuls ->
        # no cross-image score waste, no (BN, BN) additive mask needed.
        dh = q.shape[-1] // num_heads
        wo = wo_ref[0]
        outs = []
        for b in range(batch):
            rsl = slice(b * N, (b + 1) * N)
            acc = None
            for hh in range(num_heads):
                csl = slice(hh * dh, (hh + 1) * dh)
                qh = q[rsl, csl].astype(mm_dtype)
                kh = k[rsl, csl].astype(mm_dtype)
                vh = v[rsl, csl].astype(mm_dtype)
                # contract last dims directly -> no K transpose materialized
                s = lax.dot_general(qh, kh, (((1,), (1,)), ((), ())),
                                    preferred_element_type=f32)
                s = s - jnp.max(s, axis=-1, keepdims=True)
                p = jnp.exp(s)
                p = p * pl.reciprocal(jnp.sum(p, axis=-1, keepdims=True),
                                      approx=True)
                oh = jnp.dot(p.astype(mm_dtype), vh, preferred_element_type=f32)
                # fold the head straight into the output projection (no concat)
                c = jnp.dot(oh.astype(mm_dtype), wo[csl, :].astype(mm_dtype),
                            preferred_element_type=f32)
                acc = c if acc is None else acc + c
            outs.append(acc)
        out = outs[0] if batch == 1 else jnp.concatenate(outs, axis=0)
        return out + bo_ref[0].astype(f32)

    # ---- self-attention ----
    xn = ln(x, 0, 1)
    q = rope(dense(xn, swq_ref, sbq_ref)) * scale      # scale folded into q
    k = rope(dense(xn, swk_ref, sbk_ref))
    v = dense(xn, swv_ref, sbv_ref)
    x = x + attention(q, k, v, swo_ref, sbo_ref)

    # ---- cross-attention (memory = other stream, pre-layer tokens) ----
    yn = ln(mem, 6, 7)
    xn2 = ln(x, 2, 3)
    qc = rope(dense(xn2, cwq_ref, cbq_ref)) * scale
    kc = rope(dense(yn, cwk_ref, cbk_ref))
    vc = dense(yn, cwv_ref, cbv_ref)
    x = x + attention(qc, kc, vc, cwo_ref, cbo_ref)

    # ---- MLP prologue (fc1); exact erf-GELU applied outside in XLA ----
    xn3 = ln(x, 4, 5)
    h = dense(xn3, w1_ref, b1_ref)

    xmid_ref[0] = x.astype(xmid_ref.dtype)
    h_ref[0] = h.astype(h_ref.dtype)


def _block_tail_kernel(x_ref, g_ref, w2_ref, b2_ref, o_ref, *, mm_dtype):
    y = jnp.dot(g_ref[0].astype(mm_dtype), w2_ref[0].astype(mm_dtype),
                preferred_element_type=jnp.float32) + b2_ref[0].astype(jnp.float32)
    o_ref[0] = (x_ref[0].astype(jnp.float32) + y).astype(o_ref.dtype)


def _stream_spec(a):
    nd = a.ndim
    return pl.BlockSpec((1,) + a.shape[1:], lambda s: (s,) + (0,) * (nd - 1))


def _other_stream_spec(a):
    nd = a.ndim
    return pl.BlockSpec((1,) + a.shape[1:], lambda s: (1 - s,) + (0,) * (nd - 1))


def _full_spec(a):
    nd = a.ndim
    return pl.BlockSpec(a.shape, lambda s: (0,) * nd)


def decoder_block_pair(x_stack, lp, rope_consts, *, num_heads, batch, eps=1e-6,
                       mm_dtype=MM_DTYPE):
    """Runs dec_blocks[i] on (f1,f2) and dec_blocks2[i] on (f2,f1) in one call.

    x_stack: (2, B*N, C) fp32 — stream 0 = image-1 tokens, stream 1 = image-2.
    """
    cos2, sin2, rot = rope_consts
    _, BN, C = x_stack.shape
    hidden = lp["w1"].shape[-1]
    scale = float(C // num_heads) ** -0.5

    ins = [x_stack, x_stack, cos2, sin2, rot,
           lp["ln"],
           lp["s_wq"], lp["s_wk"], lp["s_wv"],
           lp["s_bq"], lp["s_bk"], lp["s_bv"], lp["s_wo"], lp["s_bo"],
           lp["c_wq"], lp["c_wk"], lp["c_wv"],
           lp["c_bq"], lp["c_bk"], lp["c_bv"], lp["c_wo"], lp["c_bo"],
           lp["w1"], lp["b1"]]
    in_specs = ([_stream_spec(x_stack), _other_stream_spec(x_stack)]
                + [_full_spec(a) for a in ins[2:5]]
                + [_stream_spec(a) for a in ins[5:]])

    x_mid, h = pl.pallas_call(
        functools.partial(_block_main_kernel, num_heads=num_heads, batch=batch,
                          scale=scale, eps=eps, mm_dtype=mm_dtype),
        grid=(2,),
        in_specs=in_specs,
        out_specs=(pl.BlockSpec((1, BN, C), lambda s: (s, 0, 0)),
                   pl.BlockSpec((1, BN, hidden), lambda s: (s, 0, 0))),
        out_shape=(jax.ShapeDtypeStruct((2, BN, C), jnp.float32),
                   jax.ShapeDtypeStruct((2, BN, hidden), jnp.float32)),
        compiler_params=pltpu.CompilerParams(dimension_semantics=("parallel",)),
    )(*ins)

    # TODO(synk): exact (erf) GELU has no Pallas TPU lowering (lax.erf_p), so it
    # stays as one fused XLA elementwise op between the two per-layer kernels.
    g = jax.nn.gelu(h, approximate=False)

    return pl.pallas_call(
        functools.partial(_block_tail_kernel, mm_dtype=mm_dtype),
        grid=(2,),
        in_specs=[_stream_spec(x_mid), _stream_spec(g),
                  _stream_spec(lp["w2"]), _stream_spec(lp["b2"])],
        out_specs=pl.BlockSpec((1, BN, C), lambda s: (s, 0, 0)),
        out_shape=jax.ShapeDtypeStruct((2, BN, C), jnp.float32),
        compiler_params=pltpu.CompilerParams(dimension_semantics=("parallel",)),
    )(x_mid, g, lp["w2"], lp["b2"])


# -------------------------- RoPE2D constants ---------------------------------

def make_rope_constants(n_y, n_x, num_heads, head_dim, batch, base=100.0):
    """RoPE2D tables + helpers, pre-laid-out for the flat (B*N, C) kernel layout."""
    D = head_dim // 2                      # per-axis rope dim
    inv_freq = 1.0 / (base ** (np.arange(0, D, 2, dtype=np.float32) / D))
    ys, xs = np.meshgrid(np.arange(n_y, dtype=np.float32),
                         np.arange(n_x, dtype=np.float32), indexing="ij")

    def tab(pos):
        fr = pos.reshape(-1)[:, None] * inv_freq[None, :]      # (N, D/2)
        fr = np.concatenate([fr, fr], axis=-1)                 # (N, D)
        return np.cos(fr), np.sin(fr)

    cy, sy = tab(ys)
    cx, sx = tab(xs)
    cos = np.concatenate([cy, cx], axis=-1)                    # (N, head_dim)
    sin = np.concatenate([sy, sx], axis=-1)

    # tile across heads (lane axis) and batch (row axis)
    cos_full = np.tile(np.tile(cos, (1, num_heads)), (batch, 1)).astype(np.float32)
    sin_full = np.tile(np.tile(sin, (1, num_heads)), (batch, 1)).astype(np.float32)

    # "rotate_half per rope axis" as a +/-1 permutation matrix (per head), then
    # block-diagonal across heads -> RoPE = t*cos + (t @ rot)*sin on (B*N, C).
    P = np.zeros((head_dim, head_dim), np.float32)
    half = D // 2
    for off in (0, D):                     # y-half then x-half
        for j in range(half):
            P[off + half + j, off + j] = -1.0
            P[off + j, off + half + j] = 1.0
    rot = np.kron(np.eye(num_heads, dtype=np.float32), P)      # (C, C)

    return (jnp.asarray(cos_full), jnp.asarray(sin_full), jnp.asarray(rot))


# ------------------------------ decoder forward -------------------------------

def dust3r_decoder(f1, f2, params, rope_consts, *, num_heads, eps=1e-6):
    B, N, Ce = f1.shape
    Cd = params["embed_w"].shape[1]
    f1_0, f2_0 = f1, f2

    # decoder_embed shares weights across both streams -> one stacked matmul.
    x = jnp.concatenate([f1.reshape(B * N, Ce), f2.reshape(B * N, Ce)], axis=0)
    x = linear(x, params["embed_w"], params["embed_b"])
    x_stack = x.reshape(2, B * N, Cd)

    f1_6 = f1_9 = f1
    f2_6 = f2_9 = f2
    for i, lp in enumerate(params["layers"], start=1):
        x_stack = decoder_block_pair(x_stack, lp, rope_consts,
                                     num_heads=num_heads, batch=B, eps=eps)
        if i == 6:
            f1_6 = x_stack[0].reshape(B, N, Cd)
            f2_6 = x_stack[1].reshape(B, N, Cd)
        elif i == 9:
            f1_9 = x_stack[0].reshape(B, N, Cd)
            f2_9 = x_stack[1].reshape(B, N, Cd)

    # final dec_norm on both streams at once (shared params)
    xn = layernorm(x_stack.reshape(2 * B * N, Cd),
                   params["decnorm_g"], params["decnorm_b"], eps=eps)
    xn = xn.reshape(2, B, N, Cd)
    return f1_0, f1_6, f1_9, xn[0], f2_0, f2_6, f2_9, xn[1]


# --------------------------- deterministic params -----------------------------

def init_params(key, enc_dim, dec_dim, num_heads, depth, mlp_ratio=4.0,
                mm_dtype=MM_DTYPE):
    """Synthetic deterministic weights, laid out the way the fused kernels want.

    Stream axis 0 of each per-layer tensor = dec_blocks[i], axis 1 = dec_blocks2[i].
    nn.Linear weights are stored transposed (in, out); the qkv projection is
    pre-split into q/k/v pieces (a pure re-layout of the same parameters).
    """
    hidden = int(dec_dim * mlp_ratio)
    keys = iter(jax.random.split(key, 1024))

    def rnd(shape, scale=0.02):
        return scale * jax.random.normal(next(keys), shape, jnp.float32)

    def layer():
        p = {}
        lns = []
        for _ in range(4):                        # norm1, norm2, norm3, norm_y
            lns.append(1.0 + rnd((2, dec_dim)))   # gamma
            lns.append(rnd((2, dec_dim)))         # beta
        p["ln"] = jnp.stack(lns, axis=1)          # (2, 8, dec_dim)
        for nm in ("s_wq", "s_wk", "s_wv", "s_wo",
                   "c_wq", "c_wk", "c_wv", "c_wo"):
            p[nm] = rnd((2, dec_dim, dec_dim)).astype(mm_dtype)
        for nm in ("s_bq", "s_bk", "s_bv", "s_bo",
                   "c_bq", "c_bk", "c_bv", "c_bo"):
            p[nm] = rnd((2, 1, dec_dim))
        p["w1"] = rnd((2, dec_dim, hidden)).astype(mm_dtype)
        p["b1"] = rnd((2, 1, hidden))
        p["w2"] = rnd((2, hidden, dec_dim)).astype(mm_dtype)
        p["b2"] = rnd((2, 1, dec_dim))
        return p

    return {
        "embed_w": rnd((enc_dim, dec_dim)).astype(mm_dtype),
        "embed_b": rnd((dec_dim,)),
        "decnorm_g": 1.0 + rnd((dec_dim,)),
        "decnorm_b": rnd((dec_dim,)),
        "layers": [layer() for _ in range(depth)],
    }


# ----------------------------------- main -------------------------------------

if __name__ == "__main__":
    # Small shapes consistent with the module: image 64x64, patch 16 -> 4x4=16
    # tokens per image.
    B = 2
    width = height = 64
    patch_size = 16
    enc_embed_dim = 96
    dec_embed_dim = 64
    dec_num_heads = 4
    dec_depth = 12
    n_y, n_x = height // patch_size, width // patch_size
    N = n_y * n_x                      # 16 tokens per image

    key = jax.random.PRNGKey(0)
    kp, k1, k2 = jax.random.split(key, 3)
    params = init_params(kp, enc_embed_dim, dec_embed_dim, dec_num_heads,
                         dec_depth, mm_dtype=MM_DTYPE)
    f1 = jax.random.normal(k1, (B, N, enc_embed_dim), jnp.float32)
    f2 = jax.random.normal(k2, (B, N, enc_embed_dim), jnp.float32)

    # NOTE: cross-attention uses the same RoPE table for q and k, which assumes
    # both images share the same patch grid (true for this module's usage).
    rope_consts = make_rope_constants(n_y, n_x, dec_num_heads,
                                      dec_embed_dim // dec_num_heads, B,
                                      base=100.0)

    fwd = jax.jit(functools.partial(dust3r_decoder, num_heads=dec_num_heads))
    outs = jax.block_until_ready(fwd(f1, f2, params, rope_consts))

    f1_0, f1_6, f1_9, f1_12, f2_0, f2_6, f2_9, f2_12 = outs
    assert f1_0.shape == (B, N, enc_embed_dim)
    assert f2_0.shape == (B, N, enc_embed_dim)
    assert f1_6.shape == (B, N, dec_embed_dim)
    assert f1_9.shape == (B, N, dec_embed_dim)
    assert f1_12.shape == (B, N, dec_embed_dim)
    assert f2_6.shape == (B, N, dec_embed_dim)
    assert f2_9.shape == (B, N, dec_embed_dim)
    assert f2_12.shape == (B, N, dec_embed_dim)
    assert all(bool(jnp.all(jnp.isfinite(o))) for o in outs)

    print("KERNEL_OK")
</pallas_src>

<mosaic_0001>
module attributes {stable_mosaic.version = 11 : i64} {
  func.func @_matmul_kernel(%arg0: i32, %arg1: i32, %arg2: i32, %arg3: memref<64x96xf32, #tpu.memory_space<vmem>>, %arg4: memref<96x64xbf16, #tpu.memory_space<vmem>>, %arg5: memref<1x64xf32, #tpu.memory_space<vmem>>, %arg6: memref<64x64xf32, #tpu.memory_space<vmem>>, %arg7: memref<64x64xf32, #tpu.memory_space<vmem>>) attributes {dimension_semantics = [#tpu.dimension_semantics<parallel>, #tpu.dimension_semantics<parallel>, #tpu.dimension_semantics<arbitrary>], iteration_bounds = array<i64: 1, 1, 1>, scalar_prefetch = 0 : i64, scratch_operands = 1 : i64, tpu.core_type = #tpu.core_type<tc>, window_params = [{transform_indices = @transform_0, window_bounds = array<i64: 64, 96>}, {transform_indices = @transform_1, window_bounds = array<i64: 96, 64>}, {transform_indices = @transform_2, window_bounds = array<i64: 1, 64>}, {transform_indices = @transform_3, window_bounds = array<i64: 64, 64>}]} {
    %c0_i32 = arith.constant 0 : i32
    %0 = arith.cmpi eq, %arg2, %c0_i32 : i32
    %1 = arith.extui %0 : i1 to i32
    %c0_i32_0 = arith.constant 0 : i32
    %2 = arith.cmpi ne, %1, %c0_i32_0 : i32
    scf.if %2 {
      %cst_10 = arith.constant 0.000000e+00 : f32
      %13 = vector.broadcast %cst_10 : f32 to vector<64x64xf32>
      %c0_11 = arith.constant 0 : index
      %c0_12 = arith.constant 0 : index
      %14 = vector.load %arg7[%c0_11, %c0_12] : memref<64x64xf32, #tpu.memory_space<vmem>>, vector<64x64xf32>
      tpu.vector_store %arg7[%c0_11, %c0_12], %13 {strides = array<i32>} : memref<64x64xf32, #tpu.memory_space<vmem>>, vector<64x64xf32>,
    } else {
    }
    %c0 = arith.constant 0 : index
    %c0_1 = arith.constant 0 : index
    %3 = vector.load %arg7[%c0, %c0_1] : memref<64x64xf32, #tpu.memory_space<vmem>>, vector<64x64xf32>
    %c0_2 = arith.constant 0 : index
    %c0_3 = arith.constant 0 : index
    %4 = vector.load %arg3[%c0_2, %c0_3] : memref<64x96xf32, #tpu.memory_space<vmem>>, vector<64x96xf32>
    %5 = arith.truncf %4 : vector<64x96xf32> to vector<64x96xbf16>
    %c0_4 = arith.constant 0 : index
    %c0_5 = arith.constant 0 : index
    %6 = vector.load %arg4[%c0_4, %c0_5] : memref<96x64xbf16, #tpu.memory_space<vmem>>, vector<96x64xbf16>
    %cst = arith.constant dense<0.000000e+00> : vector<64x64xf32>
    %7 = tpu.matmul %5, %6, %cst {dimension_numbers = #tpu.dot_dimension_numbers<[1], [0], [0], [1], [0, 0, 1, 1], [], []>} : vector<64x96xbf16>, vector<96x64xbf16>, vector<64x64xf32> -> vector<64x64xf32>
    %8 = arith.addf %3, %7 : vector<64x64xf32>
    %c0_6 = arith.constant 0 : index
    %c0_7 = arith.constant 0 : index
    %9 = vector.load %arg7[%c0_6, %c0_7] : memref<64x64xf32, #tpu.memory_space<vmem>>, vector<64x64xf32>
    tpu.vector_store %arg7[%c0_6, %c0_7], %8 {strides = array<i32>} : memref<64x64xf32, #tpu.memory_space<vmem>>, vector<64x64xf32>,
    %c0_i32_8 = arith.constant 0 : i32
    %10 = arith.cmpi eq, %arg2, %c0_i32_8 : i32
    %11 = arith.extui %10 : i1 to i32
    %c0_i32_9 = arith.constant 0 : i32
    %12 = arith.cmpi ne, %11, %c0_i32_9 : i32
    scf.if %12 {
      %c0_10 = arith.constant 0 : index
      %c0_11 = arith.constant 0 : index
      %13 = vector.load %arg7[%c0_10, %c0_11] : memref<64x64xf32, #tpu.memory_space<vmem>>, vector<64x64xf32>
      %c0_12 = arith.constant 0 : index
      %c0_13 = arith.constant 0 : index
      %14 = vector.load %arg5[%c0_12, %c0_13] : memref<1x64xf32, #tpu.memory_space<vmem>>, vector<1x64xf32>
      %15 = vector.broadcast %14 : vector<1x64xf32> to vector<64x64xf32>
      %16 = arith.addf %13, %15 : vector<64x64xf32>
      %c0_14 = arith.constant 0 : index
      %c0_15 = arith.constant 0 : index
      %17 = vector.load %arg6[%c0_14, %c0_15] : memref<64x64xf32, #tpu.memory_space<vmem>>, vector<64x64xf32>
      tpu.vector_store %arg6[%c0_14, %c0_15], %16 {strides = array<i32>} : memref<64x64xf32, #tpu.memory_space<vmem>>, vector<64x64xf32>,
    } else {
    }
    return
  }
  func.func @transform_0(%arg0: i32, %arg1: i32, %arg2: i32) -> (i32, i32) {
    %c0_i32 = arith.constant 0 : i32
    return %arg0, %arg2 : i32, i32
  }
  func.func @transform_1(%arg0: i32, %arg1: i32, %arg2: i32) -> (i32, i32) {
    %c0_i32 = arith.constant 0 : i32
    return %arg2, %arg1 : i32, i32
  }
  func.func @transform_2(%arg0: i32, %arg1: i32, %arg2: i32) -> (i32, i32) {
    %c0_i32 = arith.constant 0 : i32
    %c0_i32_0 = arith.constant 0 : i32
    return %c0_i32, %arg1 : i32, i32
  }
  func.func @transform_3(%arg0: i32, %arg1: i32, %arg2: i32) -> (i32, i32) {
    %c0_i32 = arith.constant 0 : i32
    return %arg0, %arg1 : i32, i32
  }
}

module attributes {stable_mosaic.version = 11 : i64} {
  func.func @_block_main_kernel(%arg0: i32, %arg1: memref<1x32x64xf32, #tpu.memory_space<vmem>>, %arg2: memref<1x32x64xf32, #tpu.memory_space<vmem>>, %arg3: memref<32x64xf32, #tpu.memory_space<vmem>>, %arg4: memref<32x64xf32, #tpu.memory_space<vmem>>, %arg5: memref<64x64xf32, #tpu.memory_space<vmem>>, %arg6: memref<1x8x64xf32, #tpu.memory_space<vmem>>, %arg7: memref<1x64x64xbf16, #tpu.memory_space<vmem>>, %arg8: memref<1x64x64xbf16, #tpu.memory_space<vmem>>, %arg9: memref<1x64x64xbf16, #tpu.memory_space<vmem>>, %arg10: memref<1x1x64xf32, #tpu.memory_space<vmem>>, %arg11: memref<1x1x64xf32, #tpu.memory_space<vmem>>, %arg12: memref<1x1x64xf32, #tpu.memory_space<vmem>>, %arg13: memref<1x64x64xbf16, #tpu.memory_space<vmem>>, %arg14: memref<1x1x64xf32, #tpu.memory_space<vmem>>, %arg15: memref<1x64x64xbf16, #tpu.memory_space<vmem>>, %arg16: memref<1x64x64xbf16, #tpu.memory_space<vmem>>, %arg17: memref<1x64x64xbf16, #tpu.memory_space<vmem>>, %arg18: memref<1x1x64xf32, #tpu.memory_space<vmem>>, %arg19: memref<1x1x64xf32, #tpu.memory_space<vmem>>, %arg20: memref<1x1x64xf32, #tpu.memory_space<vmem>>, %arg21: memref<1x64x64xbf16, #tpu.memory_space<vmem>>, %arg22: memref<1x1x64xf32, #tpu.memory_space<vmem>>, %arg23: memref<1x64x256xbf16, #tpu.memory_space<vmem>>, %arg24: memref<1x1x256xf32, #tpu.memory_space<vmem>>, %arg25: memref<1x32x64xf32, #tpu.memory_space<vmem>>, %arg26: memref<1x32x256xf32, #tpu.memory_space<vmem>>) attributes {dimension_semantics = [#tpu.dimension_semantics<parallel>], iteration_bounds = array<i64: 2>, scalar_prefetch = 0 : i64, scratch_operands = 0 : i64, tpu.core_type = #tpu.core_type<tc>, window_params = [{transform_indices = @transform_0, window_bounds = array<i64: 1, 32, 64>}, {transform_indices = @transform_1, window_bounds = array<i64: 1, 32, 64>}, {pipeline_mode = #tpu.pipeline_mode<synchronous>, transform_indices = @transform_2, window_bounds = array<i64: 32, 64>}, {pipeline_mode = #tpu.pipeline_mode<synchronous>, transform_indices = @transform_3, window_bounds = array<i64: 32, 64>}, {pipeline_mode = #tpu.pipeline_mode<synchronous>, transform_indices = @transform_4, window_bounds = array<i64: 64, 64>}, {transform_indices = @transform_5, window_bounds = array<i64: 1, 8, 64>}, {transform_indices = @transform_6, window_bounds = array<i64: 1, 64, 64>}, {transform_indices = @transform_7, window_bounds = array<i64: 1, 64, 64>}, {transform_indices = @transform_8, window_bounds = array<i64: 1, 64, 64>}, {transform_indices = @transform_9, window_bounds = array<i64: 1, 1, 64>}, {transform_indices = @transform_10, window_bounds = array<i64: 1, 1, 64>}, {transform_indices = @transform_11, window_bounds = array<i64: 1, 1, 64>}, {transform_indices = @transform_12, window_bounds = array<i64: 1, 64, 64>}, {transform_indices = @transform_13, window_bounds = array<i64: 1, 1, 64>}, {transform_indices = @transform_14, window_bounds = array<i64: 1, 64, 64>}, {transform_indices = @transform_15, window_bounds = array<i64: 1, 64, 64>}, {transform_indices = @transform_16, window_bounds = array<i64: 1, 64, 64>}, {transform_indices = @transform_17, window_bounds = array<i64: 1, 1, 64>}, {transform_indices = @transform_18, window_bounds = array<i64: 1, 1, 64>}, {transform_indices = @transform_19, window_bounds = array<i64: 1, 1, 64>}, {transform_indices = @transform_20, window_bounds = array<i64: 1, 64, 64>}, {transform_indices = @transform_21, window_bounds = array<i64: 1, 1, 64>}, {transform_indices = @transform_22, window_bounds = array<i64: 1, 64, 256>}, {transform_indices = @transform_23, window_bounds = array<i64: 1, 1, 256>}, {transform_indices = @transform_24, window_bounds = array<i64: 1, 32, 64>}, {transform_indices = @transform_25, window_bounds = array<i64: 1, 32, 256>}]} {
    %c0 = arith.constant 0 : index
    %c0_0 = arith.constant 0 : index
    %c0_1 = arith.constant 0 : index
    %0 = vector.load %arg1[%c0, %c0_0, %c0_1] : memref<1x32x64xf32, #tpu.memory_space<vmem>>, vector<1x32x64xf32>
    %1 = vector.shape_cast %0 : vector<1x32x64xf32> to vector<32x64xf32>
    %c0_2 = arith.constant 0 : index
    %c0_3 = arith.constant 0 : index
    %c0_4 = arith.constant 0 : index
    %2 = vector.load %arg2[%c0_2, %c0_3, %c0_4] : memref<1x32x64xf32, #tpu.memory_space<vmem>>, vector<1x32x64xf32>
    %3 = vector.shape_cast %2 : vector<1x32x64xf32> to vector<32x64xf32>
    %c0_5 = arith.constant 0 : index
    %c0_6 = arith.constant 0 : index
    %4 = vector.load %arg3[%c0_5, %c0_6] : memref<32x64xf32, #tpu.memory_space<vmem>>, vector<32x64xf32>
    %c0_7 = arith.constant 0 : index
    %c0_8 = arith.constant 0 : index
    %5 = vector.load %arg4[%c0_7, %c0_8] : memref<32x64xf32, #tpu.memory_space<vmem>>, vector<32x64xf32>
    %c0_9 = arith.constant 0 : index
    %c0_10 = arith.constant 0 : index
    %6 = vector.load %arg5[%c0_9, %c0_10] : memref<64x64xf32, #tpu.memory_space<vmem>>, vector<64x64xf32>
    %c0_11 = arith.constant 0 : index
    %c0_12 = arith.constant 0 : index
    %c0_13 = arith.constant 0 : index
    %7 = vector.load %arg6[%c0_11, %c0_12, %c0_13] : memref<1x8x64xf32, #tpu.memory_space<vmem>>, vector<1x8x64xf32>
    %8 = vector.shape_cast %7 : vector<1x8x64xf32> to vector<8x64xf32>
    %cst = arith.constant dense<0.000000e+00> : vector<32xf32>
    %9 = vector.multi_reduction <add>, %1, %cst [1] : vector<32x64xf32> to vector<32xf32>
    %10 = vector.shape_cast %9 : vector<32xf32> to vector<32x1xf32>
    %cst_14 = arith.constant 6.400000e+01 : f32
    %11 = vector.broadcast %cst_14 : f32 to vector<32x1xf32>
    %12 = arith.divf %10, %11 : vector<32x1xf32>
    %13 = vector.broadcast %12 : vector<32x1xf32> to vector<32x64xf32>
    %14 = arith.subf %1, %13 : vector<32x64xf32>
    %15 = arith.mulf %14, %14 : vector<32x64xf32>
    %cst_15 = arith.constant dense<0.000000e+00> : vector<32xf32>
    %16 = vector.multi_reduction <add>, %15, %cst_15 [1] : vector<32x64xf32> to vector<32xf32>
    %17 = vector.shape_cast %16 : vector<32xf32> to vector<32x1xf32>
    %cst_16 = arith.constant 6.400000e+01 : f32
    %18 = vector.broadcast %cst_16 : f32 to vector<32x1xf32>
    %19 = arith.divf %17, %18 : vector<32x1xf32>
    %cst_17 = arith.constant 9.99999997E-7 : f32
    %20 = vector.broadcast %cst_17 : f32 to vector<32x1xf32>
    %21 = arith.addf %19, %20 : vector<32x1xf32>
    %22 = math.rsqrt %21 : vector<32x1xf32>
    %23 = vector.broadcast %22 : vector<32x1xf32> to vector<32x64xf32>
    %24 = arith.mulf %14, %23 : vector<32x64xf32>
    %25 = vector.extract_strided_slice %8 {offsets = [0, 0], sizes = [1, 64], strides = [1, 1]} : vector<8x64xf32> to vector<1x64xf32>
    %26 = vector.broadcast %25 : vector<1x64xf32> to vector<32x64xf32>
    %27 = arith.mulf %24, %26 : vector<32x64xf32>
    %28 = vector.extract_strided_slice %8 {offsets = [1, 0], sizes = [1, 64], strides = [1, 1]} : vector<8x64xf32> to vector<1x64xf32>
    %29 = vector.broadcast %28 : vector<1x64xf32> to vector<32x64xf32>
    %30 = arith.addf %27, %29 : vector<32x64xf32>
    %31 = arith.truncf %30 : vector<32x64xf32> to vector<32x64xbf16>
    %c0_18 = arith.constant 0 : index
    %c0_19 = arith.constant 0 : index
    %c0_20 = arith.constant 0 : index
    %32 = vector.load %arg7[%c0_18, %c0_19, %c0_20] : memref<1x64x64xbf16, #tpu.memory_space<vmem>>, vector<1x64x64xbf16>
    %33 = vector.shape_cast %32 : vector<1x64x64xbf16> to vector<64x64xbf16>
    %cst_21 = arith.constant dense<0.000000e+00> : vector<32x64xf32>
    %34 = tpu.matmul %31, %33, %cst_21 {dimension_numbers = #tpu.dot_dimension_numbers<[1], [0], [0], [1], [0, 0, 1, 1], [], []>} : vector<32x64xbf16>, vector<64x64xbf16>, vector<32x64xf32> -> vector<32x64xf32>
    %c0_22 = arith.constant 0 : index
    %c0_23 = arith.constant 0 : index
    %c0_24 = arith.constant 0 : index
    %35 = vector.load %arg10[%c0_22, %c0_23, %c0_24] : memref<1x1x64xf32, #tpu.memory_space<vmem>>, vector<1x1x64xf32>
    %36 = vector.shape_cast %35 : vector<1x1x64xf32> to vector<1x64xf32>
    %37 = vector.broadcast %36 : vector<1x64xf32> to vector<32x64xf32>
    %38 = arith.addf %34, %37 : vector<32x64xf32>
    %cst_25 = arith.constant dense<0.000000e+00> : vector<32x64xf32>
    %39 = tpu.matmul %38, %6, %cst_25 {dimension_numbers = #tpu.dot_dimension_numbers<[1], [0], [0], [1], [0, 0, 1, 1], [], []>} : vector<32x64xf32>, vector<64x64xf32>, vector<32x64xf32> -> vector<32x64xf32>
    %40 = arith.mulf %38, %4 : vector<32x64xf32>
    %41 = arith.mulf %39, %5 : vector<32x64xf32>
    %42 = arith.addf %40, %41 : vector<32x64xf32>
    %cst_26 = arith.constant 2.500000e-01 : f32
    %43 = vector.broadcast %cst_26 : f32 to vector<32x64xf32>
    %44 = arith.mulf %42, %43 : vector<32x64xf32>
    %45 = arith.truncf %30 : vector<32x64xf32> to vector<32x64xbf16>
    %c0_27 = arith.constant 0 : index
    %c0_28 = arith.constant 0 : index
    %c0_29 = arith.constant 0 : index
    %46 = vector.load %arg8[%c0_27, %c0_28, %c0_29] : memref<1x64x64xbf16, #tpu.memory_space<vmem>>, vector<1x64x64xbf16>
    %47 = vector.shape_cast %46 : vector<1x64x64xbf16> to vector<64x64xbf16>
    %cst_30 = arith.constant dense<0.000000e+00> : vector<32x64xf32>
    %48 = tpu.matmul %45, %47, %cst_30 {dimension_numbers = #tpu.dot_dimension_numbers<[1], [0], [0], [1], [0, 0, 1, 1], [], []>} : vector<32x64xbf16>, vector<64x64xbf16>, vector<32x64xf32> -> vector<32x64xf32>
    %c0_31 = arith.constant 0 : index
    %c0_32 = arith.constant 0 : index
    %c0_33 = arith.constant 0 : index
    %49 = vector.load %arg11[%c0_31, %c0_32, %c0_33] : memref<1x1x64xf32, #tpu.memory_space<vmem>>, vector<1x1x64xf32>
    %50 = vector.shape_cast %49 : vector<1x1x64xf32> to vector<1x64xf32>
    %51 = vector.broadcast %50 : vector<1x64xf32> to vector<32x64xf32>
    %52 = arith.addf %48, %51 : vector<32x64xf32>
    %cst_34 = arith.constant dense<0.000000e+00> : vector<32x64xf32>
    %53 = tpu.matmul %52, %6, %cst_34 {dimension_numbers = #tpu.dot_dimension_numbers<[1], [0], [0], [1], [0, 0, 1, 1], [], []>} : vector<32x64xf32>, vector<64x64xf32>, vector<32x64xf32> -> vector<32x64xf32>
    %54 = arith.mulf %52, %4 : vector<32x64xf32>
    %55 = arith.mulf %53, %5 : vector<32x64xf32>
    %56 = arith.addf %54, %55 : vector<32x64xf32>
    %57 = arith.truncf %30 : vector<32x64xf32> to vector<32x64xbf16>
    %c0_35 = arith.constant 0 : index
    %c0_36 = arith.constant 0 : index
    %c0_37 = arith.constant 0 : index
    %58 = vector.load %arg9[%c0_35, %c0_36, %c0_37] : memref<1x64x64xbf16, #tpu.memory_space<vmem>>, vector<1x64x64xbf16>
    %59 = vector.shape_cast %58 : vector<1x64x64xbf16> to vector<64x64xbf16>
    %cst_38 = arith.constant dense<0.000000e+00> : vector<32x64xf32>
    %60 = tpu.matmul %57, %59, %cst_38 {dimension_numbers = #tpu.dot_dimension_numbers<[1], [0], [0], [1], [0, 0, 1, 1], [], []>} : vector<32x64xbf16>, vector<64x64xbf16>, vector<32x64xf32> -> vector<32x64xf32>
    %c0_39 = arith.constant 0 : index
    %c0_40 = arith.constant 0 : index
    %c0_41 = arith.constant 0 : index
    %61 = vector.load %arg12[%c0_39, %c0_40, %c0_41] : memref<1x1x64xf32, #tpu.memory_space<vmem>>, vector<1x1x64xf32>
    %62 = vector.shape_cast %61 : vector<1x1x64xf32> to vector<1x64xf32>
    %63 = vector.broadcast %62 : vector<1x64xf32> to vector<32x64xf32>
    %64 = arith.addf %60, %63 : vector<32x64xf32>
    %c0_42 = arith.constant 0 : index
    %c0_43 = arith.constant 0 : index
    %c0_44 = arith.constant 0 : index
    %65 = vector.load %arg13[%c0_42, %c0_43, %c0_44] : memref<1x64x64xbf16, #tpu.memory_space<vmem>>, vector<1x64x64xbf16>
    %66 = vector.shape_cast %65 : vector<1x64x64xbf16> to vector<64x64xbf16>
    %67 = vector.extract_strided_slice %44 {offsets = [0, 0], sizes = [16, 16], strides = [1, 1]} : vector<32x64xf32> to vector<16x16xf32>
    %68 = arith.truncf %67 : vector<16x16xf32> to vector<16x16xbf16>
    %69 = vector.extract_strided_slice %56 {offsets = [0, 0], sizes = [16, 16], strides = [1, 1]} : vector<32x64xf32> to vector<16x16xf32>
    %70 = arith.truncf %69 : vector<16x16xf32> to vector<16x16xbf16>
    %71 = vector.extract_strided_slice %64 {offsets = [0, 0], sizes = [16, 16], strides = [1, 1]} : vector<32x64xf32> to vector<16x16xf32>
    %72 = arith.truncf %71 : vector<16x16xf32> to vector<16x16xbf16>
    %cst_45 = arith.constant dense<0.000000e+00> : vector<16x16xf32>
    %73 = tpu.matmul %68, %70, %cst_45 {dimension_numbers = #tpu.dot_dimension_numbers<[1], [1], [0], [0], [0, 0, 1, 0], [], []>} : vector<16x16xbf16>, vector<16x16xbf16>, vector<16x16xf32> -> vector<16x16xf32>
    %cst_46 = arith.constant dense<0xFF800000> : vector<16xf32>
    %74 = vector.multi_reduction <maximumf>, %73, %cst_46 [1] : vector<16x16xf32> to vector<16xf32>
    %75 = vector.shape_cast %74 : vector<16xf32> to vector<16x1xf32>
    %76 = vector.broadcast %75 : vector<16x1xf32> to vector<16x16xf32>
    %77 = arith.subf %73, %76 : vector<16x16xf32>
    %78 = math.exp %77 : vector<16x16xf32>
    %cst_47 = arith.constant dense<0.000000e+00> : vector<16xf32>
    %79 = vector.multi_reduction <add>, %78, %cst_47 [1] : vector<16x16xf32> to vector<16xf32>
    %80 = vector.shape_cast %79 : vector<16xf32> to vector<16x1xf32>
    %81 = tpu.reciprocal %80 {approx = true} : vector<16x1xf32> -> vector<16x1xf32>
    %82 = vector.broadcast %81 : vector<16x1xf32> to vector<16x16xf32>
    %83 = arith.mulf %78, %82 : vector<16x16xf32>
    %84 = arith.truncf %83 : vector<16x16xf32> to vector<16x16xbf16>
    %cst_48 = arith.constant dense<0.000000e+00> : vector<16x16xf32>
    %85 = tpu.matmul %84, %72, %cst_48 {dimension_numbers = #tpu.dot_dimension_numbers<[1], [0], [0], [1], [0, 0, 1, 1], [], []>} : vector<16x16xbf16>, vector<16x16xbf16>, vector<16x16xf32> -> vector<16x16xf32>
    %86 = arith.truncf %85 : vector<16x16xf32> to vector<16x16xbf16>
    %87 = vector.extract_strided_slice %66 {offsets = [0, 0], sizes = [16, 64], strides = [1, 1]} : vector<64x64xbf16> to vector<16x64xbf16>
    %cst_49 = arith.constant dense<0.000000e+00> : vector<16x64xf32>
    %88 = tpu.matmul %86, %87, %cst_49 {dimension_numbers = #tpu.dot_dimension_numbers<[1], [0], [0], [1], [0, 0, 1, 1], [], []>} : vector<16x16xbf16>, vector<16x64xbf16>, vector<16x64xf32> -> vector<16x64xf32>
    %89 = vector.extract_strided_slice %44 {offsets = [0, 16], sizes = [16, 16], strides = [1, 1]} : vector<32x64xf32> to vector<16x16xf32>
    %90 = arith.truncf %89 : vector<16x16xf32> to vector<16x16xbf16>
    %91 = vector.extract_strided_slice %56 {offsets = [0, 16], sizes = [16, 16], strides = [1, 1]} : vector<32x64xf32> to vector<16x16xf32>
    %92 = arith.truncf %91 : vector<16x16xf32> to vector<16x16xbf16>
    %93 = vector.extract_strided_slice %64 {offsets = [0, 16], sizes = [16, 16], strides = [1, 1]} : vector<32x64xf32> to vector<16x16xf32>
    %94 = arith.truncf %93 : vector<16x16xf32> to vector<16x16xbf16>
    %cst_50 = arith.constant dense<0.000000e+00> : vector<16x16xf32>
    %95 = tpu.matmul %90, %92, %cst_50 {dimension_numbers = #tpu.dot_dimension_numbers<[1], [1], [0], [0], [0, 0, 1, 0], [], []>} : vector<16x16xbf16>, vector<16x16xbf16>, vector<16x16xf32> -> vector<16x16xf32>
    %cst_51 = arith.constant dense<0xFF800000> : vector<16xf32>
    %96 = vector.multi_reduction <maximumf>, %95, %cst_51 [1] : vector<16x16xf32> to vector<16xf32>
    %97 = vector.shape_cast %96 : vector<16xf32> to vector<16x1xf32>
    %98 = vector.broadcast %97 : vector<16x1xf32> to vector<16x16xf32>
    %99 = arith.subf %95, %98 : vector<16x16xf32>
    %100 = math.exp %99 : vector<16x16xf32>
    %cst_52 = arith.constant dense<0.000000e+00> : vector<16xf32>
    %101 = vector.multi_reduction <add>, %100, %cst_52 [1] : vector<16x16xf32> to vector<16xf32>
    %102 = vector.shape_cast %101 : vector<16xf32> to vector<16x1xf32>
    %103 = tpu.reciprocal %102 {approx = true} : vector<16x1xf32> -> vector<16x1xf32>
    %104 = vector.broadcast %103 : vector<16x1xf32> to vector<16x16xf32>
    %105 = arith.mulf %100, %104 : vector<16x16xf32>
    %106 = arith.truncf %105 : vector<16x16xf32> to vector<16x16xbf16>
    %cst_53 = arith.constant dense<0.000000e+00> : vector<16x16xf32>
    %107 = tpu.matmul %106, %94, %cst_53 {dimension_numbers = #tpu.dot_dimension_numbers<[1], [0], [0], [1], [0, 0, 1, 1], [], []>} : vector<16x16xbf16>, vector<16x16xbf16>, vector<16x16xf32> -> vector<16x16xf32>
    %108 = arith.truncf %107 : vector<16x16xf32> to vector<16x16xbf16>
    %109 = vector.extract_strided_slice %66 {offsets = [16, 0], sizes = [16, 64], strides = [1, 1]} : vector<64x64xbf16> to vector<16x64xbf16>
    %cst_54 = arith.constant dense<0.000000e+00> : vector<16x64xf32>
    %110 = tpu.matmul %108, %109, %cst_54 {dimension_numbers = #tpu.dot_dimension_numbers<[1], [0], [0], [1], [0, 0, 1, 1], [], []>} : vector<16x16xbf16>, vector<16x64xbf16>, vector<16x64xf32> -> vector<16x64xf32>
    %111 = arith.addf %88, %110 : vector<16x64xf32>
    %112 = vector.extract_strided_slice %44 {offsets = [0, 32], sizes = [16, 16], strides = [1, 1]} : vector<32x64xf32> to vector<16x16xf32>
    %113 = arith.truncf %112 : vector<16x16xf32> to vector<16x16xbf16>
    %114 = vector.extract_strided_slice %56 {offsets = [0, 32], sizes = [16, 16], strides = [1, 1]} : vector<32x64xf32> to vector<16x16xf32>
    %115 = arith.truncf %114 : vector<16x16xf32> to vector<16x16xbf16>
    %116 = vector.extract_strided_slice %64 {offsets = [0, 32], sizes = [16, 16], strides = [1, 1]} : vector<32x64xf32> to vector<16x16xf32>
    %117 = arith.truncf %116 : vector<16x16xf32> to vector<16x16xbf16>
    %cst_55 = arith.constant dense<0.000000e+00> : vector<16x16xf32>
    %118 = tpu.matmul %113, %115, %cst_55 {dimension_numbers = #tpu.dot_dimension_numbers<[1], [1], [0], [0], [0, 0, 1, 0], [], []>} : vector<16x16xbf16>, vector<16x16xbf16>, vector<16x16xf32> -> vector<16x16xf32>
    %cst_56 = arith.constant dense<0xFF800000> : vector<16xf32>
    %119 = vector.multi_reduction <maximumf>, %118, %cst_56 [1] : vector<16x16xf32> to vector<16xf32>
    %120 = vector.shape_cast %119 : vector<16xf32> to vector<16x1xf32>
    %121 = vector.broadcast %120 : vector<16x1xf32> to vector<16x16xf32>
    %122 = arith.subf %118, %121 : vector<16x16xf32>
    %123 = math.exp %122 : vector<16x16xf32>
    %cst_57 = arith.constant dense<0.000000e+00> : vector<16xf32>
    %124 = vector.multi_reduction <add>, %123, %cst_57 [1] : vector<16x16xf32> to vector<16xf32>
    %125 = vector.shape_cast %124 : vector<16xf32> to vector<16x1xf32>
    %126 = tpu.reciprocal %125 {approx = true} : vector<16x1xf32> -> vector<16x1xf32>
    %127 = vector.broadcast %126 : vector<16x1xf32> to vector<16x16xf32>
    %128 = arith.mulf %123, %127 : vector<16x16xf32>
    %129 = arith.truncf %128 : vector<16x16xf32> to vector<16x16xbf16>
    %cst_58 = arith.constant dense<0.000000e+00> : vector<16x16xf32>
    %130 = tpu.matmul %129, %117, %cst_58 {dimension_numbers = #tpu.dot_dimension_numbers<[1], [0], [0], [1], [0, 0, 1, 1], [], []>} : vector<16x16xbf16>, vector<16x16xbf16>, vector<16x16xf32> -> vector<16x16xf32>
    %131 = arith.truncf %130 : vector<16x16xf32> to vector<16x16xbf16>
    %132 = vector.extract_strided_slice %66 {offsets = [32, 0], sizes = [16, 64], strides = [1, 1]} : vector<64x64xbf16> to vector<16x64xbf16>
    %cst_59 = arith.constant dense<0.000000e+00> : vector<16x64xf32>
    %133 = tpu.matmul %131, %132, %cst_59 {dimension_numbers = #tpu.dot_dimension_numbers<[1], [0], [0], [1], [0, 0, 1, 1], [], []>} : vector<16x16xbf16>, vector<16x64xbf16>, vector<16x64xf32> -> vector<16x64xf32>
    %134 = arith.addf %111, %133 : vector<16x64xf32>
    %135 = vector.extract_strided_slice %44 {offsets = [0, 48], sizes = [16, 16], strides = [1, 1]} : vector<32x64xf32> to vector<16x16xf32>
    %136 = arith.truncf %135 : vector<16x16xf32> to vector<16x16xbf16>
    %137 = vector.extract_strided_slice %56 {offsets = [0, 48], sizes = [16, 16], strides = [1, 1]} : vector<32x64xf32> to vector<16x16xf32>
    %138 = arith.truncf %137 : vector<16x16xf32> to vector<16x16xbf16>
    %139 = vector.extract_strided_slice %64 {offsets = [0, 48], sizes = [16, 16], strides = [1, 1]} : vector<32x64xf32> to vector<16x16xf32>
    %140 = arith.truncf %139 : vector<16x16xf32> to vector<16x16xbf16>
    %cst_60 = arith.constant dense<0.000000e+00> : vector<16x16xf32>
    %141 = tpu.matmul %136, %138, %cst_60 {dimension_numbers = #tpu.dot_dimension_numbers<[1], [1], [0], [0], [0, 0, 1, 0], [], []>} : vector<16x16xbf16>, vector<16x16xbf16>, vector<16x16xf32> -> vector<16x16xf32>
    %cst_61 = arith.constant dense<0xFF800000> : vector<16xf32>
    %142 = vector.multi_reduction <maximumf>, %141, %cst_61 [1] : vector<16x16xf32> to vector<16xf32>
    %143 = vector.shape_cast %142 : vector<16xf32> to vector<16x1xf32>
    %144 = vector.broadcast %143 : vector<16x1xf32> to vector<16x16xf32>
    %145 = arith.subf %141, %144 : vector<16x16xf32>
    %146 = math.exp %145 : vector<16x16xf32>
    %cst_62 = arith.constant dense<0.000000e+00> : vector<16xf32>
    %147 = vector.multi_reduction <add>, %146, %cst_62 [1] : vector<16x16xf32> to vector<16xf32>
    %148 = vector.shape_cast %147 : vector<16xf32> to vector<16x1xf32>
    %149 = tpu.reciprocal %148 {approx = true} : vector<16x1xf32> -> vector<16x1xf32>
    %150 = vector.broadcast %149 : vector<16x1xf32> to vector<16x16xf32>
    %151 = arith.mulf %146, %150 : vector<16x16xf32>
    %152 = arith.truncf %151 : vector<16x16xf32> to vector<16x16xbf16>
    %cst_63 = arith.constant dense<0.000000e+00> : vector<16x16xf32>
    %153 = tpu.matmul %152, %140, %cst_63 {dimension_numbers = #tpu.dot_dimension_numbers<[1], [0], [0], [1], [0, 0, 1, 1], [], []>} : vector<16x16xbf16>, vector<16x16xbf16>, vector<16x16xf32> -> vector<16x16xf32>
    %154 = arith.truncf %153 : vector<16x16xf32> to vector<16x16xbf16>
    %155 = vector.extract_strided_slice %66 {offsets = [48, 0], sizes = [16, 64], strides = [1, 1]} : vector<64x64xbf16> to vector<16x64xbf16>
    %cst_64 = arith.constant dense<0.000000e+00> : vector<16x64xf32>
    %156 = tpu.matmul %154, %155, %cst_64 {dimension_numbers = #tpu.dot_dimension_numbers<[1], [0], [0], [1], [0, 0, 1, 1], [], []>} : vector<16x16xbf16>, vector<16x64xbf16>, vector<16x64xf32> -> vector<16x64xf32>
    %157 = arith.addf %134, %156 : vector<16x64xf32>
    %158 = vector.extract_strided_slice %44 {offsets = [16, 0], sizes = [16, 16], strides = [1, 1]} : vector<32x64xf32> to vector<16x16xf32>
    %159 = arith.truncf %158 : vector<16x16xf32> to vector<16x16xbf16>
    %160 = vector.extract_strided_slice %56 {offsets = [16, 0], sizes = [16, 16], strides = [1, 1]} : vector<32x64xf32> to vector<16x16xf32>
    %161 = arith.truncf %160 : vector<16x16xf32> to vector<16x16xbf16>
    %162 = vector.extract_strided_slice %64 {offsets = [16, 0], sizes = [16, 16], strides = [1, 1]} : vector<32x64xf32> to vector<16x16xf32>
    %163 = arith.truncf %162 : vector<16x16xf32> to vector<16x16xbf16>
    %cst_65 = arith.constant dense<0.000000e+00> : vector<16x16xf32>
    %164 = tpu.matmul %159, %161, %cst_65 {dimension_numbers = #tpu.dot_dimension_numbers<[1], [1], [0], [0], [0, 0, 1, 0], [], []>} : vector<16x16xbf16>, vector<16x16xbf16>, vector<16x16xf32> -> vector<16x16xf32>
    %cst_66 = arith.constant dense<0xFF800000> : vector<16xf32>
    %165 = vector.multi_reduction <maximumf>, %164, %cst_66 [1] : vector<16x16xf32> to vector<16xf32>
    %166 = vector.shape_cast %165 : vector<16xf32> to vector<16x1xf32>
    %167 = vector.broadcast %166 : vector<16x1xf32> to vector<16x16xf32>
    %168 = arith.subf %164, %167 : vector<16x16xf32>
    %169 = math.exp %168 : vector<16x16xf32>
    %cst_67 = arith.constant dense<0.000000e+00> : vector<16xf32>
    %170 = vector.multi_reduction <add>, %169, %cst_67 [1] : vector<16x16xf32> to vector<16xf32>
    %171 = vector.shape_cast %170 : vector<16xf32> to vector<16x1xf32>
    %172 = tpu.reciprocal %171 {approx = true} : vector<16x1xf32> -> vector<16x1xf32>
    %173 = vector.broadcast %172 : vector<16x1xf32> to vector<16x16xf32>
    %174 = arith.mulf %169, %173 : vector<16x16xf32>
    %175 = arith.truncf %174 : vector<16x16xf32> to vector<16x16xbf16>
    %cst_68 = arith.constant dense<0.000000e+00> : vector<16x16xf32>
    %176 = tpu.matmul %175, %163, %cst_68 {dimension_numbers = #tpu.dot_dimension_numbers<[1], [0], [0], [1], [0, 0, 1, 1], [], []>} : vector<16x16xbf16>, vector<16x16xbf16>, vector<16x16xf32> -> vector<16x16xf32>
    %177 = arith.truncf %176 : vector<16x16xf32> to vector<16x16xbf16>
    %178 = vector.extract_strided_slice %66 {offsets = [0, 0], sizes = [16, 64], strides = [1, 1]} : vector<64x64xbf16> to vector<16x64xbf16>
    %cst_69 = arith.constant dense<0.000000e+00> : vector<16x64xf32>
    %179 = tpu.matmul %177, %178, %cst_69 {dimension_numbers = #tpu.dot_dimension_numbers<[1], [0], [0], [1], [0, 0, 1, 1], [], []>} : vector<16x16xbf16>, vector<16x64xbf16>, vector<16x64xf32> -> vector<16x64xf32>
    %180 = vector.extract_strided_slice %44 {offsets = [16, 16], sizes = [16, 16], strides = [1, 1]} : vector<32x64xf32> to vector<16x16xf32>
    %181 = arith.truncf %180 : vector<16x16xf32> to vector<16x16xbf16>
    %182 = vector.extract_strided_slice %56 {offsets = [16, 16], sizes = [16, 16], strides = [1, 1]} : vector<32x64xf32> to vector<16x16xf32>
    %183 = arith.truncf %182 : vector<16x16xf32> to vector<16x16xbf16>
    %184 = vector.extract_strided_slice %64 {offsets = [16, 16], sizes = [16, 16], strides = [1, 1]} : vector<32x64xf32> to vector<16x16xf32>
    %185 = arith.truncf %184 : vector<16x16xf32> to vector<16x16xbf16>
    %cst_70 = arith.constant dense<0.000000e+00> : vector<16x16xf32>
    %186 = tpu.matmul %181, %183, %cst_70 {dimension_numbers = #tpu.dot_dimension_numbers<[1], [1], [0], [0], [0, 0, 1, 0], [], []>} : vector<16x16xbf16>, vector<16x16xbf16>, vector<16x16xf32> -> vector<16x16xf32>
    %cst_71 = arith.constant dense<0xFF800000> : vector<16xf32>
    %187 = vector.multi_reduction <maximumf>, %186, %cst_71 [1] : vector<16x16xf32> to vector<16xf32>
    %188 = vector.shape_cast %187 : vector<16xf32> to vector<16x1xf32>
    %189 = vector.broadcast %188 : vector<16x1xf32> to vector<16x16xf32>
    %190 = arith.subf %186, %189 : vector<16x16xf32>
    %191 = math.exp %190 : vector<16x16xf32>
    %cst_72 = arith.constant dense<0.000000e+00> : vector<16xf32>
    %192 = vector.multi_reduction <add>, %191, %cst_72 [1] : vector<16x16xf32> to vector<16xf32>
    %193 = vector.shape_cast %192 : vector<16xf32> to vector<16x1xf32>
    %194 = tpu.reciprocal %193 {approx = true} : vector<16x1xf32> -> vector<16x1xf32>
    %195 = vector.broadcast %194 : vector<16x1xf32> to vector<16x16xf32>
    %196 = arith.mulf %191, %195 : vector<16x16xf32>
    %197 = arith.truncf %196 : vector<16x16xf32> to vector<16x16xbf16>
    %cst_73 = arith.constant dense<0.000000e+00> : vector<16x16xf32>
    %198 = tpu.matmul %197, %185, %cst_73 {dimension_numbers = #tpu.dot_dimension_numbers<[1], [0], [0], [1], [0, 0, 1, 1], [], []>} : vector<16x16xbf16>, vector<16x16xbf16>, vector<16x16xf32> -> vector<16x16xf32>
    %199 = arith.truncf %198 : vector<16x16xf32> to vector<16x16xbf16>
    %200 = vector.extract_strided_slice %66 {offsets = [16, 0], sizes = [16, 64], strides = [1, 1]} : vector<64x64xbf16> to vector<16x64xbf16>
    %cst_74 = arith.constant dense<0.000000e+00> : vector<16x64xf32>
    %201 = tpu.matmul %199, %200, %cst_74 {dimension_numbers = #tpu.dot_dimension_numbers<[1], [0], [0], [1], [0, 0, 1, 1], [], []>} : vector<16x16xbf16>, vector<16x64xbf16>, vector<16x64xf32> -> vector<16x64xf32>
    %202 = arith.addf %179, %201 : vector<16x64xf32>
    %203 = vector.extract_strided_slice %44 {offsets = [16, 32], sizes = [16, 16], strides = [1, 1]} : vector<32x64xf32> to vector<16x16xf32>
    %204 = arith.truncf %203 : vector<16x16xf32> to vector<16x16xbf16>
    %205 = vector.extract_strided_slice %56 {offsets = [16, 32], sizes = [16, 16], strides = [1, 1]} : vector<32x64xf32> to vector<16x16xf32>
    %206 = arith.truncf %205 : vector<16x16xf32> to vector<16x16xbf16>
    %207 = vector.extract_strided_slice %64 {offsets = [16, 32], sizes = [16, 16], strides = [1, 1]} : vector<32x64xf32> to vector<16x16xf32>
    %208 = arith.truncf %207 : vector<16x16xf32> to vector<16x16xbf16>
    %cst_75 = arith.constant dense<0.000000e+00> : vector<16x16xf32>
    %209 = tpu.matmul %204, %206, %cst_75 {dimension_numbers = #tpu.dot_dimension_numbers<[1], [1], [0], [0], [0, 0, 1, 0], [], []>} : vector<16x16xbf16>, vector<16x16xbf16>, vector<16x16xf32> -> vector<16x16xf32>
    %cst_76 = arith.constant dense<0xFF800000> : vector<16xf32>
    %210 = vector.multi_reduction <maximumf>, %209, %cst_76 [1] : vector<16x16xf32> to vector<16xf32>
    %211 = vector.shape_cast %210 : vector<16xf32> to vector<16x1xf32>
    %212 = vector.broadcast %211 : vector<16x1xf32> to vector<16x16xf32>
    %213 = arith.subf %209, %212 : vector<16x16xf32>
    %214 = math.exp %213 : vector<16x16xf32>
    %cst_77 = arith.constant dense<0.000000e+00> : vector<16xf32>
    %215 = vector.multi_reduction <add>, %214, %cst_77 [1] : vector<16x16xf32> to vector<16xf32>
    %216 = vector.shape_cast %215 : vector<16xf32> to vector<16x1xf32>
    %217 = tpu.reciprocal %216 {approx = true} : vector<16x1xf32> -> vector<16x1xf32>
    %218 = vector.broadcast %217 : vector<16x1xf32> to vector<16x16xf32>
    %219 = arith.mulf %214, %218 : vector<16x16xf32>
    %220 = arith.truncf %219 : vector<16x16xf32> to vector<16x16xbf16>
    %cst_78 = arith.constant dense<0.000000e+00> : vector<16x16xf32>
    %221 = tpu.matmul %220, %208, %cst_78 {dimension_numbers = #tpu.dot_dimension_numbers<[1], [0], [0], [1], [0, 0, 1, 1], [], []>} : vector<16x16xbf16>, vector<16x16xbf16>, vector<16x16xf32> -> vector<16x16xf32>
    %222 = arith.truncf %221 : vector<16x16xf32> to vector<16x16xbf16>
    %223 = vector.extract_strided_slice %66 {offsets = [32, 0], sizes = [16, 64], strides = [1, 1]} : vector<64x64xbf16> to vector<16x64xbf16>
    %cst_79 = arith.constant dense<0.000000e+00> : vector<16x64xf32>
    %224 = tpu.matmul %222, %223, %cst_79 {dimension_numbers = #tpu.dot_dimension_numbers<[1], [0], [0], [1], [0, 0, 1, 1], [], []>} : vector<16x16xbf16>, vector<16x64xbf16>, vector<16x64xf32> -> vector<16x64xf32>
    %225 = arith.addf %202, %224 : vector<16x64xf32>
    %226 = vector.extract_strided_slice %44 {offsets = [16, 48], sizes = [16, 16], strides = [1, 1]} : vector<32x64xf32> to vector<16x16xf32>
    %227 = arith.truncf %226 : vector<16x16xf32> to vector<16x16xbf16>
    %228 = vector.extract_strided_slice %56 {offsets = [16, 48], sizes = [16, 16], strides = [1, 1]} : vector<32x64xf32> to vector<16x16xf32>
    %229 = arith.truncf %228 : vector<16x16xf32> to vector<16x16xbf16>
    %230 = vector.extract_strided_slice %64 {offsets = [16, 48], sizes = [16, 16], strides = [1, 1]} : vector<32x64xf32> to vector<16x16xf32>
    %231 = arith.truncf %230 : vector<16x16xf32> to vector<16x16xbf16>
    %cst_80 = arith.constant dense<0.000000e+00> : vector<16x16xf32>
    %232 = tpu.matmul %227, %229, %cst_80 {dimension_numbers = #tpu.dot_dimension_numbers<[1], [1], [0], [0], [0, 0, 1, 0], [], []>} : vector<16x16xbf16>, vector<16x16xbf16>, vector<16x16xf32> -> vector<16x16xf32>
    %cst_81 = arith.constant dense<0xFF800000> : vector<16xf32>
    %233 = vector.multi_reduction <maximumf>, %232, %cst_81 [1] : vector<16x16xf32> to vector<16xf32>
    %234 = vector.shape_cast %233 : vector<16xf32> to vector<16x1xf32>
    %235 = vector.broadcast %234 : vector<16x1xf32> to vector<16x16xf32>
    %236 = arith.subf %232, %235 : vector<16x16xf32>
    %237 = math.exp %236 : vector<16x16xf32>
    %cst_82 = arith.constant dense<0.000000e+00> : vector<16xf32>
    %238 = vector.multi_reduction <add>, %237, %cst_82 [1] : vector<16x16xf32> to vector<16xf32>
    %239 = vector.shape_cast %238 : vector<16xf32> to vector<16x1xf32>
    %240 = tpu.reciprocal %239 {approx = true} : vector<16x1xf32> -> vector<16x1xf32>
    %241 = vector.broadcast %240 : vector<16x1xf32> to vector<16x16xf32>
    %242 = arith.mulf %237, %241 : vector<16x16xf32>
    %243 = arith.truncf %242 : vector<16x16xf32> to vector<16x16xbf16>
    %cst_83 = arith.constant dense<0.000000e+00> : vector<16x16xf32>
    %244 = tpu.matmul %243, %231, %cst_83 {dimension_numbers = #tpu.dot_dimension_numbers<[1], [0], [0], [1], [0, 0, 1, 1], [], []>} : vector<16x16xbf16>, vector<16x16xbf16>, vector<16x16xf32> -> vector<16x16xf32>
    %245 = arith.truncf %244 : vector<16x16xf32> to vector<16x16xbf16>
    %246 = vector.extract_strided_slice %66 {offsets = [48, 0], sizes = [16, 64], strides = [1, 1]} : vector<64x64xbf16> to vector<16x64xbf16>
    %cst_84 = arith.constant dense<0.000000e+00> : vector<16x64xf32>
    %247 = tpu.matmul %245, %246, %cst_84 {dimension_numbers = #tpu.dot_dimension_numbers<[1], [0], [0], [1], [0, 0, 1, 1], [], []>} : vector<16x16xbf16>, vector<16x64xbf16>, vector<16x64xf32> -> vector<16x64xf32>
    %248 = arith.addf %225, %247 : vector<16x64xf32>
    %249 = tpu.concatenate %157, %248 in 0 : vector<16x64xf32>, vector<16x64xf32> -> vector<32x64xf32>
    %c0_85 = arith.constant 0 : index
    %c0_86 = arith.constant 0 : index
    %c0_87 = arith.constant 0 : index
    %250 = vector.load %arg14[%c0_85, %c0_86, %c0_87] : memref<1x1x64xf32, #tpu.memory_space<vmem>>, vector<1x1x64xf32>
    %251 = vector.shape_cast %250 : vector<1x1x64xf32> to vector<1x64xf32>
    %252 = vector.broadcast %251 : vector<1x64xf32> to vector<32x64xf32>
    %253 = arith.addf %249, %252 : vector<32x64xf32>
    %254 = arith.addf %1, %253 : vector<32x64xf32>
    %cst_88 = arith.constant dense<0.000000e+00> : vector<32xf32>
    %255 = vector.multi_reduction <add>, %3, %cst_88 [1] : vector<32x64xf32> to vector<32xf32>
    %256 = vector.shape_cast %255 : vector<32xf32> to vector<32x1xf32>
    %cst_89 = arith.constant 6.400000e+01 : f32
    %257 = vector.broadcast %cst_89 : f32 to vector<32x1xf32>
    %258 = arith.divf %256, %257 : vector<32x1xf32>
    %259 = vector.broadcast %258 : vector<32x1xf32> to vector<32x64xf32>
    %260 = arith.subf %3, %259 : vector<32x64xf32>
    %261 = arith.mulf %260, %260 : vector<32x64xf32>
    %cst_90 = arith.constant dense<0.000000e+00> : vector<32xf32>
    %262 = vector.multi_reduction <add>, %261, %cst_90 [1] : vector<32x64xf32> to vector<32xf32>
    %263 = vector.shape_cast %262 : vector<32xf32> to vector<32x1xf32>
    %cst_91 = arith.constant 6.400000e+01 : f32
    %264 = vector.broadcast %cst_91 : f32 to vector<32x1xf32>
    %265 = arith.divf %263, %264 : vector<32x1xf32>
    %cst_92 = arith.constant 9.99999997E-7 : f32
    %266 = vector.broadcast %cst_92 : f32 to vector<32x1xf32>
    %267 = arith.addf %265, %266 : vector<32x1xf32>
    %268 = math.rsqrt %267 : vector<32x1xf32>
    %269 = vector.broadcast %268 : vector<32x1xf32> to vector<32x64xf32>
    %270 = arith.mulf %260, %269 : vector<32x64xf32>
    %271 = vector.extract_strided_slice %8 {offsets = [6, 0], sizes = [1, 64], strides = [1, 1]} : vector<8x64xf32> to vector<1x64xf32>
    %272 = vector.broadcast %271 : vector<1x64xf32> to vector<32x64xf32>
    %273 = arith.mulf %270, %272 : vector<32x64xf32>
    %274 = vector.extract_strided_slice %8 {offsets = [7, 0], sizes = [1, 64], strides = [1, 1]} : vector<8x64xf32> to vector<1x64xf32>
    %275 = vector.broadcast %274 : vector<1x64xf32> to vector<32x64xf32>
    %276 = arith.addf %273, %275 : vector<32x64xf32>
    %cst_93 = arith.constant dense<0.000000e+00> : vector<32xf32>
    %277 = vector.multi_reduction <add>, %254, %cst_93 [1] : vector<32x64xf32> to vector<32xf32>
    %278 = vector.shape_cast %277 : vector<32xf32> to vector<32x1xf32>
    %cst_94 = arith.constant 6.400000e+01 : f32
    %279 = vector.broadcast %cst_94 : f32 to vector<32x1xf32>
    %280 = arith.divf %278, %279 : vector<32x1xf32>
    %281 = vector.broadcast %280 : vector<32x1xf32> to vector<32x64xf32>
    %282 = arith.subf %254, %281 : vector<32x64xf32>
    %283 = arith.mulf %282, %282 : vector<32x64xf32>
    %cst_95 = arith.constant dense<0.000000e+00> : vector<32xf32>
    %284 = vector.multi_reduction <add>, %283, %cst_95 [1] : vector<32x64xf32> to vector<32xf32>
    %285 = vector.shape_cast %284 : vector<32xf32> to vector<32x1xf32>
    %cst_96 = arith.constant 6.400000e+01 : f32
    %286 = vector.broadcast %cst_96 : f32 to vector<32x1xf32>
    %287 = arith.divf %285, %286 : vector<32x1xf32>
    %cst_97 = arith.constant 9.99999997E-7 : f32
    %288 = vector.broadcast %cst_97 : f32 to vector<32x1xf32>
    %289 = arith.addf %287, %288 : vector<32x1xf32>
    %290 = math.rsqrt %289 : vector<32x1xf32>
    %291 = vector.broadcast %290 : vector<32x1xf32> to vector<32x64xf32>
    %292 = arith.mulf %282, %291 : vector<32x64xf32>
    %293 = vector.extract_strided_slice %8 {offsets = [2, 0], sizes = [1, 64], strides = [1, 1]} : vector<8x64xf32> to vector<1x64xf32>
    %294 = vector.broadcast %293 : vector<1x64xf32> to vector<32x64xf32>
    %295 = arith.mulf %292, %294 : vector<32x64xf32>
    %296 = vector.extract_strided_slice %8 {offsets = [3, 0], sizes = [1, 64], strides = [1, 1]} : vector<8x64xf32> to vector<1x64xf32>
    %297 = vector.broadcast %296 : vector<1x64xf32> to vector<32x64xf32>
    %298 = arith.addf %295, %297 : vector<32x64xf32>
    %299 = arith.truncf %298 : vector<32x64xf32> to vector<32x64xbf16>
    %c0_98 = arith.constant 0 : index
    %c0_99 = arith.constant 0 : index
    %c0_100 = arith.constant 0 : index
    %300 = vector.load %arg15[%c0_98, %c0_99, %c0_100] : memref<1x64x64xbf16, #tpu.memory_space<vmem>>, vector<1x64x64xbf16>
    %301 = vector.shape_cast %300 : vector<1x64x64xbf16> to vector<64x64xbf16>
    %cst_101 = arith.constant dense<0.000000e+00> : vector<32x64xf32>
    %302 = tpu.matmul %299, %301, %cst_101 {dimension_numbers = #tpu.dot_dimension_numbers<[1], [0], [0], [1], [0, 0, 1, 1], [], []>} : vector<32x64xbf16>, vector<64x64xbf16>, vector<32x64xf32> -> vector<32x64xf32>
    %c0_102 = arith.constant 0 : index
    %c0_103 = arith.constant 0 : index
    %c0_104 = arith.constant 0 : index
    %303 = vector.load %arg18[%c0_102, %c0_103, %c0_104] : memref<1x1x64xf32, #tpu.memory_space<vmem>>, vector<1x1x64xf32>
    %304 = vector.shape_cast %303 : vector<1x1x64xf32> to vector<1x64xf32>
    %305 = vector.broadcast %304 : vector<1x64xf32> to vector<32x64xf32>
    %306 = arith.addf %302, %305 : vector<32x64xf32>
    %cst_105 = arith.constant dense<0.000000e+00> : vector<32x64xf32>
    %307 = tpu.matmul %306, %6, %cst_105 {dimension_numbers = #tpu.dot_dimension_numbers<[1], [0], [0], [1], [0, 0, 1, 1], [], []>} : vector<32x64xf32>, vector<64x64xf32>, vector<32x64xf32> -> vector<32x64xf32>
    %308 = arith.mulf %306, %4 : vector<32x64xf32>
    %309 = arith.mulf %307, %5 : vector<32x64xf32>
    %310 = arith.addf %308, %309 : vector<32x64xf32>
    %cst_106 = arith.constant 2.500000e-01 : f32
    %311 = vector.broadcast %cst_106 : f32 to vector<32x64xf32>
    %312 = arith.mulf %310, %311 : vector<32x64xf32>
    %313 = arith.truncf %276 : vector<32x64xf32> to vector<32x64xbf16>
    %c0_107 = arith.constant 0 : index
    %c0_108 = arith.constant 0 : index
    %c0_109 = arith.constant 0 : index
    %314 = vector.load %arg16[%c0_107, %c0_108, %c0_109] : memref<1x64x64xbf16, #tpu.memory_space<vmem>>, vector<1x64x64xbf16>
    %315 = vector.shape_cast %314 : vector<1x64x64xbf16> to vector<64x64xbf16>
    %cst_110 = arith.constant dense<0.000000e+00> : vector<32x64xf32>
    %316 = tpu.matmul %313, %315, %cst_110 {dimension_numbers = #tpu.dot_dimension_numbers<[1], [0], [0], [1], [0, 0, 1, 1], [], []>} : vector<32x64xbf16>, vector<64x64xbf16>, vector<32x64xf32> -> vector<32x64xf32>
    %c0_111 = arith.constant 0 : index
    %c0_112 = arith.constant 0 : index
    %c0_113 = arith.constant 0 : index
    %317 = vector.load %arg19[%c0_111, %c0_112, %c0_113] : memref<1x1x64xf32, #tpu.memory_space<vmem>>, vector<1x1x64xf32>
    %318 = vector.shape_cast %317 : vector<1x1x64xf32> to vector<1x64xf32>
    %319 = vector.broadcast %318 : vector<1x64xf32> to vector<32x64xf32>
    %320 = arith.addf %316, %319 : vector<32x64xf32>
    %cst_114 = arith.constant dense<0.000000e+00> : vector<32x64xf32>
    %321 = tpu.matmul %320, %6, %cst_114 {dimension_numbers = #tpu.dot_dimension_numbers<[1], [0], [0], [1], [0, 0, 1, 1], [], []>} : vector<32x64xf32>, vector<64x64xf32>, vector<32x64xf32> -> vector<32x64xf32>
    %322 = arith.mulf %320, %4 : vector<32x64xf32>
    %323 = arith.mulf %321, %5 : vector<32x64xf32>
    %324 = arith.addf %322, %323 : vector<32x64xf32>
    %325 = arith.truncf %276 : vector<32x64xf32> to vector<32x64xbf16>
    %c0_115 = arith.constant 0 : index
    %c0_116 = arith.constant 0 : index
    %c0_117 = arith.constant 0 : index
    %326 = vector.load %arg17[%c0_115, %c0_116, %c0_117] : memref<1x64x64xbf16, #tpu.memory_space<vmem>>, vector<1x64x64xbf16>
    %327 = vector.shape_cast %326 : vector<1x64x64xbf16> to vector<64x64xbf16>
    %cst_118 = arith.constant dense<0.000000e+00> : vector<32x64xf32>
    %328 = tpu.matmul %325, %327, %cst_118 {dimension_numbers = #tpu.dot_dimension_numbers<[1], [0], [0], [1], [0, 0, 1, 1], [], []>} : vector<32x64xbf16>, vector<64x64xbf16>, vector<32x64xf32> -> vector<32x64xf32>
    %c0_119 = arith.constant 0 : index
    %c0_120 = arith.constant 0 : index
    %c0_121 = arith.constant 0 : index
    %329 = vector.load %arg20[%c0_119, %c0_120, %c0_121] : memref<1x1x64xf32, #tpu.memory_space<vmem>>, vector<1x1x64xf32>
    %330 = vector.shape_cast %329 : vector<1x1x64xf32> to vector<1x64xf32>
    %331 = vector.broadcast %330 : vector<1x64xf32> to vector<32x64xf32>
    %332 = arith.addf %328, %331 : vector<32x64xf32>
    %c0_122 = arith.constant 0 : index
    %c0_123 = arith.constant 0 : index
    %c0_124 = arith.constant 0 : index
    %333 = vector.load %arg21[%c0_122, %c0_123, %c0_124] : memref<1x64x64xbf16, #tpu.memory_space<vmem>>, vector<1x64x64xbf16>
    %334 = vector.shape_cast %333 : vector<1x64x64xbf16> to vector<64x64xbf16>
    %335 = vector.extract_strided_slice %312 {offsets = [0, 0], sizes = [16, 16], strides = [1, 1]} : vector<32x64xf32> to vector<16x16xf32>
    %336 = arith.truncf %335 : vector<16x16xf32> to vector<16x16xbf16>
    %337 = vector.extract_strided_slice %324 {offsets = [0, 0], sizes = [16, 16], strides = [1, 1]} : vector<32x64xf32> to vector<16x16xf32>
    %338 = arith.truncf %337 : vector<16x16xf32> to vector<16x16xbf16>
    %339 = vector.extract_strided_slice %332 {offsets = [0, 0], sizes = [16, 16], strides = [1, 1]} : vector<32x64xf32> to vector<16x16xf32>
    %340 = arith.truncf %339 : vector<16x16xf32> to vector<16x16xbf16>
    %cst_125 = arith.constant dense<0.000000e+00> : vector<16x16xf32>
    %341 = tpu.matmul %336, %338, %cst_125 {dimension_numbers = #tpu.dot_dimension_numbers<[1], [1], [0], [0], [0, 0, 1, 0], [], []>} : vector<16x16xbf16>, vector<16x16xbf16>, vector<16x16xf32> -> vector<16x16xf32>
    %cst_126 = arith.constant dense<0xFF800000> : vector<16xf32>
    %342 = vector.multi_reduction <maximumf>, %341, %cst_126 [1] : vector<16x16xf32> to vector<16xf32>
    %343 = vector.shape_cast %342 : vector<16xf32> to vector<16x1xf32>
    %344 = vector.broadcast %343 : vector<16x1xf32> to vector<16x16xf32>
    %345 = arith.subf %341, %344 : vector<16x16xf32>
    %346 = math.exp %345 : vector<16x16xf32>
    %cst_127 = arith.constant dense<0.000000e+00> : vector<16xf32>
    %347 = vector.multi_reduction <add>, %346, %cst_127 [1] : vector<16x16xf32> to vector<16xf32>
    %348 = vector.shape_cast %347 : vector<16xf32> to vector<16x1xf32>
    %349 = tpu.reciprocal %348 {approx = true} : vector<16x1xf32> -> vector<16x1xf32>
    %350 = vector.broadcast %349 : vector<16x1xf32> to vector<16x16xf32>
    %351 = arith.mulf %346, %350 : vector<16x16xf32>
    %352 = arith.truncf %351 : vector<16x16xf32> to vector<16x16xbf16>
    %cst_128 = arith.constant dense<0.000000e+00> : vector<16x16xf32>
    %353 = tpu.matmul %352, %340, %cst_128 {dimension_numbers = #tpu.dot_dimension_numbers<[1], [0], [0], [1], [0, 0, 1, 1], [], []>} : vector<16x16xbf16>, vector<16x16xbf16>, vector<16x16xf32> -> vector<16x16xf32>
    %354 = arith.truncf %353 : vector<16x16xf32> to vector<16x16xbf16>
    %355 = vector.extract_strided_slice %334 {offsets = [0, 0], sizes = [16, 64], strides = [1, 1]} : vector<64x64xbf16> to vector<16x64xbf16>
    %cst_129 = arith.constant dense<0.000000e+00> : vector<16x64xf32>
    %356 = tpu.matmul %354, %355, %cst_129 {dimension_numbers = #tpu.dot_dimension_numbers<[1], [0], [0], [1], [0, 0, 1, 1], [], []>} : vector<16x16xbf16>, vector<16x64xbf16>, vector<16x64xf32> -> vector<16x64xf32>
    %357 = vector.extract_strided_slice %312 {offsets = [0, 16], sizes = [16, 16], strides = [1, 1]} : vector<32x64xf32> to vector<16x16xf32>
    %358 = arith.truncf %357 : vector<16x16xf32> to vector<16x16xbf16>
    %359 = vector.extract_strided_slice %324 {offsets = [0, 16], sizes = [16, 16], strides = [1, 1]} : vector<32x64xf32> to vector<16x16xf32>
    %360 = arith.truncf %359 : vector<16x16xf32> to vector<16x16xbf16>
    %361 = vector.extract_strided_slice %332 {offsets = [0, 16], sizes = [16, 16], strides = [1, 1]} : vector<32x64xf32> to vector<16x16xf32>
    %362 = arith.truncf %361 : vector<16x16xf32> to vector<16x16xbf16>
    %cst_130 = arith.constant dense<0.000000e+00> : vector<16x16xf32>
    %363 = tpu.matmul %358, %360, %cst_130 {dimension_numbers = #tpu.dot_dimension_numbers<[1], [1], [0], [0], [0, 0, 1, 0], [], []>} : vector<16x16xbf16>, vector<16x16xbf16>, vector<16x16xf32> -> vector<16x16xf32>
    %cst_131 = arith.constant dense<0xFF800000> : vector<16xf32>
    %364 = vector.multi_reduction <maximumf>, %363, %cst_131 [1] : vector<16x16xf32> to vector<16xf32>
    %365 = vector.shape_cast %364 : vector<16xf32> to vector<16x1xf32>
    %366 = vector.broadcast %365 : vector<16x1xf32> to vector<16x16xf32>
    %367 = arith.subf %363, %366 : vector<16x16xf32>
    %368 = math.exp %367 : vector<16x16xf32>
    %cst_132 = arith.constant dense<0.000000e+00> : vector<16xf32>
    %369 = vector.multi_reduction <add>, %368, %cst_132 [1] : vector<16x16xf32> to vector<16xf32>
    %370 = vector.shape_cast %369 : vector<16xf32> to vector<16x1xf32>
    %371 = tpu.reciprocal %370 {approx = true} : vector<16x1xf32> -> vector<16x1xf32>
    %372 = vector.broadcast %371 : vector<16x1xf32> to vector<16x16xf32>
    %373 = arith.mulf %368, %372 : vector<16x16xf32>
    %374 = arith.truncf %373 : vector<16x16xf32> to vector<16x16xbf16>
    %cst_133 = arith.constant dense<0.000000e+00> : vector<16x16xf32>
    %375 = tpu.matmul %374, %362, %cst_133 {dimension_numbers = #tpu.dot_dimension_numbers<[1], [0], [0], [1], [0, 0, 1, 1], [], []>} : vector<16x16xbf16>, vector<16x16xbf16>, vector<16x16xf32> -> vector<16x16xf32>
    %376 = arith.truncf %375 : vector<16x16xf32> to vector<16x16xbf16>
    %377 = vector.extract_strided_slice %334 {offsets = [16, 0], sizes = [16, 64], strides = [1, 1]} : vector<64x64xbf16> to vector<16x64xbf16>
    %cst_134 = arith.constant dense<0.000000e+00> : vector<16x64xf32>
    %378 = tpu.matmul %376, %377, %cst_134 {dimension_numbers = #tpu.dot_dimension_numbers<[1], [0], [0], [1], [0, 0, 1, 1], [], []>} : vector<16x16xbf16>, vector<16x64xbf16>, vector<16x64xf32> -> vector<16x64xf32>
    %379 = arith.addf %356, %378 : vector<16x64xf32>
    %380 = vector.extract_strided_slice %312 {offsets = [0, 32], sizes = [16, 16], strides = [1, 1]} : vector<32x64xf32> to vector<16x16xf32>
    %381 = arith.truncf %380 : vector<16x16xf32> to vector<16x16xbf16>
    %382 = vector.extract_strided_slice %324 {offsets = [0, 32], sizes = [16, 16], strides = [1, 1]} : vector<32x64xf32> to vector<16x16xf32>
    %383 = arith.truncf %382 : vector<16x16xf32> to vector<16x16xbf16>
    %384 = vector.extract_strided_slice %332 {offsets = [0, 32], sizes = [16, 16], strides = [1, 1]} : vector<32x64xf32> to vector<16x16xf32>
    %385 = arith.truncf %384 : vector<16x16xf32> to vector<16x16xbf16>
    %cst_135 = arith.constant dense<0.000000e+00> : vector<16x16xf32>
    %386 = tpu.matmul %381, %383, %cst_135 {dimension_numbers = #tpu.dot_dimension_numbers<[1], [1], [0], [0], [0, 0, 1, 0], [], []>} : vector<16x16xbf16>, vector<16x16xbf16>, vector<16x16xf32> -> vector<16x16xf32>
    %cst_136 = arith.constant dense<0xFF800000> : vector<16xf32>
    %387 = vector.multi_reduction <maximumf>, %386, %cst_136 [1] : vector<16x16xf32> to vector<16xf32>
    %388 = vector.shape_cast %387 : vector<16xf32> to vector<16x1xf32>
    %389 = vector.broadcast %388 : vector<16x1xf32> to vector<16x16xf32>
    %390 = arith.subf %386, %389 : vector<16x16xf32>
    %391 = math.exp %390 : vector<16x16xf32>
    %cst_137 = arith.constant dense<0.000000e+00> : vector<16xf32>
    %392 = vector.multi_reduction <add>, %391, %cst_137 [1] : vector<16x16xf32> to vector<16xf32>
    %393 = vector.shape_cast %392 : vector<16xf32> to vector<16x1xf32>
    %394 = tpu.reciprocal %393 {approx = true} : vector<16x1xf32> -> vector<16x1xf32>
    %395 = vector.broadcast %394 : vector<16x1xf32> to vector<16x16xf32>
    %396 = arith.mulf %391, %395 : vector<16x16xf32>
    %397 = arith.truncf %396 : vector<16x16xf32> to vector<16x16xbf16>
    %cst_138 = arith.constant dense<0.000000e+00> : vector<16x16xf32>
    %398 = tpu.matmul %397, %385, %cst_138 {dimension_numbers = #tpu.dot_dimension_numbers<[1], [0], [0], [1], [0, 0, 1, 1], [], []>} : vector<16x16xbf16>, vector<16x16xbf16>, vector<16x16xf32> -> vector<16x16xf32>
    %399 = arith.truncf %398 : vector<16x16xf32> to vector<16x16xbf16>
    %400 = vector.extract_strided_slice %334 {offsets = [32, 0], sizes = [16, 64], strides = [1, 1]} : vector<64x64xbf16> to vector<16x64xbf16>
    %cst_139 = arith.constant dense<0.000000e+00> : vector<16x64xf32>
    %401 = tpu.matmul %399, %400, %cst_139 {dimension_numbers = #tpu.dot_dimension_numbers<[1], [0], [0], [1], [0, 0, 1, 1], [], []>} : vector<16x16xbf16>, vector<16x64xbf16>, vector<16x64xf32> -> vector<16x64xf32>
    %402 = arith.addf %379, %401 : vector<16x64xf32>
    %403 = vector.extract_strided_slice %312 {offsets = [0, 48], sizes = [16, 16], strides = [1, 1]} : vector<32x64xf32> to vector<16x16xf32>
    %404 = arith.truncf %403 : vector<16x16xf32> to vector<16x16xbf16>
    %405 = vector.extract_strided_slice %324 {offsets = [0, 48], sizes = [16, 16], strides = [1, 1]} : vector<32x64xf32> to vector<16x16xf32>
    %406 = arith.truncf %405 : vector<16x16xf32> to vector<16x16xbf16>
    %407 = vector.extract_strided_slice %332 {offsets = [0, 48], sizes = [16, 16], strides = [1, 1]} : vector<32x64xf32> to vector<16x16xf32>
    %408 = arith.truncf %407 : vector<16x16xf32> to vector<16x16xbf16>
    %cst_140 = arith.constant dense<0.000000e+00> : vector<16x16xf32>
    %409 = tpu.matmul %404, %406, %cst_140 {dimension_numbers = #tpu.dot_dimension_numbers<[1], [1], [0], [0], [0, 0, 1, 0], [], []>} : vector<16x16xbf16>, vector<16x16xbf16>, vector<16x16xf32> -> vector<16x16xf32>
    %cst_141 = arith.constant dense<0xFF800000> : vector<16xf32>
    %410 = vector.multi_reduction <maximumf>, %409, %cst_141 [1] : vector<16x16xf32> to vector<16xf32>
    %411 = vector.shape_cast %410 : vector<16xf32> to vector<16x1xf32>
    %412 = vector.broadcast %411 : vector<16x1xf32> to vector<16x16xf32>
    %413 = arith.subf %409, %412 : vector<16x16xf32>
    %414 = math.exp %413 : vector<16x16xf32>
    %cst_142 = arith.constant dense<0.000000e+00> : vector<16xf32>
    %415 = vector.multi_reduction <add>, %414, %cst_142 [1] : vector<16x16xf32> to vector<16xf32>
    %416 = vector.shape_cast %415 : vector<16xf32> to vector<16x1xf32>
    %417 = tpu.reciprocal %416 {approx = true} : vector<16x1xf32> -> vector<16x1xf32>
    %418 = vector.broadcast %417 : vector<16x1xf32> to vector<16x16xf32>
    %419 = arith.mulf %414, %418 : vector<16x16xf32>
    %420 = arith.truncf %419 : vector<16x16xf32> to vector<16x16xbf16>
    %cst_143 = arith.constant dense<0.000000e+00> : vector<16x16xf32>
    %421 = tpu.matmul %420, %408, %cst_143 {dimension_numbers = #tpu.dot_dimension_numbers<[1], [0], [0], [1], [0, 0, 1, 1], [], []>} : vector<16x16xbf16>, vector<16x16xbf16>, vector<16x16xf32> -> vector<16x16xf32>
    %422 = arith.truncf %421 : vector<16x16xf32> to vector<16x16xbf16>
    %423 = vector.extract_strided_slice %334 {offsets = [48, 0], sizes = [16, 64], strides = [1, 1]} : vector<64x64xbf16> to vector<16x64xbf16>
    %cst_144 = arith.constant dense<0.000000e+00> : vector<16x64xf32>
    %424 = tpu.matmul %422, %423, %cst_144 {dimension_numbers = #tpu.dot_dimension_numbers<[1], [0], [0], [1], [0, 0, 1, 1], [], []>} : vector<16x16xbf16>, vector<16x64xbf16>, vector<16x64xf32> -> vector<16x64xf32>
    %425 = arith.addf %402, %424 : vector<16x64xf32>
    %426 = vector.extract_strided_slice %312 {offsets = [16, 0], sizes = [16, 16], strides = [1, 1]} : vector<32x64xf32> to vector<16x16xf32>
    %427 = arith.truncf %426 : vector<16x16xf32> to vector<16x16xbf16>
    %428 = vector.extract_strided_slice %324 {offsets = [16, 0], sizes = [16, 16], strides = [1, 1]} : vector<32x64xf32> to vector<16x16xf32>
    %429 = arith.truncf %428 : vector<16x16xf32> to vector<16x16xbf16>
    %430 = vector.extract_strided_slice %332 {offsets = [16, 0], sizes = [16, 16], strides = [1, 1]} : vector<32x64xf32> to vector<16x16xf32>
    %431 = arith.truncf %430 : vector<16x16xf32> to vector<16x16xbf16>
    %cst_145 = arith.constant dense<0.000000e+00> : vector<16x16xf32>
    %432 = tpu.matmul %427, %429, %cst_145 {dimension_numbers = #tpu.dot_dimension_numbers<[1], [1], [0], [0], [0, 0, 1, 0], [], []>} : vector<16x16xbf16>, vector<16x16xbf16>, vector<16x16xf32> -> vector<16x16xf32>
    %cst_146 = arith.constant dense<0xFF800000> : vector<16xf32>
    %433 = vector.multi_reduction <maximumf>, %432, %cst_146 [1] : vector<16x16xf32> to vector<16xf32>
    %434 = vector.shape_cast %433 : vector<16xf32> to vector<16x1xf32>
    %435 = vector.broadcast %434 : vector<16x1xf32> to vector<16x16xf32>
    %436 = arith.subf %432, %435 : vector<16x16xf32>
    %437 = math.exp %436 : vector<16x16xf32>
    %cst_147 = arith.constant dense<0.000000e+00> : vector<16xf32>
    %438 = vector.multi_reduction <add>, %437, %cst_147 [1] : vector<16x16xf32> to vector<16xf32>
    %439 = vector.shape_cast %438 : vector<16xf32> to vector<16x1xf32>
    %440 = tpu.reciprocal %439 {approx = true} : vector<16x1xf32> -> vector<16x1xf32>
    %441 = vector.broadcast %440 : vector<16x1xf32> to vector<16x16xf32>
    %442 = arith.mulf %437, %441 : vector<16x16xf32>
    %443 = arith.truncf %442 : vector<16x16xf32> to vector<16x16xbf16>
    %cst_148 = arith.constant dense<0.000000e+00> : vector<16x16xf32>
    %444 = tpu.matmul %443, %431, %cst_148 {dimension_numbers = #tpu.dot_dimension_numbers<[1], [0], [0], [1], [0, 0, 1, 1], [], []>} : vector<16x16xbf16>, vector<16x16xbf16>, vector<16x16xf32> -> vector<16x16xf32>
    %445 = arith.truncf %444 : vector<16x16xf32> to vector<16x16xbf16>
    %446 = vector.extract_strided_slice %334 {offsets = [0, 0], sizes = [16, 64], strides = [1, 1]} : vector<64x64xbf16> to vector<16x64xbf16>
    %cst_149 = arith.constant dense<0.000000e+00> : vector<16x64xf32>
    %447 = tpu.matmul %445, %446, %cst_149 {dimension_numbers = #tpu.dot_dimension_numbers<[1], [0], [0], [1], [0, 0, 1, 1], [], []>} : vector<16x16xbf16>, vector<16x64xbf16>, vector<16x64xf32> -> vector<16x64xf32>
    %448 = vector.extract_strided_slice %312 {offsets = [16, 16], sizes = [16, 16], strides = [1, 1]} : vector<32x64xf32> to vector<16x16xf32>
    %449 = arith.truncf %448 : vector<16x16xf32> to vector<16x16xbf16>
    %450 = vector.extract_strided_slice %324 {offsets = [16, 16], sizes = [16, 16], strides = [1, 1]} : vector<32x64xf32> to vector<16x16xf32>
    %451 = arith.truncf %450 : vector<16x16xf32> to vector<16x16xbf16>
    %452 = vector.extract_strided_slice %332 {offsets = [16, 16], sizes = [16, 16], strides = [1, 1]} : vector<32x64xf32> to vector<16x16xf32>
    %453 = arith.truncf %452 : vector<16x16xf32> to vector<16x16xbf16>
    %cst_150 = arith.constant dense<0.000000e+00> : vector<16x16xf32>
    %454 = tpu.matmul %449, %451, %cst_150 {dimension_numbers = #tpu.dot_dimension_numbers<[1], [1], [0], [0], [0, 0, 1, 0], [], []>} : vector<16x16xbf16>, vector<16x16xbf16>, vector<16x16xf32> -> vector<16x16xf32>
    %cst_151 = arith.constant dense<0xFF800000> : vector<16xf32>
    %455 = vector.multi_reduction <maximumf>, %454, %cst_151 [1] : vector<16x16xf32> to vector<16xf32>
    %456 = vector.shape_cast %455 : vector<16xf32> to vector<16x1xf32>
    %457 = vector.broadcast %456 : vector<16x1xf32> to vector<16x16xf32>
    %458 = arith.subf %454, %457 : vector<16x16xf32>
    %459 = math.exp %458 : vector<16x16xf32>
    %cst_152 = arith.constant dense<0.000000e+00> : vector<16xf32>
    %460 = vector.multi_reduction <add>, %459, %cst_152 [1] : vector<16x16xf32> to vector<16xf32>
    %461 = vector.shape_cast %460 : vector<16xf32> to vector<16x1xf32>
    %462 = tpu.reciprocal %461 {approx = true} : vector<16x1xf32> -> vector<16x1xf32>
    %463 = vector.broadcast %462 : vector<16x1xf32> to vector<16x16xf32>
    %464 = arith.mulf %459, %463 : vector<16x16xf32>
    %465 = arith.truncf %464 : vector<16x16xf32> to vector<16x16xbf16>
    %cst_153 = arith.constant dense<0.000000e+00> : vector<16x16xf32>
    %466 = tpu.matmul %465, %453, %cst_153 {dimension_numbers = #tpu.dot_dimension_numbers<[1], [0], [0], [1], [0, 0, 1, 1], [], []>} : vector<16x16xbf16>, vector<16x16xbf16>, vector<16x16xf32> -> vector<16x16xf32>
    %467 = arith.truncf %466 : vector<16x16xf32> to vector<16x16xbf16>
    %468 = vector.extract_strided_slice %334 {offsets = [16, 0], sizes = [16, 64], strides = [1, 1]} : vector<64x64xbf16> to vector<16x64xbf16>
    %cst_154 = arith.constant dense<0.000000e+00> : vector<16x64xf32>
    %469 = tpu.matmul %467, %468, %cst_154 {dimension_numbers = #tpu.dot_dimension_numbers<[1], [0], [0], [1], [0, 0, 1, 1], [], []>} : vector<16x16xbf16>, vector<16x64xbf16>, vector<16x64xf32> -> vector<16x64xf32>
    %470 = arith.addf %447, %469 : vector<16x64xf32>
    %471 = vector.extract_strided_slice %312 {offsets = [16, 32], sizes = [16, 16], strides = [1, 1]} : vector<32x64xf32> to vector<16x16xf32>
    %472 = arith.truncf %471 : vector<16x16xf32> to vector<16x16xbf16>
    %473 = vector.extract_strided_slice %324 {offsets = [16, 32], sizes = [16, 16], strides = [1, 1]} : vector<32x64xf32> to vector<16x16xf32>
    %474 = arith.truncf %473 : vector<16x16xf32> to vector<16x16xbf16>
    %475 = vector.extract_strided_slice %332 {offsets = [16, 32], sizes = [16, 16], strides = [1, 1]} : vector<32x64xf32> to vector<16x16xf32>
    %476 = arith.truncf %475 : vector<16x16xf32> to vector<16x16xbf16>
    %cst_155 = arith.constant dense<0.000000e+00> : vector<16x16xf32>
    %477 = tpu.matmul %472, %474, %cst_155 {dimension_numbers = #tpu.dot_dimension_numbers<[1], [1], [0], [0], [0, 0, 1, 0], [], []>} : vector<16x16xbf16>, vector<16x16xbf16>, vector<16x16xf32> -> vector<16x16xf32>
    %cst_156 = arith.constant dense<0xFF800000> : vector<16xf32>
    %478 = vector.multi_reduction <maximumf>, %477, %cst_156 [1] : vector<16x16xf32> to vector<16xf32>
    %479 = vector.shape_cast %478 : vector<16xf32> to vector<16x1xf32>
    %480 = vector.broadcast %479 : vector<16x1xf32> to vector<16x16xf32>
    %481 = arith.subf %477, %480 : vector<16x16xf32>
    %482 = math.exp %481 : vector<16x16xf32>
    %cst_157 = arith.constant dense<0.000000e+00> : vector<16xf32>
    %483 = vector.multi_reduction <add>, %482, %cst_157 [1] : vector<16x16xf32> to vector<16xf32>
    %484 = vector.shape_cast %483 : vector<16xf32> to vector<16x1xf32>
    %485 = tpu.reciprocal %484 {approx = true} : vector<16x1xf32> -> vector<16x1xf32>
    %486 = vector.broadcast %485 : vector<16x1xf32> to vector<16x16xf32>
    %487 = arith.mulf %482, %486 : vector<16x16xf32>
    %488 = arith.truncf %487 : vector<16x16xf32> to vector<16x16xbf16>
    %cst_158 = arith.constant dense<0.000000e+00> : vector<16x16xf32>
    %489 = tpu.matmul %488, %476, %cst_158 {dimension_numbers = #tpu.dot_dimension_numbers<[1], [0], [0], [1], [0, 0, 1, 1], [], []>} : vector<16x16xbf16>, vector<16x16xbf16>, vector<16x16xf32> -> vector<16x16xf32>
    %490 = arith.truncf %489 : vector<16x16xf32> to vector<16x16xbf16>
    %491 = vector.extract_strided_slice %334 {offsets = [32, 0], sizes = [16, 64], strides = [1, 1]} : vector<64x64xbf16> to vector<16x64xbf16>
    %cst_159 = arith.constant dense<0.000000e+00> : vector<16x64xf32>
    %492 = tpu.matmul %490, %491, %cst_159 {dimension_numbers = #tpu.dot_dimension_numbers<[1], [0], [0], [1], [0, 0, 1, 1], [], []>} : vector<16x16xbf16>, vector<16x64xbf16>, vector<16x64xf32> -> vector<16x64xf32>
    %493 = arith.addf %470, %492 : vector<16x64xf32>
    %494 = vector.extract_strided_slice %312 {offsets = [16, 48], sizes = [16, 16], strides = [1, 1]} : vector<32x64xf32> to vector<16x16xf32>
    %495 = arith.truncf %494 : vector<16x16xf32> to vector<16x16xbf16>
    %496 = vector.extract_strided_slice %324 {offsets = [16, 48], sizes = [16, 16], strides = [1, 1]} : vector<32x64xf32> to vector<16x16xf32>
    %497 = arith.truncf %496 : vector<16x16xf32> to vector<16x16xbf16>
    %498 = vector.extract_strided_slice %332 {offsets = [16, 48], sizes = [16, 16], strides = [1, 1]} : vector<32x64xf32> to vector<16x16xf32>
    %499 = arith.truncf %498 : vector<16x16xf32> to vector<16x16xbf16>
    %cst_160 = arith.constant dense<0.000000e+00> : vector<16x16xf32>
    %500 = tpu.matmul %495, %497, %cst_160 {dimension_numbers = #tpu.dot_dimension_numbers<[1], [1], [0], [0], [0, 0, 1, 0], [], []>} : vector<16x16xbf16>, vector<16x16xbf16>, vector<16x16xf32> -> vector<16x16xf32>
    %cst_161 = arith.constant dense<0xFF800000> : vector<16xf32>
    %501 = vector.multi_reduction <maximumf>, %500, %cst_161 [1] : vector<16x16xf32> to vector<16xf32>
    %502 = vector.shape_cast %501 : vector<16xf32> to vector<16x1xf32>
    %503 = vector.broadcast %502 : vector<16x1xf32> to vector<16x16xf32>
    %504 = arith.subf %500, %503 : vector<16x16xf32>
    %505 = math.exp %504 : vector<16x16xf32>
    %cst_162 = arith.constant dense<0.000000e+00> : vector<16xf32>
    %506 = vector.multi_reduction <add>, %505, %cst_162 [1] : vector<16x16xf32> to vector<16xf32>
    %507 = vector.shape_cast %506 : vector<16xf32> to vector<16x1xf32>
    %508 = tpu.reciprocal %507 {approx = true} : vector<16x1xf32> -> vector<16x1xf32>
    %509 = vector.broadcast %508 : vector<16x1xf32> to vector<16x16xf32>
    %510 = arith.mulf %505, %509 : vector<16x16xf32>
    %511 = arith.truncf %510 : vector<16x16xf32> to vector<16x16xbf16>
    %cst_163 = arith.constant dense<0.000000e+00> : vector<16x16xf32>
    %512 = tpu.matmul %511, %499, %cst_163 {dimension_numbers = #tpu.dot_dimension_numbers<[1], [0], [0], [1], [0, 0, 1, 1], [], []>} : vector<16x16xbf16>, vector<16x16xbf16>, vector<16x16xf32> -> vector<16x16xf32>
    %513 = arith.truncf %512 : vector<16x16xf32> to vector<16x16xbf16>
    %514 = vector.extract_strided_slice %334 {offsets = [48, 0], sizes = [16, 64], strides = [1, 1]} : vector<64x64xbf16> to vector<16x64xbf16>
    %cst_164 = arith.constant dense<0.000000e+00> : vector<16x64xf32>
    %515 = tpu.matmul %513, %514, %cst_164 {dimension_numbers = #tpu.dot_dimension_numbers<[1], [0], [0], [1], [0, 0, 1, 1], [], []>} : vector<16x16xbf16>, vector<16x64xbf16>, vector<16x64xf32> -> vector<16x64xf32>
    %516 = arith.addf %493, %515 : vector<16x64xf32>
    %517 = tpu.concatenate %425, %516 in 0 : vector<16x64xf32>, vector<16x64xf32> -> vector<32x64xf32>
    %c0_165 = arith.constant 0 : index
    %c0_166 = arith.constant 0 : index
    %c0_167 = arith.constant 0 : index
    %518 = vector.load %arg22[%c0_165, %c0_166, %c0_167] : memref<1x1x64xf32, #tpu.memory_space<vmem>>, vector<1x1x64xf32>
    %519 = vector.shape_cast %518 : vector<1x1x64xf32> to vector<1x64xf32>
    %520 = vector.broadcast %519 : vector<1x64xf32> to vector<32x64xf32>
    %521 = arith.addf %517, %520 : vector<32x64xf32>
    %522 = arith.addf %254, %521 : vector<32x64xf32>
    %cst_168 = arith.constant dense<0.000000e+00> : vector<32xf32>
    %523 = vector.multi_reduction <add>, %522, %cst_168 [1] : vector<32x64xf32> to vector<32xf32>
    %524 = vector.shape_cast %523 : vector<32xf32> to vector<32x1xf32>
    %cst_169 = arith.constant 6.400000e+01 : f32
    %525 = vector.broadcast %cst_169 : f32 to vector<32x1xf32>
    %526 = arith.divf %524, %525 : vector<32x1xf32>
    %527 = vector.broadcast %526 : vector<32x1xf32> to vector<32x64xf32>
    %528 = arith.subf %522, %527 : vector<32x64xf32>
    %529 = arith.mulf %528, %528 : vector<32x64xf32>
    %cst_170 = arith.constant dense<0.000000e+00> : vector<32xf32>
    %530 = vector.multi_reduction <add>, %529, %cst_170 [1] : vector<32x64xf32> to vector<32xf32>
    %531 = vector.shape_cast %530 : vector<32xf32> to vector<32x1xf32>
    %cst_171 = arith.constant 6.400000e+01 : f32
    %532 = vector.broadcast %cst_171 : f32 to vector<32x1xf32>
    %533 = arith.divf %531, %532 : vector<32x1xf32>
    %cst_172 = arith.constant 9.99999997E-7 : f32
    %534 = vector.broadcast %cst_172 : f32 to vector<32x1xf32>
    %535 = arith.addf %533, %534 : vector<32x1xf32>
    %536 = math.rsqrt %535 : vector<32x1xf32>
    %537 = vector.broadcast %536 : vector<32x1xf32> to vector<32x64xf32>
    %538 = arith.mulf %528, %537 : vector<32x64xf32>
    %539 = vector.extract_strided_slice %8 {offsets = [4, 0], sizes = [1, 64], strides = [1, 1]} : vector<8x64xf32> to vector<1x64xf32>
    %540 = vector.broadcast %539 : vector<1x64xf32> to vector<32x64xf32>
    %541 = arith.mulf %538, %540 : vector<32x64xf32>
    %542 = vector.extract_strided_slice %8 {offsets = [5, 0], sizes = [1, 64], strides = [1, 1]} : vector<8x64xf32> to vector<1x64xf32>
    %543 = vector.broadcast %542 : vector<1x64xf32> to vector<32x64xf32>
    %544 = arith.addf %541, %543 : vector<32x64xf32>
    %545 = arith.truncf %544 : vector<32x64xf32> to vector<32x64xbf16>
    %c0_173 = arith.constant 0 : index
    %c0_174 = arith.constant 0 : index
    %c0_175 = arith.constant 0 : index
    %546 = vector.load %arg23[%c0_173, %c0_174, %c0_175] : memref<1x64x256xbf16, #tpu.memory_space<vmem>>, vector<1x64x256xbf16>
    %547 = vector.shape_cast %546 : vector<1x64x256xbf16> to vector<64x256xbf16>
    %cst_176 = arith.constant dense<0.000000e+00> : vector<32x256xf32>
    %548 = tpu.matmul %545, %547, %cst_176 {dimension_numbers = #tpu.dot_dimension_numbers<[1], [0], [0], [1], [0, 0, 1, 1], [], []>} : vector<32x64xbf16>, vector<64x256xbf16>, vector<32x256xf32> -> vector<32x256xf32>
    %c0_177 = arith.constant 0 : index
    %c0_178 = arith.constant 0 : index
    %c0_179 = arith.constant 0 : index
    %549 = vector.load %arg24[%c0_177, %c0_178, %c0_179] : memref<1x1x256xf32, #tpu.memory_space<vmem>>, vector<1x1x256xf32>
    %550 = vector.shape_cast %549 : vector<1x1x256xf32> to vector<1x256xf32>
    %551 = vector.broadcast %550 : vector<1x256xf32> to vector<32x256xf32>
    %552 = arith.addf %548, %551 : vector<32x256xf32>
    %c0_180 = arith.constant 0 : index
    %c0_181 = arith.constant 0 : index
    %c0_182 = arith.constant 0 : index
    %553 = vector.load %arg25[%c0_180, %c0_181, %c0_182] : memref<1x32x64xf32, #tpu.memory_space<vmem>>, vector<1x32x64xf32>
    %554 = vector.shape_cast %553 : vector<1x32x64xf32> to vector<32x64xf32>
    %555 = vector.shape_cast %522 : vector<32x64xf32> to vector<1x32x64xf32>
    tpu.vector_store %arg25[%c0_180, %c0_181, %c0_182], %555 {strides = array<i32>} : memref<1x32x64xf32, #tpu.memory_space<vmem>>, vector<1x32x64xf32>,
    %c0_183 = arith.constant 0 : index
    %c0_184 = arith.constant 0 : index
    %c0_185 = arith.constant 0 : index
    %556 = vector.load %arg26[%c0_183, %c0_184, %c0_185] : memref<1x32x256xf32, #tpu.memory_space<vmem>>, vector<1x32x256xf32>
    %557 = vector.shape_cast %556 : vector<1x32x256xf32> to vector<32x256xf32>
    %558 = vector.shape_cast %552 : vector<32x256xf32> to vector<1x32x256xf32>
    tpu.vector_store %arg26[%c0_183, %c0_184, %c0_185], %558 {strides = array<i32>} : memref<1x32x256xf32, #tpu.memory_space<vmem>>, vector<1x32x256xf32>,
    return
  }
  func.func @transform_0(%arg0: i32) -> (i32, i32, i32) {
    %c0_i32 = arith.constant 0 : i32
    %c0_i32_0 = arith.constant 0 : i32
    %c0_i32_1 = arith.constant 0 : i32
    return %arg0, %c0_i32, %c0_i32_0 : i32, i32, i32
  }
  func.func @transform_1(%arg0: i32) -> (i32, i32, i32) {
    %c1_i32 = arith.constant 1 : i32
    %0 = arith.subi %c1_i32, %arg0 : i32
    %c0_i32 = arith.constant 0 : i32
    %c0_i32_0 = arith.constant 0 : i32
    %c0_i32_1 = arith.constant 0 : i32
    return %0, %c0_i32, %c0_i32_0 : i32, i32, i32
  }
  func.func @transform_2(%arg0: i32) -> (i32, i32) {
    %c0_i32 = arith.constant 0 : i32
    %c0_i32_0 = arith.constant 0 : i32
    %c0_i32_1 = arith.constant 0 : i32
    return %c0_i32, %c0_i32_0 : i32, i32
  }
  func.func @transform_3(%arg0: i32) -> (i32, i32) {
    %c0_i32 = arith.constant 0 : i32
    %c0_i32_0 = arith.constant 0 : i32
    %c0_i32_1 = arith.constant 0 : i32
    return %c0_i32, %c0_i32_0 : i32, i32
  }
  func.func @transform_4(%arg0: i32) -> (i32, i32) {
    %c0_i32 = arith.constant 0 : i32
    %c0_i32_0 = arith.constant 0 : i32
    %c0_i32_1 = arith.constant 0 : i32
    return %c0_i32, %c0_i32_0 : i32, i32
  }
  func.func @transform_5(%arg0: i32) -> (i32, i32, i32) {
    %c0_i32 = arith.constant 0 : i32
    %c0_i32_0 = arith.constant 0 : i32
    %c0_i32_1 = arith.constant 0 : i32
    return %arg0, %c0_i32, %c0_i32_0 : i32, i32, i32
  }
  func.func @transform_6(%arg0: i32) -> (i32, i32, i32) {
    %c0_i32 = arith.constant 0 : i32
    %c0_i32_0 = arith.constant 0 : i32
    %c0_i32_1 = arith.constant 0 : i32
    return %arg0, %c0_i32, %c0_i32_0 : i32, i32, i32
  }
  func.func @transform_7(%arg0: i32) -> (i32, i32, i32) {
    %c0_i32 = arith.constant 0 : i32
    %c0_i32_0 = arith.constant 0 : i32
    %c0_i32_1 = arith.constant 0 : i32
    return %arg0, %c0_i32, %c0_i32_0 : i32, i32, i32
  }
  func.func @transform_8(%arg0: i32) -> (i32, i32, i32) {
    %c0_i32 = arith.constant 0 : i32
    %c0_i32_0 = arith.constant 0 : i32
    %c0_i32_1 = arith.constant 0 : i32
    return %arg0, %c0_i32, %c0_i32_0 : i32, i32, i32
  }
  func.func @transform_9(%arg0: i32) -> (i32, i32, i32) {
    %c0_i32 = arith.constant 0 : i32
    %c0_i32_0 = arith.constant 0 : i32
    %c0_i32_1 = arith.constant 0 : i32
    return %arg0, %c0_i32, %c0_i32_0 : i32, i32, i32
  }
  func.func @transform_10(%arg0: i32) -> (i32, i32, i32) {
    %c0_i32 = arith.constant 0 : i32
    %c0_i32_0 = arith.constant 0 : i32
    %c0_i32_1 = arith.constant 0 : i32
    return %arg0, %c0_i32, %c0_i32_0 : i32, i32, i32
  }
  func.func @transform_11(%arg0: i32) -> (i32, i32, i32) {
    %c0_i32 = arith.constant 0 : i32
    %c0_i32_0 = arith.constant 0 : i32
    %c0_i32_1 = arith.constant 0 : i32
    return %arg0, %c0_i32, %c0_i32_0 : i32, i32, i32
  }
  func.func @transform_12(%arg0: i32) -> (i32, i32, i32) {
    %c0_i32 = arith.constant 0 : i32
    %c0_i32_0 = arith.constant 0 : i32
    %c0_i32_1 = arith.constant 0 : i32
    return %arg0, %c0_i32, %c0_i32_0 : i32, i32, i32
  }
  func.func @transform_13(%arg0: i32) -> (i32, i32, i32) {
    %c0_i32 = arith.constant 0 : i32
    %c0_i32_0 = arith.constant 0 : i32
    %c0_i32_1 = arith.constant 0 : i32
    return %arg0, %c0_i32, %c0_i32_0 : i32, i32, i32
  }
  func.func @transform_14(%arg0: i32) -> (i32, i32, i32) {
    %c0_i32 = arith.constant 0 : i32
    %c0_i32_0 = arith.constant 0 : i32
    %c0_i32_1 = arith.constant 0 : i32
    return %arg0, %c0_i32, %c0_i32_0 : i32, i32, i32
  }
  func.func @transform_15(%arg0: i32) -> (i32, i32, i32) {
    %c0_i32 = arith.constant 0 : i32
    %c0_i32_0 = arith.constant 0 : i32
    %c0_i32_1 = arith.constant 0 : i32
    return %arg0, %c0_i32, %c0_i32_0 : i32, i32, i32
  }
  func.func @transform_16(%arg0: i32) -> (i32, i32, i32) {
    %c0_i32 = arith.constant 0 : i32
    %c0_i32_0 = arith.constant 0 : i32
    %c0_i32_1 = arith.constant 0 : i32
    return %arg0, %c0_i32, %c0_i32_0 : i32, i32, i32
  }
  func.func @transform_17(%arg0: i32) -> (i32, i32, i32) {
    %c0_i32 = arith.constant 0 : i32
    %c0_i32_0 = arith.constant 0 : i32
    %c0_i32_1 = arith.constant 0 : i32
    return %arg0, %c0_i32, %c0_i32_0 : i32, i32, i32
  }
  func.func @transform_18(%arg0: i32) -> (i32, i32, i32) {
    %c0_i32 = arith.constant 0 : i32
    %c0_i32_0 = arith.constant 0 : i32
    %c0_i32_1 = arith.constant 0 : i32
    return %arg0, %c0_i32, %c0_i32_0 : i32, i32, i32
  }
  func.func @transform_19(%arg0: i32) -> (i32, i32, i32) {
    %c0_i32 = arith.constant 0 : i32
    %c0_i32_0 = arith.constant 0 : i32
    %c0_i32_1 = arith.constant 0 : i32
    return %arg0, %c0_i32, %c0_i32_0 : i32, i32, i32
  }
  func.func @transform_20(%arg0: i32) -> (i32, i32, i32) {
    %c0_i32 = arith.constant 0 : i32
    %c0_i32_0 = arith.constant 0 : i32
    %c0_i32_1 = arith.constant 0 : i32
    return %arg0, %c0_i32, %c0_i32_0 : i32, i32, i32
  }
  func.func @transform_21(%arg0: i32) -> (i32, i32, i32) {
    %c0_i32 = arith.constant 0 : i32
    %c0_i32_0 = arith.constant 0 : i32
    %c0_i32_1 = arith.constant 0 : i32
    return %arg0, %c0_i32, %c0_i32_0 : i32, i32, i32
  }
  func.func @transform_22(%arg0: i32) -> (i32, i32, i32) {
    %c0_i32 = arith.constant 0 : i32
    %c0_i32_0 = arith.constant 0 : i32
    %c0_i32_1 = arith.constant 0 : i32
    return %arg0, %c0_i32, %c0_i32_0 : i32, i32, i32
  }
  func.func @transform_23(%arg0: i32) -> (i32, i32, i32) {
    %c0_i32 = arith.constant 0 : i32
    %c0_i32_0 = arith.constant 0 : i32
    %c0_i32_1 = arith.constant 0 : i32
    return %arg0, %c0_i32, %c0_i32_0 : i32, i32, i32
  }
  func.func @transform_24(%arg0: i32) -> (i32, i32, i32) {
    %c0_i32 = arith.constant 0 : i32
    %c0_i32_0 = arith.constant 0 : i32
    %c0_i32_1 = arith.constant 0 : i32
    return %arg0, %c0_i32, %c0_i32_0 : i32, i32, i32
  }
  func.func @transform_25(%arg0: i32) -> (i32, i32, i32) {
    %c0_i32 = arith.constant 0 : i32
    %c0_i32_0 = arith.constant 0 : i32
    %c0_i32_1 = arith.constant 0 : i32
    return %arg0, %c0_i32, %c0_i32_0 : i32, i32, i32
  }
}

module attributes {stable_mosaic.version = 11 : i64} {
  func.func @_layernorm_kernel(%arg0: i32, %arg1: memref<64x64xf32, #tpu.memory_space<vmem>>, %arg2: memref<1x64xf32, #tpu.memory_space<vmem>>, %arg3: memref<1x64xf32, #tpu.memory_space<vmem>>, %arg4: memref<64x64xf32, #tpu.memory_space<vmem>>) attributes {dimension_semantics = [#tpu.dimension_semantics<parallel>], iteration_bounds = array<i64: 1>, scalar_prefetch = 0 : i64, scratch_operands = 0 : i64, tpu.core_type = #tpu.core_type<tc>, window_params = [{transform_indices = @transform_0, window_bounds = array<i64: 64, 64>}, {pipeline_mode = #tpu.pipeline_mode<synchronous>, transform_indices = @transform_1, window_bounds = array<i64: 1, 64>}, {pipeline_mode = #tpu.pipeline_mode<synchronous>, transform_indices = @transform_2, window_bounds = array<i64: 1, 64>}, {transform_indices = @transform_3, window_bounds = array<i64: 64, 64>}]} {
    %c0 = arith.constant 0 : index
    %c0_0 = arith.constant 0 : index
    %0 = vector.load %arg1[%c0, %c0_0] : memref<64x64xf32, #tpu.memory_space<vmem>>, vector<64x64xf32>
    %cst = arith.constant dense<0.000000e+00> : vector<64xf32>
    %1 = vector.multi_reduction <add>, %0, %cst [1] : vector<64x64xf32> to vector<64xf32>
    %2 = vector.shape_cast %1 : vector<64xf32> to vector<64x1xf32>
    %cst_1 = arith.constant 6.400000e+01 : f32
    %3 = vector.broadcast %cst_1 : f32 to vector<64x1xf32>
    %4 = arith.divf %2, %3 : vector<64x1xf32>
    %5 = vector.broadcast %4 : vector<64x1xf32> to vector<64x64xf32>
    %6 = arith.subf %0, %5 : vector<64x64xf32>
    %7 = arith.mulf %6, %6 : vector<64x64xf32>
    %cst_2 = arith.constant dense<0.000000e+00> : vector<64xf32>
    %8 = vector.multi_reduction <add>, %7, %cst_2 [1] : vector<64x64xf32> to vector<64xf32>
    %9 = vector.shape_cast %8 : vector<64xf32> to vector<64x1xf32>
    %cst_3 = arith.constant 6.400000e+01 : f32
    %10 = vector.broadcast %cst_3 : f32 to vector<64x1xf32>
    %11 = arith.divf %9, %10 : vector<64x1xf32>
    %cst_4 = arith.constant 9.99999997E-7 : f32
    %12 = vector.broadcast %cst_4 : f32 to vector<64x1xf32>
    %13 = arith.addf %11, %12 : vector<64x1xf32>
    %14 = math.rsqrt %13 : vector<64x1xf32>
    %15 = vector.broadcast %14 : vector<64x1xf32> to vector<64x64xf32>
    %16 = arith.mulf %6, %15 : vector<64x64xf32>
    %c0_5 = arith.constant 0 : index
    %c0_6 = arith.constant 0 : index
    %17 = vector.load %arg2[%c0_5, %c0_6] : memref<1x64xf32, #tpu.memory_space<vmem>>, vector<1x64xf32>
    %18 = vector.broadcast %17 : vector<1x64xf32> to vector<64x64xf32>
    %19 = arith.mulf %16, %18 : vector<64x64xf32>
    %c0_7 = arith.constant 0 : index
    %c0_8 = arith.constant 0 : index
    %20 = vector.load %arg3[%c0_7, %c0_8] : memref<1x64xf32, #tpu.memory_space<vmem>>, vector<1x64xf32>
    %21 = vector.broadcast %20 : vector<1x64xf32> to vector<64x64xf32>
    %22 = arith.addf %19, %21 : vector<64x64xf32>
    %c0_9 = arith.constant 0 : index
    %c0_10 = arith.constant 0 : index
    %23 = vector.load %arg4[%c0_9, %c0_10] : memref<64x64xf32, #tpu.memory_space<vmem>>, vector<64x64xf32>
    tpu.vector_store %arg4[%c0_9, %c0_10], %22 {strides = array<i32>} : memref<64x64xf32, #tpu.memory_space<vmem>>, vector<64x64xf32>,
    return
  }
  func.func @transform_0(%arg0: i32) -> (i32, i32) {
    %c0_i32 = arith.constant 0 : i32
    %c0_i32_0 = arith.constant 0 : i32
    return %arg0, %c0_i32 : i32, i32
  }
  func.func @transform_1(%arg0: i32) -> (i32, i32) {
    %c0_i32 = arith.constant 0 : i32
    %c0_i32_0 = arith.constant 0 : i32
    %c0_i32_1 = arith.constant 0 : i32
    return %c0_i32, %c0_i32_0 : i32, i32
  }
  func.func @transform_2(%arg0: i32) -> (i32, i32) {
    %c0_i32 = arith.constant 0 : i32
    %c0_i32_0 = arith.constant 0 : i32
    %c0_i32_1 = arith.constant 0 : i32
    return %c0_i32, %c0_i32_0 : i32, i32
  }
  func.func @transform_3(%arg0: i32) -> (i32, i32) {
    %c0_i32 = arith.constant 0 : i32
    %c0_i32_0 = arith.constant 0 : i32
    return %arg0, %c0_i32 : i32, i32
  }
}

module attributes {stable_mosaic.version = 11 : i64} {
  func.func @_block_tail_kernel(%arg0: i32, %arg1: memref<1x32x64xf32, #tpu.memory_space<vmem>>, %arg2: memref<1x32x256xf32, #tpu.memory_space<vmem>>, %arg3: memref<1x256x64xbf16, #tpu.memory_space<vmem>>, %arg4: memref<1x1x64xf32, #tpu.memory_space<vmem>>, %arg5: memref<1x32x64xf32, #tpu.memory_space<vmem>>) attributes {dimension_semantics = [#tpu.dimension_semantics<parallel>], iteration_bounds = array<i64: 2>, scalar_prefetch = 0 : i64, scratch_operands = 0 : i64, tpu.core_type = #tpu.core_type<tc>, window_params = [{transform_indices = @transform_0, window_bounds = array<i64: 1, 32, 64>}, {transform_indices = @transform_1, window_bounds = array<i64: 1, 32, 256>}, {transform_indices = @transform_2, window_bounds = array<i64: 1, 256, 64>}, {transform_indices = @transform_3, window_bounds = array<i64: 1, 1, 64>}, {transform_indices = @transform_4, window_bounds = array<i64: 1, 32, 64>}]} {
    %c0 = arith.constant 0 : index
    %c0_0 = arith.constant 0 : index
    %c0_1 = arith.constant 0 : index
    %0 = vector.load %arg2[%c0, %c0_0, %c0_1] : memref<1x32x256xf32, #tpu.memory_space<vmem>>, vector<1x32x256xf32>
    %1 = vector.shape_cast %0 : vector<1x32x256xf32> to vector<32x256xf32>
    %2 = arith.truncf %1 : vector<32x256xf32> to vector<32x256xbf16>
    %c0_2 = arith.constant 0 : index
    %c0_3 = arith.constant 0 : index
    %c0_4 = arith.constant 0 : index
    %3 = vector.load %arg3[%c0_2, %c0_3, %c0_4] : memref<1x256x64xbf16, #tpu.memory_space<vmem>>, vector<1x256x64xbf16>
    %4 = vector.shape_cast %3 : vector<1x256x64xbf16> to vector<256x64xbf16>
    %cst = arith.constant dense<0.000000e+00> : vector<32x64xf32>
    %5 = tpu.matmul %2, %4, %cst {dimension_numbers = #tpu.dot_dimension_numbers<[1], [0], [0], [1], [0, 0, 1, 1], [], []>} : vector<32x256xbf16>, vector<256x64xbf16>, vector<32x64xf32> -> vector<32x64xf32>
    %c0_5 = arith.constant 0 : index
    %c0_6 = arith.constant 0 : index
    %c0_7 = arith.constant 0 : index
    %6 = vector.load %arg4[%c0_5, %c0_6, %c0_7] : memref<1x1x64xf32, #tpu.memory_space<vmem>>, vector<1x1x64xf32>
    %7 = vector.shape_cast %6 : vector<1x1x64xf32> to vector<1x64xf32>
    %8 = vector.broadcast %7 : vector<1x64xf32> to vector<32x64xf32>
    %9 = arith.addf %5, %8 : vector<32x64xf32>
    %c0_8 = arith.constant 0 : index
    %c0_9 = arith.constant 0 : index
    %c0_10 = arith.constant 0 : index
    %10 = vector.load %arg1[%c0_8, %c0_9, %c0_10] : memref<1x32x64xf32, #tpu.memory_space<vmem>>, vector<1x32x64xf32>
    %11 = vector.shape_cast %10 : vector<1x32x64xf32> to vector<32x64xf32>
    %12 = arith.addf %11, %9 : vector<32x64xf32>
    %c0_11 = arith.constant 0 : index
    %c0_12 = arith.constant 0 : index
    %c0_13 = arith.constant 0 : index
    %13 = vector.load %arg5[%c0_11, %c0_12, %c0_13] : memref<1x32x64xf32, #tpu.memory_space<vmem>>, vector<1x32x64xf32>
    %14 = vector.shape_cast %13 : vector<1x32x64xf32> to vector<32x64xf32>
    %15 = vector.shape_cast %12 : vector<32x64xf32> to vector<1x32x64xf32>
    tpu.vector_store %arg5[%c0_11, %c0_12, %c0_13], %15 {strides = array<i32>} : memref<1x32x64xf32, #tpu.memory_space<vmem>>, vector<1x32x64xf32>,
    return
  }
  func.func @transform_0(%arg0: i32) -> (i32, i32, i32) {
    %c0_i32 = arith.constant 0 : i32
    %c0_i32_0 = arith.constant 0 : i32
    %c0_i32_1 = arith.constant 0 : i32
    return %arg0, %c0_i32, %c0_i32_0 : i32, i32, i32
  }
  func.func @transform_1(%arg0: i32) -> (i32, i32, i32) {
    %c0_i32 = arith.constant 0 : i32
    %c0_i32_0 = arith.constant 0 : i32
    %c0_i32_1 = arith.constant 0 : i32
    return %arg0, %c0_i32, %c0_i32_0 : i32, i32, i32
  }
  func.func @transform_2(%arg0: i32) -> (i32, i32, i32) {
    %c0_i32 = arith.constant 0 : i32
    %c0_i32_0 = arith.constant 0 : i32
    %c0_i32_1 = arith.constant 0 : i32
    return %arg0, %c0_i32, %c0_i32_0 : i32, i32, i32
  }
  func.func @transform_3(%arg0: i32) -> (i32, i32, i32) {
    %c0_i32 = arith.constant 0 : i32
    %c0_i32_0 = arith.constant 0 : i32
    %c0_i32_1 = arith.constant 0 : i32
    return %arg0, %c0_i32, %c0_i32_0 : i32, i32, i32
  }
  func.func @transform_4(%arg0: i32) -> (i32, i32, i32) {
    %c0_i32 = arith.constant 0 : i32
    %c0_i32_0 = arith.constant 0 : i32
    %c0_i32_1 = arith.constant 0 : i32
    return %arg0, %c0_i32, %c0_i32_0 : i32, i32, i32
  }
}

</mosaic_0001>

<llo_original>
// kernel: dust3r_decoder.26
$region0: #{dust3r_decoder.26}
  #allocation0 [shape = 'u32[]', space=smem, size = 0x4, offset = 0x4, fixed_abs, tag = 'smem constant byte address 0x4 - core index']
  #allocation1 [shape = 'u32[144,128]{1,0:T(1,128)}', space=vmem, size = 0x12000, scoped, tag = 'internal scratch']
  #allocation2 [shape = 'f32[64,64]{1,0:T(8,128)}', space=vmem, size = 0x8000, scoped, tag = 'scratch operand']
  %s0 = inlined_call_operand.vmem [shape: f32[64,96], index: 0, kind: input, shape index: {}]
  %s1 = inlined_call_operand.vmem [shape: bf16[96,64], index: 1, kind: input, shape index: {}]
  %s2 = inlined_call_operand.vmem [shape: f32[1,64], index: 2, kind: input, shape index: {}]
  %s3 = inlined_call_operand.vmem [shape: f32[64,64], index: 3, kind: output, shape index: {}]
  %s4 = sld [smem:[#allocation0]]
  $region30: #{dust3r_decoder.26} parent=0
    _
  %s6 = ssub.s32 1, %s4
  %s7 = scalar_select 0, %s6, %s4
  // Predicated region
  $region2: #{dust3r_decoder.26} parent=0 // pred_check
    _
  $region3: #{dust3r_decoder.26} parent=0 // pred_check_branch
    %9 = sbr.rel (0) target = $region5
  $region4: #{dust3r_decoder.26} parent=0 // pred_region
    _
  $region5: #{dust3r_decoder.26} parent=0 // pred_fallthru
    _
  // Predicated region
  $region6: #{dust3r_decoder.26} parent=0 // pred_check
    _
  $region7: #{dust3r_decoder.26} parent=0 // pred_check_branch
    %11 = sbr.rel (0) target = $region9
  $region8: #{dust3r_decoder.26} parent=0 // pred_region
    _
  $region9: #{dust3r_decoder.26} parent=0 // pred_fallthru
    _
  // Predicated region
  $region10: #{dust3r_decoder.26} parent=0 // pred_check
    _
  $region11: #{dust3r_decoder.26} parent=0 // pred_check_branch
    %13 = sbr.rel (0) target = $region13
  $region12: #{dust3r_decoder.26} parent=0 // pred_region
    _
  $region13: #{dust3r_decoder.26} parent=0 // pred_fallthru
    _
  %p15 = scmp.eq.s32.totalorder 0, 0
  // Predicated region
  $region14: #{dust3r_decoder.26} parent=0 // pred_check
    %p16 = pneg %p15
  $region15: #{dust3r_decoder.26} parent=0 // pred_check_branch
    %18 = sbr.rel (%p16) target = $region17
  $region16: #{dust3r_decoder.26} parent=0 // pred_region
    %vm19 = vcmask 523264
    %20 = vst.msk [vmem:[#allocation2] sm:$0xff] %vm19, 0.0
    %21 = vst.msk [vmem:[#allocation2 + $0x8] sm:$0xff] %vm19, 0.0
    %22 = vst.msk [vmem:[#allocation2 + $0x10] sm:$0xff] %vm19, 0.0
    %23 = vst.msk [vmem:[#allocation2 + $0x18] sm:$0xff] %vm19, 0.0
    %24 = vst.msk [vmem:[#allocation2 + $0x20] sm:$0xff] %vm19, 0.0
    %25 = vst.msk [vmem:[#allocation2 + $0x28] sm:$0xff] %vm19, 0.0
    %26 = vst.msk [vmem:[#allocation2 + $0x30] sm:$0xff] %vm19, 0.0
    %27 = vst.msk [vmem:[#allocation2 + $0x38] sm:$0xff] %vm19, 0.0
  $region17: #{dust3r_decoder.26} parent=0 // pred_fallthru
    _
  %v28 = vld [vmem:[#allocation2] sm:$0xff]
  %v29 = vld [vmem:[#allocation2 + $0x8] sm:$0xff]
  %v30 = vld [vmem:[#allocation2 + $0x10] sm:$0xff]
  %v31 = vld [vmem:[#allocation2 + $0x18] sm:$0xff]
  %v32 = vld [vmem:[#allocation2 + $0x20] sm:$0xff]
  %v33 = vld [vmem:[#allocation2 + $0x28] sm:$0xff]
  %v34 = vld [vmem:[#allocation2 + $0x30] sm:$0xff]
  %v35 = vld [vmem:[#allocation2 + $0x38] sm:$0xff]
  %v36 = vld [vmem:[%s0] sm:$0xff]
  %v37 = vld [vmem:[%s0 + $0x8] sm:$0xff]
  %v38 = vld [vmem:[%s0 + $0x10] sm:$0xff]
  %v39 = vld [vmem:[%s0 + $0x18] sm:$0xff]
  %v40 = vld [vmem:[%s0 + $0x20] sm:$0xff]
  %v41 = vld [vmem:[%s0 + $0x28] sm:$0xff]
  %v42 = vld [vmem:[%s0 + $0x30] sm:$0xff]
  %v43 = vld [vmem:[%s0 + $0x38] sm:$0xff]
  %v44 = vpack.c.bf16 %v37, %v36
  %v45 = vpack.c.bf16 %v39, %v38
  %v46 = vpack.c.bf16 %v41, %v40
  %v47 = vpack.c.bf16 %v43, %v42
  %v48 = vld [vmem:[%s1] sm:$0xf]
  %v49 = vld [vmem:[%s1 + $0x4] sm:$0xf]
  %v50 = vld [vmem:[%s1 + $0x8] sm:$0xf]
  %v51 = vld [vmem:[%s1 + $0xc] sm:$0xf]
  %v52 = vld [vmem:[%s1 + $0x10] sm:$0xf]
  %v53 = vld [vmem:[%s1 + $0x14] sm:$0xf]
  %v54 = vld [vmem:[%s1 + $0x18] sm:$0xf]
  %v55 = vld [vmem:[%s1 + $0x1c] sm:$0xf]
  %v56 = vld [vmem:[%s1 + $0x20] sm:$0xf]
  %v57 = vld [vmem:[%s1 + $0x24] sm:$0xf]
  %v58 = vld [vmem:[%s1 + $0x28] sm:$0xf]
  %v59 = vld [vmem:[%s1 + $0x2c] sm:$0xf]
  %v72 = vunpack.c.l.b16 %v48
  %v73 = vunpack.c.l.b16 %v49
  %v74 = vunpack.c.l.b16 %v50
  %v75 = vunpack.c.l.b16 %v51
  %v76 = vunpack.c.l.b16 %v52
  %v77 = vunpack.c.l.b16 %v53
  %v78 = vunpack.c.l.b16 %v54
  %v79 = vunpack.c.l.b16 %v55
  %v80 = vunpack.c.l.b16 %v56
  %v81 = vunpack.c.l.b16 %v57
  %v82 = vunpack.c.l.b16 %v58
  %v83 = vunpack.c.l.b16 %v59
  %v84 = vpack.c.b16 %v73, %v72
  %v85 = vpack.c.b16 %v75, %v74
  %v86 = vpack.c.b16 %v77, %v76
  %v87 = vpack.c.b16 %v79, %v78
  %v88 = vpack.c.b16 %v81, %v80
  %v89 = vpack.c.b16 %v83, %v82
  %vm96 = vcmask 785408
  %v98 = vsel %vm96, %v44, 0
  %v101 = vsel %vm96, %v45, 0
  %v104 = vsel %vm96, %v46, 0
  %v107 = vsel %vm96, %v47, 0
  %109 = vmatprep.subr.bf16.mxu0 0
  %110 = vmatpush1.bf16.msra.mxu0 %v84
  %111 = vmatprep.subr.bf16.mxu0 0
  %112 = vmatpush1.bf16.msra.mxu0 %v85
  %113 = vmatprep.subr.bf16.mxu0 0
  %114 = vmatpush1.bf16.msra.mxu0 %v86
  %115 = vmatprep.subr.bf16.mxu0 0
  %116 = vmatpush1.bf16.msra.mxu0 %v87
  %117 = vmatprep.subr.bf16.mxu0 0
  %118 = vmatpush1.bf16.msra.mxu0 %v88
  %119 = vmatprep.subr.bf16.mxu0 0
  %120 = vmatpush1.bf16.msra.mxu0 %v89
  %121 = vmatprep.subr.bf16.mxu0 0
  %122 = vmatpush1.bf16.msra.mxu0 0
  %123 = vmatprep.subr.bf16.mxu0 0
  %124 = vmatpush1.bf16.msra.mxu0 0
  %125 = vmatprep.subr.bf16.mxu0 0
  %126 = vmatpush1.bf16.msra.mxu0 0
  %127 = vmatprep.subr.bf16.mxu0 0
  %128 = vmatpush1.bf16.msra.mxu0 0
  %129 = vmatprep.subr.bf16.mxu0 0
  %130 = vmatpush1.bf16.msra.mxu0 0
  %131 = vmatprep.subr.bf16.mxu0 0
  %132 = vmatpush1.bf16.msra.mxu0 0
  %133 = vmatprep.subr.bf16.mxu0 0
  %134 = vmatpush1.bf16.msra.mxu0 0
  %135 = vmatprep.subr.bf16.mxu0 0
  %136 = vmatpush1.bf16.msra.mxu0 0
  %137 = vmatprep.subr.bf16.mxu0 0
  %138 = vmatpush1.bf16.msra.mxu0 0
  %139 = vmatprep.subr.bf16.mxu0 0
  %140 = vmatpush1.bf16.msra.mxu0 0
  %141 = vmatprep.mubr.bf16.mxu0 0
  %142 = vmatmul.mubr.bf16.gmra.mrb[0].mxu0 %v98
  %v143 = vpop.f32.mrb[0].mxu0
  %v144 = vadd.f32 0.0, %v143
  %v145 = vpop.f32.mrb[0].mxu0
  %v146 = vpop.f32.mrb[0].mxu0
  %v147 = vadd.f32 0.0, %v146
  %v148 = vpop.f32.mrb[0].mxu0
  %149 = vmatprep.mubr.bf16.mxu0 0
  %150 = vmatmul.mubr.bf16.gmra.mrb[0].mxu0 %v101
  %v151 = vpop.f32.mrb[0].mxu0
  %v152 = vadd.f32 0.0, %v151
  %v153 = vpop.f32.mrb[0].mxu0
  %v154 = vpop.f32.mrb[0].mxu0
  %v155 = vadd.f32 0.0, %v154
  %v156 = vpop.f32.mrb[0].mxu0
  %157 = vmatprep.mubr.bf16.mxu0 0
  %158 = vmatmul.mubr.bf16.gmra.mrb[0].mxu0 %v104
  %v159 = vpop.f32.mrb[0].mxu0
  %v160 = vadd.f32 0.0, %v159
  %v161 = vpop.f32.mrb[0].mxu0
  %v162 = vpop.f32.mrb[0].mxu0
  %v163 = vadd.f32 0.0, %v162
  %v164 = vpop.f32.mrb[0].mxu0
  %165 = vmatprep.mubr.bf16.mxu0 0
  %166 = vmatmul.mubr.bf16.gmra.mrb[0].mxu0 %v107
  %v167 = vpop.f32.mrb[0].mxu0
  %v168 = vadd.f32 0.0, %v167
  %v169 = vpop.f32.mrb[0].mxu0
  %v170 = vpop.f32.mrb[0].mxu0
  %v171 = vadd.f32 0.0, %v170
  %v172 = vpop.f32.mrb[0].mxu0
  %173 = vdwg.mxu0
  %v174 = vadd.f32 %v28, %v144
  %v175 = vadd.f32 %v29, %v147
  %v176 = vadd.f32 %v30, %v152
  %v177 = vadd.f32 %v31, %v155
  %v178 = vadd.f32 %v32, %v160
  %v179 = vadd.f32 %v33, %v163
  %v180 = vadd.f32 %v34, %v168
  %v181 = vadd.f32 %v35, %v171
  %vm182 = vcmask 523264
  %183 = vst.msk [vmem:[#allocation2] sm:$0xff] %vm182, %v174
  %184 = vst.msk [vmem:[#allocation2 + $0x8] sm:$0xff] %vm182, %v175
  %185 = vst.msk [vmem:[#allocation2 + $0x10] sm:$0xff] %vm182, %v176
  %186 = vst.msk [vmem:[#allocation2 + $0x18] sm:$0xff] %vm182, %v177
  %187 = vst.msk [vmem:[#allocation2 + $0x20] sm:$0xff] %vm182, %v178
  %188 = vst.msk [vmem:[#allocation2 + $0x28] sm:$0xff] %vm182, %v179
  %189 = vst.msk [vmem:[#allocation2 + $0x30] sm:$0xff] %vm182, %v180
  %190 = vst.msk [vmem:[#allocation2 + $0x38] sm:$0xff] %vm182, %v181
  // Predicated region
  $region18: #{dust3r_decoder.26} parent=0 // pred_check
    %p191 = pneg %p15
  $region19: #{dust3r_decoder.26} parent=0 // pred_check_branch
    %193 = sbr.rel (%p191) target = $region21
  $region20: #{dust3r_decoder.26} parent=0 // pred_region
    %v194 = vld [vmem:[#allocation2] sm:$0xff]
    %v195 = vld [vmem:[#allocation2 + $0x8] sm:$0xff]
    %v196 = vld [vmem:[#allocation2 + $0x10] sm:$0xff]
    %v197 = vld [vmem:[#allocation2 + $0x18] sm:$0xff]
    %v198 = vld [vmem:[#allocation2 + $0x20] sm:$0xff]
    %v199 = vld [vmem:[#allocation2 + $0x28] sm:$0xff]
    %v200 = vld [vmem:[#allocation2 + $0x30] sm:$0xff]
    %v201 = vld [vmem:[#allocation2 + $0x38] sm:$0xff]
    %v202 = vld [vmem:[%s2] sm:$0x1]
    %v204 = vlaneseq
    %v205 = vshrl.u32 %v204, 7
    %v206 = vsub.s32 0, %v205
    %v207 = vrot.slane %v202, %v206
    %v209 = vadd.f32 %v194, %v207
    %v210 = vadd.f32 %v195, %v207
    %v211 = vadd.f32 %v196, %v207
    %v212 = vadd.f32 %v197, %v207
    %v213 = vadd.f32 %v198, %v207
    %v214 = vadd.f32 %v199, %v207
    %v215 = vadd.f32 %v200, %v207
    %v216 = vadd.f32 %v201, %v207
    %217 = vst.msk [vmem:[%s3] sm:$0xff] %vm182, %v209
    %218 = vst.msk [vmem:[%s3 + $0x8] sm:$0xff] %vm182, %v210
    %219 = vst.msk [vmem:[%s3 + $0x10] sm:$0xff] %vm182, %v211
    %220 = vst.msk [vmem:[%s3 + $0x18] sm:$0xff] %vm182, %v212
    %221 = vst.msk [vmem:[%s3 + $0x20] sm:$0xff] %vm182, %v213
    %222 = vst.msk [vmem:[%s3 + $0x28] sm:$0xff] %vm182, %v214
    %223 = vst.msk [vmem:[%s3 + $0x30] sm:$0xff] %vm182, %v215
    %224 = vst.msk [vmem:[%s3 + $0x38] sm:$0xff] %vm182, %v216
  $region21: #{dust3r_decoder.26} parent=0 // pred_fallthru
    _
  // Predicated region
  $region22: #{dust3r_decoder.26} parent=0 // pred_check
    _
  $region23: #{dust3r_decoder.26} parent=0 // pred_check_branch
    %226 = sbr.rel (0) target = $region25
  $region24: #{dust3r_decoder.26} parent=0 // pred_region
    _
  $region25: #{dust3r_decoder.26} parent=0 // pred_fallthru
    _
  // Predicated region
  $region26: #{dust3r_decoder.26} parent=0 // pred_check
    _
  $region27: #{dust3r_decoder.26} parent=0 // pred_check_branch
    %228 = sbr.rel (0) target = $region29
  $region28: #{dust3r_decoder.26} parent=0 // pred_region
    _
  $region29: #{dust3r_decoder.26} parent=0 // pred_fallthru
    _

// kernel: dust3r_decoder.28
$region0: #{dust3r_decoder.28}
  #allocation0 [shape = 'u32[]', space=smem, size = 0x4, offset = 0x4, fixed_abs, tag = 'smem constant byte address 0x4 - core index']
  #allocation1 [shape = 'u32[144,128]{1,0:T(1,128)}', space=vmem, size = 0x12000, scoped, tag = 'internal scratch']
  %s0 = inlined_call_operand.vmem [shape: f32[2,32,64], index: 0, kind: input, shape index: {}]
  %s1 = inlined_call_operand.vmem [shape: f32[2,32,256], index: 1, kind: input, shape index: {}]
  %s2 = inlined_call_operand.vmem [shape: bf16[2,256,64], index: 2, kind: input, shape index: {}]
  %s3 = inlined_call_operand.vmem [shape: f32[2,1,64], index: 3, kind: input, shape index: {}]
  %s4 = inlined_call_operand.vmem [shape: f32[2,32,64], index: 4, kind: output, shape index: {}]
  %s5 = sld [smem:[#allocation0]]
  $region49: #{dust3r_decoder.28} parent=0
    _
  %s7 = ssub.s32 1, %s5
  %s8 = scalar_select 0, %s7, %s5
  loop: start=0, step=1, limit=4
  $region2: #{dust3r_decoder.28} parent=0 // loop_pre_header
    _
  $region3: #{dust3r_decoder.28} parent=0 // loop_header
    %s10 = sphi 0, %s14
    %p11 = scmp.ge.s32.totalorder %s10, 4
    %s20 = sphi 0, %s22
    %s23 = sphi 0, %s20
    %s24 = sphi 0, %s23
    %s40 = sphi 0, %s24
    %s46 = sphi 0, %s48
    %s49 = sphi 0, %s46
    %s50 = sphi 0, %s49
    %s66 = sphi 0, %s50
    %s72 = sphi 0, %s74
    %s75 = sphi 0, %s72
    %s76 = sphi 0, %s75
    %s92 = sphi 0, %s76
    %s98 = sphi 0, %s100
    %s101 = sphi 0, %s98
    %s102 = sphi 0, %s101
    %s118 = sphi 0, %s102
    %s124 = sphi 0, %s126
    %s127 = sphi 0, %s124
    %s128 = sphi 0, %s127
    %s144 = sphi 0, %s128
  $region4: #{dust3r_decoder.28} parent=0 // loop_header_branch
    %13 = sbr.rel (%p11) target = $region8
  $region5: #{dust3r_decoder.28} parent=0 // loop_body
    %s15 = ssub.s32 %s10, 1
    %s16 = ssub.s32 %s10, 2
    %s17 = sadd.s32 %s10, 1
    %s18 = ssub.s32 %s10, %s17
    %p19 = scmp.eq.s32.totalorder %s18, 0
    %s21 = sadd.s32 %s20, 1
    %s22 = scalar_select %p19, %s20, %s21
    %p25 = pneg %p19
    %p26 = scmp.eq.s32.totalorder %s10, 1
    %p27 = por %p25, %p26
    %p28 = scmp.ne.s32.totalorder %s20, %s23
    %p29 = scmp.eq.s32.totalorder %s10, 0
    %p30 = por %p28, %p29
    %p31 = scmp.ne.s32.totalorder %s20, %s23
    %p32 = scmp.eq.s32.totalorder %s15, 1
    %p33 = por %p31, %p32
    %p34 = scmp.ne.s32.totalorder %s23, %s24
    %p35 = scmp.eq.s32.totalorder %s15, 0
    %p36 = por %p34, %p35
    %p37 = scmp.ne.s32.totalorder %s23, %s24
    %p38 = scmp.eq.s32.totalorder %s16, 1
    %p39 = por %p37, %p38
    %p41 = scmp.ne.s32.totalorder %s24, %s40
    %p42 = scmp.eq.s32.totalorder %s16, 0
    %p43 = por %p41, %p42
    %s44 = ssub.s32 %s10, %s17
    %p45 = scmp.eq.s32.totalorder %s44, 0
    %s47 = sadd.s32 %s46, 1
    %s48 = scalar_select %p45, %s46, %s47
    %p51 = pneg %p45
    %p52 = scmp.eq.s32.totalorder %s10, 1
    %p53 = por %p51, %p52
    %p54 = scmp.ne.s32.totalorder %s46, %s49
    %p55 = scmp.eq.s32.totalorder %s10, 0
    %p56 = por %p54, %p55
    %p57 = scmp.ne.s32.totalorder %s46, %s49
    %p58 = scmp.eq.s32.totalorder %s15, 1
    %p59 = por %p57, %p58
    %p60 = scmp.ne.s32.totalorder %s49, %s50
    %p61 = scmp.eq.s32.totalorder %s15, 0
    %p62 = por %p60, %p61
    %p63 = scmp.ne.s32.totalorder %s49, %s50
    %p64 = scmp.eq.s32.totalorder %s16, 1
    %p65 = por %p63, %p64
    %p67 = scmp.ne.s32.totalorder %s50, %s66
    %p68 = scmp.eq.s32.totalorder %s16, 0
    %p69 = por %p67, %p68
    %s70 = ssub.s32 %s10, %s17
    %p71 = scmp.eq.s32.totalorder %s70, 0
    %s73 = sadd.s32 %s72, 1
    %s74 = scalar_select %p71, %s72, %s73
    %p77 = pneg %p71
    %p78 = scmp.eq.s32.totalorder %s10, 1
    %p79 = por %p77, %p78
    %p80 = scmp.ne.s32.totalorder %s72, %s75
    %p81 = scmp.eq.s32.totalorder %s10, 0
    %p82 = por %p80, %p81
    %p83 = scmp.ne.s32.totalorder %s72, %s75
    %p84 = scmp.eq.s32.totalorder %s15, 1
    %p85 = por %p83, %p84
    %p86 = scmp.ne.s32.totalorder %s75, %s76
    %p87 = scmp.eq.s32.totalorder %s15, 0
    %p88 = por %p86, %p87
    %p89 = scmp.ne.s32.totalorder %s75, %s76
    %p90 = scmp.eq.s32.totalorder %s16, 1
    %p91 = por %p89, %p90
    %p93 = scmp.ne.s32.totalorder %s76, %s92
    %p94 = scmp.eq.s32.totalorder %s16, 0
    %p95 = por %p93, %p94
    %s96 = ssub.s32 %s10, %s17
    %p97 = scmp.eq.s32.totalorder %s96, 0
    %s99 = sadd.s32 %s98, 1
    %s100 = scalar_select %p97, %s98, %s99
    %p103 = pneg %p97
    %p104 = scmp.eq.s32.totalorder %s10, 1
    %p105 = por %p103, %p104
    %p106 = scmp.ne.s32.totalorder %s98, %s101
    %p107 = scmp.eq.s32.totalorder %s10, 0
    %p108 = por %p106, %p107
    %p109 = scmp.ne.s32.totalorder %s98, %s101
    %p110 = scmp.eq.s32.totalorder %s15, 1
    %p111 = por %p109, %p110
    %p112 = scmp.ne.s32.totalorder %s101, %s102
    %p113 = scmp.eq.s32.totalorder %s15, 0
    %p114 = por %p112, %p113
    %p115 = scmp.ne.s32.totalorder %s101, %s102
    %p116 = scmp.eq.s32.totalorder %s16, 1
    %p117 = por %p115, %p116
    %p119 = scmp.ne.s32.totalorder %s102, %s118
    %p120 = scmp.eq.s32.totalorder %s16, 0
    %p121 = por %p119, %p120
    %s122 = ssub.s32 %s10, %s17
    %p123 = scmp.eq.s32.totalorder %s122, 0
    %s125 = sadd.s32 %s124, 1
    %s126 = scalar_select %p123, %s124, %s125
    %p129 = pneg %p123
    %p130 = scmp.eq.s32.totalorder %s10, 1
    %p131 = por %p129, %p130
    %p132 = scmp.ne.s32.totalorder %s124, %s127
    %p133 = scmp.eq.s32.totalorder %s10, 0
    %p134 = por %p132, %p133
    %p135 = scmp.ne.s32.totalorder %s124, %s127
    %p136 = scmp.eq.s32.totalorder %s15, 1
    %p137 = por %p135, %p136
    %p138 = scmp.ne.s32.totalorder %s127, %s128
    %p139 = scmp.eq.s32.totalorder %s15, 0
    %p140 = por %p138, %p139
    %p141 = scmp.ne.s32.totalorder %s127, %s128
    %p142 = scmp.eq.s32.totalorder %s16, 1
    %p143 = por %p141, %p142
    %p145 = scmp.ne.s32.totalorder %s128, %s144
    %p146 = scmp.eq.s32.totalorder %s16, 0
    %p147 = por %p145, %p146
    %p148 = scmp.le.s32.totalorder 1, %s10
    %p149 = scmp.lt.s32.totalorder %s10, 3
    %p150 = pnand %p148, %p149
    %p151 = pneg %p150
    // Predicated region
    $region9: #{dust3r_decoder.28} parent=5 // pred_check
      _
    $region10: #{dust3r_decoder.28} parent=5 // pred_check_branch
      %153 = sbr.rel (%p150) target = $region12
    $region11: #{dust3r_decoder.28} parent=5 // pred_region
      %s154 = ssub.s32 %s10, 1
    $region12: #{dust3r_decoder.28} parent=5 // pred_fallthru
      _
    %p155 = scmp.lt.s32.totalorder %s10, 2
    // Predicated region
    $region13: #{dust3r_decoder.28} parent=5 // pred_check
      %p156 = pneg %p155
    $region14: #{dust3r_decoder.28} parent=5 // pred_check_branch
      %158 = sbr.rel (%p156) target = $region16
    $region15: #{dust3r_decoder.28} parent=5 // pred_region
      // Predicated region
      $region17: #{dust3r_decoder.28} parent=15 // pred_check
        %p159 = pneg %p30
      $region18: #{dust3r_decoder.28} parent=15 // pred_check_branch
        %161 = sbr.rel (%p159) target = $region20
      $region19: #{dust3r_decoder.28} parent=15 // pred_region
        %p162 = scmp.lt.s32.totalorder %s10, 1
        %s163 = scalar_select %p162, %s10, 1
        %s164 = smul.addr %s163, 4
        %s165 = smul.addr %s164, 8
        %s166 = scalar_lea.vmem %s0, %s165
      $region20: #{dust3r_decoder.28} parent=15 // pred_fallthru
        _
      // Predicated region
      $region21: #{dust3r_decoder.28} parent=15 // pred_check
        %p167 = pneg %p56
      $region22: #{dust3r_decoder.28} parent=15 // pred_check_branch
        %169 = sbr.rel (%p167) target = $region24
      $region23: #{dust3r_decoder.28} parent=15 // pred_region
        %p170 = scmp.lt.s32.totalorder %s10, 1
        %s171 = scalar_select %p170, %s10, 1
        %s172 = smul.addr %s171, 8
        %s173 = smul.addr %s172, 8
        %s174 = scalar_lea.vmem %s1, %s173
      $region24: #{dust3r_decoder.28} parent=15 // pred_fallthru
        _
      // Predicated region
      $region25: #{dust3r_decoder.28} parent=15 // pred_check
        %p175 = pneg %p82
      $region26: #{dust3r_decoder.28} parent=15 // pred_check_branch
        %177 = sbr.rel (%p175) target = $region28
      $region27: #{dust3r_decoder.28} parent=15 // pred_region
        %p178 = scmp.lt.s32.totalorder %s10, 1
        %s179 = scalar_select %p178, %s10, 1
        %s180 = smul.addr %s179, 32
        %s181 = smul.addr %s180, 4
        %s182 = scalar_lea.vmem %s2, %s181
      $region28: #{dust3r_decoder.28} parent=15 // pred_fallthru
        _
      // Predicated region
      $region29: #{dust3r_decoder.28} parent=15 // pred_check
        %p183 = pneg %p108
      $region30: #{dust3r_decoder.28} parent=15 // pred_check_branch
        %185 = sbr.rel (%p183) target = $region32
      $region31: #{dust3r_decoder.28} parent=15 // pred_region
        %p186 = scmp.lt.s32.totalorder %s10, 1
        %s187 = scalar_select %p186, %s10, 1
        %s188 = scalar_lea.vmem %s3, %s187
      $region32: #{dust3r_decoder.28} parent=15 // pred_fallthru
        _
    $region16: #{dust3r_decoder.28} parent=5 // pred_fallthru
      _
    %p189 = scmp.le.s32.totalorder 1, %s10
    %p190 = scmp.lt.s32.totalorder %s10, 3
    %p191 = pnand %p189, %p190
    %p192 = pneg %p191
    // Predicated region
    $region33: #{dust3r_decoder.28} parent=5 // pred_check
      _
    $region34: #{dust3r_decoder.28} parent=5 // pred_check_branch
      %194 = sbr.rel (%p191) target = $region36
    $region35: #{dust3r_decoder.28} parent=5 // pred_region
      %s195 = ssub.s32 %s10, 1
      %p196 = scmp.lt.s32.totalorder %s15, 1
      %s197 = scalar_select %p196, %s15, 1
      %s198 = smul.addr %s197, 4
      %s199 = smul.addr %s198, 8
      %s200 = scalar_lea.vmem %s0, %s199
      %p201 = pneg %p36
      %p202 = pneg %p33
      %p203 = scmp.lt.s32.totalorder %s15, 1
      %s204 = scalar_select %p203, %s15, 1
      %s205 = smul.addr %s204, 8
      %s206 = smul.addr %s205, 8
      %s207 = scalar_lea.vmem %s1, %s206
      %p208 = pneg %p62
      %p209 = pneg %p59
      %p210 = scmp.lt.s32.totalorder %s15, 1
      %s211 = scalar_select %p210, %s15, 1
      %s212 = smul.addr %s211, 32
      %s213 = smul.addr %s212, 4
      %s214 = scalar_lea.vmem %s2, %s213
      %p215 = pneg %p88
      %p216 = pneg %p85
      %p217 = scmp.lt.s32.totalorder %s15, 1
      %s218 = scalar_select %p217, %s15, 1
      %s219 = scalar_lea.vmem %s3, %s218
      %p220 = pneg %p114
      %p221 = pneg %p111
      %p222 = pneg %p140
      %p223 = pneg %p137
      %p224 = scmp.lt.s32.totalorder %s15, 1
      %s225 = scalar_select %p224, %s15, 1
      %s226 = smul.addr %s225, 4
      %s227 = smul.addr %s226, 8
      %s228 = scalar_lea.vmem %s4, %s227
      %p229 = scmp.lt.s32.totalorder %s15, 1
      %s230 = scalar_select %p229, %s15, 1
      %s231 = smul.addr %s230, 4
      %s232 = smul.addr %s231, 8
      %s233 = scalar_lea.vmem %s0, %s232
      %p234 = scmp.lt.s32.totalorder %s15, 1
      %s235 = scalar_select %p234, %s15, 1
      %s236 = smul.addr %s235, 8
      %s237 = smul.addr %s236, 8
      %s238 = scalar_lea.vmem %s1, %s237
      %p239 = scmp.lt.s32.totalorder %s15, 1
      %s240 = scalar_select %p239, %s15, 1
      %s241 = smul.addr %s240, 32
      %s242 = smul.addr %s241, 4
      %s243 = scalar_lea.vmem %s2, %s242
      %p244 = scmp.lt.s32.totalorder %s15, 1
      %s245 = scalar_select %p244, %s15, 1
      %s246 = scalar_lea.vmem %s3, %s245
      %p247 = scmp.lt.s32.totalorder %s15, 1
      %s248 = scalar_select %p247, %s15, 1
      %s249 = smul.addr %s248, 4
      %s250 = smul.addr %s249, 8
      %s251 = scalar_lea.vmem %s4, %s250
      %v253 = vld [vmem:[%s238] sm:$0xff]
      %v254 = vld [vmem:[%s238 + $0x8] sm:$0xff]
      %v255 = vld [vmem:[%s238 + $0x10] sm:$0xff]
      %v256 = vld [vmem:[%s238 + $0x18] sm:$0xff]
      %v257 = vld [vmem:[%s238 + $0x20] sm:$0xff]
      %v258 = vld [vmem:[%s238 + $0x28] sm:$0xff]
      %v259 = vld [vmem:[%s238 + $0x30] sm:$0xff]
      %v260 = vld [vmem:[%s238 + $0x38] sm:$0xff]
      %v261 = vpack.c.bf16 %v255, %v253
      %v262 = vpack.c.bf16 %v256, %v254
      %v263 = vpack.c.bf16 %v259, %v257
      %v264 = vpack.c.bf16 %v260, %v258
      %v265 = vld [vmem:[%s243] sm:$0xf]
      %v266 = vld [vmem:[%s243 + $0x4] sm:$0xf]
      %v267 = vld [vmem:[%s243 + $0x8] sm:$0xf]
      %v268 = vld [vmem:[%s243 + $0xc] sm:$0xf]
      %v269 = vld [vmem:[%s243 + $0x10] sm:$0xf]
      %v270 = vld [vmem:[%s243 + $0x14] sm:$0xf]
      %v271 = vld [vmem:[%s243 + $0x18] sm:$0xf]
      %v272 = vld [vmem:[%s243 + $0x1c] sm:$0xf]
      %v273 = vld [vmem:[%s243 + $0x20] sm:$0xf]
      %v274 = vld [vmem:[%s243 + $0x24] sm:$0xf]
      %v275 = vld [vmem:[%s243 + $0x28] sm:$0xf]
      %v276 = vld [vmem:[%s243 + $0x2c] sm:$0xf]
      %v277 = vld [vmem:[%s243 + $0x30] sm:$0xf]
      %v278 = vld [vmem:[%s243 + $0x34] sm:$0xf]
      %v279 = vld [vmem:[%s243 + $0x38] sm:$0xf]
      %v280 = vld [vmem:[%s243 + $0x3c] sm:$0xf]
      %v281 = vld [vmem:[%s243 + $0x40] sm:$0xf]
      %v282 = vld [vmem:[%s243 + $0x44] sm:$0xf]
      %v283 = vld [vmem:[%s243 + $0x48] sm:$0xf]
      %v284 = vld [vmem:[%s243 + $0x4c] sm:$0xf]
      %v285 = vld [vmem:[%s243 + $0x50] sm:$0xf]
      %v286 = vld [vmem:[%s243 + $0x54] sm:$0xf]
      %v287 = vld [vmem:[%s243 + $0x58] sm:$0xf]
      %v288 = vld [vmem:[%s243 + $0x5c] sm:$0xf]
      %v289 = vld [vmem:[%s243 + $0x60] sm:$0xf]
      %v290 = vld [vmem:[%s243 + $0x64] sm:$0xf]
      %v291 = vld [vmem:[%s243 + $0x68] sm:$0xf]
      %v292 = vld [vmem:[%s243 + $0x6c] sm:$0xf]
      %v293 = vld [vmem:[%s243 + $0x70] sm:$0xf]
      %v294 = vld [vmem:[%s243 + $0x74] sm:$0xf]
      %v295 = vld [vmem:[%s243 + $0x78] sm:$0xf]
      %v296 = vld [vmem:[%s243 + $0x7c] sm:$0xf]
      %v297 = vld [vmem:[%s246] sm:$0x1]
      %v299 = vlaneseq
      %v300 = vshrl.u32 %v299, 7
      %v301 = vsub.s32 0, %v300
      %v302 = vrot.slane %v297, %v301
      %v336 = vunpack.c.l.b16 %v265
      %v337 = vunpack.c.l.b16 %v266
      %v338 = vunpack.c.l.b16 %v267
      %v339 = vunpack.c.l.b16 %v268
      %v340 = vunpack.c.l.b16 %v269
      %v341 = vunpack.c.l.b16 %v270
      %v342 = vunpack.c.l.b16 %v271
      %v343 = vunpack.c.l.b16 %v272
      %v344 = vunpack.c.l.b16 %v273
      %v345 = vunpack.c.l.b16 %v274
      %v346 = vunpack.c.l.b16 %v275
      %v347 = vunpack.c.l.b16 %v276
      %v348 = vunpack.c.l.b16 %v277
      %v349 = vunpack.c.l.b16 %v278
      %v350 = vunpack.c.l.b16 %v279
      %v351 = vunpack.c.l.b16 %v280
      %v352 = vunpack.c.l.b16 %v281
      %v353 = vunpack.c.l.b16 %v282
      %v354 = vunpack.c.l.b16 %v283
      %v355 = vunpack.c.l.b16 %v284
      %v356 = vunpack.c.l.b16 %v285
      %v357 = vunpack.c.l.b16 %v286
      %v358 = vunpack.c.l.b16 %v287
      %v359 = vunpack.c.l.b16 %v288
      %v360 = vunpack.c.l.b16 %v289
      %v361 = vunpack.c.l.b16 %v290
      %v362 = vunpack.c.l.b16 %v291
      %v363 = vunpack.c.l.b16 %v292
      %v364 = vunpack.c.l.b16 %v293
      %v365 = vunpack.c.l.b16 %v294
      %v366 = vunpack.c.l.b16 %v295
      %v367 = vunpack.c.l.b16 %v296
      %v368 = vpack.c.b16 %v337, %v336
      %v369 = vpack.c.b16 %v339, %v338
      %v370 = vpack.c.b16 %v341, %v340
      %v371 = vpack.c.b16 %v343, %v342
      %v372 = vpack.c.b16 %v345, %v344
      %v373 = vpack.c.b16 %v347, %v346
      %v374 = vpack.c.b16 %v349, %v348
      %v375 = vpack.c.b16 %v351, %v350
      %v376 = vpack.c.b16 %v353, %v352
      %v377 = vpack.c.b16 %v355, %v354
      %v378 = vpack.c.b16 %v357, %v356
      %v379 = vpack.c.b16 %v359, %v358
      %v380 = vpack.c.b16 %v361, %v360
      %v381 = vpack.c.b16 %v363, %v362
      %v382 = vpack.c.b16 %v365, %v364
      %v383 = vpack.c.b16 %v367, %v366
      %400 = vmatprep.subr.bf16.mxu0 0
      %401 = vmatpush1.bf16.msra.mxu0 %v368
      %402 = vmatprep.subr.bf16.mxu0 0
      %403 = vmatpush1.bf16.msra.mxu0 %v369
      %404 = vmatprep.subr.bf16.mxu0 0
      %405 = vmatpush1.bf16.msra.mxu0 %v370
      %406 = vmatprep.subr.bf16.mxu0 0
      %407 = vmatpush1.bf16.msra.mxu0 %v371
      %408 = vmatprep.subr.bf16.mxu0 0
      %409 = vmatpush1.bf16.msra.mxu0 %v372
      %410 = vmatprep.subr.bf16.mxu0 0
      %411 = vmatpush1.bf16.msra.mxu0 %v373
      %412 = vmatprep.subr.bf16.mxu0 0
      %413 = vmatpush1.bf16.msra.mxu0 %v374
      %414 = vmatprep.subr.bf16.mxu0 0
      %415 = vmatpush1.bf16.msra.mxu0 %v375
      %416 = vmatprep.subr.bf16.mxu0 0
      %417 = vmatpush1.bf16.msra.mxu0 %v376
      %418 = vmatprep.subr.bf16.mxu0 0
      %419 = vmatpush1.bf16.msra.mxu0 %v377
      %420 = vmatprep.subr.bf16.mxu0 0
      %421 = vmatpush1.bf16.msra.mxu0 %v378
      %422 = vmatprep.subr.bf16.mxu0 0
      %423 = vmatpush1.bf16.msra.mxu0 %v379
      %424 = vmatprep.subr.bf16.mxu0 0
      %425 = vmatpush1.bf16.msra.mxu0 %v380
      %426 = vmatprep.subr.bf16.mxu0 0
      %427 = vmatpush1.bf16.msra.mxu0 %v381
      %428 = vmatprep.subr.bf16.mxu0 0
      %429 = vmatpush1.bf16.msra.mxu0 %v382
      %430 = vmatprep.subr.bf16.mxu0 0
      %431 = vmatpush1.bf16.msra.mxu0 %v383
      %432 = vmatprep.mubr.bf16.mxu0 %v262
      %433 = vmatmul.mubr.bf16.gmra.mrb[0].mxu0 %v261
      %v434 = vpop.f32.mrb[0].mxu0
      %v435 = vadd.f32 %v302, %v434
      %v436 = vpop.f32.mrb[0].mxu0
      %v437 = vpop.f32.mrb[0].mxu0
      %v438 = vadd.f32 %v302, %v437
      %v439 = vpop.f32.mrb[0].mxu0
      %440 = vmatprep.mubr.bf16.mxu0 %v264
      %441 = vmatmul.mubr.bf16.gmra.mrb[0].mxu0 %v263
      %v442 = vpop.f32.mrb[0].mxu0
      %v443 = vadd.f32 %v302, %v442
      %v444 = vpop.f32.mrb[0].mxu0
      %v445 = vpop.f32.mrb[0].mxu0
      %v446 = vadd.f32 %v302, %v445
      %v447 = vpop.f32.mrb[0].mxu0
      %448 = vdwg.mxu0
      %v449 = vld [vmem:[%s233] sm:$0xff]
      %v450 = vld [vmem:[%s233 + $0x8] sm:$0xff]
      %v451 = vld [vmem:[%s233 + $0x10] sm:$0xff]
      %v452 = vld [vmem:[%s233 + $0x18] sm:$0xff]
      %v453 = vadd.f32 %v449, %v435
      %v454 = vadd.f32 %v450, %v438
      %v455 = vadd.f32 %v451, %v443
      %v456 = vadd.f32 %v452, %v446
      %vm457 = vcmask 523264
      %458 = vst.msk [vmem:[%s251] sm:$0xff] %vm457, %v453
      %459 = vst.msk [vmem:[%s251 + $0x8] sm:$0xff] %vm457, %v454
      %460 = vst.msk [vmem:[%s251 + $0x10] sm:$0xff] %vm457, %v455
      %461 = vst.msk [vmem:[%s251 + $0x18] sm:$0xff] %vm457, %v456
      %p462 = scmp.lt.s32.totalorder %s15, 1
      %s463 = scalar_select %p462, %s15, 1
      %s464 = smul.addr %s463, 4
      %s465 = smul.addr %s464, 8
      %s466 = scalar_lea.vmem %s4, %s465
      // Predicated region
      $region37: #{dust3r_decoder.28} parent=35 // pred_check
        %p467 = pneg %p137
      $region38: #{dust3r_decoder.28} parent=35 // pred_check_branch
        %469 = sbr.rel (%p467) target = $region40
      $region39: #{dust3r_decoder.28} parent=35 // pred_region
        _
      $region40: #{dust3r_decoder.28} parent=35 // pred_fallthru
        _
    $region36: #{dust3r_decoder.28} parent=5 // pred_fallthru
      _
    %p470 = scmp.le.s32.totalorder 2, %s10
    // Predicated region
    $region41: #{dust3r_decoder.28} parent=5 // pred_check
      %p471 = pneg %p470
    $region42: #{dust3r_decoder.28} parent=5 // pred_check_branch
      %473 = sbr.rel (%p471) target = $region44
    $region43: #{dust3r_decoder.28} parent=5 // pred_region
      %s474 = ssub.s32 %s10, 2
      // Predicated region
      $region45: #{dust3r_decoder.28} parent=43 // pred_check
        %p475 = pneg %p143
      $region46: #{dust3r_decoder.28} parent=43 // pred_check_branch
        %477 = sbr.rel (%p475) target = $region48
      $region47: #{dust3r_decoder.28} parent=43 // pred_region
        %p478 = scmp.lt.s32.totalorder %s16, 1
        %s479 = scalar_select %p478, %s16, 1
        %s480 = smul.addr %s479, 4
        %s481 = smul.addr %s480, 8
        %s482 = scalar_lea.vmem %s4, %s481
      $region48: #{dust3r_decoder.28} parent=43 // pred_fallthru
        _
    $region44: #{dust3r_decoder.28} parent=5 // pred_fallthru
      _
  $region6: #{dust3r_decoder.28} parent=0 // loop_footer
    %s14 = sadd.s32 1, %s10
  $region7: #{dust3r_decoder.28} parent=0 // loop_footer_branch
    %9 = sbr.rel target = $region3
  $region8: #{dust3r_decoder.28} parent=0 // loop_exit
    _

// kernel: dust3r_decoder.51
$region0: #{dust3r_decoder.51}
  #allocation0 [shape = 'u32[]', space=smem, size = 0x4, offset = 0x4, fixed_abs, tag = 'smem constant byte address 0x4 - core index']
  #allocation1 [shape = 'u32[144,128]{1,0:T(1,128)}', space=vmem, size = 0x12000, scoped, tag = 'internal scratch']
  %s0 = inlined_call_operand.vmem [shape: f32[64,64], index: 0, kind: input, shape index: {}]
  %s1 = inlined_call_operand.vmem [shape: f32[1,64], index: 1, kind: input, shape index: {}]
  %s2 = inlined_call_operand.vmem [shape: f32[1,64], index: 2, kind: input, shape index: {}]
  %s3 = inlined_call_operand.vmem [shape: f32[64,64], index: 3, kind: output, shape index: {}]
  %s4 = sld [smem:[#allocation0]]
  $region22: #{dust3r_decoder.51} parent=0
    _
  %s6 = ssub.s32 1, %s4
  %s7 = scalar_select 0, %s6, %s4
  // Predicated region
  $region2: #{dust3r_decoder.51} parent=0 // pred_check
    _
  $region3: #{dust3r_decoder.51} parent=0 // pred_check_branch
    %9 = sbr.rel (0) target = $region5
  $region4: #{dust3r_decoder.51} parent=0 // pred_region
    _
  $region5: #{dust3r_decoder.51} parent=0 // pred_fallthru
    _
  // Predicated region
  $region6: #{dust3r_decoder.51} parent=0 // pred_check
    _
  $region7: #{dust3r_decoder.51} parent=0 // pred_check_branch
    %11 = sbr.rel (0) target = $region9
  $region8: #{dust3r_decoder.51} parent=0 // pred_region
    _
  $region9: #{dust3r_decoder.51} parent=0 // pred_fallthru
    _
  // Predicated region
  $region10: #{dust3r_decoder.51} parent=0 // pred_check
    _
  $region11: #{dust3r_decoder.51} parent=0 // pred_check_branch
    %13 = sbr.rel (0) target = $region13
  $region12: #{dust3r_decoder.51} parent=0 // pred_region
    _
  $region13: #{dust3r_decoder.51} parent=0 // pred_fallthru
    _
  %v14 = vld [vmem:[%s0] sm:$0xff]
  %v15 = vld [vmem:[%s0 + $0x8] sm:$0xff]
  %v16 = vld [vmem:[%s0 + $0x10] sm:$0xff]
  %v17 = vld [vmem:[%s0 + $0x18] sm:$0xff]
  %v18 = vld [vmem:[%s0 + $0x20] sm:$0xff]
  %v19 = vld [vmem:[%s0 + $0x28] sm:$0xff]
  %v20 = vld [vmem:[%s0 + $0x30] sm:$0xff]
  %v21 = vld [vmem:[%s0 + $0x38] sm:$0xff]
  %vm22 = vcmask 523264
  %v23 = vsel %vm22, %v14, 0.0
  %24 = vadd.xlane.f32.xlu0 %v23
  %v25 = vpop.xlane.xlu0 %24
  %v26 = vsel %vm22, %v15, 0.0
  %27 = vadd.xlane.f32.xlu0 %v26
  %v28 = vpop.xlane.xlu0 %27
  %v29 = vsel %vm22, %v16, 0.0
  %30 = vadd.xlane.f32.xlu0 %v29
  %v31 = vpop.xlane.xlu0 %30
  %v32 = vsel %vm22, %v17, 0.0
  %33 = vadd.xlane.f32.xlu0 %v32
  %v34 = vpop.xlane.xlu0 %33
  %v35 = vsel %vm22, %v18, 0.0
  %36 = vadd.xlane.f32.xlu0 %v35
  %v37 = vpop.xlane.xlu0 %36
  %v38 = vsel %vm22, %v19, 0.0
  %39 = vadd.xlane.f32.xlu0 %v38
  %v40 = vpop.xlane.xlu0 %39
  %v41 = vsel %vm22, %v20, 0.0
  %42 = vadd.xlane.f32.xlu0 %v41
  %v43 = vpop.xlane.xlu0 %42
  %v44 = vsel %vm22, %v21, 0.0
  %45 = vadd.xlane.f32.xlu0 %v44
  %v46 = vpop.xlane.xlu0 %45
  %v47 = vrcp.pop 64.0
  %v48 = vmul.f32 %v25, %v47
  %v49 = vmul.f32 %v28, %v47
  %v50 = vmul.f32 %v31, %v47
  %v51 = vmul.f32 %v34, %v47
  %v52 = vmul.f32 %v37, %v47
  %v53 = vmul.f32 %v40, %v47
  %v54 = vmul.f32 %v43, %v47
  %v55 = vmul.f32 %v46, %v47
  %v56 = vsub.f32 %v14, %v48
  %v57 = vsub.f32 %v15, %v49
  %v58 = vsub.f32 %v16, %v50
  %v59 = vsub.f32 %v17, %v51
  %v60 = vsub.f32 %v18, %v52
  %v61 = vsub.f32 %v19, %v53
  %v62 = vsub.f32 %v20, %v54
  %v63 = vsub.f32 %v21, %v55
  %v64 = vmul.f32 %v56, %v56
  %v65 = vmul.f32 %v57, %v57
  %v66 = vmul.f32 %v58, %v58
  %v67 = vmul.f32 %v59, %v59
  %v68 = vmul.f32 %v60, %v60
  %v69 = vmul.f32 %v61, %v61
  %v70 = vmul.f32 %v62, %v62
  %v71 = vmul.f32 %v63, %v63
  %v72 = vsel %vm22, %v64, 0.0
  %73 = vadd.xlane.f32.xlu0 %v72
  %v74 = vpop.xlane.xlu0 %73
  %v75 = vsel %vm22, %v65, 0.0
  %76 = vadd.xlane.f32.xlu0 %v75
  %v77 = vpop.xlane.xlu0 %76
  %v78 = vsel %vm22, %v66, 0.0
  %79 = vadd.xlane.f32.xlu0 %v78
  %v80 = vpop.xlane.xlu0 %79
  %v81 = vsel %vm22, %v67, 0.0
  %82 = vadd.xlane.f32.xlu0 %v81
  %v83 = vpop.xlane.xlu0 %82
  %v84 = vsel %vm22, %v68, 0.0
  %85 = vadd.xlane.f32.xlu0 %v84
  %v86 = vpop.xlane.xlu0 %85
  %v87 = vsel %vm22, %v69, 0.0
  %88 = vadd.xlane.f32.xlu0 %v87
  %v89 = vpop.xlane.xlu0 %88
  %v90 = vsel %vm22, %v70, 0.0
  %91 = vadd.xlane.f32.xlu0 %v90
  %v92 = vpop.xlane.xlu0 %91
  %v93 = vsel %vm22, %v71, 0.0
  %94 = vadd.xlane.f32.xlu0 %v93
  %v95 = vpop.xlane.xlu0 %94
  %v96 = vmul.f32 %v74, %v47
  %v97 = vmul.f32 %v77, %v47
  %v98 = vmul.f32 %v80, %v47
  %v99 = vmul.f32 %v83, %v47
  %v100 = vmul.f32 %v86, %v47
  %v101 = vmul.f32 %v89, %v47
  %v102 = vmul.f32 %v92, %v47
  %v103 = vmul.f32 %v95, %v47
  %v104 = vadd.f32 %v96, 1e-06
  %v105 = vadd.f32 %v97, 1e-06
  %v106 = vadd.f32 %v98, 1e-06
  %v107 = vadd.f32 %v99, 1e-06
  %v108 = vadd.f32 %v100, 1e-06
  %v109 = vadd.f32 %v101, 1e-06
  %v110 = vadd.f32 %v102, 1e-06
  %v111 = vadd.f32 %v103, 1e-06
  %v112 = vrsqrt.pop %v104
  %v113 = vrsqrt.pop %v105
  %v114 = vrsqrt.pop %v106
  %v115 = vrsqrt.pop %v107
  %v116 = vrsqrt.pop %v108
  %v117 = vrsqrt.pop %v109
  %v118 = vrsqrt.pop %v110
  %v119 = vrsqrt.pop %v111
  %v120 = vmul.f32 %v56, %v112
  %v121 = vmul.f32 %v57, %v113
  %v122 = vmul.f32 %v58, %v114
  %v123 = vmul.f32 %v59, %v115
  %v124 = vmul.f32 %v60, %v116
  %v125 = vmul.f32 %v61, %v117
  %v126 = vmul.f32 %v62, %v118
  %v127 = vmul.f32 %v63, %v119
  %v128 = vld [vmem:[%s1] sm:$0x1]
  %v130 = vlaneseq
  %v131 = vshrl.u32 %v130, 7
  %v132 = vsub.s32 0, %v131
  %v133 = vrot.slane %v128, %v132
  %v135 = vmul.f32 %v120, %v133
  %v136 = vmul.f32 %v121, %v133
  %v137 = vmul.f32 %v122, %v133
  %v138 = vmul.f32 %v123, %v133
  %v139 = vmul.f32 %v124, %v133
  %v140 = vmul.f32 %v125, %v133
  %v141 = vmul.f32 %v126, %v133
  %v142 = vmul.f32 %v127, %v133
  %v143 = vld [vmem:[%s2] sm:$0x1]
  %v145 = vlaneseq
  %v146 = vshrl.u32 %v145, 7
  %v147 = vsub.s32 0, %v146
  %v148 = vrot.slane %v143, %v147
  %v150 = vadd.f32 %v135, %v148
  %v151 = vadd.f32 %v136, %v148
  %v152 = vadd.f32 %v137, %v148
  %v153 = vadd.f32 %v138, %v148
  %v154 = vadd.f32 %v139, %v148
  %v155 = vadd.f32 %v140, %v148
  %v156 = vadd.f32 %v141, %v148
  %v157 = vadd.f32 %v142, %v148
  %158 = vst.msk [vmem:[%s3] sm:$0xff] %vm22, %v150
  %159 = vst.msk [vmem:[%s3 + $0x8] sm:$0xff] %vm22, %v151
  %160 = vst.msk [vmem:[%s3 + $0x10] sm:$0xff] %vm22, %v152
  %161 = vst.msk [vmem:[%s3 + $0x18] sm:$0xff] %vm22, %v153
  %162 = vst.msk [vmem:[%s3 + $0x20] sm:$0xff] %vm22, %v154
  %163 = vst.msk [vmem:[%s3 + $0x28] sm:$0xff] %vm22, %v155
  %164 = vst.msk [vmem:[%s3 + $0x30] sm:$0xff] %vm22, %v156
  %165 = vst.msk [vmem:[%s3 + $0x38] sm:$0xff] %vm22, %v157
  // Predicated region
  $region14: #{dust3r_decoder.51} parent=0 // pred_check
    _
  $region15: #{dust3r_decoder.51} parent=0 // pred_check_branch
    %167 = sbr.rel (0) target = $region17
  $region16: #{dust3r_decoder.51} parent=0 // pred_region
    _
  $region17: #{dust3r_decoder.51} parent=0 // pred_fallthru
    _
  // Predicated region
  $region18: #{dust3r_decoder.51} parent=0 // pred_check
    _
  $region19: #{dust3r_decoder.51} parent=0 // pred_check_branch
    %169 = sbr.rel (0) target = $region21
  $region20: #{dust3r_decoder.51} parent=0 // pred_region
    _
  $region21: #{dust3r_decoder.51} parent=0 // pred_fallthru
    _

// kernel: dust3r_decoder.27
$region0: #{dust3r_decoder.27}
  #allocation0 [shape = 'u32[]', space=smem, size = 0x4, offset = 0x4, fixed_abs, tag = 'smem constant byte address 0x4 - core index']
  #allocation1 [shape = 'u32[144,128]{1,0:T(1,128)}', space=vmem, size = 0x12000, scoped, tag = 'internal scratch']
  %s0 = inlined_call_operand.vmem [shape: f32[2,32,64], index: 0, kind: input, shape index: {}, may-alias: {0,1}]
  %s1 = inlined_call_operand.vmem [shape: f32[2,32,64], index: 1, kind: input, shape index: {}, may-alias: {0,1}]
  %s2 = inlined_call_operand.vmem [shape: f32[32,64], index: 2, kind: input, shape index: {}]
  %s3 = inlined_call_operand.vmem [shape: f32[32,64], index: 3, kind: input, shape index: {}]
  %s4 = inlined_call_operand.vmem [shape: f32[64,64], index: 4, kind: input, shape index: {}]
  %s5 = inlined_call_operand.vmem [shape: f32[2,8,64], index: 5, kind: input, shape index: {}]
  %s6 = inlined_call_operand.vmem [shape: bf16[2,64,64], index: 6, kind: input, shape index: {}]
  %s7 = inlined_call_operand.vmem [shape: bf16[2,64,64], index: 7, kind: input, shape index: {}]
  %s8 = inlined_call_operand.vmem [shape: bf16[2,64,64], index: 8, kind: input, shape index: {}]
  %s9 = inlined_call_operand.vmem [shape: f32[2,1,64], index: 9, kind: input, shape index: {}]
  %s10 = inlined_call_operand.vmem [shape: f32[2,1,64], index: 10, kind: input, shape index: {}]
  %s11 = inlined_call_operand.vmem [shape: f32[2,1,64], index: 11, kind: input, shape index: {}]
  %s12 = inlined_call_operand.vmem [shape: bf16[2,64,64], index: 12, kind: input, shape index: {}]
  %s13 = inlined_call_operand.vmem [shape: f32[2,1,64], index: 13, kind: input, shape index: {}]
  %s14 = inlined_call_operand.vmem [shape: bf16[2,64,64], index: 14, kind: input, shape index: {}]
  %s15 = inlined_call_operand.vmem [shape: bf16[2,64,64], index: 15, kind: input, shape index: {}]
  %s16 = inlined_call_operand.vmem [shape: bf16[2,64,64], index: 16, kind: input, shape index: {}]
  %s17 = inlined_call_operand.vmem [shape: f32[2,1,64], index: 17, kind: input, shape index: {}]
  %s18 = inlined_call_operand.vmem [shape: f32[2,1,64], index: 18, kind: input, shape index: {}]
  %s19 = inlined_call_operand.vmem [shape: f32[2,1,64], index: 19, kind: input, shape index: {}]
  %s20 = inlined_call_operand.vmem [shape: bf16[2,64,64], index: 20, kind: input, shape index: {}]
  %s21 = inlined_call_operand.vmem [shape: f32[2,1,64], index: 21, kind: input, shape index: {}]
  %s22 = inlined_call_operand.vmem [shape: bf16[2,64,256], index: 22, kind: input, shape index: {}]
  %s23 = inlined_call_operand.vmem [shape: f32[2,1,256], index: 23, kind: input, shape index: {}]
  %s24 = inlined_call_operand.vmem [shape: f32[2,32,64], index: 24, kind: output, shape index: {0}]
  %s25 = inlined_call_operand.vmem [shape: f32[2,32,256], index: 25, kind: output, shape index: {1}]
  %26 = xla_tuple %s24, %s25
  %s27 = sld [smem:[#allocation0]]
  $region137: #{dust3r_decoder.27} parent=0
    _
  %s29 = ssub.s32 1, %s27
  %s30 = scalar_select 0, %s29, %s27
  loop: start=0, step=1, limit=4
  $region2: #{dust3r_decoder.27} parent=0 // loop_pre_header
    _
  $region3: #{dust3r_decoder.27} parent=0 // loop_header
    %s32 = sphi 0, %s36
    %p33 = scmp.ge.s32.totalorder %s32, 4
    %s42 = sphi 0, %s44
    %s45 = sphi 0, %s42
    %s46 = sphi 0, %s45
    %s62 = sphi 0, %s46
    %s70 = sphi 0, %s72
    %s73 = sphi 0, %s70
    %s74 = sphi 0, %s73
    %s90 = sphi 0, %s74
    %s94 = sphi 0, %s94
    %s96 = sphi 0, %s94
    %s97 = sphi 0, %s96
    %s111 = sphi 0, %s97
    %s115 = sphi 0, %s115
    %s117 = sphi 0, %s115
    %s118 = sphi 0, %s117
    %s132 = sphi 0, %s118
    %s136 = sphi 0, %s136
    %s138 = sphi 0, %s136
    %s139 = sphi 0, %s138
    %s153 = sphi 0, %s139
    %s159 = sphi 0, %s161
    %s162 = sphi 0, %s159
    %s163 = sphi 0, %s162
    %s179 = sphi 0, %s163
    %s185 = sphi 0, %s187
    %s188 = sphi 0, %s185
    %s189 = sphi 0, %s188
    %s205 = sphi 0, %s189
    %s211 = sphi 0, %s213
    %s214 = sphi 0, %s211
    %s215 = sphi 0, %s214
    %s231 = sphi 0, %s215
    %s237 = sphi 0, %s239
    %s240 = sphi 0, %s237
    %s241 = sphi 0, %s240
    %s257 = sphi 0, %s241
    %s263 = sphi 0, %s265
    %s266 = sphi 0, %s263
    %s267 = sphi 0, %s266
    %s283 = sphi 0, %s267
    %s289 = sphi 0, %s291
    %s292 = sphi 0, %s289
    %s293 = sphi 0, %s292
    %s309 = sphi 0, %s293
    %s315 = sphi 0, %s317
    %s318 = sphi 0, %s315
    %s319 = sphi 0, %s318
    %s335 = sphi 0, %s319
    %s341 = sphi 0, %s343
    %s344 = sphi 0, %s341
    %s345 = sphi 0, %s344
    %s361 = sphi 0, %s345
    %s367 = sphi 0, %s369
    %s370 = sphi 0, %s367
    %s371 = sphi 0, %s370
    %s387 = sphi 0, %s371
    %s393 = sphi 0, %s395
    %s396 = sphi 0, %s393
    %s397 = sphi 0, %s396
    %s413 = sphi 0, %s397
    %s419 = sphi 0, %s421
    %s422 = sphi 0, %s419
    %s423 = sphi 0, %s422
    %s439 = sphi 0, %s423
    %s445 = sphi 0, %s447
    %s448 = sphi 0, %s445
    %s449 = sphi 0, %s448
    %s465 = sphi 0, %s449
    %s471 = sphi 0, %s473
    %s474 = sphi 0, %s471
    %s475 = sphi 0, %s474
    %s491 = sphi 0, %s475
    %s497 = sphi 0, %s499
    %s500 = sphi 0, %s497
    %s501 = sphi 0, %s500
    %s517 = sphi 0, %s501
    %s523 = sphi 0, %s525
    %s526 = sphi 0, %s523
    %s527 = sphi 0, %s526
    %s543 = sphi 0, %s527
    %s549 = sphi 0, %s551
    %s552 = sphi 0, %s549
    %s553 = sphi 0, %s552
    %s569 = sphi 0, %s553
    %s575 = sphi 0, %s577
    %s578 = sphi 0, %s575
    %s579 = sphi 0, %s578
    %s595 = sphi 0, %s579
    %s601 = sphi 0, %s603
    %s604 = sphi 0, %s601
    %s605 = sphi 0, %s604
    %s621 = sphi 0, %s605
    %s627 = sphi 0, %s629
    %s630 = sphi 0, %s627
    %s631 = sphi 0, %s630
    %s647 = sphi 0, %s631
    %s653 = sphi 0, %s655
    %s656 = sphi 0, %s653
    %s657 = sphi 0, %s656
    %s673 = sphi 0, %s657
    %s679 = sphi 0, %s681
    %s682 = sphi 0, %s679
    %s683 = sphi 0, %s682
    %s699 = sphi 0, %s683
  $region4: #{dust3r_decoder.27} parent=0 // loop_header_branch
    %35 = sbr.rel (%p33) target = $region8
  $region5: #{dust3r_decoder.27} parent=0 // loop_body
    %s37 = ssub.s32 %s32, 1
    %s38 = ssub.s32 %s32, 2
    %s39 = sadd.s32 %s32, 1
    %s40 = ssub.s32 %s32, %s39
    %p41 = scmp.eq.s32.totalorder %s40, 0
    %s43 = sadd.s32 %s42, 1
    %s44 = scalar_select %p41, %s42, %s43
    %p47 = pneg %p41
    %p48 = scmp.eq.s32.totalorder %s32, 1
    %p49 = por %p47, %p48
    %p50 = scmp.ne.s32.totalorder %s42, %s45
    %p51 = scmp.eq.s32.totalorder %s32, 0
    %p52 = por %p50, %p51
    %p53 = scmp.ne.s32.totalorder %s42, %s45
    %p54 = scmp.eq.s32.totalorder %s37, 1
    %p55 = por %p53, %p54
    %p56 = scmp.ne.s32.totalorder %s45, %s46
    %p57 = scmp.eq.s32.totalorder %s37, 0
    %p58 = por %p56, %p57
    %p59 = scmp.ne.s32.totalorder %s45, %s46
    %p60 = scmp.eq.s32.totalorder %s38, 1
    %p61 = por %p59, %p60
    %p63 = scmp.ne.s32.totalorder %s46, %s62
    %p64 = scmp.eq.s32.totalorder %s38, 0
    %p65 = por %p63, %p64
    %s66 = ssub.s32 1, %s32
    %s67 = ssub.s32 1, %s39
    %s68 = ssub.s32 %s66, %s67
    %p69 = scmp.eq.s32.totalorder %s68, 0
    %s71 = sadd.s32 %s70, 1
    %s72 = scalar_select %p69, %s70, %s71
    %p75 = pneg %p69
    %p76 = scmp.eq.s32.totalorder %s32, 1
    %p77 = por %p75, %p76
    %p78 = scmp.ne.s32.totalorder %s70, %s73
    %p79 = scmp.eq.s32.totalorder %s32, 0
    %p80 = por %p78, %p79
    %p81 = scmp.ne.s32.totalorder %s70, %s73
    %p82 = scmp.eq.s32.totalorder %s37, 1
    %p83 = por %p81, %p82
    %p84 = scmp.ne.s32.totalorder %s73, %s74
    %p85 = scmp.eq.s32.totalorder %s37, 0
    %p86 = por %p84, %p85
    %p87 = scmp.ne.s32.totalorder %s73, %s74
    %p88 = scmp.eq.s32.totalorder %s38, 1
    %p89 = por %p87, %p88
    %p91 = scmp.ne.s32.totalorder %s74, %s90
    %p92 = scmp.eq.s32.totalorder %s38, 0
    %p93 = por %p91, %p92
    %s95 = sadd.s32 %s94, 1
    %p98 = scmp.eq.s32.totalorder %s32, 1
    %p99 = scmp.ne.s32.totalorder %s94, %s96
    %p100 = scmp.eq.s32.totalorder %s32, 0
    %p101 = por %p99, %p100
    %p102 = scmp.ne.s32.totalorder %s94, %s96
    %p103 = scmp.eq.s32.totalorder %s37, 1
    %p104 = por %p102, %p103
    %p105 = scmp.ne.s32.totalorder %s96, %s97
    %p106 = scmp.eq.s32.totalorder %s37, 0
    %p107 = por %p105, %p106
    %p108 = scmp.ne.s32.totalorder %s96, %s97
    %p109 = scmp.eq.s32.totalorder %s38, 1
    %p110 = por %p108, %p109
    %p112 = scmp.ne.s32.totalorder %s97, %s111
    %p113 = scmp.eq.s32.totalorder %s38, 0
    %p114 = por %p112, %p113
    %s116 = sadd.s32 %s115, 1
    %p119 = scmp.eq.s32.totalorder %s32, 1
    %p120 = scmp.ne.s32.totalorder %s115, %s117
    %p121 = scmp.eq.s32.totalorder %s32, 0
    %p122 = por %p120, %p121
    %p123 = scmp.ne.s32.totalorder %s115, %s117
    %p124 = scmp.eq.s32.totalorder %s37, 1
    %p125 = por %p123, %p124
    %p126 = scmp.ne.s32.totalorder %s117, %s118
    %p127 = scmp.eq.s32.totalorder %s37, 0
    %p128 = por %p126, %p127
    %p129 = scmp.ne.s32.totalorder %s117, %s118
    %p130 = scmp.eq.s32.totalorder %s38, 1
    %p131 = por %p129, %p130
    %p133 = scmp.ne.s32.totalorder %s118, %s132
    %p134 = scmp.eq.s32.totalorder %s38, 0
    %p135 = por %p133, %p134
    %s137 = sadd.s32 %s136, 1
    %p140 = scmp.eq.s32.totalorder %s32, 1
    %p141 = scmp.ne.s32.totalorder %s136, %s138
    %p142 = scmp.eq.s32.totalorder %s32, 0
    %p143 = por %p141, %p142
    %p144 = scmp.ne.s32.totalorder %s136, %s138
    %p145 = scmp.eq.s32.totalorder %s37, 1
    %p146 = por %p144, %p145
    %p147 = scmp.ne.s32.totalorder %s138, %s139
    %p148 = scmp.eq.s32.totalorder %s37, 0
    %p149 = por %p147, %p148
    %p150 = scmp.ne.s32.totalorder %s138, %s139
    %p151 = scmp.eq.s32.totalorder %s38, 1
    %p152 = por %p150, %p151
    %p154 = scmp.ne.s32.totalorder %s139, %s153
    %p155 = scmp.eq.s32.totalorder %s38, 0
    %p156 = por %p154, %p155
    %s157 = ssub.s32 %s32, %s39
    %p158 = scmp.eq.s32.totalorder %s157, 0
    %s160 = sadd.s32 %s159, 1
    %s161 = scalar_select %p158, %s159, %s160
    %p164 = pneg %p158
    %p165 = scmp.eq.s32.totalorder %s32, 1
    %p166 = por %p164, %p165
    %p167 = scmp.ne.s32.totalorder %s159, %s162
    %p168 = scmp.eq.s32.totalorder %s32, 0
    %p169 = por %p167, %p168
    %p170 = scmp.ne.s32.totalorder %s159, %s162
    %p171 = scmp.eq.s32.totalorder %s37, 1
    %p172 = por %p170, %p171
    %p173 = scmp.ne.s32.totalorder %s162, %s163
    %p174 = scmp.eq.s32.totalorder %s37, 0
    %p175 = por %p173, %p174
    %p176 = scmp.ne.s32.totalorder %s162, %s163
    %p177 = scmp.eq.s32.totalorder %s38, 1
    %p178 = por %p176, %p177
    %p180 = scmp.ne.s32.totalorder %s163, %s179
    %p181 = scmp.eq.s32.totalorder %s38, 0
    %p182 = por %p180, %p181
    %s183 = ssub.s32 %s32, %s39
    %p184 = scmp.eq.s32.totalorder %s183, 0
    %s186 = sadd.s32 %s185, 1
    %s187 = scalar_select %p184, %s185, %s186
    %p190 = pneg %p184
    %p191 = scmp.eq.s32.totalorder %s32, 1
    %p192 = por %p190, %p191
    %p193 = scmp.ne.s32.totalorder %s185, %s188
    %p194 = scmp.eq.s32.totalorder %s32, 0
    %p195 = por %p193, %p194
    %p196 = scmp.ne.s32.totalorder %s185, %s188
    %p197 = scmp.eq.s32.totalorder %s37, 1
    %p198 = por %p196, %p197
    %p199 = scmp.ne.s32.totalorder %s188, %s189
    %p200 = scmp.eq.s32.totalorder %s37, 0
    %p201 = por %p199, %p200
    %p202 = scmp.ne.s32.totalorder %s188, %s189
    %p203 = scmp.eq.s32.totalorder %s38, 1
    %p204 = por %p202, %p203
    %p206 = scmp.ne.s32.totalorder %s189, %s205
    %p207 = scmp.eq.s32.totalorder %s38, 0
    %p208 = por %p206, %p207
    %s209 = ssub.s32 %s32, %s39
    %p210 = scmp.eq.s32.totalorder %s209, 0
    %s212 = sadd.s32 %s211, 1
    %s213 = scalar_select %p210, %s211, %s212
    %p216 = pneg %p210
    %p217 = scmp.eq.s32.totalorder %s32, 1
    %p218 = por %p216, %p217
    %p219 = scmp.ne.s32.totalorder %s211, %s214
    %p220 = scmp.eq.s32.totalorder %s32, 0
    %p221 = por %p219, %p220
    %p222 = scmp.ne.s32.totalorder %s211, %s214
    %p223 = scmp.eq.s32.totalorder %s37, 1
    %p224 = por %p222, %p223
    %p225 = scmp.ne.s32.totalorder %s214, %s215
    %p226 = scmp.eq.s32.totalorder %s37, 0
    %p227 = por %p225, %p226
    %p228 = scmp.ne.s32.totalorder %s214, %s215
    %p229 = scmp.eq.s32.totalorder %s38, 1
    %p230 = por %p228, %p229
    %p232 = scmp.ne.s32.totalorder %s215, %s231
    %p233 = scmp.eq.s32.totalorder %s38, 0
    %p234 = por %p232, %p233
    %s235 = ssub.s32 %s32, %s39
    %p236 = scmp.eq.s32.totalorder %s235, 0
    %s238 = sadd.s32 %s237, 1
    %s239 = scalar_select %p236, %s237, %s238
    %p242 = pneg %p236
    %p243 = scmp.eq.s32.totalorder %s32, 1
    %p244 = por %p242, %p243
    %p245 = scmp.ne.s32.totalorder %s237, %s240
    %p246 = scmp.eq.s32.totalorder %s32, 0
    %p247 = por %p245, %p246
    %p248 = scmp.ne.s32.totalorder %s237, %s240
    %p249 = scmp.eq.s32.totalorder %s37, 1
    %p250 = por %p248, %p249
    %p251 = scmp.ne.s32.totalorder %s240, %s241
    %p252 = scmp.eq.s32.totalorder %s37, 0
    %p253 = por %p251, %p252
    %p254 = scmp.ne.s32.totalorder %s240, %s241
    %p255 = scmp.eq.s32.totalorder %s38, 1
    %p256 = por %p254, %p255
    %p258 = scmp.ne.s32.totalorder %s241, %s257
    %p259 = scmp.eq.s32.totalorder %s38, 0
    %p260 = por %p258, %p259
    %s261 = ssub.s32 %s32, %s39
    %p262 = scmp.eq.s32.totalorder %s261, 0
    %s264 = sadd.s32 %s263, 1
    %s265 = scalar_select %p262, %s263, %s264
    %p268 = pneg %p262
    %p269 = scmp.eq.s32.totalorder %s32, 1
    %p270 = por %p268, %p269
    %p271 = scmp.ne.s32.totalorder %s263, %s266
    %p272 = scmp.eq.s32.totalorder %s32, 0
    %p273 = por %p271, %p272
    %p274 = scmp.ne.s32.totalorder %s263, %s266
    %p275 = scmp.eq.s32.totalorder %s37, 1
    %p276 = por %p274, %p275
    %p277 = scmp.ne.s32.totalorder %s266, %s267
    %p278 = scmp.eq.s32.totalorder %s37, 0
    %p279 = por %p277, %p278
    %p280 = scmp.ne.s32.totalorder %s266, %s267
    %p281 = scmp.eq.s32.totalorder %s38, 1
    %p282 = por %p280, %p281
    %p284 = scmp.ne.s32.totalorder %s267, %s283
    %p285 = scmp.eq.s32.totalorder %s38, 0
    %p286 = por %p284, %p285
    %s287 = ssub.s32 %s32, %s39
    %p288 = scmp.eq.s32.totalorder %s287, 0
    %s290 = sadd.s32 %s289, 1
    %s291 = scalar_select %p288, %s289, %s290
    %p294 = pneg %p288
    %p295 = scmp.eq.s32.totalorder %s32, 1
    %p296 = por %p294, %p295
    %p297 = scmp.ne.s32.totalorder %s289, %s292
    %p298 = scmp.eq.s32.totalorder %s32, 0
    %p299 = por %p297, %p298
    %p300 = scmp.ne.s32.totalorder %s289, %s292
    %p301 = scmp.eq.s32.totalorder %s37, 1
    %p302 = por %p300, %p301
    %p303 = scmp.ne.s32.totalorder %s292, %s293
    %p304 = scmp.eq.s32.totalorder %s37, 0
    %p305 = por %p303, %p304
    %p306 = scmp.ne.s32.totalorder %s292, %s293
    %p307 = scmp.eq.s32.totalorder %s38, 1
    %p308 = por %p306, %p307
    %p310 = scmp.ne.s32.totalorder %s293, %s309
    %p311 = scmp.eq.s32.totalorder %s38, 0
    %p312 = por %p310, %p311
    %s313 = ssub.s32 %s32, %s39
    %p314 = scmp.eq.s32.totalorder %s313, 0
    %s316 = sadd.s32 %s315, 1
    %s317 = scalar_select %p314, %s315, %s316
    %p320 = pneg %p314
    %p321 = scmp.eq.s32.totalorder %s32, 1
    %p322 = por %p320, %p321
    %p323 = scmp.ne.s32.totalorder %s315, %s318
    %p324 = scmp.eq.s32.totalorder %s32, 0
    %p325 = por %p323, %p324
    %p326 = scmp.ne.s32.totalorder %s315, %s318
    %p327 = scmp.eq.s32.totalorder %s37, 1
    %p328 = por %p326, %p327
    %p329 = scmp.ne.s32.totalorder %s318, %s319
    %p330 = scmp.eq.s32.totalorder %s37, 0
    %p331 = por %p329, %p330
    %p332 = scmp.ne.s32.totalorder %s318, %s319
    %p333 = scmp.eq.s32.totalorder %s38, 1
    %p334 = por %p332, %p333
    %p336 = scmp.ne.s32.totalorder %s319, %s335
    %p337 = scmp.eq.s32.totalorder %s38, 0
    %p338 = por %p336, %p337
    %s339 = ssub.s32 %s32, %s39
    %p340 = scmp.eq.s32.totalorder %s339, 0
    %s342 = sadd.s32 %s341, 1
    %s343 = scalar_select %p340, %s341, %s342
    %p346 = pneg %p340
    %p347 = scmp.eq.s32.totalorder %s32, 1
    %p348 = por %p346, %p347
    %p349 = scmp.ne.s32.totalorder %s341, %s344
    %p350 = scmp.eq.s32.totalorder %s32, 0
    %p351 = por %p349, %p350
    %p352 = scmp.ne.s32.totalorder %s341, %s344
    %p353 = scmp.eq.s32.totalorder %s37, 1
    %p354 = por %p352, %p353
    %p355 = scmp.ne.s32.totalorder %s344, %s345
    %p356 = scmp.eq.s32.totalorder %s37, 0
    %p357 = por %p355, %p356
    %p358 = scmp.ne.s32.totalorder %s344, %s345
    %p359 = scmp.eq.s32.totalorder %s38, 1
    %p360 = por %p358, %p359
    %p362 = scmp.ne.s32.totalorder %s345, %s361
    %p363 = scmp.eq.s32.totalorder %s38, 0
    %p364 = por %p362, %p363
    %s365 = ssub.s32 %s32, %s39
    %p366 = scmp.eq.s32.totalorder %s365, 0
    %s368 = sadd.s32 %s367, 1
    %s369 = scalar_select %p366, %s367, %s368
    %p372 = pneg %p366
    %p373 = scmp.eq.s32.totalorder %s32, 1
    %p374 = por %p372, %p373
    %p375 = scmp.ne.s32.totalorder %s367, %s370
    %p376 = scmp.eq.s32.totalorder %s32, 0
    %p377 = por %p375, %p376
    %p378 = scmp.ne.s32.totalorder %s367, %s370
    %p379 = scmp.eq.s32.totalorder %s37, 1
    %p380 = por %p378, %p379
    %p381 = scmp.ne.s32.totalorder %s370, %s371
    %p382 = scmp.eq.s32.totalorder %s37, 0
    %p383 = por %p381, %p382
    %p384 = scmp.ne.s32.totalorder %s370, %s371
    %p385 = scmp.eq.s32.totalorder %s38, 1
    %p386 = por %p384, %p385
    %p388 = scmp.ne.s32.totalorder %s371, %s387
    %p389 = scmp.eq.s32.totalorder %s38, 0
    %p390 = por %p388, %p389
    %s391 = ssub.s32 %s32, %s39
    %p392 = scmp.eq.s32.totalorder %s391, 0
    %s394 = sadd.s32 %s393, 1
    %s395 = scalar_select %p392, %s393, %s394
    %p398 = pneg %p392
    %p399 = scmp.eq.s32.totalorder %s32, 1
    %p400 = por %p398, %p399
    %p401 = scmp.ne.s32.totalorder %s393, %s396
    %p402 = scmp.eq.s32.totalorder %s32, 0
    %p403 = por %p401, %p402
    %p404 = scmp.ne.s32.totalorder %s393, %s396
    %p405 = scmp.eq.s32.totalorder %s37, 1
    %p406 = por %p404, %p405
    %p407 = scmp.ne.s32.totalorder %s396, %s397
    %p408 = scmp.eq.s32.totalorder %s37, 0
    %p409 = por %p407, %p408
    %p410 = scmp.ne.s32.totalorder %s396, %s397
    %p411 = scmp.eq.s32.totalorder %s38, 1
    %p412 = por %p410, %p411
    %p414 = scmp.ne.s32.totalorder %s397, %s413
    %p415 = scmp.eq.s32.totalorder %s38, 0
    %p416 = por %p414, %p415
    %s417 = ssub.s32 %s32, %s39
    %p418 = scmp.eq.s32.totalorder %s417, 0
    %s420 = sadd.s32 %s419, 1
    %s421 = scalar_select %p418, %s419, %s420
    %p424 = pneg %p418
    %p425 = scmp.eq.s32.totalorder %s32, 1
    %p426 = por %p424, %p425
    %p427 = scmp.ne.s32.totalorder %s419, %s422
    %p428 = scmp.eq.s32.totalorder %s32, 0
    %p429 = por %p427, %p428
    %p430 = scmp.ne.s32.totalorder %s419, %s422
    %p431 = scmp.eq.s32.totalorder %s37, 1
    %p432 = por %p430, %p431
    %p433 = scmp.ne.s32.totalorder %s422, %s423
    %p434 = scmp.eq.s32.totalorder %s37, 0
    %p435 = por %p433, %p434
    %p436 = scmp.ne.s32.totalorder %s422, %s423
    %p437 = scmp.eq.s32.totalorder %s38, 1
    %p438 = por %p436, %p437
    %p440 = scmp.ne.s32.totalorder %s423, %s439
    %p441 = scmp.eq.s32.totalorder %s38, 0
    %p442 = por %p440, %p441
    %s443 = ssub.s32 %s32, %s39
    %p444 = scmp.eq.s32.totalorder %s443, 0
    %s446 = sadd.s32 %s445, 1
    %s447 = scalar_select %p444, %s445, %s446
    %p450 = pneg %p444
    %p451 = scmp.eq.s32.totalorder %s32, 1
    %p452 = por %p450, %p451
    %p453 = scmp.ne.s32.totalorder %s445, %s448
    %p454 = scmp.eq.s32.totalorder %s32, 0
    %p455 = por %p453, %p454
    %p456 = scmp.ne.s32.totalorder %s445, %s448
    %p457 = scmp.eq.s32.totalorder %s37, 1
    %p458 = por %p456, %p457
    %p459 = scmp.ne.s32.totalorder %s448, %s449
    %p460 = scmp.eq.s32.totalorder %s37, 0
    %p461 = por %p459, %p460
    %p462 = scmp.ne.s32.totalorder %s448, %s449
    %p463 = scmp.eq.s32.totalorder %s38, 1
    %p464 = por %p462, %p463
    %p466 = scmp.ne.s32.totalorder %s449, %s465
    %p467 = scmp.eq.s32.totalorder %s38, 0
    %p468 = por %p466, %p467
    %s469 = ssub.s32 %s32, %s39
    %p470 = scmp.eq.s32.totalorder %s469, 0
    %s472 = sadd.s32 %s471, 1
    %s473 = scalar_select %p470, %s471, %s472
    %p476 = pneg %p470
    %p477 = scmp.eq.s32.totalorder %s32, 1
    %p478 = por %p476, %p477
    %p479 = scmp.ne.s32.totalorder %s471, %s474
    %p480 = scmp.eq.s32.totalorder %s32, 0
    %p481 = por %p479, %p480
    %p482 = scmp.ne.s32.totalorder %s471, %s474
    %p483 = scmp.eq.s32.totalorder %s37, 1
    %p484 = por %p482, %p483
    %p485 = scmp.ne.s32.totalorder %s474, %s475
    %p486 = scmp.eq.s32.totalorder %s37, 0
    %p487 = por %p485, %p486
    %p488 = scmp.ne.s32.totalorder %s474, %s475
    %p489 = scmp.eq.s32.totalorder %s38, 1
    %p490 = por %p488, %p489
    %p492 = scmp.ne.s32.totalorder %s475, %s491
    %p493 = scmp.eq.s32.totalorder %s38, 0
    %p494 = por %p492, %p493
    %s495 = ssub.s32 %s32, %s39
    %p496 = scmp.eq.s32.totalorder %s495, 0
    %s498 = sadd.s32 %s497, 1
    %s499 = scalar_select %p496, %s497, %s498
    %p502 = pneg %p496
    %p503 = scmp.eq.s32.totalorder %s32, 1
    %p504 = por %p502, %p503
    %p505 = scmp.ne.s32.totalorder %s497, %s500
    %p506 = scmp.eq.s32.totalorder %s32, 0
    %p507 = por %p505, %p506
    %p508 = scmp.ne.s32.totalorder %s497, %s500
    %p509 = scmp.eq.s32.totalorder %s37, 1
    %p510 = por %p508, %p509
    %p511 = scmp.ne.s32.totalorder %s500, %s501
    %p512 = scmp.eq.s32.totalorder %s37, 0
    %p513 = por %p511, %p512
    %p514 = scmp.ne.s32.totalorder %s500, %s501
    %p515 = scmp.eq.s32.totalorder %s38, 1
    %p516 = por %p514, %p515
    %p518 = scmp.ne.s32.totalorder %s501, %s517
    %p519 = scmp.eq.s32.totalorder %s38, 0
    %p520 = por %p518, %p519
    %s521 = ssub.s32 %s32, %s39
    %p522 = scmp.eq.s32.totalorder %s521, 0
    %s524 = sadd.s32 %s523, 1
    %s525 = scalar_select %p522, %s523, %s524
    %p528 = pneg %p522
    %p529 = scmp.eq.s32.totalorder %s32, 1
    %p530 = por %p528, %p529
    %p531 = scmp.ne.s32.totalorder %s523, %s526
    %p532 = scmp.eq.s32.totalorder %s32, 0
    %p533 = por %p531, %p532
    %p534 = scmp.ne.s32.totalorder %s523, %s526
    %p535 = scmp.eq.s32.totalorder %s37, 1
    %p536 = por %p534, %p535
    %p537 = scmp.ne.s32.totalorder %s526, %s527
    %p538 = scmp.eq.s32.totalorder %s37, 0
    %p539 = por %p537, %p538
    %p540 = scmp.ne.s32.totalorder %s526, %s527
    %p541 = scmp.eq.s32.totalorder %s38, 1
    %p542 = por %p540, %p541
    %p544 = scmp.ne.s32.totalorder %s527, %s543
    %p545 = scmp.eq.s32.totalorder %s38, 0
    %p546 = por %p544, %p545
    %s547 = ssub.s32 %s32, %s39
    %p548 = scmp.eq.s32.totalorder %s547, 0
    %s550 = sadd.s32 %s549, 1
    %s551 = scalar_select %p548, %s549, %s550
    %p554 = pneg %p548
    %p555 = scmp.eq.s32.totalorder %s32, 1
    %p556 = por %p554, %p555
    %p557 = scmp.ne.s32.totalorder %s549, %s552
    %p558 = scmp.eq.s32.totalorder %s32, 0
    %p559 = por %p557, %p558
    %p560 = scmp.ne.s32.totalorder %s549, %s552
    %p561 = scmp.eq.s32.totalorder %s37, 1
    %p562 = por %p560, %p561
    %p563 = scmp.ne.s32.totalorder %s552, %s553
    %p564 = scmp.eq.s32.totalorder %s37, 0
    %p565 = por %p563, %p564
    %p566 = scmp.ne.s32.totalorder %s552, %s553
    %p567 = scmp.eq.s32.totalorder %s38, 1
    %p568 = por %p566, %p567
    %p570 = scmp.ne.s32.totalorder %s553, %s569
    %p571 = scmp.eq.s32.totalorder %s38, 0
    %p572 = por %p570, %p571
    %s573 = ssub.s32 %s32, %s39
    %p574 = scmp.eq.s32.totalorder %s573, 0
    %s576 = sadd.s32 %s575, 1
    %s577 = scalar_select %p574, %s575, %s576
    %p580 = pneg %p574
    %p581 = scmp.eq.s32.totalorder %s32, 1
    %p582 = por %p580, %p581
    %p583 = scmp.ne.s32.totalorder %s575, %s578
    %p584 = scmp.eq.s32.totalorder %s32, 0
    %p585 = por %p583, %p584
    %p586 = scmp.ne.s32.totalorder %s575, %s578
    %p587 = scmp.eq.s32.totalorder %s37, 1
    %p588 = por %p586, %p587
    %p589 = scmp.ne.s32.totalorder %s578, %s579
    %p590 = scmp.eq.s32.totalorder %s37, 0
    %p591 = por %p589, %p590
    %p592 = scmp.ne.s32.totalorder %s578, %s579
    %p593 = scmp.eq.s32.totalorder %s38, 1
    %p594 = por %p592, %p593
    %p596 = scmp.ne.s32.totalorder %s579, %s595
    %p597 = scmp.eq.s32.totalorder %s38, 0
    %p598 = por %p596, %p597
    %s599 = ssub.s32 %s32, %s39
    %p600 = scmp.eq.s32.totalorder %s599, 0
    %s602 = sadd.s32 %s601, 1
    %s603 = scalar_select %p600, %s601, %s602
    %p606 = pneg %p600
    %p607 = scmp.eq.s32.totalorder %s32, 1
    %p608 = por %p606, %p607
    %p609 = scmp.ne.s32.totalorder %s601, %s604
    %p610 = scmp.eq.s32.totalorder %s32, 0
    %p611 = por %p609, %p610
    %p612 = scmp.ne.s32.totalorder %s601, %s604
    %p613 = scmp.eq.s32.totalorder %s37, 1
    %p614 = por %p612, %p613
    %p615 = scmp.ne.s32.totalorder %s604, %s605
    %p616 = scmp.eq.s32.totalorder %s37, 0
    %p617 = por %p615, %p616
    %p618 = scmp.ne.s32.totalorder %s604, %s605
    %p619 = scmp.eq.s32.totalorder %s38, 1
    %p620 = por %p618, %p619
    %p622 = scmp.ne.s32.totalorder %s605, %s621
    %p623 = scmp.eq.s32.totalorder %s38, 0
    %p624 = por %p622, %p623
    %s625 = ssub.s32 %s32, %s39
    %p626 = scmp.eq.s32.totalorder %s625, 0
    %s628 = sadd.s32 %s627, 1
    %s629 = scalar_select %p626, %s627, %s628
    %p632 = pneg %p626
    %p633 = scmp.eq.s32.totalorder %s32, 1
    %p634 = por %p632, %p633
    %p635 = scmp.ne.s32.totalorder %s627, %s630
    %p636 = scmp.eq.s32.totalorder %s32, 0
    %p637 = por %p635, %p636
    %p638 = scmp.ne.s32.totalorder %s627, %s630
    %p639 = scmp.eq.s32.totalorder %s37, 1
    %p640 = por %p638, %p639
    %p641 = scmp.ne.s32.totalorder %s630, %s631
    %p642 = scmp.eq.s32.totalorder %s37, 0
    %p643 = por %p641, %p642
    %p644 = scmp.ne.s32.totalorder %s630, %s631
    %p645 = scmp.eq.s32.totalorder %s38, 1
    %p646 = por %p644, %p645
    %p648 = scmp.ne.s32.totalorder %s631, %s647
    %p649 = scmp.eq.s32.totalorder %s38, 0
    %p650 = por %p648, %p649
    %s651 = ssub.s32 %s32, %s39
    %p652 = scmp.eq.s32.totalorder %s651, 0
    %s654 = sadd.s32 %s653, 1
    %s655 = scalar_select %p652, %s653, %s654
    %p658 = pneg %p652
    %p659 = scmp.eq.s32.totalorder %s32, 1
    %p660 = por %p658, %p659
    %p661 = scmp.ne.s32.totalorder %s653, %s656
    %p662 = scmp.eq.s32.totalorder %s32, 0
    %p663 = por %p661, %p662
    %p664 = scmp.ne.s32.totalorder %s653, %s656
    %p665 = scmp.eq.s32.totalorder %s37, 1
    %p666 = por %p664, %p665
    %p667 = scmp.ne.s32.totalorder %s656, %s657
    %p668 = scmp.eq.s32.totalorder %s37, 0
    %p669 = por %p667, %p668
    %p670 = scmp.ne.s32.totalorder %s656, %s657
    %p671 = scmp.eq.s32.totalorder %s38, 1
    %p672 = por %p670, %p671
    %p674 = scmp.ne.s32.totalorder %s657, %s673
    %p675 = scmp.eq.s32.totalorder %s38, 0
    %p676 = por %p674, %p675
    %s677 = ssub.s32 %s32, %s39
    %p678 = scmp.eq.s32.totalorder %s677, 0
    %s680 = sadd.s32 %s679, 1
    %s681 = scalar_select %p678, %s679, %s680
    %p684 = pneg %p678
    %p685 = scmp.eq.s32.totalorder %s32, 1
    %p686 = por %p684, %p685
    %p687 = scmp.ne.s32.totalorder %s679, %s682
    %p688 = scmp.eq.s32.totalorder %s32, 0
    %p689 = por %p687, %p688
    %p690 = scmp.ne.s32.totalorder %s679, %s682
    %p691 = scmp.eq.s32.totalorder %s37, 1
    %p692 = por %p690, %p691
    %p693 = scmp.ne.s32.totalorder %s682, %s683
    %p694 = scmp.eq.s32.totalorder %s37, 0
    %p695 = por %p693, %p694
    %p696 = scmp.ne.s32.totalorder %s682, %s683
    %p697 = scmp.eq.s32.totalorder %s38, 1
    %p698 = por %p696, %p697
    %p700 = scmp.ne.s32.totalorder %s683, %s699
    %p701 = scmp.eq.s32.totalorder %s38, 0
    %p702 = por %p700, %p701
    %p703 = scmp.le.s32.totalorder 1, %s32
    %p704 = scmp.lt.s32.totalorder %s32, 3
    %p705 = pnand %p703, %p704
    %p706 = pneg %p705
    // Predicated region
    $region9: #{dust3r_decoder.27} parent=5 // pred_check
      _
    $region10: #{dust3r_decoder.27} parent=5 // pred_check_branch
      %708 = sbr.rel (%p705) target = $region12
    $region11: #{dust3r_decoder.27} parent=5 // pred_region
      %s709 = ssub.s32 %s32, 1
      // Predicated region
      $region13: #{dust3r_decoder.27} parent=11 // pred_check
        %p710 = pneg %p107
      $region14: #{dust3r_decoder.27} parent=11 // pred_check_branch
        %712 = sbr.rel (%p710) target = $region16
      $region15: #{dust3r_decoder.27} parent=11 // pred_region
        _
      $region16: #{dust3r_decoder.27} parent=11 // pred_fallthru
        _
      // Predicated region
      $region17: #{dust3r_decoder.27} parent=11 // pred_check
        %p713 = pneg %p128
      $region18: #{dust3r_decoder.27} parent=11 // pred_check_branch
        %715 = sbr.rel (%p713) target = $region20
      $region19: #{dust3r_decoder.27} parent=11 // pred_region
        _
      $region20: #{dust3r_decoder.27} parent=11 // pred_fallthru
        _
      // Predicated region
      $region21: #{dust3r_decoder.27} parent=11 // pred_check
        %p716 = pneg %p149
      $region22: #{dust3r_decoder.27} parent=11 // pred_check_branch
        %718 = sbr.rel (%p716) target = $region24
      $region23: #{dust3r_decoder.27} parent=11 // pred_region
        _
      $region24: #{dust3r_decoder.27} parent=11 // pred_fallthru
        _
    $region12: #{dust3r_decoder.27} parent=5 // pred_fallthru
      _
    %p719 = scmp.lt.s32.totalorder %s32, 2
    // Predicated region
    $region25: #{dust3r_decoder.27} parent=5 // pred_check
      %p720 = pneg %p719
    $region26: #{dust3r_decoder.27} parent=5 // pred_check_branch
      %722 = sbr.rel (%p720) target = $region28
    $region27: #{dust3r_decoder.27} parent=5 // pred_region
      // Predicated region
      $region29: #{dust3r_decoder.27} parent=27 // pred_check
        %p723 = pneg %p52
      $region30: #{dust3r_decoder.27} parent=27 // pred_check_branch
        %725 = sbr.rel (%p723) target = $region32
      $region31: #{dust3r_decoder.27} parent=27 // pred_region
        %p726 = scmp.lt.s32.totalorder %s32, 1
        %s727 = scalar_select %p726, %s32, 1
        %s728 = smul.addr %s727, 4
        %s729 = smul.addr %s728, 8
        %s730 = scalar_lea.vmem %s0, %s729
      $region32: #{dust3r_decoder.27} parent=27 // pred_fallthru
        _
      // Predicated region
      $region33: #{dust3r_decoder.27} parent=27 // pred_check
        %p731 = pneg %p80
      $region34: #{dust3r_decoder.27} parent=27 // pred_check_branch
        %733 = sbr.rel (%p731) target = $region36
      $region35: #{dust3r_decoder.27} parent=27 // pred_region
        %s734 = ssub.s32 1, %s32
        %p735 = scmp.lt.s32.totalorder %s734, 1
        %s736 = scalar_select %p735, %s734, 1
        %s737 = smul.addr %s736, 4
        %s738 = smul.addr %s737, 8
        %s739 = scalar_lea.vmem %s1, %s738
        %s740 = ssub.s32 1, %s32
      $region36: #{dust3r_decoder.27} parent=27 // pred_fallthru
        _
      // Predicated region
      $region37: #{dust3r_decoder.27} parent=27 // pred_check
        %p741 = pneg %p169
      $region38: #{dust3r_decoder.27} parent=27 // pred_check_branch
        %743 = sbr.rel (%p741) target = $region40
      $region39: #{dust3r_decoder.27} parent=27 // pred_region
        %p744 = scmp.lt.s32.totalorder %s32, 1
        %s745 = scalar_select %p744, %s32, 1
        %s746 = smul.addr %s745, 8
        %s747 = scalar_lea.vmem %s5, %s746
      $region40: #{dust3r_decoder.27} parent=27 // pred_fallthru
        _
      // Predicated region
      $region41: #{dust3r_decoder.27} parent=27 // pred_check
        %p748 = pneg %p195
      $region42: #{dust3r_decoder.27} parent=27 // pred_check_branch
        %750 = sbr.rel (%p748) target = $region44
      $region43: #{dust3r_decoder.27} parent=27 // pred_region
        %p751 = scmp.lt.s32.totalorder %s32, 1
        %s752 = scalar_select %p751, %s32, 1
        %s753 = smul.addr %s752, 8
        %s754 = smul.addr %s753, 4
        %s755 = scalar_lea.vmem %s6, %s754
      $region44: #{dust3r_decoder.27} parent=27 // pred_fallthru
        _
      // Predicated region
      $region45: #{dust3r_decoder.27} parent=27 // pred_check
        %p756 = pneg %p221
      $region46: #{dust3r_decoder.27} parent=27 // pred_check_branch
        %758 = sbr.rel (%p756) target = $region48
      $region47: #{dust3r_decoder.27} parent=27 // pred_region
        %p759 = scmp.lt.s32.totalorder %s32, 1
        %s760 = scalar_select %p759, %s32, 1
        %s761 = smul.addr %s760, 8
        %s762 = smul.addr %s761, 4
        %s763 = scalar_lea.vmem %s7, %s762
      $region48: #{dust3r_decoder.27} parent=27 // pred_fallthru
        _
      // Predicated region
      $region49: #{dust3r_decoder.27} parent=27 // pred_check
        %p764 = pneg %p247
      $region50: #{dust3r_decoder.27} parent=27 // pred_check_branch
        %766 = sbr.rel (%p764) target = $region52
      $region51: #{dust3r_decoder.27} parent=27 // pred_region
        %p767 = scmp.lt.s32.totalorder %s32, 1
        %s768 = scalar_select %p767, %s32, 1
        %s769 = smul.addr %s768, 8
        %s770 = smul.addr %s769, 4
        %s771 = scalar_lea.vmem %s8, %s770
      $region52: #{dust3r_decoder.27} parent=27 // pred_fallthru
        _
      // Predicated region
      $region53: #{dust3r_decoder.27} parent=27 // pred_check
        %p772 = pneg %p273
      $region54: #{dust3r_decoder.27} parent=27 // pred_check_branch
        %774 = sbr.rel (%p772) target = $region56
      $region55: #{dust3r_decoder.27} parent=27 // pred_region
        %p775 = scmp.lt.s32.totalorder %s32, 1
        %s776 = scalar_select %p775, %s32, 1
        %s777 = scalar_lea.vmem %s9, %s776
      $region56: #{dust3r_decoder.27} parent=27 // pred_fallthru
        _
      // Predicated region
      $region57: #{dust3r_decoder.27} parent=27 // pred_check
        %p778 = pneg %p299
      $region58: #{dust3r_decoder.27} parent=27 // pred_check_branch
        %780 = sbr.rel (%p778) target = $region60
      $region59: #{dust3r_decoder.27} parent=27 // pred_region
        %p781 = scmp.lt.s32.totalorder %s32, 1
        %s782 = scalar_select %p781, %s32, 1
        %s783 = scalar_lea.vmem %s10, %s782
      $region60: #{dust3r_decoder.27} parent=27 // pred_fallthru
        _
      // Predicated region
      $region61: #{dust3r_decoder.27} parent=27 // pred_check
        %p784 = pneg %p325
      $region62: #{dust3r_decoder.27} parent=27 // pred_check_branch
        %786 = sbr.rel (%p784) target = $region64
      $region63: #{dust3r_decoder.27} parent=27 // pred_region
        %p787 = scmp.lt.s32.totalorder %s32, 1
        %s788 = scalar_select %p787, %s32, 1
        %s789 = scalar_lea.vmem %s11, %s788
      $region64: #{dust3r_decoder.27} parent=27 // pred_fallthru
        _
      // Predicated region
      $region65: #{dust3r_decoder.27} parent=27 // pred_check
        %p790 = pneg %p351
      $region66: #{dust3r_decoder.27} parent=27 // pred_check_branch
        %792 = sbr.rel (%p790) target = $region68
      $region67: #{dust3r_decoder.27} parent=27 // pred_region
        %p793 = scmp.lt.s32.totalorder %s32, 1
        %s794 = scalar_select %p793, %s32, 1
        %s795 = smul.addr %s794, 8
        %s796 = smul.addr %s795, 4
        %s797 = scalar_lea.vmem %s12, %s796
      $region68: #{dust3r_decoder.27} parent=27 // pred_fallthru
        _
      // Predicated region
      $region69: #{dust3r_decoder.27} parent=27 // pred_check
        %p798 = pneg %p377
      $region70: #{dust3r_decoder.27} parent=27 // pred_check_branch
        %800 = sbr.rel (%p798) target = $region72
      $region71: #{dust3r_decoder.27} parent=27 // pred_region
        %p801 = scmp.lt.s32.totalorder %s32, 1
        %s802 = scalar_select %p801, %s32, 1
        %s803 = scalar_lea.vmem %s13, %s802
      $region72: #{dust3r_decoder.27} parent=27 // pred_fallthru
        _
      // Predicated region
      $region73: #{dust3r_decoder.27} parent=27 // pred_check
        %p804 = pneg %p403
      $region74: #{dust3r_decoder.27} parent=27 // pred_check_branch
        %806 = sbr.rel (%p804) target = $region76
      $region75: #{dust3r_decoder.27} parent=27 // pred_region
        %p807 = scmp.lt.s32.totalorder %s32, 1
        %s808 = scalar_select %p807, %s32, 1
        %s809 = smul.addr %s808, 8
        %s810 = smul.addr %s809, 4
        %s811 = scalar_lea.vmem %s14, %s810
      $region76: #{dust3r_decoder.27} parent=27 // pred_fallthru
        _
      // Predicated region
      $region77: #{dust3r_decoder.27} parent=27 // pred_check
        %p812 = pneg %p429
      $region78: #{dust3r_decoder.27} parent=27 // pred_check_branch
        %814 = sbr.rel (%p812) target = $region80
      $region79: #{dust3r_decoder.27} parent=27 // pred_region
        %p815 = scmp.lt.s32.totalorder %s32, 1
        %s816 = scalar_select %p815, %s32, 1
        %s817 = smul.addr %s816, 8
        %s818 = smul.addr %s817, 4
        %s819 = scalar_lea.vmem %s15, %s818
      $region80: #{dust3r_decoder.27} parent=27 // pred_fallthru
        _
      // Predicated region
      $region81: #{dust3r_decoder.27} parent=27 // pred_check
        %p820 = pneg %p455
      $region82: #{dust3r_decoder.27} parent=27 // pred_check_branch
        %822 = sbr.rel (%p820) target = $region84
      $region83: #{dust3r_decoder.27} parent=27 // pred_region
        %p823 = scmp.lt.s32.totalorder %s32, 1
        %s824 = scalar_select %p823, %s32, 1
        %s825 = smul.addr %s824, 8
        %s826 = smul.addr %s825, 4
        %s827 = scalar_lea.vmem %s16, %s826
      $region84: #{dust3r_decoder.27} parent=27 // pred_fallthru
        _
      // Predicated region
      $region85: #{dust3r_decoder.27} parent=27 // pred_check
        %p828 = pneg %p481
      $region86: #{dust3r_decoder.27} parent=27 // pred_check_branch
        %830 = sbr.rel (%p828) target = $region88
      $region87: #{dust3r_decoder.27} parent=27 // pred_region
        %p831 = scmp.lt.s32.totalorder %s32, 1
        %s832 = scalar_select %p831, %s32, 1
        %s833 = scalar_lea.vmem %s17, %s832
      $region88: #{dust3r_decoder.27} parent=27 // pred_fallthru
        _
      // Predicated region
      $region89: #{dust3r_decoder.27} parent=27 // pred_check
        %p834 = pneg %p507
      $region90: #{dust3r_decoder.27} parent=27 // pred_check_branch
        %836 = sbr.rel (%p834) target = $region92
      $region91: #{dust3r_decoder.27} parent=27 // pred_region
        %p837 = scmp.lt.s32.totalorder %s32, 1
        %s838 = scalar_select %p837, %s32, 1
        %s839 = scalar_lea.vmem %s18, %s838
      $region92: #{dust3r_decoder.27} parent=27 // pred_fallthru
        _
      // Predicated region
      $region93: #{dust3r_decoder.27} parent=27 // pred_check
        %p840 = pneg %p533
      $region94: #{dust3r_decoder.27} parent=27 // pred_check_branch
        %842 = sbr.rel (%p840) target = $region96
      $region95: #{dust3r_decoder.27} parent=27 // pred_region
        %p843 = scmp.lt.s32.totalorder %s32, 1
        %s844 = scalar_select %p843, %s32, 1
        %s845 = scalar_lea.vmem %s19, %s844
      $region96: #{dust3r_decoder.27} parent=27 // pred_fallthru
        _
      // Predicated region
      $region97: #{dust3r_decoder.27} parent=27 // pred_check
        %p846 = pneg %p559
      $region98: #{dust3r_decoder.27} parent=27 // pred_check_branch
        %848 = sbr.rel (%p846) target = $region100
      $region99: #{dust3r_decoder.27} parent=27 // pred_region
        %p849 = scmp.lt.s32.totalorder %s32, 1
        %s850 = scalar_select %p849, %s32, 1
        %s851 = smul.addr %s850, 8
        %s852 = smul.addr %s851, 4
        %s853 = scalar_lea.vmem %s20, %s852
      $region100: #{dust3r_decoder.27} parent=27 // pred_fallthru
        _
      // Predicated region
      $region101: #{dust3r_decoder.27} parent=27 // pred_check
        %p854 = pneg %p585
      $region102: #{dust3r_decoder.27} parent=27 // pred_check_branch
        %856 = sbr.rel (%p854) target = $region104
      $region103: #{dust3r_decoder.27} parent=27 // pred_region
        %p857 = scmp.lt.s32.totalorder %s32, 1
        %s858 = scalar_select %p857, %s32, 1
        %s859 = scalar_lea.vmem %s21, %s858
      $region104: #{dust3r_decoder.27} parent=27 // pred_fallthru
        _
      // Predicated region
      $region105: #{dust3r_decoder.27} parent=27 // pred_check
        %p860 = pneg %p611
      $region106: #{dust3r_decoder.27} parent=27 // pred_check_branch
        %862 = sbr.rel (%p860) target = $region108
      $region107: #{dust3r_decoder.27} parent=27 // pred_region
        %p863 = scmp.lt.s32.totalorder %s32, 1
        %s864 = scalar_select %p863, %s32, 1
        %s865 = smul.addr %s864, 16
        %s866 = smul.addr %s865, 4
        %s867 = scalar_lea.vmem %s22, %s866
      $region108: #{dust3r_decoder.27} parent=27 // pred_fallthru
        _
      // Predicated region
      $region109: #{dust3r_decoder.27} parent=27 // pred_check
        %p868 = pneg %p637
      $region110: #{dust3r_decoder.27} parent=27 // pred_check_branch
        %870 = sbr.rel (%p868) target = $region112
      $region111: #{dust3r_decoder.27} parent=27 // pred_region
        %p871 = scmp.lt.s32.totalorder %s32, 1
        %s872 = scalar_select %p871, %s32, 1
        %s873 = smul.addr %s872, 2
        %s874 = scalar_lea.vmem %s23, %s873
      $region112: #{dust3r_decoder.27} parent=27 // pred_fallthru
        _
    $region28: #{dust3r_decoder.27} parent=5 // pred_fallthru
      _
    %p875 = scmp.le.s32.totalorder 1, %s32
    %p876 = scmp.lt.s32.totalorder %s32, 3
    %p877 = pnand %p875, %p876
    %p878 = pneg %p877
    // Predicated region
    $region113: #{dust3r_decoder.27} parent=5 // pred_check
      _
    $region114: #{dust3r_decoder.27} parent=5 // pred_check_branch
      %880 = sbr.rel (%p877) target = $region116
    $region115: #{dust3r_decoder.27} parent=5 // pred_region
      %s881 = ssub.s32 %s32, 1
      %p882 = scmp.lt.s32.totalorder %s37, 1
      %s883 = scalar_select %p882, %s37, 1
      %s884 = smul.addr %s883, 4
      %s885 = smul.addr %s884, 8
      %s886 = scalar_lea.vmem %s0, %s885
      %p887 = pneg %p58
      %p888 = pneg %p55
      %s889 = ssub.s32 1, %s37
      %p890 = scmp.lt.s32.totalorder %s889, 1
      %s891 = scalar_select %p890, %s889, 1
      %s892 = smul.addr %s891, 4
      %s893 = smul.addr %s892, 8
      %s894 = scalar_lea.vmem %s1, %s893
      %p895 = pneg %p86
      %p896 = pneg %p83
      %p897 = pneg %p107
      %p898 = pneg %p104
      %p899 = pneg %p128
      %p900 = pneg %p125
      %p901 = pneg %p149
      %p902 = pneg %p146
      %p903 = scmp.lt.s32.totalorder %s37, 1
      %s904 = scalar_select %p903, %s37, 1
      %s905 = smul.addr %s904, 8
      %s906 = scalar_lea.vmem %s5, %s905
      %p907 = pneg %p175
      %p908 = pneg %p172
      %p909 = scmp.lt.s32.totalorder %s37, 1
      %s910 = scalar_select %p909, %s37, 1
      %s911 = smul.addr %s910, 8
      %s912 = smul.addr %s911, 4
      %s913 = scalar_lea.vmem %s6, %s912
      %p914 = pneg %p201
      %p915 = pneg %p198
      %p916 = scmp.lt.s32.totalorder %s37, 1
      %s917 = scalar_select %p916, %s37, 1
      %s918 = smul.addr %s917, 8
      %s919 = smul.addr %s918, 4
      %s920 = scalar_lea.vmem %s7, %s919
      %p921 = pneg %p227
      %p922 = pneg %p224
      %p923 = scmp.lt.s32.totalorder %s37, 1
      %s924 = scalar_select %p923, %s37, 1
      %s925 = smul.addr %s924, 8
      %s926 = smul.addr %s925, 4
      %s927 = scalar_lea.vmem %s8, %s926
      %p928 = pneg %p253
      %p929 = pneg %p250
      %p930 = scmp.lt.s32.totalorder %s37, 1
      %s931 = scalar_select %p930, %s37, 1
      %s932 = scalar_lea.vmem %s9, %s931
      %p933 = pneg %p279
      %p934 = pneg %p276
      %p935 = scmp.lt.s32.totalorder %s37, 1
      %s936 = scalar_select %p935, %s37, 1
      %s937 = scalar_lea.vmem %s10, %s936
      %p938 = pneg %p305
      %p939 = pneg %p302
      %p940 = scmp.lt.s32.totalorder %s37, 1
      %s941 = scalar_select %p940, %s37, 1
      %s942 = scalar_lea.vmem %s11, %s941
      %p943 = pneg %p331
      %p944 = pneg %p328
      %p945 = scmp.lt.s32.totalorder %s37, 1
      %s946 = scalar_select %p945, %s37, 1
      %s947 = smul.addr %s946, 8
      %s948 = smul.addr %s947, 4
      %s949 = scalar_lea.vmem %s12, %s948
      %p950 = pneg %p357
      %p951 = pneg %p354
      %p952 = scmp.lt.s32.totalorder %s37, 1
      %s953 = scalar_select %p952, %s37, 1
      %s954 = scalar_lea.vmem %s13, %s953
      %p955 = pneg %p383
      %p956 = pneg %p380
      %p957 = scmp.lt.s32.totalorder %s37, 1
      %s958 = scalar_select %p957, %s37, 1
      %s959 = smul.addr %s958, 8
      %s960 = smul.addr %s959, 4
      %s961 = scalar_lea.vmem %s14, %s960
      %p962 = pneg %p409
      %p963 = pneg %p406
      %p964 = scmp.lt.s32.totalorder %s37, 1
      %s965 = scalar_select %p964, %s37, 1
      %s966 = smul.addr %s965, 8
      %s967 = smul.addr %s966, 4
      %s968 = scalar_lea.vmem %s15, %s967
      %p969 = pneg %p435
      %p970 = pneg %p432
      %p971 = scmp.lt.s32.totalorder %s37, 1
      %s972 = scalar_select %p971, %s37, 1
      %s973 = smul.addr %s972, 8
      %s974 = smul.addr %s973, 4
      %s975 = scalar_lea.vmem %s16, %s974
      %p976 = pneg %p461
      %p977 = pneg %p458
      %p978 = scmp.lt.s32.totalorder %s37, 1
      %s979 = scalar_select %p978, %s37, 1
      %s980 = scalar_lea.vmem %s17, %s979
      %p981 = pneg %p487
      %p982 = pneg %p484
      %p983 = scmp.lt.s32.totalorder %s37, 1
      %s984 = scalar_select %p983, %s37, 1
      %s985 = scalar_lea.vmem %s18, %s984
      %p986 = pneg %p513
      %p987 = pneg %p510
      %p988 = scmp.lt.s32.totalorder %s37, 1
      %s989 = scalar_select %p988, %s37, 1
      %s990 = scalar_lea.vmem %s19, %s989
      %p991 = pneg %p539
      %p992 = pneg %p536
      %p993 = scmp.lt.s32.totalorder %s37, 1
      %s994 = scalar_select %p993, %s37, 1
      %s995 = smul.addr %s994, 8
      %s996 = smul.addr %s995, 4
      %s997 = scalar_lea.vmem %s20, %s996
      %p998 = pneg %p565
      %p999 = pneg %p562
      %p1000 = scmp.lt.s32.totalorder %s37, 1
      %s1001 = scalar_select %p1000, %s37, 1
      %s1002 = scalar_lea.vmem %s21, %s1001
      %p1003 = pneg %p591
      %p1004 = pneg %p588
      %p1005 = scmp.lt.s32.totalorder %s37, 1
      %s1006 = scalar_select %p1005, %s37, 1
      %s1007 = smul.addr %s1006, 16
      %s1008 = smul.addr %s1007, 4
      %s1009 = scalar_lea.vmem %s22, %s1008
      %p1010 = pneg %p617
      %p1011 = pneg %p614
      %p1012 = scmp.lt.s32.totalorder %s37, 1
      %s1013 = scalar_select %p1012, %s37, 1
      %s1014 = smul.addr %s1013, 2
      %s1015 = scalar_lea.vmem %s23, %s1014
      %p1016 = pneg %p643
      %p1017 = pneg %p640
      %p1018 = pneg %p669
      %p1019 = pneg %p666
      %p1020 = scmp.lt.s32.totalorder %s37, 1
      %s1021 = scalar_select %p1020, %s37, 1
      %s1022 = smul.addr %s1021, 4
      %s1023 = smul.addr %s1022, 8
      %s1024 = scalar_lea.vmem %s24, %s1023
      %p1025 = pneg %p695
      %p1026 = pneg %p692
      %p1027 = scmp.lt.s32.totalorder %s37, 1
      %s1028 = scalar_select %p1027, %s37, 1
      %s1029 = smul.addr %s1028, 8
      %s1030 = smul.addr %s1029, 8
      %s1031 = scalar_lea.vmem %s25, %s1030
      %p1032 = scmp.lt.s32.totalorder %s37, 1
      %s1033 = scalar_select %p1032, %s37, 1
      %s1034 = smul.addr %s1033, 4
      %s1035 = smul.addr %s1034, 8
      %s1036 = scalar_lea.vmem %s0, %s1035
      %s1037 = ssub.s32 1, %s37
      %p1038 = scmp.lt.s32.totalorder %s1037, 1
      %s1039 = scalar_select %p1038, %s1037, 1
      %s1040 = smul.addr %s1039, 4
      %s1041 = smul.addr %s1040, 8
      %s1042 = scalar_lea.vmem %s1, %s1041
      %s1043 = ssub.s32 1, %s37
      %p1044 = scmp.lt.s32.totalorder %s37, 1
      %s1045 = scalar_select %p1044, %s37, 1
      %s1046 = smul.addr %s1045, 8
      %s1047 = scalar_lea.vmem %s5, %s1046
      %p1048 = scmp.lt.s32.totalorder %s37, 1
      %s1049 = scalar_select %p1048, %s37, 1
      %s1050 = smul.addr %s1049, 8
      %s1051 = smul.addr %s1050, 4
      %s1052 = scalar_lea.vmem %s6, %s1051
      %p1053 = scmp.lt.s32.totalorder %s37, 1
      %s1054 = scalar_select %p1053, %s37, 1
      %s1055 = smul.addr %s1054, 8
      %s1056 = smul.addr %s1055, 4
      %s1057 = scalar_lea.vmem %s7, %s1056
      %p1058 = scmp.lt.s32.totalorder %s37, 1
      %s1059 = scalar_select %p1058, %s37, 1
      %s1060 = smul.addr %s1059, 8
      %s1061 = smul.addr %s1060, 4
      %s1062 = scalar_lea.vmem %s8, %s1061
      %p1063 = scmp.lt.s32.totalorder %s37, 1
      %s1064 = scalar_select %p1063, %s37, 1
      %s1065 = scalar_lea.vmem %s9, %s1064
      %p1066 = scmp.lt.s32.totalorder %s37, 1
      %s1067 = scalar_select %p1066, %s37, 1
      %s1068 = scalar_lea.vmem %s10, %s1067
      %p1069 = scmp.lt.s32.totalorder %s37, 1
      %s1070 = scalar_select %p1069, %s37, 1
      %s1071 = scalar_lea.vmem %s11, %s1070
      %p1072 = scmp.lt.s32.totalorder %s37, 1
      %s1073 = scalar_select %p1072, %s37, 1
      %s1074 = smul.addr %s1073, 8
      %s1075 = smul.addr %s1074, 4
      %s1076 = scalar_lea.vmem %s12, %s1075
      %p1077 = scmp.lt.s32.totalorder %s37, 1
      %s1078 = scalar_select %p1077, %s37, 1
      %s1079 = scalar_lea.vmem %s13, %s1078
      %p1080 = scmp.lt.s32.totalorder %s37, 1
      %s1081 = scalar_select %p1080, %s37, 1
      %s1082 = smul.addr %s1081, 8
      %s1083 = smul.addr %s1082, 4
      %s1084 = scalar_lea.vmem %s14, %s1083
      %p1085 = scmp.lt.s32.totalorder %s37, 1
      %s1086 = scalar_select %p1085, %s37, 1
      %s1087 = smul.addr %s1086, 8
      %s1088 = smul.addr %s1087, 4
      %s1089 = scalar_lea.vmem %s15, %s1088
      %p1090 = scmp.lt.s32.totalorder %s37, 1
      %s1091 = scalar_select %p1090, %s37, 1
      %s1092 = smul.addr %s1091, 8
      %s1093 = smul.addr %s1092, 4
      %s1094 = scalar_lea.vmem %s16, %s1093
      %p1095 = scmp.lt.s32.totalorder %s37, 1
      %s1096 = scalar_select %p1095, %s37, 1
      %s1097 = scalar_lea.vmem %s17, %s1096
      %p1098 = scmp.lt.s32.totalorder %s37, 1
      %s1099 = scalar_select %p1098, %s37, 1
      %s1100 = scalar_lea.vmem %s18, %s1099
      %p1101 = scmp.lt.s32.totalorder %s37, 1
      %s1102 = scalar_select %p1101, %s37, 1
      %s1103 = scalar_lea.vmem %s19, %s1102
      %p1104 = scmp.lt.s32.totalorder %s37, 1
      %s1105 = scalar_select %p1104, %s37, 1
      %s1106 = smul.addr %s1105, 8
      %s1107 = smul.addr %s1106, 4
      %s1108 = scalar_lea.vmem %s20, %s1107
      %p1109 = scmp.lt.s32.totalorder %s37, 1
      %s1110 = scalar_select %p1109, %s37, 1
      %s1111 = scalar_lea.vmem %s21, %s1110
      %p1112 = scmp.lt.s32.totalorder %s37, 1
      %s1113 = scalar_select %p1112, %s37, 1
      %s1114 = smul.addr %s1113, 16
      %s1115 = smul.addr %s1114, 4
      %s1116 = scalar_lea.vmem %s22, %s1115
      %p1117 = scmp.lt.s32.totalorder %s37, 1
      %s1118 = scalar_select %p1117, %s37, 1
      %s1119 = smul.addr %s1118, 2
      %s1120 = scalar_lea.vmem %s23, %s1119
      %p1121 = scmp.lt.s32.totalorder %s37, 1
      %s1122 = scalar_select %p1121, %s37, 1
      %s1123 = smul.addr %s1122, 4
      %s1124 = smul.addr %s1123, 8
      %s1125 = scalar_lea.vmem %s24, %s1124
      %p1126 = scmp.lt.s32.totalorder %s37, 1
      %s1127 = scalar_select %p1126, %s37, 1
      %s1128 = smul.addr %s1127, 8
      %s1129 = smul.addr %s1128, 8
      %s1130 = scalar_lea.vmem %s25, %s1129
      %v1132 = vld [vmem:[%s1036] sm:$0xff]
      %v1133 = vld [vmem:[%s1036 + $0x8] sm:$0xff]
      %v1134 = vld [vmem:[%s1036 + $0x10] sm:$0xff]
      %v1135 = vld [vmem:[%s1036 + $0x18] sm:$0xff]
      %v1136 = vld [vmem:[%s1042] sm:$0xff]
      %v1137 = vld [vmem:[%s1042 + $0x8] sm:$0xff]
      %v1138 = vld [vmem:[%s1042 + $0x10] sm:$0xff]
      %v1139 = vld [vmem:[%s1042 + $0x18] sm:$0xff]
      %v1140 = vld [vmem:[%s2] sm:$0xff]
      %v1141 = vld [vmem:[%s2 + $0x8] sm:$0xff]
      %v1142 = vld [vmem:[%s2 + $0x10] sm:$0xff]
      %v1143 = vld [vmem:[%s2 + $0x18] sm:$0xff]
      %v1144 = vld [vmem:[%s3] sm:$0xff]
      %v1145 = vld [vmem:[%s3 + $0x8] sm:$0xff]
      %v1146 = vld [vmem:[%s3 + $0x10] sm:$0xff]
      %v1147 = vld [vmem:[%s3 + $0x18] sm:$0xff]
      %v1148 = vld [vmem:[%s4] sm:$0xff]
      %v1149 = vld [vmem:[%s4 + $0x8] sm:$0xff]
      %v1150 = vld [vmem:[%s4 + $0x10] sm:$0xff]
      %v1151 = vld [vmem:[%s4 + $0x18] sm:$0xff]
      %v1152 = vld [vmem:[%s4 + $0x20] sm:$0xff]
      %v1153 = vld [vmem:[%s4 + $0x28] sm:$0xff]
      %v1154 = vld [vmem:[%s4 + $0x30] sm:$0xff]
      %v1155 = vld [vmem:[%s4 + $0x38] sm:$0xff]
      %v1156 = vld [vmem:[%s1047] sm:$0xff]
      %vm1157 = vcmask 523264
      %v1158 = vsel %vm1157, %v1132, 0.0
      %1159 = vadd.xlane.f32.xlu0 %v1158
      %v1160 = vpop.xlane.xlu0 %1159
      %v1161 = vsel %vm1157, %v1133, 0.0
      %1162 = vadd.xlane.f32.xlu0 %v1161
      %v1163 = vpop.xlane.xlu0 %1162
      %v1164 = vsel %vm1157, %v1134, 0.0
      %1165 = vadd.xlane.f32.xlu0 %v1164
      %v1166 = vpop.xlane.xlu0 %1165
      %v1167 = vsel %vm1157, %v1135, 0.0
      %1168 = vadd.xlane.f32.xlu0 %v1167
      %v1169 = vpop.xlane.xlu0 %1168
      %v1170 = vrcp.pop 64.0
      %v1171 = vmul.f32 %v1160, %v1170
      %v1172 = vmul.f32 %v1163, %v1170
      %v1173 = vmul.f32 %v1166, %v1170
      %v1174 = vmul.f32 %v1169, %v1170
      %v1175 = vsub.f32 %v1132, %v1171
      %v1176 = vsub.f32 %v1133, %v1172
      %v1177 = vsub.f32 %v1134, %v1173
      %v1178 = vsub.f32 %v1135, %v1174
      %v1179 = vmul.f32 %v1175, %v1175
      %v1180 = vmul.f32 %v1176, %v1176
      %v1181 = vmul.f32 %v1177, %v1177
      %v1182 = vmul.f32 %v1178, %v1178
      %v1183 = vsel %vm1157, %v1179, 0.0
      %1184 = vadd.xlane.f32.xlu0 %v1183
      %v1185 = vpop.xlane.xlu0 %1184
      %v1186 = vsel %vm1157, %v1180, 0.0
      %1187 = vadd.xlane.f32.xlu0 %v1186
      %v1188 = vpop.xlane.xlu0 %1187
      %v1189 = vsel %vm1157, %v1181, 0.0
      %1190 = vadd.xlane.f32.xlu0 %v1189
      %v1191 = vpop.xlane.xlu0 %1190
      %v1192 = vsel %vm1157, %v1182, 0.0
      %1193 = vadd.xlane.f32.xlu0 %v1192
      %v1194 = vpop.xlane.xlu0 %1193
      %v1195 = vmul.f32 %v1185, %v1170
      %v1196 = vmul.f32 %v1188, %v1170
      %v1197 = vmul.f32 %v1191, %v1170
      %v1198 = vmul.f32 %v1194, %v1170
      %v1199 = vadd.f32 %v1195, 1e-06
      %v1200 = vadd.f32 %v1196, 1e-06
      %v1201 = vadd.f32 %v1197, 1e-06
      %v1202 = vadd.f32 %v1198, 1e-06
      %v1203 = vrsqrt.pop %v1199
      %v1204 = vrsqrt.pop %v1200
      %v1205 = vrsqrt.pop %v1201
      %v1206 = vrsqrt.pop %v1202
      %v1207 = vmul.f32 %v1175, %v1203
      %v1208 = vmul.f32 %v1176, %v1204
      %v1209 = vmul.f32 %v1177, %v1205
      %v1210 = vmul.f32 %v1178, %v1206
      %v1211 = vlaneseq
      %v1212 = vshrl.u32 %v1211, 7
      %v1213 = vsub.s32 0, %v1212
      %v1214 = vrot.slane %v1156, %v1213
      %v1215 = vmul.f32 %v1207, %v1214
      %v1216 = vmul.f32 %v1208, %v1214
      %v1217 = vmul.f32 %v1209, %v1214
      %v1218 = vmul.f32 %v1210, %v1214
      %v1219 = vlaneseq
      %v1220 = vshrl.u32 %v1219, 7
      %v1221 = vsub.s32 1, %v1220
      %v1222 = vrot.slane %v1156, %v1221
      %v1223 = vadd.f32 %v1215, %v1222
      %v1224 = vadd.f32 %v1216, %v1222
      %v1225 = vadd.f32 %v1217, %v1222
      %v1226 = vadd.f32 %v1218, %v1222
      %v1227 = vpack.c.bf16 %v1224, %v1223
      %v1228 = vpack.c.bf16 %v1226, %v1225
      %v1229 = vld [vmem:[%s1052] sm:$0xf]
      %v1230 = vld [vmem:[%s1052 + $0x4] sm:$0xf]
      %v1231 = vld [vmem:[%s1052 + $0x8] sm:$0xf]
      %v1232 = vld [vmem:[%s1052 + $0xc] sm:$0xf]
      %v1233 = vld [vmem:[%s1052 + $0x10] sm:$0xf]
      %v1234 = vld [vmem:[%s1052 + $0x14] sm:$0xf]
      %v1235 = vld [vmem:[%s1052 + $0x18] sm:$0xf]
      %v1236 = vld [vmem:[%s1052 + $0x1c] sm:$0xf]
      %v1237 = vld [vmem:[%s1065] sm:$0x1]
      %v1239 = vlaneseq
      %v1240 = vshrl.u32 %v1239, 7
      %v1241 = vsub.s32 0, %v1240
      %v1242 = vrot.slane %v1237, %v1241
      %v1252 = vunpack.c.l.b16 %v1229
      %v1253 = vunpack.c.l.b16 %v1230
      %v1254 = vunpack.c.l.b16 %v1231
      %v1255 = vunpack.c.l.b16 %v1232
      %v1256 = vunpack.c.l.b16 %v1233
      %v1257 = vunpack.c.l.b16 %v1234
      %v1258 = vunpack.c.l.b16 %v1235
      %v1259 = vunpack.c.l.b16 %v1236
      %v1260 = vpack.c.b16 %v1253, %v1252
      %v1261 = vpack.c.b16 %v1255, %v1254
      %v1262 = vpack.c.b16 %v1257, %v1256
      %v1263 = vpack.c.b16 %v1259, %v1258
      %v1269 = vsel %vm1157, %v1227, 0
      %v1272 = vsel %vm1157, %v1228, 0
      %1274 = vmatprep.subr.bf16.mxu0 0
      %1275 = vmatpush1.bf16.msra.mxu0 %v1260
      %1276 = vmatprep.subr.bf16.mxu0 0
      %1277 = vmatpush1.bf16.msra.mxu0 %v1261
      %1278 = vmatprep.subr.bf16.mxu0 0
      %1279 = vmatpush1.bf16.msra.mxu0 %v1262
      %1280 = vmatprep.subr.bf16.mxu0 0
      %1281 = vmatpush1.bf16.msra.mxu0 %v1263
      %1282 = vmatprep.subr.bf16.mxu0 0
      %1283 = vmatpush1.bf16.msra.mxu0 0
      %1284 = vmatprep.subr.bf16.mxu0 0
      %1285 = vmatpush1.bf16.msra.mxu0 0
      %1286 = vmatprep.subr.bf16.mxu0 0
      %1287 = vmatpush1.bf16.msra.mxu0 0
      %1288 = vmatprep.subr.bf16.mxu0 0
      %1289 = vmatpush1.bf16.msra.mxu0 0
      %1290 = vmatprep.subr.bf16.mxu0 0
      %1291 = vmatpush1.bf16.msra.mxu0 0
      %1292 = vmatprep.subr.bf16.mxu0 0
      %1293 = vmatpush1.bf16.msra.mxu0 0
      %1294 = vmatprep.subr.bf16.mxu0 0
      %1295 = vmatpush1.bf16.msra.mxu0 0
      %1296 = vmatprep.subr.bf16.mxu0 0
      %1297 = vmatpush1.bf16.msra.mxu0 0
      %1298 = vmatprep.subr.bf16.mxu0 0
      %1299 = vmatpush1.bf16.msra.mxu0 0
      %1300 = vmatprep.subr.bf16.mxu0 0
      %1301 = vmatpush1.bf16.msra.mxu0 0
      %1302 = vmatprep.subr.bf16.mxu0 0
      %1303 = vmatpush1.bf16.msra.mxu0 0
      %1304 = vmatprep.subr.bf16.mxu0 0
      %1305 = vmatpush1.bf16.msra.mxu0 0
      %1306 = vmatprep.mubr.bf16.mxu0 0
      %1307 = vmatmul.mubr.bf16.gmra.mrb[0].mxu0 %v1269
      %v1308 = vpop.f32.mrb[0].mxu0
      %v1309 = vadd.f32 %v1242, %v1308
      %v1310 = vpop.f32.mrb[0].mxu0
      %v1311 = vpop.f32.mrb[0].mxu0
      %v1312 = vadd.f32 %v1242, %v1311
      %v1313 = vpop.f32.mrb[0].mxu0
      %1314 = vmatprep.mubr.bf16.mxu0 0
      %1315 = vmatmul.mubr.bf16.gmra.mrb[0].mxu0 %v1272
      %v1316 = vpop.f32.mrb[0].mxu0
      %v1317 = vadd.f32 %v1242, %v1316
      %v1318 = vpop.f32.mrb[0].mxu0
      %v1319 = vpop.f32.mrb[0].mxu0
      %v1320 = vadd.f32 %v1242, %v1319
      %v1321 = vpop.f32.mrb[0].mxu0
      %1322 = vdwg.mxu0
      %v1324 = vsel %vm1157, %v1309, 0
      %v1327 = vsel %vm1157, %v1312, 0
      %v1330 = vsel %vm1157, %v1317, 0
      %v1333 = vsel %vm1157, %v1320, 0
      %1335 = vmatprep.subr.mxu0 0.0
      %1336 = vmatpush1.msra.mxu0 %v1148
      %1337 = vmatprep.subr.mxu0 0.0
      %1338 = vmatpush1.msra.mxu0 %v1149
      %1339 = vmatprep.subr.mxu0 0.0
      %1340 = vmatpush1.msra.mxu0 %v1150
      %1341 = vmatprep.subr.mxu0 0.0
      %1342 = vmatpush1.msra.mxu0 %v1151
      %1343 = vmatprep.subr.mxu0 0.0
      %1344 = vmatpush1.msra.mxu0 %v1152
      %1345 = vmatprep.subr.mxu0 0.0
      %1346 = vmatpush1.msra.mxu0 %v1153
      %1347 = vmatprep.subr.mxu0 0.0
      %1348 = vmatpush1.msra.mxu0 %v1154
      %1349 = vmatprep.subr.mxu0 0.0
      %1350 = vmatpush1.msra.mxu0 %v1155
      %1351 = vmatprep.subr.mxu0 0.0
      %1352 = vmatpush1.msra.mxu0 0.0
      %1353 = vmatprep.subr.mxu0 0.0
      %1354 = vmatpush1.msra.mxu0 0.0
      %1355 = vmatprep.subr.mxu0 0.0
      %1356 = vmatpush1.msra.mxu0 0.0
      %1357 = vmatprep.subr.mxu0 0.0
      %1358 = vmatpush1.msra.mxu0 0.0
      %1359 = vmatprep.subr.mxu0 0.0
      %1360 = vmatpush1.msra.mxu0 0.0
      %1361 = vmatprep.subr.mxu0 0.0
      %1362 = vmatpush1.msra.mxu0 0.0
      %1363 = vmatprep.subr.mxu0 0.0
      %1364 = vmatpush1.msra.mxu0 0.0
      %1365 = vmatprep.subr.mxu0 0.0
      %1366 = vmatpush1.msra.mxu0 0.0
      %1367 = vmatprep.subr.mxu0 0.0
      %1368 = vmatpush1.msra.mxu0 0.0
      %1369 = vmatprep.subr.mxu0 0.0
      %1370 = vmatpush1.msra.mxu0 0.0
      %1371 = vmatprep.subr.mxu0 0.0
      %1372 = vmatpush1.msra.mxu0 0.0
      %1373 = vmatprep.subr.mxu0 0.0
      %1374 = vmatpush1.msra.mxu0 0.0
      %1375 = vmatprep.subr.mxu0 0.0
      %1376 = vmatpush1.msra.mxu0 0.0
      %1377 = vmatprep.subr.mxu0 0.0
      %1378 = vmatpush1.msra.mxu0 0.0
      %1379 = vmatprep.subr.mxu0 0.0
      %1380 = vmatpush1.msra.mxu0 0.0
      %1381 = vmatprep.subr.mxu0 0.0
      %1382 = vmatpush1.msra.mxu0 0.0
      %1383 = vmatprep.subr.mxu0 0.0
      %1384 = vmatpush1.msra.mxu0 0.0
      %1385 = vmatprep.subr.mxu0 0.0
      %1386 = vmatpush1.msra.mxu0 0.0
      %1387 = vmatprep.subr.mxu0 0.0
      %1388 = vmatpush1.msra.mxu0 0.0
      %1389 = vmatprep.subr.mxu0 0.0
      %1390 = vmatpush1.msra.mxu0 0.0
      %1391 = vmatprep.subr.mxu0 0.0
      %1392 = vmatpush1.msra.mxu0 0.0
      %1393 = vmatprep.subr.mxu0 0.0
      %1394 = vmatpush1.msra.mxu0 0.0
      %1395 = vmatprep.subr.mxu0 0.0
      %1396 = vmatpush1.msra.mxu0 0.0
      %1397 = vmatprep.subr.mxu0 0.0
      %1398 = vmatpush1.msra.mxu0 0.0
      %1399 = vmatprep.mubr.f32.mxu0 0.0
      %1400 = vmatmul.mubr.f32.gmra.mrb[0].mxu0 %v1324
      %v1401 = vpop.f32.mrb[0].mxu0
      %v1402 = vadd.f32 0.0, %v1401
      %v1403 = vpop.f32.mrb[0].mxu0
      %1404 = vmatprep.mubr.f32.mxu0 0.0
      %1405 = vmatmul.mubr.f32.gmra.mrb[0].mxu0 %v1327
      %v1406 = vpop.f32.mrb[0].mxu0
      %v1407 = vadd.f32 0.0, %v1406
      %v1408 = vpop.f32.mrb[0].mxu0
      %1409 = vmatprep.mubr.f32.mxu0 0.0
      %1410 = vmatmul.mubr.f32.gmra.mrb[0].mxu0 %v1330
      %v1411 = vpop.f32.mrb[0].mxu0
      %v1412 = vadd.f32 0.0, %v1411
      %v1413 = vpop.f32.mrb[0].mxu0
      %1414 = vmatprep.mubr.f32.mxu0 0.0
      %1415 = vmatmul.mubr.f32.gmra.mrb[0].mxu0 %v1333
      %v1416 = vpop.f32.mrb[0].mxu0
      %v1417 = vadd.f32 0.0, %v1416
      %v1418 = vpop.f32.mrb[0].mxu0
      %1419 = vdwg.mxu0
      %v1420 = vmul.f32 %v1309, %v1140
      %v1421 = vmul.f32 %v1312, %v1141
      %v1422 = vmul.f32 %v1317, %v1142
      %v1423 = vmul.f32 %v1320, %v1143
      %v1424 = vmul.f32 %v1402, %v1144
      %v1425 = vmul.f32 %v1407, %v1145
      %v1426 = vmul.f32 %v1412, %v1146
      %v1427 = vmul.f32 %v1417, %v1147
      %v1428 = vadd.f32 %v1420, %v1424
      %v1429 = vadd.f32 %v1421, %v1425
      %v1430 = vadd.f32 %v1422, %v1426
      %v1431 = vadd.f32 %v1423, %v1427
      %v1432 = vmul.f32 %v1428, 0.25
      %v1433 = vmul.f32 %v1429, 0.25
      %v1434 = vmul.f32 %v1430, 0.25
      %v1435 = vmul.f32 %v1431, 0.25
      %v1436 = vld [vmem:[%s1057] sm:$0xf]
      %v1437 = vld [vmem:[%s1057 + $0x4] sm:$0xf]
      %v1438 = vld [vmem:[%s1057 + $0x8] sm:$0xf]
      %v1439 = vld [vmem:[%s1057 + $0xc] sm:$0xf]
      %v1440 = vld [vmem:[%s1057 + $0x10] sm:$0xf]
      %v1441 = vld [vmem:[%s1057 + $0x14] sm:$0xf]
      %v1442 = vld [vmem:[%s1057 + $0x18] sm:$0xf]
      %v1443 = vld [vmem:[%s1057 + $0x1c] sm:$0xf]
      %v1444 = vld [vmem:[%s1068] sm:$0x1]
      %v1446 = vlaneseq
      %v1447 = vshrl.u32 %v1446, 7
      %v1448 = vsub.s32 0, %v1447
      %v1449 = vrot.slane %v1444, %v1448
      %v1459 = vunpack.c.l.b16 %v1436
      %v1460 = vunpack.c.l.b16 %v1437
      %v1461 = vunpack.c.l.b16 %v1438
      %v1462 = vunpack.c.l.b16 %v1439
      %v1463 = vunpack.c.l.b16 %v1440
      %v1464 = vunpack.c.l.b16 %v1441
      %v1465 = vunpack.c.l.b16 %v1442
      %v1466 = vunpack.c.l.b16 %v1443
      %v1467 = vpack.c.b16 %v1460, %v1459
      %v1468 = vpack.c.b16 %v1462, %v1461
      %v1469 = vpack.c.b16 %v1464, %v1463
      %v1470 = vpack.c.b16 %v1466, %v1465
      %1475 = vmatprep.subr.bf16.mxu0 0
      %1476 = vmatpush1.bf16.msra.mxu0 %v1467
      %1477 = vmatprep.subr.bf16.mxu0 0
      %1478 = vmatpush1.bf16.msra.mxu0 %v1468
      %1479 = vmatprep.subr.bf16.mxu0 0
      %1480 = vmatpush1.bf16.msra.mxu0 %v1469
      %1481 = vmatprep.subr.bf16.mxu0 0
      %1482 = vmatpush1.bf16.msra.mxu0 %v1470
      %1483 = vmatprep.subr.bf16.mxu0 0
      %1484 = vmatpush1.bf16.msra.mxu0 0
      %1485 = vmatprep.subr.bf16.mxu0 0
      %1486 = vmatpush1.bf16.msra.mxu0 0
      %1487 = vmatprep.subr.bf16.mxu0 0
      %1488 = vmatpush1.bf16.msra.mxu0 0
      %1489 = vmatprep.subr.bf16.mxu0 0
      %1490 = vmatpush1.bf16.msra.mxu0 0
      %1491 = vmatprep.subr.bf16.mxu0 0
      %1492 = vmatpush1.bf16.msra.mxu0 0
      %1493 = vmatprep.subr.bf16.mxu0 0
      %1494 = vmatpush1.bf16.msra.mxu0 0
      %1495 = vmatprep.subr.bf16.mxu0 0
      %1496 = vmatpush1.bf16.msra.mxu0 0
      %1497 = vmatprep.subr.bf16.mxu0 0
      %1498 = vmatpush1.bf16.msra.mxu0 0
      %1499 = vmatprep.subr.bf16.mxu0 0
      %1500 = vmatpush1.bf16.msra.mxu0 0
      %1501 = vmatprep.subr.bf16.mxu0 0
      %1502 = vmatpush1.bf16.msra.mxu0 0
      %1503 = vmatprep.subr.bf16.mxu0 0
      %1504 = vmatpush1.bf16.msra.mxu0 0
      %1505 = vmatprep.subr.bf16.mxu0 0
      %1506 = vmatpush1.bf16.msra.mxu0 0
      %1507 = vmatprep.mubr.bf16.mxu0 0
      %1508 = vmatmul.mubr.bf16.gmra.mrb[0].mxu0 %v1269
      %v1509 = vpop.f32.mrb[0].mxu0
      %v1510 = vadd.f32 %v1449, %v1509
      %v1511 = vpop.f32.mrb[0].mxu0
      %v1512 = vpop.f32.mrb[0].mxu0
      %v1513 = vadd.f32 %v1449, %v1512
      %v1514 = vpop.f32.mrb[0].mxu0
      %1515 = vmatprep.mubr.bf16.mxu0 0
      %1516 = vmatmul.mubr.bf16.gmra.mrb[0].mxu0 %v1272
      %v1517 = vpop.f32.mrb[0].mxu0
      %v1518 = vadd.f32 %v1449, %v1517
      %v1519 = vpop.f32.mrb[0].mxu0
      %v1520 = vpop.f32.mrb[0].mxu0
      %v1521 = vadd.f32 %v1449, %v1520
      %v1522 = vpop.f32.mrb[0].mxu0
      %1523 = vdwg.mxu0
      %v1525 = vsel %vm1157, %v1510, 0
      %v1528 = vsel %vm1157, %v1513, 0
      %v1531 = vsel %vm1157, %v1518, 0
      %v1534 = vsel %vm1157, %v1521, 0
      %1536 = vmatprep.subr.mxu0 0.0
      %1537 = vmatpush1.msra.mxu0 %v1148
      %1538 = vmatprep.subr.mxu0 0.0
      %1539 = vmatpush1.msra.mxu0 %v1149
      %1540 = vmatprep.subr.mxu0 0.0
      %1541 = vmatpush1.msra.mxu0 %v1150
      %1542 = vmatprep.subr.mxu0 0.0
      %1543 = vmatpush1.msra.mxu0 %v1151
      %1544 = vmatprep.subr.mxu0 0.0
      %1545 = vmatpush1.msra.mxu0 %v1152
      %1546 = vmatprep.subr.mxu0 0.0
      %1547 = vmatpush1.msra.mxu0 %v1153
      %1548 = vmatprep.subr.mxu0 0.0
      %1549 = vmatpush1.msra.mxu0 %v1154
      %1550 = vmatprep.subr.mxu0 0.0
      %1551 = vmatpush1.msra.mxu0 %v1155
      %1552 = vmatprep.subr.mxu0 0.0
      %1553 = vmatpush1.msra.mxu0 0.0
      %1554 = vmatprep.subr.mxu0 0.0
      %1555 = vmatpush1.msra.mxu0 0.0
      %1556 = vmatprep.subr.mxu0 0.0
      %1557 = vmatpush1.msra.mxu0 0.0
      %1558 = vmatprep.subr.mxu0 0.0
      %1559 = vmatpush1.msra.mxu0 0.0
      %1560 = vmatprep.subr.mxu0 0.0
      %1561 = vmatpush1.msra.mxu0 0.0
      %1562 = vmatprep.subr.mxu0 0.0
      %1563 = vmatpush1.msra.mxu0 0.0
      %1564 = vmatprep.subr.mxu0 0.0
      %1565 = vmatpush1.msra.mxu0 0.0
      %1566 = vmatprep.subr.mxu0 0.0
      %1567 = vmatpush1.msra.mxu0 0.0
      %1568 = vmatprep.subr.mxu0 0.0
      %1569 = vmatpush1.msra.mxu0 0.0
      %1570 = vmatprep.subr.mxu0 0.0
      %1571 = vmatpush1.msra.mxu0 0.0
      %1572 = vmatprep.subr.mxu0 0.0
      %1573 = vmatpush1.msra.mxu0 0.0
      %1574 = vmatprep.subr.mxu0 0.0
      %1575 = vmatpush1.msra.mxu0 0.0
      %1576 = vmatprep.subr.mxu0 0.0
      %1577 = vmatpush1.msra.mxu0 0.0
      %1578 = vmatprep.subr.mxu0 0.0
      %1579 = vmatpush1.msra.mxu0 0.0
      %1580 = vmatprep.subr.mxu0 0.0
      %1581 = vmatpush1.msra.mxu0 0.0
      %1582 = vmatprep.subr.mxu0 0.0
      %1583 = vmatpush1.msra.mxu0 0.0
      %1584 = vmatprep.subr.mxu0 0.0
      %1585 = vmatpush1.msra.mxu0 0.0
      %1586 = vmatprep.subr.mxu0 0.0
      %1587 = vmatpush1.msra.mxu0 0.0
      %1588 = vmatprep.subr.mxu0 0.0
      %1589 = vmatpush1.msra.mxu0 0.0
      %1590 = vmatprep.subr.mxu0 0.0
      %1591 = vmatpush1.msra.mxu0 0.0
      %1592 = vmatprep.subr.mxu0 0.0
      %1593 = vmatpush1.msra.mxu0 0.0
      %1594 = vmatprep.subr.mxu0 0.0
      %1595 = vmatpush1.msra.mxu0 0.0
      %1596 = vmatprep.subr.mxu0 0.0
      %1597 = vmatpush1.msra.mxu0 0.0
      %1598 = vmatprep.subr.mxu0 0.0
      %1599 = vmatpush1.msra.mxu0 0.0
      %1600 = vmatprep.mubr.f32.mxu0 0.0
      %1601 = vmatmul.mubr.f32.gmra.mrb[0].mxu0 %v1525
      %v1602 = vpop.f32.mrb[0].mxu0
      %v1603 = vadd.f32 0.0, %v1602
      %v1604 = vpop.f32.mrb[0].mxu0
      %1605 = vmatprep.mubr.f32.mxu0 0.0
      %1606 = vmatmul.mubr.f32.gmra.mrb[0].mxu0 %v1528
      %v1607 = vpop.f32.mrb[0].mxu0
      %v1608 = vadd.f32 0.0, %v1607
      %v1609 = vpop.f32.mrb[0].mxu0
      %1610 = vmatprep.mubr.f32.mxu0 0.0
      %1611 = vmatmul.mubr.f32.gmra.mrb[0].mxu0 %v1531
      %v1612 = vpop.f32.mrb[0].mxu0
      %v1613 = vadd.f32 0.0, %v1612
      %v1614 = vpop.f32.mrb[0].mxu0
      %1615 = vmatprep.mubr.f32.mxu0 0.0
      %1616 = vmatmul.mubr.f32.gmra.mrb[0].mxu0 %v1534
      %v1617 = vpop.f32.mrb[0].mxu0
      %v1618 = vadd.f32 0.0, %v1617
      %v1619 = vpop.f32.mrb[0].mxu0
      %1620 = vdwg.mxu0
      %v1621 = vmul.f32 %v1510, %v1140
      %v1622 = vmul.f32 %v1513, %v1141
      %v1623 = vmul.f32 %v1518, %v1142
      %v1624 = vmul.f32 %v1521, %v1143
      %v1625 = vmul.f32 %v1603, %v1144
      %v1626 = vmul.f32 %v1608, %v1145
      %v1627 = vmul.f32 %v1613, %v1146
      %v1628 = vmul.f32 %v1618, %v1147
      %v1629 = vadd.f32 %v1621, %v1625
      %v1630 = vadd.f32 %v1622, %v1626
      %v1631 = vadd.f32 %v1623, %v1627
      %v1632 = vadd.f32 %v1624, %v1628
      %v1633 = vld [vmem:[%s1062] sm:$0xf]
      %v1634 = vld [vmem:[%s1062 + $0x4] sm:$0xf]
      %v1635 = vld [vmem:[%s1062 + $0x8] sm:$0xf]
      %v1636 = vld [vmem:[%s1062 + $0xc] sm:$0xf]
      %v1637 = vld [vmem:[%s1062 + $0x10] sm:$0xf]
      %v1638 = vld [vmem:[%s1062 + $0x14] sm:$0xf]
      %v1639 = vld [vmem:[%s1062 + $0x18] sm:$0xf]
      %v1640 = vld [vmem:[%s1062 + $0x1c] sm:$0xf]
      %v1641 = vld [vmem:[%s1071] sm:$0x1]
      %v1643 = vlaneseq
      %v1644 = vshrl.u32 %v1643, 7
      %v1645 = vsub.s32 0, %v1644
      %v1646 = vrot.slane %v1641, %v1645
      %v1656 = vunpack.c.l.b16 %v1633
      %v1657 = vunpack.c.l.b16 %v1634
      %v1658 = vunpack.c.l.b16 %v1635
      %v1659 = vunpack.c.l.b16 %v1636
      %v1660 = vunpack.c.l.b16 %v1637
      %v1661 = vunpack.c.l.b16 %v1638
      %v1662 = vunpack.c.l.b16 %v1639
      %v1663 = vunpack.c.l.b16 %v1640
      %v1664 = vpack.c.b16 %v1657, %v1656
      %v1665 = vpack.c.b16 %v1659, %v1658
      %v1666 = vpack.c.b16 %v1661, %v1660
      %v1667 = vpack.c.b16 %v1663, %v1662
      %1672 = vmatprep.subr.bf16.mxu0 0
      %1673 = vmatpush1.bf16.msra.mxu0 %v1664
      %1674 = vmatprep.subr.bf16.mxu0 0
      %1675 = vmatpush1.bf16.msra.mxu0 %v1665
      %1676 = vmatprep.subr.bf16.mxu0 0
      %1677 = vmatpush1.bf16.msra.mxu0 %v1666
      %1678 = vmatprep.subr.bf16.mxu0 0
      %1679 = vmatpush1.bf16.msra.mxu0 %v1667
      %1680 = vmatprep.subr.bf16.mxu0 0
      %1681 = vmatpush1.bf16.msra.mxu0 0
      %1682 = vmatprep.subr.bf16.mxu0 0
      %1683 = vmatpush1.bf16.msra.mxu0 0
      %1684 = vmatprep.subr.bf16.mxu0 0
      %1685 = vmatpush1.bf16.msra.mxu0 0
      %1686 = vmatprep.subr.bf16.mxu0 0
      %1687 = vmatpush1.bf16.msra.mxu0 0
      %1688 = vmatprep.subr.bf16.mxu0 0
      %1689 = vmatpush1.bf16.msra.mxu0 0
      %1690 = vmatprep.subr.bf16.mxu0 0
      %1691 = vmatpush1.bf16.msra.mxu0 0
      %1692 = vmatprep.subr.bf16.mxu0 0
      %1693 = vmatpush1.bf16.msra.mxu0 0
      %1694 = vmatprep.subr.bf16.mxu0 0
      %1695 = vmatpush1.bf16.msra.mxu0 0
      %1696 = vmatprep.subr.bf16.mxu0 0
      %1697 = vmatpush1.bf16.msra.mxu0 0
      %1698 = vmatprep.subr.bf16.mxu0 0
      %1699 = vmatpush1.bf16.msra.mxu0 0
      %1700 = vmatprep.subr.bf16.mxu0 0
      %1701 = vmatpush1.bf16.msra.mxu0 0
      %1702 = vmatprep.subr.bf16.mxu0 0
      %1703 = vmatpush1.bf16.msra.mxu0 0
      %1704 = vmatprep.mubr.bf16.mxu0 0
      %1705 = vmatmul.mubr.bf16.gmra.mrb[0].mxu0 %v1269
      %v1706 = vpop.f32.mrb[0].mxu0
      %v1707 = vadd.f32 %v1646, %v1706
      %v1708 = vpop.f32.mrb[0].mxu0
      %v1709 = vpop.f32.mrb[0].mxu0
      %v1710 = vadd.f32 %v1646, %v1709
      %v1711 = vpop.f32.mrb[0].mxu0
      %1712 = vmatprep.mubr.bf16.mxu0 0
      %1713 = vmatmul.mubr.bf16.gmra.mrb[0].mxu0 %v1272
      %v1714 = vpop.f32.mrb[0].mxu0
      %v1715 = vadd.f32 %v1646, %v1714
      %v1716 = vpop.f32.mrb[0].mxu0
      %v1717 = vpop.f32.mrb[0].mxu0
      %v1718 = vadd.f32 %v1646, %v1717
      %v1719 = vpop.f32.mrb[0].mxu0
      %1720 = vdwg.mxu0
      %v1721 = vld [vmem:[%s1076] sm:$0xf]
      %v1722 = vld [vmem:[%s1076 + $0x4] sm:$0xf]
      %v1723 = vld [vmem:[%s1076 + $0x8] sm:$0xf]
      %v1724 = vld [vmem:[%s1076 + $0xc] sm:$0xf]
      %v1725 = vld [vmem:[%s1076 + $0x10] sm:$0xf]
      %v1726 = vld [vmem:[%s1076 + $0x14] sm:$0xf]
      %v1727 = vld [vmem:[%s1076 + $0x18] sm:$0xf]
      %v1728 = vld [vmem:[%s1076 + $0x1c] sm:$0xf]
      %v1729 = vpack.c.bf16 %v1433, %v1432
      %v1730 = vpack.c.bf16 %v1630, %v1629
      %v1731 = vpack.c.bf16 %v1710, %v1707
      %vm1732 = vcmask 130048
      %v1734 = vsel %vm1732, %v1729, 0
      %v1737 = vsel %vm1732, %v1730, 0
      %1739 = vmatprep.subr.bf16.mxu0 0
      %1740 = vmatpush1.bf16.xpose.msra.mxu0 %v1737
      %1741 = vmatprep.subr.bf16.mxu0 0
      %1742 = vmatpush1.bf16.xpose.msra.mxu0 0
      %1743 = vmatprep.subr.bf16.mxu0 0
      %1744 = vmatpush1.bf16.xpose.msra.mxu0 0
      %1745 = vmatprep.subr.bf16.mxu0 0
      %1746 = vmatpush1.bf16.xpose.msra.mxu0 0
      %1747 = vmatprep.subr.bf16.mxu0 0
      %1748 = vmatpush1.bf16.xpose.msra.mxu0 0
      %1749 = vmatprep.subr.bf16.mxu0 0
      %1750 = vmatpush1.bf16.xpose.msra.mxu0 0
      %1751 = vmatprep.subr.bf16.mxu0 0
      %1752 = vmatpush1.bf16.xpose.msra.mxu0 0
      %1753 = vmatprep.subr.bf16.mxu0 0
      %1754 = vmatpush1.bf16.xpose.msra.mxu0 0
      %1755 = vmatprep.subr.bf16.mxu0 0
      %1756 = vmatpush1.bf16.xpose.msra.mxu0 0
      %1757 = vmatprep.subr.bf16.mxu0 0
      %1758 = vmatpush1.bf16.xpose.msra.mxu0 0
      %1759 = vmatprep.subr.bf16.mxu0 0
      %1760 = vmatpush1.bf16.xpose.msra.mxu0 0
      %1761 = vmatprep.subr.bf16.mxu0 0
      %1762 = vmatpush1.bf16.xpose.msra.mxu0 0
      %1763 = vmatprep.subr.bf16.mxu0 0
      %1764 = vmatpush1.bf16.xpose.msra.mxu0 0
      %1765 = vmatprep.subr.bf16.mxu0 0
      %1766 = vmatpush1.bf16.xpose.msra.mxu0 0
      %1767 = vmatprep.subr.bf16.mxu0 0
      %1768 = vmatpush1.bf16.xpose.msra.mxu0 0
      %1769 = vmatprep.subr.bf16.mxu0 0
      %1770 = vmatpush1.bf16.xpose.msra.mxu0 0
      %1771 = vmatprep.mubr.bf16.mxu0 0
      %1772 = vmatmul.mubr.bf16.gmra.mrb[0].mxu0 %v1734
      %v1773 = vpop.f32.mrb[0].mxu0
      %v1774 = vadd.f32 0.0, %v1773
      %v1775 = vpop.f32.mrb[0].mxu0
      %v1776 = vpop.f32.mrb[0].mxu0
      %v1777 = vadd.f32 0.0, %v1776
      %v1778 = vpop.f32.mrb[0].mxu0
      %1779 = vdwg.mxu0
      %v1780 = vsel %vm1732, %v1774, -inf
      %1781 = vmax.xlane.f32.xlu0 %v1780
      %v1782 = vpop.xlane.xlu0 %1781
      %v1783 = vsel %vm1732, %v1777, -inf
      %1784 = vmax.xlane.f32.xlu0 %v1783
      %v1785 = vpop.xlane.xlu0 %1784
      %v1786 = vsub.f32 %v1774, %v1782
      %v1787 = vsub.f32 %v1777, %v1785
      %v1788 = vmul.f32 %v1786, 1.442695
      %v1789 = vpow.pop %v1788
      %v1790 = vmul.f32 %v1787, 1.442695
      %v1791 = vpow.pop %v1790
      %v1792 = vsel %vm1732, %v1789, 0.0
      %1793 = vadd.xlane.f32.xlu0 %v1792
      %v1794 = vpop.xlane.xlu0 %1793
      %v1795 = vsel %vm1732, %v1791, 0.0
      %1796 = vadd.xlane.f32.xlu0 %v1795
      %v1797 = vpop.xlane.xlu0 %1796
      %v1798 = vrcp.pop %v1794
      %v1799 = vrcp.pop %v1797
      %v1800 = vmul.f32 %v1789, %v1798
      %v1801 = vmul.f32 %v1791, %v1799
      %v1802 = vpack.c.bf16 %v1801, %v1800
      %v1804 = vsel %vm1732, %v1802, 0
      %1806 = vmatprep.subr.bf16.mxu0 0
      %1807 = vmatpush1.bf16.msra.mxu0 %v1731
      %1808 = vmatprep.subr.bf16.mxu0 0
      %1809 = vmatpush1.bf16.msra.mxu0 0
      %1810 = vmatprep.subr.bf16.mxu0 0
      %1811 = vmatpush1.bf16.msra.mxu0 0
      %1812 = vmatprep.subr.bf16.mxu0 0
      %1813 = vmatpush1.bf16.msra.mxu0 0
      %1814 = vmatprep.subr.bf16.mxu0 0
      %1815 = vmatpush1.bf16.msra.mxu0 0
      %1816 = vmatprep.subr.bf16.mxu0 0
      %1817 = vmatpush1.bf16.msra.mxu0 0
      %1818 = vmatprep.subr.bf16.mxu0 0
      %1819 = vmatpush1.bf16.msra.mxu0 0
      %1820 = vmatprep.subr.bf16.mxu0 0
      %1821 = vmatpush1.bf16.msra.mxu0 0
      %1822 = vmatprep.subr.bf16.mxu0 0
      %1823 = vmatpush1.bf16.msra.mxu0 0
      %1824 = vmatprep.subr.bf16.mxu0 0
      %1825 = vmatpush1.bf16.msra.mxu0 0
      %1826 = vmatprep.subr.bf16.mxu0 0
      %1827 = vmatpush1.bf16.msra.mxu0 0
      %1828 = vmatprep.subr.bf16.mxu0 0
      %1829 = vmatpush1.bf16.msra.mxu0 0
      %1830 = vmatprep.subr.bf16.mxu0 0
      %1831 = vmatpush1.bf16.msra.mxu0 0
      %1832 = vmatprep.subr.bf16.mxu0 0
      %1833 = vmatpush1.bf16.msra.mxu0 0
      %1834 = vmatprep.subr.bf16.mxu0 0
      %1835 = vmatpush1.bf16.msra.mxu0 0
      %1836 = vmatprep.subr.bf16.mxu0 0
      %1837 = vmatpush1.bf16.msra.mxu0 0
      %1838 = vmatprep.mubr.bf16.mxu0 0
      %1839 = vmatmul.mubr.bf16.gmra.mrb[0].mxu0 %v1804
      %v1840 = vpop.f32.mrb[0].mxu0
      %v1841 = vadd.f32 0.0, %v1840
      %v1842 = vpop.f32.mrb[0].mxu0
      %v1843 = vpop.f32.mrb[0].mxu0
      %v1844 = vadd.f32 0.0, %v1843
      %v1845 = vpop.f32.mrb[0].mxu0
      %1846 = vdwg.mxu0
      %v1847 = vpack.c.bf16 %v1844, %v1841
      %1849 = vrot.lane.b32.xlu0 %v1729, 112
      %v1850 = vpop.permute.xlu0 %1849
      %1852 = vrot.lane.b32.xlu0 %v1730, 112
      %v1853 = vpop.permute.xlu0 %1852
      %v1855 = vsel %vm1732, %v1850, 0
      %v1858 = vsel %vm1732, %v1853, 0
      %1860 = vmatprep.subr.bf16.mxu0 0
      %1861 = vmatpush1.bf16.xpose.msra.mxu0 %v1858
      %1862 = vmatprep.subr.bf16.mxu0 0
      %1863 = vmatpush1.bf16.xpose.msra.mxu0 0
      %1864 = vmatprep.subr.bf16.mxu0 0
      %1865 = vmatpush1.bf16.xpose.msra.mxu0 0
      %1866 = vmatprep.subr.bf16.mxu0 0
      %1867 = vmatpush1.bf16.xpose.msra.mxu0 0
      %1868 = vmatprep.subr.bf16.mxu0 0
      %1869 = vmatpush1.bf16.xpose.msra.mxu0 0
      %1870 = vmatprep.subr.bf16.mxu0 0
      %1871 = vmatpush1.bf16.xpose.msra.mxu0 0
      %1872 = vmatprep.subr.bf16.mxu0 0
      %1873 = vmatpush1.bf16.xpose.msra.mxu0 0
      %1874 = vmatprep.subr.bf16.mxu0 0
      %1875 = vmatpush1.bf16.xpose.msra.mxu0 0
      %1876 = vmatprep.subr.bf16.mxu0 0
      %1877 = vmatpush1.bf16.xpose.msra.mxu0 0
      %1878 = vmatprep.subr.bf16.mxu0 0
      %1879 = vmatpush1.bf16.xpose.msra.mxu0 0
      %1880 = vmatprep.subr.bf16.mxu0 0
      %1881 = vmatpush1.bf16.xpose.msra.mxu0 0
      %1882 = vmatprep.subr.bf16.mxu0 0
      %1883 = vmatpush1.bf16.xpose.msra.mxu0 0
      %1884 = vmatprep.subr.bf16.mxu0 0
      %1885 = vmatpush1.bf16.xpose.msra.mxu0 0
      %1886 = vmatprep.subr.bf16.mxu0 0
      %1887 = vmatpush1.bf16.xpose.msra.mxu0 0
      %1888 = vmatprep.subr.bf16.mxu0 0
      %1889 = vmatpush1.bf16.xpose.msra.mxu0 0
      %1890 = vmatprep.subr.bf16.mxu0 0
      %1891 = vmatpush1.bf16.xpose.msra.mxu0 0
      %1892 = vmatprep.mubr.bf16.mxu0 0
      %1893 = vmatmul.mubr.bf16.gmra.mrb[0].mxu0 %v1855
      %v1894 = vpop.f32.mrb[0].mxu0
      %v1895 = vadd.f32 0.0, %v1894
      %v1896 = vpop.f32.mrb[0].mxu0
      %v1897 = vpop.f32.mrb[0].mxu0
      %v1898 = vadd.f32 0.0, %v1897
      %v1899 = vpop.f32.mrb[0].mxu0
      %1900 = vdwg.mxu0
      %v1901 = vsel %vm1732, %v1895, -inf
      %1902 = vmax.xlane.f32.xlu0 %v1901
      %v1903 = vpop.xlane.xlu0 %1902
      %v1904 = vsel %vm1732, %v1898, -inf
      %1905 = vmax.xlane.f32.xlu0 %v1904
      %v1906 = vpop.xlane.xlu0 %1905
      %v1907 = vsub.f32 %v1895, %v1903
      %v1908 = vsub.f32 %v1898, %v1906
      %v1909 = vmul.f32 %v1907, 1.442695
      %v1910 = vpow.pop %v1909
      %v1911 = vmul.f32 %v1908, 1.442695
      %v1912 = vpow.pop %v1911
      %v1913 = vsel %vm1732, %v1910, 0.0
      %1914 = vadd.xlane.f32.xlu0 %v1913
      %v1915 = vpop.xlane.xlu0 %1914
      %v1916 = vsel %vm1732, %v1912, 0.0
      %1917 = vadd.xlane.f32.xlu0 %v1916
      %v1918 = vpop.xlane.xlu0 %1917
      %v1919 = vrcp.pop %v1915
      %v1920 = vrcp.pop %v1918
      %v1921 = vmul.f32 %v1910, %v1919
      %v1922 = vmul.f32 %v1912, %v1920
      %v1923 = vpack.c.bf16 %v1922, %v1921
      %1925 = vrot.lane.b32.xlu0 %v1731, 112
      %v1926 = vpop.permute.xlu0 %1925
      %v1929 = vsel %vm1732, %v1923, 0
      %1931 = vmatprep.subr.bf16.mxu0 0
      %1932 = vmatpush1.bf16.msra.mxu0 %v1926
      %1933 = vmatprep.subr.bf16.mxu0 0
      %1934 = vmatpush1.bf16.msra.mxu0 0
      %1935 = vmatprep.subr.bf16.mxu0 0
      %1936 = vmatpush1.bf16.msra.mxu0 0
      %1937 = vmatprep.subr.bf16.mxu0 0
      %1938 = vmatpush1.bf16.msra.mxu0 0
      %1939 = vmatprep.subr.bf16.mxu0 0
      %1940 = vmatpush1.bf16.msra.mxu0 0
      %1941 = vmatprep.subr.bf16.mxu0 0
      %1942 = vmatpush1.bf16.msra.mxu0 0
      %1943 = vmatprep.subr.bf16.mxu0 0
      %1944 = vmatpush1.bf16.msra.mxu0 0
      %1945 = vmatprep.subr.bf16.mxu0 0
      %1946 = vmatpush1.bf16.msra.mxu0 0
      %1947 = vmatprep.subr.bf16.mxu0 0
      %1948 = vmatpush1.bf16.msra.mxu0 0
      %1949 = vmatprep.subr.bf16.mxu0 0
      %1950 = vmatpush1.bf16.msra.mxu0 0
      %1951 = vmatprep.subr.bf16.mxu0 0
      %1952 = vmatpush1.bf16.msra.mxu0 0
      %1953 = vmatprep.subr.bf16.mxu0 0
      %1954 = vmatpush1.bf16.msra.mxu0 0
      %1955 = vmatprep.subr.bf16.mxu0 0
      %1956 = vmatpush1.bf16.msra.mxu0 0
      %1957 = vmatprep.subr.bf16.mxu0 0
      %1958 = vmatpush1.bf16.msra.mxu0 0
      %1959 = vmatprep.subr.bf16.mxu0 0
      %1960 = vmatpush1.bf16.msra.mxu0 0
      %1961 = vmatprep.subr.bf16.mxu0 0
      %1962 = vmatpush1.bf16.msra.mxu0 0
      %1963 = vmatprep.mubr.bf16.mxu0 0
      %1964 = vmatmul.mubr.bf16.gmra.mrb[0].mxu0 %v1929
      %v1965 = vpop.f32.mrb[0].mxu0
      %v1966 = vadd.f32 0.0, %v1965
      %v1967 = vpop.f32.mrb[0].mxu0
      %v1968 = vpop.f32.mrb[0].mxu0
      %v1969 = vadd.f32 0.0, %v1968
      %v1970 = vpop.f32.mrb[0].mxu0
      %1971 = vdwg.mxu0
      %v1972 = vpack.c.bf16 %v1969, %v1966
      %v1975 = vunpack.c.l.b16 %v1723
      %v1976 = vunpack.c.l.b16 %v1724
      %v1977 = vpack.c.b16 %v1976, %v1975
      %v1980 = vsel %vm1732, %v1972, 0
      %1982 = vmatprep.subr.bf16.mxu0 0
      %1983 = vmatpush1.bf16.msra.mxu0 %v1977
      %1984 = vmatprep.subr.bf16.mxu0 0
      %1985 = vmatpush1.bf16.msra.mxu0 0
      %1986 = vmatprep.subr.bf16.mxu0 0
      %1987 = vmatpush1.bf16.msra.mxu0 0
      %1988 = vmatprep.subr.bf16.mxu0 0
      %1989 = vmatpush1.bf16.msra.mxu0 0
      %1990 = vmatprep.subr.bf16.mxu0 0
      %1991 = vmatpush1.bf16.msra.mxu0 0
      %1992 = vmatprep.subr.bf16.mxu0 0
      %1993 = vmatpush1.bf16.msra.mxu0 0
      %1994 = vmatprep.subr.bf16.mxu0 0
      %1995 = vmatpush1.bf16.msra.mxu0 0
      %1996 = vmatprep.subr.bf16.mxu0 0
      %1997 = vmatpush1.bf16.msra.mxu0 0
      %1998 = vmatprep.subr.bf16.mxu0 0
      %1999 = vmatpush1.bf16.msra.mxu0 0
      %2000 = vmatprep.subr.bf16.mxu0 0
      %2001 = vmatpush1.bf16.msra.mxu0 0
      %2002 = vmatprep.subr.bf16.mxu0 0
      %2003 = vmatpush1.bf16.msra.mxu0 0
      %2004 = vmatprep.subr.bf16.mxu0 0
      %2005 = vmatpush1.bf16.msra.mxu0 0
      %2006 = vmatprep.subr.bf16.mxu0 0
      %2007 = vmatpush1.bf16.msra.mxu0 0
      %2008 = vmatprep.subr.bf16.mxu0 0
      %2009 = vmatpush1.bf16.msra.mxu0 0
      %2010 = vmatprep.subr.bf16.mxu0 0
      %2011 = vmatpush1.bf16.msra.mxu0 0
      %2012 = vmatprep.subr.bf16.mxu0 0
      %2013 = vmatpush1.bf16.msra.mxu0 0
      %2014 = vmatprep.mubr.bf16.mxu0 0
      %2015 = vmatmul.mubr.bf16.gmra.mrb[0].mxu0 %v1980
      %v2016 = vpop.f32.mrb[0].mxu0
      %v2017 = vadd.f32 0.0, %v2016
      %v2018 = vpop.f32.mrb[0].mxu0
      %v2019 = vpop.f32.mrb[0].mxu0
      %v2020 = vadd.f32 0.0, %v2019
      %v2021 = vpop.f32.mrb[0].mxu0
      %2022 = vdwg.mxu0
      %v2025 = vunpack.c.l.b16 %v1721
      %v2026 = vunpack.c.l.b16 %v1722
      %v2027 = vpack.c.b16 %v2026, %v2025
      %v2030 = vsel %vm1732, %v1847, 0
      %2032 = vmatprep.subr.bf16.mxu0 0
      %2033 = vmatpush1.bf16.msra.mxu0 %v2027
      %2034 = vmatprep.subr.bf16.mxu0 0
      %2035 = vmatpush1.bf16.msra.mxu0 0
      %2036 = vmatprep.subr.bf16.mxu0 0
      %2037 = vmatpush1.bf16.msra.mxu0 0
      %2038 = vmatprep.subr.bf16.mxu0 0
      %2039 = vmatpush1.bf16.msra.mxu0 0
      %2040 = vmatprep.subr.bf16.mxu0 0
      %2041 = vmatpush1.bf16.msra.mxu0 0
      %2042 = vmatprep.subr.bf16.mxu0 0
      %2043 = vmatpush1.bf16.msra.mxu0 0
      %2044 = vmatprep.subr.bf16.mxu0 0
      %2045 = vmatpush1.bf16.msra.mxu0 0
      %2046 = vmatprep.subr.bf16.mxu0 0
      %2047 = vmatpush1.bf16.msra.mxu0 0
      %2048 = vmatprep.subr.bf16.mxu0 0
      %2049 = vmatpush1.bf16.msra.mxu0 0
      %2050 = vmatprep.subr.bf16.mxu0 0
      %2051 = vmatpush1.bf16.msra.mxu0 0
      %2052 = vmatprep.subr.bf16.mxu0 0
      %2053 = vmatpush1.bf16.msra.mxu0 0
      %2054 = vmatprep.subr.bf16.mxu0 0
      %2055 = vmatpush1.bf16.msra.mxu0 0
      %2056 = vmatprep.subr.bf16.mxu0 0
      %2057 = vmatpush1.bf16.msra.mxu0 0
      %2058 = vmatprep.subr.bf16.mxu0 0
      %2059 = vmatpush1.bf16.msra.mxu0 0
      %2060 = vmatprep.subr.bf16.mxu0 0
      %2061 = vmatpush1.bf16.msra.mxu0 0
      %2062 = vmatprep.subr.bf16.mxu0 0
      %2063 = vmatpush1.bf16.msra.mxu0 0
      %2064 = vmatprep.mubr.bf16.mxu0 0
      %2065 = vmatmul.mubr.bf16.gmra.mrb[0].mxu0 %v2030
      %v2066 = vpop.f32.mrb[0].mxu0
      %v2067 = vadd.f32 %v2017, %v2066
      %v2068 = vpop.f32.mrb[0].mxu0
      %v2069 = vpop.f32.mrb[0].mxu0
      %v2070 = vadd.f32 %v2020, %v2069
      %v2071 = vpop.f32.mrb[0].mxu0
      %2072 = vdwg.mxu0
      %2073 = vrot.lane.b32.xlu0 %v1729, 96
      %v2074 = vpop.permute.xlu0 %2073
      %2075 = vrot.lane.b32.xlu0 %v1730, 96
      %v2076 = vpop.permute.xlu0 %2075
      %v2078 = vsel %vm1732, %v2074, 0
      %v2081 = vsel %vm1732, %v2076, 0
      %2083 = vmatprep.subr.bf16.mxu0 0
      %2084 = vmatpush1.bf16.xpose.msra.mxu0 %v2081
      %2085 = vmatprep.subr.bf16.mxu0 0
      %2086 = vmatpush1.bf16.xpose.msra.mxu0 0
      %2087 = vmatprep.subr.bf16.mxu0 0
      %2088 = vmatpush1.bf16.xpose.msra.mxu0 0
      %2089 = vmatprep.subr.bf16.mxu0 0
      %2090 = vmatpush1.bf16.xpose.msra.mxu0 0
      %2091 = vmatprep.subr.bf16.mxu0 0
      %2092 = vmatpush1.bf16.xpose.msra.mxu0 0
      %2093 = vmatprep.subr.bf16.mxu0 0
      %2094 = vmatpush1.bf16.xpose.msra.mxu0 0
      %2095 = vmatprep.subr.bf16.mxu0 0
      %2096 = vmatpush1.bf16.xpose.msra.mxu0 0
      %2097 = vmatprep.subr.bf16.mxu0 0
      %2098 = vmatpush1.bf16.xpose.msra.mxu0 0
      %2099 = vmatprep.subr.bf16.mxu0 0
      %2100 = vmatpush1.bf16.xpose.msra.mxu0 0
      %2101 = vmatprep.subr.bf16.mxu0 0
      %2102 = vmatpush1.bf16.xpose.msra.mxu0 0
      %2103 = vmatprep.subr.bf16.mxu0 0
      %2104 = vmatpush1.bf16.xpose.msra.mxu0 0
      %2105 = vmatprep.subr.bf16.mxu0 0
      %2106 = vmatpush1.bf16.xpose.msra.mxu0 0
      %2107 = vmatprep.subr.bf16.mxu0 0
      %2108 = vmatpush1.bf16.xpose.msra.mxu0 0
      %2109 = vmatprep.subr.bf16.mxu0 0
      %2110 = vmatpush1.bf16.xpose.msra.mxu0 0
      %2111 = vmatprep.subr.bf16.mxu0 0
      %2112 = vmatpush1.bf16.xpose.msra.mxu0 0
      %2113 = vmatprep.subr.bf16.mxu0 0
      %2114 = vmatpush1.bf16.xpose.msra.mxu0 0
      %2115 = vmatprep.mubr.bf16.mxu0 0
      %2116 = vmatmul.mubr.bf16.gmra.mrb[0].mxu0 %v2078
      %v2117 = vpop.f32.mrb[0].mxu0
      %v2118 = vadd.f32 0.0, %v2117
      %v2119 = vpop.f32.mrb[0].mxu0
      %v2120 = vpop.f32.mrb[0].mxu0
      %v2121 = vadd.f32 0.0, %v2120
      %v2122 = vpop.f32.mrb[0].mxu0
      %2123 = vdwg.mxu0
      %v2124 = vsel %vm1732, %v2118, -inf
      %2125 = vmax.xlane.f32.xlu0 %v2124
      %v2126 = vpop.xlane.xlu0 %2125
      %v2127 = vsel %vm1732, %v2121, -inf
      %2128 = vmax.xlane.f32.xlu0 %v2127
      %v2129 = vpop.xlane.xlu0 %2128
      %v2130 = vsub.f32 %v2118, %v2126
      %v2131 = vsub.f32 %v2121, %v2129
      %v2132 = vmul.f32 %v2130, 1.442695
      %v2133 = vpow.pop %v2132
      %v2134 = vmul.f32 %v2131, 1.442695
      %v2135 = vpow.pop %v2134
      %v2136 = vsel %vm1732, %v2133, 0.0
      %2137 = vadd.xlane.f32.xlu0 %v2136
      %v2138 = vpop.xlane.xlu0 %2137
      %v2139 = vsel %vm1732, %v2135, 0.0
      %2140 = vadd.xlane.f32.xlu0 %v2139
      %v2141 = vpop.xlane.xlu0 %2140
      %v2142 = vrcp.pop %v2138
      %v2143 = vrcp.pop %v2141
      %v2144 = vmul.f32 %v2133, %v2142
      %v2145 = vmul.f32 %v2135, %v2143
      %v2146 = vpack.c.bf16 %v2145, %v2144
      %2147 = vrot.lane.b32.xlu0 %v1731, 96
      %v2148 = vpop.permute.xlu0 %2147
      %v2151 = vsel %vm1732, %v2146, 0
      %2153 = vmatprep.subr.bf16.mxu0 0
      %2154 = vmatpush1.bf16.msra.mxu0 %v2148
      %2155 = vmatprep.subr.bf16.mxu0 0
      %2156 = vmatpush1.bf16.msra.mxu0 0
      %2157 = vmatprep.subr.bf16.mxu0 0
      %2158 = vmatpush1.bf16.msra.mxu0 0
      %2159 = vmatprep.subr.bf16.mxu0 0
      %2160 = vmatpush1.bf16.msra.mxu0 0
      %2161 = vmatprep.subr.bf16.mxu0 0
      %2162 = vmatpush1.bf16.msra.mxu0 0
      %2163 = vmatprep.subr.bf16.mxu0 0
      %2164 = vmatpush1.bf16.msra.mxu0 0
      %2165 = vmatprep.subr.bf16.mxu0 0
      %2166 = vmatpush1.bf16.msra.mxu0 0
      %2167 = vmatprep.subr.bf16.mxu0 0
      %2168 = vmatpush1.bf16.msra.mxu0 0
      %2169 = vmatprep.subr.bf16.mxu0 0
      %2170 = vmatpush1.bf16.msra.mxu0 0
      %2171 = vmatprep.subr.bf16.mxu0 0
      %2172 = vmatpush1.bf16.msra.mxu0 0
      %2173 = vmatprep.subr.bf16.mxu0 0
      %2174 = vmatpush1.bf16.msra.mxu0 0
      %2175 = vmatprep.subr.bf16.mxu0 0
      %2176 = vmatpush1.bf16.msra.mxu0 0
      %2177 = vmatprep.subr.bf16.mxu0 0
      %2178 = vmatpush1.bf16.msra.mxu0 0
      %2179 = vmatprep.subr.bf16.mxu0 0
      %2180 = vmatpush1.bf16.msra.mxu0 0
      %2181 = vmatprep.subr.bf16.mxu0 0
      %2182 = vmatpush1.bf16.msra.mxu0 0
      %2183 = vmatprep.subr.bf16.mxu0 0
      %2184 = vmatpush1.bf16.msra.mxu0 0
      %2185 = vmatprep.mubr.bf16.mxu0 0
      %2186 = vmatmul.mubr.bf16.gmra.mrb[0].mxu0 %v2151
      %v2187 = vpop.f32.mrb[0].mxu0
      %v2188 = vadd.f32 0.0, %v2187
      %v2189 = vpop.f32.mrb[0].mxu0
      %v2190 = vpop.f32.mrb[0].mxu0
      %v2191 = vadd.f32 0.0, %v2190
      %v2192 = vpop.f32.mrb[0].mxu0
      %2193 = vdwg.mxu0
      %v2194 = vpack.c.bf16 %v2191, %v2188
      %v2197 = vunpack.c.l.b16 %v1725
      %v2198 = vunpack.c.l.b16 %v1726
      %v2199 = vpack.c.b16 %v2198, %v2197
      %v2202 = vsel %vm1732, %v2194, 0
      %2204 = vmatprep.subr.bf16.mxu0 0
      %2205 = vmatpush1.bf16.msra.mxu0 %v2199
      %2206 = vmatprep.subr.bf16.mxu0 0
      %2207 = vmatpush1.bf16.msra.mxu0 0
      %2208 = vmatprep.subr.bf16.mxu0 0
      %2209 = vmatpush1.bf16.msra.mxu0 0
      %2210 = vmatprep.subr.bf16.mxu0 0
      %2211 = vmatpush1.bf16.msra.mxu0 0
      %2212 = vmatprep.subr.bf16.mxu0 0
      %2213 = vmatpush1.bf16.msra.mxu0 0
      %2214 = vmatprep.subr.bf16.mxu0 0
      %2215 = vmatpush1.bf16.msra.mxu0 0
      %2216 = vmatprep.subr.bf16.mxu0 0
      %2217 = vmatpush1.bf16.msra.mxu0 0
      %2218 = vmatprep.subr.bf16.mxu0 0
      %2219 = vmatpush1.bf16.msra.mxu0 0
      %2220 = vmatprep.subr.bf16.mxu0 0
      %2221 = vmatpush1.bf16.msra.mxu0 0
      %2222 = vmatprep.subr.bf16.mxu0 0
      %2223 = vmatpush1.bf16.msra.mxu0 0
      %2224 = vmatprep.subr.bf16.mxu0 0
      %2225 = vmatpush1.bf16.msra.mxu0 0
      %2226 = vmatprep.subr.bf16.mxu0 0
      %2227 = vmatpush1.bf16.msra.mxu0 0
      %2228 = vmatprep.subr.bf16.mxu0 0
      %2229 = vmatpush1.bf16.msra.mxu0 0
      %2230 = vmatprep.subr.bf16.mxu0 0
      %2231 = vmatpush1.bf16.msra.mxu0 0
      %2232 = vmatprep.subr.bf16.mxu0 0
      %2233 = vmatpush1.bf16.msra.mxu0 0
      %2234 = vmatprep.subr.bf16.mxu0 0
      %2235 = vmatpush1.bf16.msra.mxu0 0
      %2236 = vmatprep.mubr.bf16.mxu0 0
      %2237 = vmatmul.mubr.bf16.gmra.mrb[0].mxu0 %v2202
      %v2238 = vpop.f32.mrb[0].mxu0
      %v2239 = vadd.f32 0.0, %v2238
      %v2240 = vpop.f32.mrb[0].mxu0
      %v2241 = vpop.f32.mrb[0].mxu0
      %v2242 = vadd.f32 0.0, %v2241
      %v2243 = vpop.f32.mrb[0].mxu0
      %2244 = vdwg.mxu0
      %v2245 = vadd.f32 %v2067, %v2239
      %v2246 = vadd.f32 %v2070, %v2242
      %2247 = vrot.lane.b32.xlu0 %v1729, 80
      %v2248 = vpop.permute.xlu0 %2247
      %2249 = vrot.lane.b32.xlu0 %v1730, 80
      %v2250 = vpop.permute.xlu0 %2249
      %v2252 = vsel %vm1732, %v2248, 0
      %v2255 = vsel %vm1732, %v2250, 0
      %2257 = vmatprep.subr.bf16.mxu0 0
      %2258 = vmatpush1.bf16.xpose.msra.mxu0 %v2255
      %2259 = vmatprep.subr.bf16.mxu0 0
      %2260 = vmatpush1.bf16.xpose.msra.mxu0 0
      %2261 = vmatprep.subr.bf16.mxu0 0
      %2262 = vmatpush1.bf16.xpose.msra.mxu0 0
      %2263 = vmatprep.subr.bf16.mxu0 0
      %2264 = vmatpush1.bf16.xpose.msra.mxu0 0
      %2265 = vmatprep.subr.bf16.mxu0 0
      %2266 = vmatpush1.bf16.xpose.msra.mxu0 0
      %2267 = vmatprep.subr.bf16.mxu0 0
      %2268 = vmatpush1.bf16.xpose.msra.mxu0 0
      %2269 = vmatprep.subr.bf16.mxu0 0
      %2270 = vmatpush1.bf16.xpose.msra.mxu0 0
      %2271 = vmatprep.subr.bf16.mxu0 0
      %2272 = vmatpush1.bf16.xpose.msra.mxu0 0
      %2273 = vmatprep.subr.bf16.mxu0 0
      %2274 = vmatpush1.bf16.xpose.msra.mxu0 0
      %2275 = vmatprep.subr.bf16.mxu0 0
      %2276 = vmatpush1.bf16.xpose.msra.mxu0 0
      %2277 = vmatprep.subr.bf16.mxu0 0
      %2278 = vmatpush1.bf16.xpose.msra.mxu0 0
      %2279 = vmatprep.subr.bf16.mxu0 0
      %2280 = vmatpush1.bf16.xpose.msra.mxu0 0
      %2281 = vmatprep.subr.bf16.mxu0 0
      %2282 = vmatpush1.bf16.xpose.msra.mxu0 0
      %2283 = vmatprep.subr.bf16.mxu0 0
      %2284 = vmatpush1.bf16.xpose.msra.mxu0 0
      %2285 = vmatprep.subr.bf16.mxu0 0
      %2286 = vmatpush1.bf16.xpose.msra.mxu0 0
      %2287 = vmatprep.subr.bf16.mxu0 0
      %2288 = vmatpush1.bf16.xpose.msra.mxu0 0
      %2289 = vmatprep.mubr.bf16.mxu0 0
      %2290 = vmatmul.mubr.bf16.gmra.mrb[0].mxu0 %v2252
      %v2291 = vpop.f32.mrb[0].mxu0
      %v2292 = vadd.f32 0.0, %v2291
      %v2293 = vpop.f32.mrb[0].mxu0
      %v2294 = vpop.f32.mrb[0].mxu0
      %v2295 = vadd.f32 0.0, %v2294
      %v2296 = vpop.f32.mrb[0].mxu0
      %2297 = vdwg.mxu0
      %v2298 = vsel %vm1732, %v2292, -inf
      %2299 = vmax.xlane.f32.xlu0 %v2298
      %v2300 = vpop.xlane.xlu0 %2299
      %v2301 = vsel %vm1732, %v2295, -inf
      %2302 = vmax.xlane.f32.xlu0 %v2301
      %v2303 = vpop.xlane.xlu0 %2302
      %v2304 = vsub.f32 %v2292, %v2300
      %v2305 = vsub.f32 %v2295, %v2303
      %v2306 = vmul.f32 %v2304, 1.442695
      %v2307 = vpow.pop %v2306
      %v2308 = vmul.f32 %v2305, 1.442695
      %v2309 = vpow.pop %v2308
      %v2310 = vsel %vm1732, %v2307, 0.0
      %2311 = vadd.xlane.f32.xlu0 %v2310
      %v2312 = vpop.xlane.xlu0 %2311
      %v2313 = vsel %vm1732, %v2309, 0.0
      %2314 = vadd.xlane.f32.xlu0 %v2313
      %v2315 = vpop.xlane.xlu0 %2314
      %v2316 = vrcp.pop %v2312
      %v2317 = vrcp.pop %v2315
      %v2318 = vmul.f32 %v2307, %v2316
      %v2319 = vmul.f32 %v2309, %v2317
      %v2320 = vpack.c.bf16 %v2319, %v2318
      %2321 = vrot.lane.b32.xlu0 %v1731, 80
      %v2322 = vpop.permute.xlu0 %2321
      %v2325 = vsel %vm1732, %v2320, 0
      %2327 = vmatprep.subr.bf16.mxu0 0
      %2328 = vmatpush1.bf16.msra.mxu0 %v2322
      %2329 = vmatprep.subr.bf16.mxu0 0
      %2330 = vmatpush1.bf16.msra.mxu0 0
      %2331 = vmatprep.subr.bf16.mxu0 0
      %2332 = vmatpush1.bf16.msra.mxu0 0
      %2333 = vmatprep.subr.bf16.mxu0 0
      %2334 = vmatpush1.bf16.msra.mxu0 0
      %2335 = vmatprep.subr.bf16.mxu0 0
      %2336 = vmatpush1.bf16.msra.mxu0 0
      %2337 = vmatprep.subr.bf16.mxu0 0
      %2338 = vmatpush1.bf16.msra.mxu0 0
      %2339 = vmatprep.subr.bf16.mxu0 0
      %2340 = vmatpush1.bf16.msra.mxu0 0
      %2341 = vmatprep.subr.bf16.mxu0 0
      %2342 = vmatpush1.bf16.msra.mxu0 0
      %2343 = vmatprep.subr.bf16.mxu0 0
      %2344 = vmatpush1.bf16.msra.mxu0 0
      %2345 = vmatprep.subr.bf16.mxu0 0
      %2346 = vmatpush1.bf16.msra.mxu0 0
      %2347 = vmatprep.subr.bf16.mxu0 0
      %2348 = vmatpush1.bf16.msra.mxu0 0
      %2349 = vmatprep.subr.bf16.mxu0 0
      %2350 = vmatpush1.bf16.msra.mxu0 0
      %2351 = vmatprep.subr.bf16.mxu0 0
      %2352 = vmatpush1.bf16.msra.mxu0 0
      %2353 = vmatprep.subr.bf16.mxu0 0
      %2354 = vmatpush1.bf16.msra.mxu0 0
      %2355 = vmatprep.subr.bf16.mxu0 0
      %2356 = vmatpush1.bf16.msra.mxu0 0
      %2357 = vmatprep.subr.bf16.mxu0 0
      %2358 = vmatpush1.bf16.msra.mxu0 0
      %2359 = vmatprep.mubr.bf16.mxu0 0
      %2360 = vmatmul.mubr.bf16.gmra.mrb[0].mxu0 %v2325
      %v2361 = vpop.f32.mrb[0].mxu0
      %v2362 = vadd.f32 0.0, %v2361
      %v2363 = vpop.f32.mrb[0].mxu0
      %v2364 = vpop.f32.mrb[0].mxu0
      %v2365 = vadd.f32 0.0, %v2364
      %v2366 = vpop.f32.mrb[0].mxu0
      %2367 = vdwg.mxu0
      %v2368 = vpack.c.bf16 %v2365, %v2362
      %v2371 = vunpack.c.l.b16 %v1727
      %v2372 = vunpack.c.l.b16 %v1728
      %v2373 = vpack.c.b16 %v2372, %v2371
      %v2376 = vsel %vm1732, %v2368, 0
      %2378 = vmatprep.subr.bf16.mxu0 0
      %2379 = vmatpush1.bf16.msra.mxu0 %v2373
      %2380 = vmatprep.subr.bf16.mxu0 0
      %2381 = vmatpush1.bf16.msra.mxu0 0
      %2382 = vmatprep.subr.bf16.mxu0 0
      %2383 = vmatpush1.bf16.msra.mxu0 0
      %2384 = vmatprep.subr.bf16.mxu0 0
      %2385 = vmatpush1.bf16.msra.mxu0 0
      %2386 = vmatprep.subr.bf16.mxu0 0
      %2387 = vmatpush1.bf16.msra.mxu0 0
      %2388 = vmatprep.subr.bf16.mxu0 0
      %2389 = vmatpush1.bf16.msra.mxu0 0
      %2390 = vmatprep.subr.bf16.mxu0 0
      %2391 = vmatpush1.bf16.msra.mxu0 0
      %2392 = vmatprep.subr.bf16.mxu0 0
      %2393 = vmatpush1.bf16.msra.mxu0 0
      %2394 = vmatprep.subr.bf16.mxu0 0
      %2395 = vmatpush1.bf16.msra.mxu0 0
      %2396 = vmatprep.subr.bf16.mxu0 0
      %2397 = vmatpush1.bf16.msra.mxu0 0
      %2398 = vmatprep.subr.bf16.mxu0 0
      %2399 = vmatpush1.bf16.msra.mxu0 0
      %2400 = vmatprep.subr.bf16.mxu0 0
      %2401 = vmatpush1.bf16.msra.mxu0 0
      %2402 = vmatprep.subr.bf16.mxu0 0
      %2403 = vmatpush1.bf16.msra.mxu0 0
      %2404 = vmatprep.subr.bf16.mxu0 0
      %2405 = vmatpush1.bf16.msra.mxu0 0
      %2406 = vmatprep.subr.bf16.mxu0 0
      %2407 = vmatpush1.bf16.msra.mxu0 0
      %2408 = vmatprep.subr.bf16.mxu0 0
      %2409 = vmatpush1.bf16.msra.mxu0 0
      %2410 = vmatprep.mubr.bf16.mxu0 0
      %2411 = vmatmul.mubr.bf16.gmra.mrb[0].mxu0 %v2376
      %v2412 = vpop.f32.mrb[0].mxu0
      %v2413 = vadd.f32 0.0, %v2412
      %v2414 = vpop.f32.mrb[0].mxu0
      %v2415 = vpop.f32.mrb[0].mxu0
      %v2416 = vadd.f32 0.0, %v2415
      %v2417 = vpop.f32.mrb[0].mxu0
      %2418 = vdwg.mxu0
      %v2419 = vadd.f32 %v2245, %v2413
      %v2420 = vadd.f32 %v2246, %v2416
      %v2421 = vpack.c.bf16 %v1435, %v1434
      %v2422 = vpack.c.bf16 %v1632, %v1631
      %v2423 = vpack.c.bf16 %v1718, %v1715
      %v2425 = vsel %vm1732, %v2421, 0
      %v2428 = vsel %vm1732, %v2422, 0
      %2430 = vmatprep.subr.bf16.mxu0 0
      %2431 = vmatpush1.bf16.xpose.msra.mxu0 %v2428
      %2432 = vmatprep.subr.bf16.mxu0 0
      %2433 = vmatpush1.bf16.xpose.msra.mxu0 0
      %2434 = vmatprep.subr.bf16.mxu0 0
      %2435 = vmatpush1.bf16.xpose.msra.mxu0 0
      %2436 = vmatprep.subr.bf16.mxu0 0
      %2437 = vmatpush1.bf16.xpose.msra.mxu0 0
      %2438 = vmatprep.subr.bf16.mxu0 0
      %2439 = vmatpush1.bf16.xpose.msra.mxu0 0
      %2440 = vmatprep.subr.bf16.mxu0 0
      %2441 = vmatpush1.bf16.xpose.msra.mxu0 0
      %2442 = vmatprep.subr.bf16.mxu0 0
      %2443 = vmatpush1.bf16.xpose.msra.mxu0 0
      %2444 = vmatprep.subr.bf16.mxu0 0
      %2445 = vmatpush1.bf16.xpose.msra.mxu0 0
      %2446 = vmatprep.subr.bf16.mxu0 0
      %2447 = vmatpush1.bf16.xpose.msra.mxu0 0
      %2448 = vmatprep.subr.bf16.mxu0 0
      %2449 = vmatpush1.bf16.xpose.msra.mxu0 0
      %2450 = vmatprep.subr.bf16.mxu0 0
      %2451 = vmatpush1.bf16.xpose.msra.mxu0 0
      %2452 = vmatprep.subr.bf16.mxu0 0
      %2453 = vmatpush1.bf16.xpose.msra.mxu0 0
      %2454 = vmatprep.subr.bf16.mxu0 0
      %2455 = vmatpush1.bf16.xpose.msra.mxu0 0
      %2456 = vmatprep.subr.bf16.mxu0 0
      %2457 = vmatpush1.bf16.xpose.msra.mxu0 0
      %2458 = vmatprep.subr.bf16.mxu0 0
      %2459 = vmatpush1.bf16.xpose.msra.mxu0 0
      %2460 = vmatprep.subr.bf16.mxu0 0
      %2461 = vmatpush1.bf16.xpose.msra.mxu0 0
      %2462 = vmatprep.mubr.bf16.mxu0 0
      %2463 = vmatmul.mubr.bf16.gmra.mrb[0].mxu0 %v2425
      %v2464 = vpop.f32.mrb[0].mxu0
      %v2465 = vadd.f32 0.0, %v2464
      %v2466 = vpop.f32.mrb[0].mxu0
      %v2467 = vpop.f32.mrb[0].mxu0
      %v2468 = vadd.f32 0.0, %v2467
      %v2469 = vpop.f32.mrb[0].mxu0
      %2470 = vdwg.mxu0
      %v2471 = vsel %vm1732, %v2465, -inf
      %2472 = vmax.xlane.f32.xlu0 %v2471
      %v2473 = vpop.xlane.xlu0 %2472
      %v2474 = vsel %vm1732, %v2468, -inf
      %2475 = vmax.xlane.f32.xlu0 %v2474
      %v2476 = vpop.xlane.xlu0 %2475
      %v2477 = vsub.f32 %v2465, %v2473
      %v2478 = vsub.f32 %v2468, %v2476
      %v2479 = vmul.f32 %v2477, 1.442695
      %v2480 = vpow.pop %v2479
      %v2481 = vmul.f32 %v2478, 1.442695
      %v2482 = vpow.pop %v2481
      %v2483 = vsel %vm1732, %v2480, 0.0
      %2484 = vadd.xlane.f32.xlu0 %v2483
      %v2485 = vpop.xlane.xlu0 %2484
      %v2486 = vsel %vm1732, %v2482, 0.0
      %2487 = vadd.xlane.f32.xlu0 %v2486
      %v2488 = vpop.xlane.xlu0 %2487
      %v2489 = vrcp.pop %v2485
      %v2490 = vrcp.pop %v2488
      %v2491 = vmul.f32 %v2480, %v2489
      %v2492 = vmul.f32 %v2482, %v2490
      %v2493 = vpack.c.bf16 %v2492, %v2491
      %v2495 = vsel %vm1732, %v2493, 0
      %2497 = vmatprep.subr.bf16.mxu0 0
      %2498 = vmatpush1.bf16.msra.mxu0 %v2423
      %2499 = vmatprep.subr.bf16.mxu0 0
      %2500 = vmatpush1.bf16.msra.mxu0 0
      %2501 = vmatprep.subr.bf16.mxu0 0
      %2502 = vmatpush1.bf16.msra.mxu0 0
      %2503 = vmatprep.subr.bf16.mxu0 0
      %2504 = vmatpush1.bf16.msra.mxu0 0
      %2505 = vmatprep.subr.bf16.mxu0 0
      %2506 = vmatpush1.bf16.msra.mxu0 0
      %2507 = vmatprep.subr.bf16.mxu0 0
      %2508 = vmatpush1.bf16.msra.mxu0 0
      %2509 = vmatprep.subr.bf16.mxu0 0
      %2510 = vmatpush1.bf16.msra.mxu0 0
      %2511 = vmatprep.subr.bf16.mxu0 0
      %2512 = vmatpush1.bf16.msra.mxu0 0
      %2513 = vmatprep.subr.bf16.mxu0 0
      %2514 = vmatpush1.bf16.msra.mxu0 0
      %2515 = vmatprep.subr.bf16.mxu0 0
      %2516 = vmatpush1.bf16.msra.mxu0 0
      %2517 = vmatprep.subr.bf16.mxu0 0
      %2518 = vmatpush1.bf16.msra.mxu0 0
      %2519 = vmatprep.subr.bf16.mxu0 0
      %2520 = vmatpush1.bf16.msra.mxu0 0
      %2521 = vmatprep.subr.bf16.mxu0 0
      %2522 = vmatpush1.bf16.msra.mxu0 0
      %2523 = vmatprep.subr.bf16.mxu0 0
      %2524 = vmatpush1.bf16.msra.mxu0 0
      %2525 = vmatprep.subr.bf16.mxu0 0
      %2526 = vmatpush1.bf16.msra.mxu0 0
      %2527 = vmatprep.subr.bf16.mxu0 0
      %2528 = vmatpush1.bf16.msra.mxu0 0
      %2529 = vmatprep.mubr.bf16.mxu0 0
      %2530 = vmatmul.mubr.bf16.gmra.mrb[0].mxu0 %v2495
      %v2531 = vpop.f32.mrb[0].mxu0
      %v2532 = vadd.f32 0.0, %v2531
      %v2533 = vpop.f32.mrb[0].mxu0
      %v2534 = vpop.f32.mrb[0].mxu0
      %v2535 = vadd.f32 0.0, %v2534
      %v2536 = vpop.f32.mrb[0].mxu0
      %2537 = vdwg.mxu0
      %v2538 = vpack.c.bf16 %v2535, %v2532
      %2540 = vrot.lane.b32.xlu0 %v2421, 112
      %v2541 = vpop.permute.xlu0 %2540
      %2543 = vrot.lane.b32.xlu0 %v2422, 112
      %v2544 = vpop.permute.xlu0 %2543
      %v2546 = vsel %vm1732, %v2541, 0
      %v2549 = vsel %vm1732, %v2544, 0
      %2551 = vmatprep.subr.bf16.mxu0 0
      %2552 = vmatpush1.bf16.xpose.msra.mxu0 %v2549
      %2553 = vmatprep.subr.bf16.mxu0 0
      %2554 = vmatpush1.bf16.xpose.msra.mxu0 0
      %2555 = vmatprep.subr.bf16.mxu0 0
      %2556 = vmatpush1.bf16.xpose.msra.mxu0 0
      %2557 = vmatprep.subr.bf16.mxu0 0
      %2558 = vmatpush1.bf16.xpose.msra.mxu0 0
      %2559 = vmatprep.subr.bf16.mxu0 0
      %2560 = vmatpush1.bf16.xpose.msra.mxu0 0
      %2561 = vmatprep.subr.bf16.mxu0 0
      %2562 = vmatpush1.bf16.xpose.msra.mxu0 0
      %2563 = vmatprep.subr.bf16.mxu0 0
      %2564 = vmatpush1.bf16.xpose.msra.mxu0 0
      %2565 = vmatprep.subr.bf16.mxu0 0
      %2566 = vmatpush1.bf16.xpose.msra.mxu0 0
      %2567 = vmatprep.subr.bf16.mxu0 0
      %2568 = vmatpush1.bf16.xpose.msra.mxu0 0
      %2569 = vmatprep.subr.bf16.mxu0 0
      %2570 = vmatpush1.bf16.xpose.msra.mxu0 0
      %2571 = vmatprep.subr.bf16.mxu0 0
      %2572 = vmatpush1.bf16.xpose.msra.mxu0 0
      %2573 = vmatprep.subr.bf16.mxu0 0
      %2574 = vmatpush1.bf16.xpose.msra.mxu0 0
      %2575 = vmatprep.subr.bf16.mxu0 0
      %2576 = vmatpush1.bf16.xpose.msra.mxu0 0
      %2577 = vmatprep.subr.bf16.mxu0 0
      %2578 = vmatpush1.bf16.xpose.msra.mxu0 0
      %2579 = vmatprep.subr.bf16.mxu0 0
      %2580 = vmatpush1.bf16.xpose.msra.mxu0 0
      %2581 = vmatprep.subr.bf16.mxu0 0
      %2582 = vmatpush1.bf16.xpose.msra.mxu0 0
      %2583 = vmatprep.mubr.bf16.mxu0 0
      %2584 = vmatmul.mubr.bf16.gmra.mrb[0].mxu0 %v2546
      %v2585 = vpop.f32.mrb[0].mxu0
      %v2586 = vadd.f32 0.0, %v2585
      %v2587 = vpop.f32.mrb[0].mxu0
      %v2588 = vpop.f32.mrb[0].mxu0
      %v2589 = vadd.f32 0.0, %v2588
      %v2590 = vpop.f32.mrb[0].mxu0
      %2591 = vdwg.mxu0
      %v2592 = vsel %vm1732, %v2586, -inf
      %2593 = vmax.xlane.f32.xlu0 %v2592
      %v2594 = vpop.xlane.xlu0 %2593
      %v2595 = vsel %vm1732, %v2589, -inf
      %2596 = vmax.xlane.f32.xlu0 %v2595
      %v2597 = vpop.xlane.xlu0 %2596
      %v2598 = vsub.f32 %v2586, %v2594
      %v2599 = vsub.f32 %v2589, %v2597
      %v2600 = vmul.f32 %v2598, 1.442695
      %v2601 = vpow.pop %v2600
      %v2602 = vmul.f32 %v2599, 1.442695
      %v2603 = vpow.pop %v2602
      %v2604 = vsel %vm1732, %v2601, 0.0
      %2605 = vadd.xlane.f32.xlu0 %v2604
      %v2606 = vpop.xlane.xlu0 %2605
      %v2607 = vsel %vm1732, %v2603, 0.0
      %2608 = vadd.xlane.f32.xlu0 %v2607
      %v2609 = vpop.xlane.xlu0 %2608
      %v2610 = vrcp.pop %v2606
      %v2611 = vrcp.pop %v2609
      %v2612 = vmul.f32 %v2601, %v2610
      %v2613 = vmul.f32 %v2603, %v2611
      %v2614 = vpack.c.bf16 %v2613, %v2612
      %2616 = vrot.lane.b32.xlu0 %v2423, 112
      %v2617 = vpop.permute.xlu0 %2616
      %v2620 = vsel %vm1732, %v2614, 0
      %2622 = vmatprep.subr.bf16.mxu0 0
      %2623 = vmatpush1.bf16.msra.mxu0 %v2617
      %2624 = vmatprep.subr.bf16.mxu0 0
      %2625 = vmatpush1.bf16.msra.mxu0 0
      %2626 = vmatprep.subr.bf16.mxu0 0
      %2627 = vmatpush1.bf16.msra.mxu0 0
      %2628 = vmatprep.subr.bf16.mxu0 0
      %2629 = vmatpush1.bf16.msra.mxu0 0
      %2630 = vmatprep.subr.bf16.mxu0 0
      %2631 = vmatpush1.bf16.msra.mxu0 0
      %2632 = vmatprep.subr.bf16.mxu0 0
      %2633 = vmatpush1.bf16.msra.mxu0 0
      %2634 = vmatprep.subr.bf16.mxu0 0
      %2635 = vmatpush1.bf16.msra.mxu0 0
      %2636 = vmatprep.subr.bf16.mxu0 0
      %2637 = vmatpush1.bf16.msra.mxu0 0
      %2638 = vmatprep.subr.bf16.mxu0 0
      %2639 = vmatpush1.bf16.msra.mxu0 0
      %2640 = vmatprep.subr.bf16.mxu0 0
      %2641 = vmatpush1.bf16.msra.mxu0 0
      %2642 = vmatprep.subr.bf16.mxu0 0
      %2643 = vmatpush1.bf16.msra.mxu0 0
      %2644 = vmatprep.subr.bf16.mxu0 0
      %2645 = vmatpush1.bf16.msra.mxu0 0
      %2646 = vmatprep.subr.bf16.mxu0 0
      %2647 = vmatpush1.bf16.msra.mxu0 0
      %2648 = vmatprep.subr.bf16.mxu0 0
      %2649 = vmatpush1.bf16.msra.mxu0 0
      %2650 = vmatprep.subr.bf16.mxu0 0
      %2651 = vmatpush1.bf16.msra.mxu0 0
      %2652 = vmatprep.subr.bf16.mxu0 0
      %2653 = vmatpush1.bf16.msra.mxu0 0
      %2654 = vmatprep.mubr.bf16.mxu0 0
      %2655 = vmatmul.mubr.bf16.gmra.mrb[0].mxu0 %v2620
      %v2656 = vpop.f32.mrb[0].mxu0
      %v2657 = vadd.f32 0.0, %v2656
      %v2658 = vpop.f32.mrb[0].mxu0
      %v2659 = vpop.f32.mrb[0].mxu0
      %v2660 = vadd.f32 0.0, %v2659
      %v2661 = vpop.f32.mrb[0].mxu0
      %2662 = vdwg.mxu0
      %v2663 = vpack.c.bf16 %v2660, %v2657
      %v2665 = vsel %vm1732, %v2663, 0
      %2667 = vmatprep.subr.bf16.mxu0 0
      %2668 = vmatpush1.bf16.msra.mxu0 %v1977
      %2669 = vmatprep.subr.bf16.mxu0 0
      %2670 = vmatpush1.bf16.msra.mxu0 0
      %2671 = vmatprep.subr.bf16.mxu0 0
      %2672 = vmatpush1.bf16.msra.mxu0 0
      %2673 = vmatprep.subr.bf16.mxu0 0
      %2674 = vmatpush1.bf16.msra.mxu0 0
      %2675 = vmatprep.subr.bf16.mxu0 0
      %2676 = vmatpush1.bf16.msra.mxu0 0
      %2677 = vmatprep.subr.bf16.mxu0 0
      %2678 = vmatpush1.bf16.msra.mxu0 0
      %2679 = vmatprep.subr.bf16.mxu0 0
      %2680 = vmatpush1.bf16.msra.mxu0 0
      %2681 = vmatprep.subr.bf16.mxu0 0
      %2682 = vmatpush1.bf16.msra.mxu0 0
      %2683 = vmatprep.subr.bf16.mxu0 0
      %2684 = vmatpush1.bf16.msra.mxu0 0
      %2685 = vmatprep.subr.bf16.mxu0 0
      %2686 = vmatpush1.bf16.msra.mxu0 0
      %2687 = vmatprep.subr.bf16.mxu0 0
      %2688 = vmatpush1.bf16.msra.mxu0 0
      %2689 = vmatprep.subr.bf16.mxu0 0
      %2690 = vmatpush1.bf16.msra.mxu0 0
      %2691 = vmatprep.subr.bf16.mxu0 0
      %2692 = vmatpush1.bf16.msra.mxu0 0
      %2693 = vmatprep.subr.bf16.mxu0 0
      %2694 = vmatpush1.bf16.msra.mxu0 0
      %2695 = vmatprep.subr.bf16.mxu0 0
      %2696 = vmatpush1.bf16.msra.mxu0 0
      %2697 = vmatprep.subr.bf16.mxu0 0
      %2698 = vmatpush1.bf16.msra.mxu0 0
      %2699 = vmatprep.mubr.bf16.mxu0 0
      %2700 = vmatmul.mubr.bf16.gmra.mrb[0].mxu0 %v2665
      %v2701 = vpop.f32.mrb[0].mxu0
      %v2702 = vadd.f32 0.0, %v2701
      %v2703 = vpop.f32.mrb[0].mxu0
      %v2704 = vpop.f32.mrb[0].mxu0
      %v2705 = vadd.f32 0.0, %v2704
      %v2706 = vpop.f32.mrb[0].mxu0
      %2707 = vdwg.mxu0
      %v2709 = vsel %vm1732, %v2538, 0
      %2711 = vmatprep.subr.bf16.mxu0 0
      %2712 = vmatpush1.bf16.msra.mxu0 %v2027
      %2713 = vmatprep.subr.bf16.mxu0 0
      %2714 = vmatpush1.bf16.msra.mxu0 0
      %2715 = vmatprep.subr.bf16.mxu0 0
      %2716 = vmatpush1.bf16.msra.mxu0 0
      %2717 = vmatprep.subr.bf16.mxu0 0
      %2718 = vmatpush1.bf16.msra.mxu0 0
      %2719 = vmatprep.subr.bf16.mxu0 0
      %2720 = vmatpush1.bf16.msra.mxu0 0
      %2721 = vmatprep.subr.bf16.mxu0 0
      %2722 = vmatpush1.bf16.msra.mxu0 0
      %2723 = vmatprep.subr.bf16.mxu0 0
      %2724 = vmatpush1.bf16.msra.mxu0 0
      %2725 = vmatprep.subr.bf16.mxu0 0
      %2726 = vmatpush1.bf16.msra.mxu0 0
      %2727 = vmatprep.subr.bf16.mxu0 0
      %2728 = vmatpush1.bf16.msra.mxu0 0
      %2729 = vmatprep.subr.bf16.mxu0 0
      %2730 = vmatpush1.bf16.msra.mxu0 0
      %2731 = vmatprep.subr.bf16.mxu0 0
      %2732 = vmatpush1.bf16.msra.mxu0 0
      %2733 = vmatprep.subr.bf16.mxu0 0
      %2734 = vmatpush1.bf16.msra.mxu0 0
      %2735 = vmatprep.subr.bf16.mxu0 0
      %2736 = vmatpush1.bf16.msra.mxu0 0
      %2737 = vmatprep.subr.bf16.mxu0 0
      %2738 = vmatpush1.bf16.msra.mxu0 0
      %2739 = vmatprep.subr.bf16.mxu0 0
      %2740 = vmatpush1.bf16.msra.mxu0 0
      %2741 = vmatprep.subr.bf16.mxu0 0
      %2742 = vmatpush1.bf16.msra.mxu0 0
      %2743 = vmatprep.mubr.bf16.mxu0 0
      %2744 = vmatmul.mubr.bf16.gmra.mrb[0].mxu0 %v2709
      %v2745 = vpop.f32.mrb[0].mxu0
      %v2746 = vadd.f32 %v2702, %v2745
      %v2747 = vpop.f32.mrb[0].mxu0
      %v2748 = vpop.f32.mrb[0].mxu0
      %v2749 = vadd.f32 %v2705, %v2748
      %v2750 = vpop.f32.mrb[0].mxu0
      %2751 = vdwg.mxu0
      %2752 = vrot.lane.b32.xlu0 %v2421, 96
      %v2753 = vpop.permute.xlu0 %2752
      %2754 = vrot.lane.b32.xlu0 %v2422, 96
      %v2755 = vpop.permute.xlu0 %2754
      %v2757 = vsel %vm1732, %v2753, 0
      %v2760 = vsel %vm1732, %v2755, 0
      %2762 = vmatprep.subr.bf16.mxu0 0
      %2763 = vmatpush1.bf16.xpose.msra.mxu0 %v2760
      %2764 = vmatprep.subr.bf16.mxu0 0
      %2765 = vmatpush1.bf16.xpose.msra.mxu0 0
      %2766 = vmatprep.subr.bf16.mxu0 0
      %2767 = vmatpush1.bf16.xpose.msra.mxu0 0
      %2768 = vmatprep.subr.bf16.mxu0 0
      %2769 = vmatpush1.bf16.xpose.msra.mxu0 0
      %2770 = vmatprep.subr.bf16.mxu0 0
      %2771 = vmatpush1.bf16.xpose.msra.mxu0 0
      %2772 = vmatprep.subr.bf16.mxu0 0
      %2773 = vmatpush1.bf16.xpose.msra.mxu0 0
      %2774 = vmatprep.subr.bf16.mxu0 0
      %2775 = vmatpush1.bf16.xpose.msra.mxu0 0
      %2776 = vmatprep.subr.bf16.mxu0 0
      %2777 = vmatpush1.bf16.xpose.msra.mxu0 0
      %2778 = vmatprep.subr.bf16.mxu0 0
      %2779 = vmatpush1.bf16.xpose.msra.mxu0 0
      %2780 = vmatprep.subr.bf16.mxu0 0
      %2781 = vmatpush1.bf16.xpose.msra.mxu0 0
      %2782 = vmatprep.subr.bf16.mxu0 0
      %2783 = vmatpush1.bf16.xpose.msra.mxu0 0
      %2784 = vmatprep.subr.bf16.mxu0 0
      %2785 = vmatpush1.bf16.xpose.msra.mxu0 0
      %2786 = vmatprep.subr.bf16.mxu0 0
      %2787 = vmatpush1.bf16.xpose.msra.mxu0 0
      %2788 = vmatprep.subr.bf16.mxu0 0
      %2789 = vmatpush1.bf16.xpose.msra.mxu0 0
      %2790 = vmatprep.subr.bf16.mxu0 0
      %2791 = vmatpush1.bf16.xpose.msra.mxu0 0
      %2792 = vmatprep.subr.bf16.mxu0 0
      %2793 = vmatpush1.bf16.xpose.msra.mxu0 0
      %2794 = vmatprep.mubr.bf16.mxu0 0
      %2795 = vmatmul.mubr.bf16.gmra.mrb[0].mxu0 %v2757
      %v2796 = vpop.f32.mrb[0].mxu0
      %v2797 = vadd.f32 0.0, %v2796
      %v2798 = vpop.f32.mrb[0].mxu0
      %v2799 = vpop.f32.mrb[0].mxu0
      %v2800 = vadd.f32 0.0, %v2799
      %v2801 = vpop.f32.mrb[0].mxu0
      %2802 = vdwg.mxu0
      %v2803 = vsel %vm1732, %v2797, -inf
      %2804 = vmax.xlane.f32.xlu0 %v2803
      %v2805 = vpop.xlane.xlu0 %2804
      %v2806 = vsel %vm1732, %v2800, -inf
      %2807 = vmax.xlane.f32.xlu0 %v2806
      %v2808 = vpop.xlane.xlu0 %2807
      %v2809 = vsub.f32 %v2797, %v2805
      %v2810 = vsub.f32 %v2800, %v2808
      %v2811 = vmul.f32 %v2809, 1.442695
      %v2812 = vpow.pop %v2811
      %v2813 = vmul.f32 %v2810, 1.442695
      %v2814 = vpow.pop %v2813
      %v2815 = vsel %vm1732, %v2812, 0.0
      %2816 = vadd.xlane.f32.xlu0 %v2815
      %v2817 = vpop.xlane.xlu0 %2816
      %v2818 = vsel %vm1732, %v2814, 0.0
      %2819 = vadd.xlane.f32.xlu0 %v2818
      %v2820 = vpop.xlane.xlu0 %2819
      %v2821 = vrcp.pop %v2817
      %v2822 = vrcp.pop %v2820
      %v2823 = vmul.f32 %v2812, %v2821
      %v2824 = vmul.f32 %v2814, %v2822
      %v2825 = vpack.c.bf16 %v2824, %v2823
      %2826 = vrot.lane.b32.xlu0 %v2423, 96
      %v2827 = vpop.permute.xlu0 %2826
      %v2830 = vsel %vm1732, %v2825, 0
      %2832 = vmatprep.subr.bf16.mxu0 0
      %2833 = vmatpush1.bf16.msra.mxu0 %v2827
      %2834 = vmatprep.subr.bf16.mxu0 0
      %2835 = vmatpush1.bf16.msra.mxu0 0
      %2836 = vmatprep.subr.bf16.mxu0 0
      %2837 = vmatpush1.bf16.msra.mxu0 0
      %2838 = vmatprep.subr.bf16.mxu0 0
      %2839 = vmatpush1.bf16.msra.mxu0 0
      %2840 = vmatprep.subr.bf16.mxu0 0
      %2841 = vmatpush1.bf16.msra.mxu0 0
      %2842 = vmatprep.subr.bf16.mxu0 0
      %2843 = vmatpush1.bf16.msra.mxu0 0
      %2844 = vmatprep.subr.bf16.mxu0 0
      %2845 = vmatpush1.bf16.msra.mxu0 0
      %2846 = vmatprep.subr.bf16.mxu0 0
      %2847 = vmatpush1.bf16.msra.mxu0 0
      %2848 = vmatprep.subr.bf16.mxu0 0
      %2849 = vmatpush1.bf16.msra.mxu0 0
      %2850 = vmatprep.subr.bf16.mxu0 0
      %2851 = vmatpush1.bf16.msra.mxu0 0
      %2852 = vmatprep.subr.bf16.mxu0 0
      %2853 = vmatpush1.bf16.msra.mxu0 0
      %2854 = vmatprep.subr.bf16.mxu0 0
      %2855 = vmatpush1.bf16.msra.mxu0 0
      %2856 = vmatprep.subr.bf16.mxu0 0
      %2857 = vmatpush1.bf16.msra.mxu0 0
      %2858 = vmatprep.subr.bf16.mxu0 0
      %2859 = vmatpush1.bf16.msra.mxu0 0
      %2860 = vmatprep.subr.bf16.mxu0 0
      %2861 = vmatpush1.bf16.msra.mxu0 0
      %2862 = vmatprep.subr.bf16.mxu0 0
      %2863 = vmatpush1.bf16.msra.mxu0 0
      %2864 = vmatprep.mubr.bf16.mxu0 0
      %2865 = vmatmul.mubr.bf16.gmra.mrb[0].mxu0 %v2830
      %v2866 = vpop.f32.mrb[0].mxu0
      %v2867 = vadd.f32 0.0, %v2866
      %v2868 = vpop.f32.mrb[0].mxu0
      %v2869 = vpop.f32.mrb[0].mxu0
      %v2870 = vadd.f32 0.0, %v2869
      %v2871 = vpop.f32.mrb[0].mxu0
      %2872 = vdwg.mxu0
      %v2873 = vpack.c.bf16 %v2870, %v2867
      %v2875 = vsel %vm1732, %v2873, 0
      %2877 = vmatprep.subr.bf16.mxu0 0
      %2878 = vmatpush1.bf16.msra.mxu0 %v2199
      %2879 = vmatprep.subr.bf16.mxu0 0
      %2880 = vmatpush1.bf16.msra.mxu0 0
      %2881 = vmatprep.subr.bf16.mxu0 0
      %2882 = vmatpush1.bf16.msra.mxu0 0
      %2883 = vmatprep.subr.bf16.mxu0 0
      %2884 = vmatpush1.bf16.msra.mxu0 0
      %2885 = vmatprep.subr.bf16.mxu0 0
      %2886 = vmatpush1.bf16.msra.mxu0 0
      %2887 = vmatprep.subr.bf16.mxu0 0
      %2888 = vmatpush1.bf16.msra.mxu0 0
      %2889 = vmatprep.subr.bf16.mxu0 0
      %2890 = vmatpush1.bf16.msra.mxu0 0
      %2891 = vmatprep.subr.bf16.mxu0 0
      %2892 = vmatpush1.bf16.msra.mxu0 0
      %2893 = vmatprep.subr.bf16.mxu0 0
      %2894 = vmatpush1.bf16.msra.mxu0 0
      %2895 = vmatprep.subr.bf16.mxu0 0
      %2896 = vmatpush1.bf16.msra.mxu0 0
      %2897 = vmatprep.subr.bf16.mxu0 0
      %2898 = vmatpush1.bf16.msra.mxu0 0
      %2899 = vmatprep.subr.bf16.mxu0 0
      %2900 = vmatpush1.bf16.msra.mxu0 0
      %2901 = vmatprep.subr.bf16.mxu0 0
      %2902 = vmatpush1.bf16.msra.mxu0 0
      %2903 = vmatprep.subr.bf16.mxu0 0
      %2904 = vmatpush1.bf16.msra.mxu0 0
      %2905 = vmatprep.subr.bf16.mxu0 0
      %2906 = vmatpush1.bf16.msra.mxu0 0
      %2907 = vmatprep.subr.bf16.mxu0 0
      %2908 = vmatpush1.bf16.msra.mxu0 0
      %2909 = vmatprep.mubr.bf16.mxu0 0
      %2910 = vmatmul.mubr.bf16.gmra.mrb[0].mxu0 %v2875
      %v2911 = vpop.f32.mrb[0].mxu0
      %v2912 = vadd.f32 0.0, %v2911
      %v2913 = vpop.f32.mrb[0].mxu0
      %v2914 = vpop.f32.mrb[0].mxu0
      %v2915 = vadd.f32 0.0, %v2914
      %v2916 = vpop.f32.mrb[0].mxu0
      %2917 = vdwg.mxu0
      %v2918 = vadd.f32 %v2746, %v2912
      %v2919 = vadd.f32 %v2749, %v2915
      %2920 = vrot.lane.b32.xlu0 %v2421, 80
      %v2921 = vpop.permute.xlu0 %2920
      %2922 = vrot.lane.b32.xlu0 %v2422, 80
      %v2923 = vpop.permute.xlu0 %2922
      %v2925 = vsel %vm1732, %v2921, 0
      %v2928 = vsel %vm1732, %v2923, 0
      %2930 = vmatprep.subr.bf16.mxu0 0
      %2931 = vmatpush1.bf16.xpose.msra.mxu0 %v2928
      %2932 = vmatprep.subr.bf16.mxu0 0
      %2933 = vmatpush1.bf16.xpose.msra.mxu0 0
      %2934 = vmatprep.subr.bf16.mxu0 0
      %2935 = vmatpush1.bf16.xpose.msra.mxu0 0
      %2936 = vmatprep.subr.bf16.mxu0 0
      %2937 = vmatpush1.bf16.xpose.msra.mxu0 0
      %2938 = vmatprep.subr.bf16.mxu0 0
      %2939 = vmatpush1.bf16.xpose.msra.mxu0 0
      %2940 = vmatprep.subr.bf16.mxu0 0
      %2941 = vmatpush1.bf16.xpose.msra.mxu0 0
      %2942 = vmatprep.subr.bf16.mxu0 0
      %2943 = vmatpush1.bf16.xpose.msra.mxu0 0
      %2944 = vmatprep.subr.bf16.mxu0 0
      %2945 = vmatpush1.bf16.xpose.msra.mxu0 0
      %2946 = vmatprep.subr.bf16.mxu0 0
      %2947 = vmatpush1.bf16.xpose.msra.mxu0 0
      %2948 = vmatprep.subr.bf16.mxu0 0
      %2949 = vmatpush1.bf16.xpose.msra.mxu0 0
      %2950 = vmatprep.subr.bf16.mxu0 0
      %2951 = vmatpush1.bf16.xpose.msra.mxu0 0
      %2952 = vmatprep.subr.bf16.mxu0 0
      %2953 = vmatpush1.bf16.xpose.msra.mxu0 0
      %2954 = vmatprep.subr.bf16.mxu0 0
      %2955 = vmatpush1.bf16.xpose.msra.mxu0 0
      %2956 = vmatprep.subr.bf16.mxu0 0
      %2957 = vmatpush1.bf16.xpose.msra.mxu0 0
      %2958 = vmatprep.subr.bf16.mxu0 0
      %2959 = vmatpush1.bf16.xpose.msra.mxu0 0
      %2960 = vmatprep.subr.bf16.mxu0 0
      %2961 = vmatpush1.bf16.xpose.msra.mxu0 0
      %2962 = vmatprep.mubr.bf16.mxu0 0
      %2963 = vmatmul.mubr.bf16.gmra.mrb[0].mxu0 %v2925
      %v2964 = vpop.f32.mrb[0].mxu0
      %v2965 = vadd.f32 0.0, %v2964
      %v2966 = vpop.f32.mrb[0].mxu0
      %v2967 = vpop.f32.mrb[0].mxu0
      %v2968 = vadd.f32 0.0, %v2967
      %v2969 = vpop.f32.mrb[0].mxu0
      %2970 = vdwg.mxu0
      %v2971 = vsel %vm1732, %v2965, -inf
      %2972 = vmax.xlane.f32.xlu0 %v2971
      %v2973 = vpop.xlane.xlu0 %2972
      %v2974 = vsel %vm1732, %v2968, -inf
      %2975 = vmax.xlane.f32.xlu0 %v2974
      %v2976 = vpop.xlane.xlu0 %2975
      %v2977 = vsub.f32 %v2965, %v2973
      %v2978 = vsub.f32 %v2968, %v2976
      %v2979 = vmul.f32 %v2977, 1.442695
      %v2980 = vpow.pop %v2979
      %v2981 = vmul.f32 %v2978, 1.442695
      %v2982 = vpow.pop %v2981
      %v2983 = vsel %vm1732, %v2980, 0.0
      %2984 = vadd.xlane.f32.xlu0 %v2983
      %v2985 = vpop.xlane.xlu0 %2984
      %v2986 = vsel %vm1732, %v2982, 0.0
      %2987 = vadd.xlane.f32.xlu0 %v2986
      %v2988 = vpop.xlane.xlu0 %2987
      %v2989 = vrcp.pop %v2985
      %v2990 = vrcp.pop %v2988
      %v2991 = vmul.f32 %v2980, %v2989
      %v2992 = vmul.f32 %v2982, %v2990
      %v2993 = vpack.c.bf16 %v2992, %v2991
      %2994 = vrot.lane.b32.xlu0 %v2423, 80
      %v2995 = vpop.permute.xlu0 %2994
      %v2998 = vsel %vm1732, %v2993, 0
      %3000 = vmatprep.subr.bf16.mxu0 0
      %3001 = vmatpush1.bf16.msra.mxu0 %v2995
      %3002 = vmatprep.subr.bf16.mxu0 0
      %3003 = vmatpush1.bf16.msra.mxu0 0
      %3004 = vmatprep.subr.bf16.mxu0 0
      %3005 = vmatpush1.bf16.msra.mxu0 0
      %3006 = vmatprep.subr.bf16.mxu0 0
      %3007 = vmatpush1.bf16.msra.mxu0 0
      %3008 = vmatprep.subr.bf16.mxu0 0
      %3009 = vmatpush1.bf16.msra.mxu0 0
      %3010 = vmatprep.subr.bf16.mxu0 0
      %3011 = vmatpush1.bf16.msra.mxu0 0
      %3012 = vmatprep.subr.bf16.mxu0 0
      %3013 = vmatpush1.bf16.msra.mxu0 0
      %3014 = vmatprep.subr.bf16.mxu0 0
      %3015 = vmatpush1.bf16.msra.mxu0 0
      %3016 = vmatprep.subr.bf16.mxu0 0
      %3017 = vmatpush1.bf16.msra.mxu0 0
      %3018 = vmatprep.subr.bf16.mxu0 0
      %3019 = vmatpush1.bf16.msra.mxu0 0
      %3020 = vmatprep.subr.bf16.mxu0 0
      %3021 = vmatpush1.bf16.msra.mxu0 0
      %3022 = vmatprep.subr.bf16.mxu0 0
      %3023 = vmatpush1.bf16.msra.mxu0 0
      %3024 = vmatprep.subr.bf16.mxu0 0
      %3025 = vmatpush1.bf16.msra.mxu0 0
      %3026 = vmatprep.subr.bf16.mxu0 0
      %3027 = vmatpush1.bf16.msra.mxu0 0
      %3028 = vmatprep.subr.bf16.mxu0 0
      %3029 = vmatpush1.bf16.msra.mxu0 0
      %3030 = vmatprep.subr.bf16.mxu0 0
      %3031 = vmatpush1.bf16.msra.mxu0 0
      %3032 = vmatprep.mubr.bf16.mxu0 0
      %3033 = vmatmul.mubr.bf16.gmra.mrb[0].mxu0 %v2998
      %v3034 = vpop.f32.mrb[0].mxu0
      %v3035 = vadd.f32 0.0, %v3034
      %v3036 = vpop.f32.mrb[0].mxu0
      %v3037 = vpop.f32.mrb[0].mxu0
      %v3038 = vadd.f32 0.0, %v3037
      %v3039 = vpop.f32.mrb[0].mxu0
      %3040 = vdwg.mxu0
      %v3041 = vpack.c.bf16 %v3038, %v3035
      %v3043 = vsel %vm1732, %v3041, 0
      %3045 = vmatprep.subr.bf16.mxu0 0
      %3046 = vmatpush1.bf16.msra.mxu0 %v2373
      %3047 = vmatprep.subr.bf16.mxu0 0
      %3048 = vmatpush1.bf16.msra.mxu0 0
      %3049 = vmatprep.subr.bf16.mxu0 0
      %3050 = vmatpush1.bf16.msra.mxu0 0
      %3051 = vmatprep.subr.bf16.mxu0 0
      %3052 = vmatpush1.bf16.msra.mxu0 0
      %3053 = vmatprep.subr.bf16.mxu0 0
      %3054 = vmatpush1.bf16.msra.mxu0 0
      %3055 = vmatprep.subr.bf16.mxu0 0
      %3056 = vmatpush1.bf16.msra.mxu0 0
      %3057 = vmatprep.subr.bf16.mxu0 0
      %3058 = vmatpush1.bf16.msra.mxu0 0
      %3059 = vmatprep.subr.bf16.mxu0 0
      %3060 = vmatpush1.bf16.msra.mxu0 0
      %3061 = vmatprep.subr.bf16.mxu0 0
      %3062 = vmatpush1.bf16.msra.mxu0 0
      %3063 = vmatprep.subr.bf16.mxu0 0
      %3064 = vmatpush1.bf16.msra.mxu0 0
      %3065 = vmatprep.subr.bf16.mxu0 0
      %3066 = vmatpush1.bf16.msra.mxu0 0
      %3067 = vmatprep.subr.bf16.mxu0 0
      %3068 = vmatpush1.bf16.msra.mxu0 0
      %3069 = vmatprep.subr.bf16.mxu0 0
      %3070 = vmatpush1.bf16.msra.mxu0 0
      %3071 = vmatprep.subr.bf16.mxu0 0
      %3072 = vmatpush1.bf16.msra.mxu0 0
      %3073 = vmatprep.subr.bf16.mxu0 0
      %3074 = vmatpush1.bf16.msra.mxu0 0
      %3075 = vmatprep.subr.bf16.mxu0 0
      %3076 = vmatpush1.bf16.msra.mxu0 0
      %3077 = vmatprep.mubr.bf16.mxu0 0
      %3078 = vmatmul.mubr.bf16.gmra.mrb[0].mxu0 %v3043
      %v3079 = vpop.f32.mrb[0].mxu0
      %v3080 = vadd.f32 0.0, %v3079
      %v3081 = vpop.f32.mrb[0].mxu0
      %v3082 = vpop.f32.mrb[0].mxu0
      %v3083 = vadd.f32 0.0, %v3082
      %v3084 = vpop.f32.mrb[0].mxu0
      %3085 = vdwg.mxu0
      %v3086 = vadd.f32 %v2918, %v3080
      %v3087 = vadd.f32 %v2919, %v3083
      %v3088 = vld [vmem:[%s1079] sm:$0x1]
      %v3090 = vlaneseq
      %v3091 = vshrl.u32 %v3090, 7
      %v3092 = vsub.s32 0, %v3091
      %v3093 = vrot.slane %v3088, %v3092
      %v3095 = vadd.f32 %v2419, %v3093
      %v3096 = vadd.f32 %v2420, %v3093
      %v3097 = vadd.f32 %v3086, %v3093
      %v3098 = vadd.f32 %v3087, %v3093
      %v3099 = vadd.f32 %v1132, %v3095
      %v3100 = vadd.f32 %v1133, %v3096
      %v3101 = vadd.f32 %v1134, %v3097
      %v3102 = vadd.f32 %v1135, %v3098
      %v3103 = vsel %vm1157, %v1136, 0.0
      %3104 = vadd.xlane.f32.xlu0 %v3103
      %v3105 = vpop.xlane.xlu0 %3104
      %v3106 = vsel %vm1157, %v1137, 0.0
      %3107 = vadd.xlane.f32.xlu0 %v3106
      %v3108 = vpop.xlane.xlu0 %3107
      %v3109 = vsel %vm1157, %v1138, 0.0
      %3110 = vadd.xlane.f32.xlu0 %v3109
      %v3111 = vpop.xlane.xlu0 %3110
      %v3112 = vsel %vm1157, %v1139, 0.0
      %3113 = vadd.xlane.f32.xlu0 %v3112
      %v3114 = vpop.xlane.xlu0 %3113
      %v3115 = vmul.f32 %v3105, %v1170
      %v3116 = vmul.f32 %v3108, %v1170
      %v3117 = vmul.f32 %v3111, %v1170
      %v3118 = vmul.f32 %v3114, %v1170
      %v3119 = vsub.f32 %v1136, %v3115
      %v3120 = vsub.f32 %v1137, %v3116
      %v3121 = vsub.f32 %v1138, %v3117
      %v3122 = vsub.f32 %v1139, %v3118
      %v3123 = vmul.f32 %v3119, %v3119
      %v3124 = vmul.f32 %v3120, %v3120
      %v3125 = vmul.f32 %v3121, %v3121
      %v3126 = vmul.f32 %v3122, %v3122
      %v3127 = vsel %vm1157, %v3123, 0.0
      %3128 = vadd.xlane.f32.xlu0 %v3127
      %v3129 = vpop.xlane.xlu0 %3128
      %v3130 = vsel %vm1157, %v3124, 0.0
      %3131 = vadd.xlane.f32.xlu0 %v3130
      %v3132 = vpop.xlane.xlu0 %3131
      %v3133 = vsel %vm1157, %v3125, 0.0
      %3134 = vadd.xlane.f32.xlu0 %v3133
      %v3135 = vpop.xlane.xlu0 %3134
      %v3136 = vsel %vm1157, %v3126, 0.0
      %3137 = vadd.xlane.f32.xlu0 %v3136
      %v3138 = vpop.xlane.xlu0 %3137
      %v3139 = vmul.f32 %v3129, %v1170
      %v3140 = vmul.f32 %v3132, %v1170
      %v3141 = vmul.f32 %v3135, %v1170
      %v3142 = vmul.f32 %v3138, %v1170
      %v3143 = vadd.f32 %v3139, 1e-06
      %v3144 = vadd.f32 %v3140, 1e-06
      %v3145 = vadd.f32 %v3141, 1e-06
      %v3146 = vadd.f32 %v3142, 1e-06
      %v3147 = vrsqrt.pop %v3143
      %v3148 = vrsqrt.pop %v3144
      %v3149 = vrsqrt.pop %v3145
      %v3150 = vrsqrt.pop %v3146
      %v3151 = vmul.f32 %v3119, %v3147
      %v3152 = vmul.f32 %v3120, %v3148
      %v3153 = vmul.f32 %v3121, %v3149
      %v3154 = vmul.f32 %v3122, %v3150
      %v3155 = vlaneseq
      %v3156 = vshrl.u32 %v3155, 7
      %v3157 = vsub.s32 6, %v3156
      %v3158 = vrot.slane %v1156, %v3157
      %v3159 = vmul.f32 %v3151, %v3158
      %v3160 = vmul.f32 %v3152, %v3158
      %v3161 = vmul.f32 %v3153, %v3158
      %v3162 = vmul.f32 %v3154, %v3158
      %v3163 = vlaneseq
      %v3164 = vshrl.u32 %v3163, 7
      %v3165 = vsub.s32 7, %v3164
      %v3166 = vrot.slane %v1156, %v3165
      %v3167 = vadd.f32 %v3159, %v3166
      %v3168 = vadd.f32 %v3160, %v3166
      %v3169 = vadd.f32 %v3161, %v3166
      %v3170 = vadd.f32 %v3162, %v3166
      %v3171 = vsel %vm1157, %v3099, 0.0
      %3172 = vadd.xlane.f32.xlu0 %v3171
      %v3173 = vpop.xlane.xlu0 %3172
      %v3174 = vsel %vm1157, %v3100, 0.0
      %3175 = vadd.xlane.f32.xlu0 %v3174
      %v3176 = vpop.xlane.xlu0 %3175
      %v3177 = vsel %vm1157, %v3101, 0.0
      %3178 = vadd.xlane.f32.xlu0 %v3177
      %v3179 = vpop.xlane.xlu0 %3178
      %v3180 = vsel %vm1157, %v3102, 0.0
      %3181 = vadd.xlane.f32.xlu0 %v3180
      %v3182 = vpop.xlane.xlu0 %3181
      %v3183 = vmul.f32 %v3173, %v1170
      %v3184 = vmul.f32 %v3176, %v1170
      %v3185 = vmul.f32 %v3179, %v1170
      %v3186 = vmul.f32 %v3182, %v1170
      %v3187 = vsub.f32 %v3099, %v3183
      %v3188 = vsub.f32 %v3100, %v3184
      %v3189 = vsub.f32 %v3101, %v3185
      %v3190 = vsub.f32 %v3102, %v3186
      %v3191 = vmul.f32 %v3187, %v3187
      %v3192 = vmul.f32 %v3188, %v3188
      %v3193 = vmul.f32 %v3189, %v3189
      %v3194 = vmul.f32 %v3190, %v3190
      %v3195 = vsel %vm1157, %v3191, 0.0
      %3196 = vadd.xlane.f32.xlu0 %v3195
      %v3197 = vpop.xlane.xlu0 %3196
      %v3198 = vsel %vm1157, %v3192, 0.0
      %3199 = vadd.xlane.f32.xlu0 %v3198
      %v3200 = vpop.xlane.xlu0 %3199
      %v3201 = vsel %vm1157, %v3193, 0.0
      %3202 = vadd.xlane.f32.xlu0 %v3201
      %v3203 = vpop.xlane.xlu0 %3202
      %v3204 = vsel %vm1157, %v3194, 0.0
      %3205 = vadd.xlane.f32.xlu0 %v3204
      %v3206 = vpop.xlane.xlu0 %3205
      %v3207 = vmul.f32 %v3197, %v1170
      %v3208 = vmul.f32 %v3200, %v1170
      %v3209 = vmul.f32 %v3203, %v1170
      %v3210 = vmul.f32 %v3206, %v1170
      %v3211 = vadd.f32 %v3207, 1e-06
      %v3212 = vadd.f32 %v3208, 1e-06
      %v3213 = vadd.f32 %v3209, 1e-06
      %v3214 = vadd.f32 %v3210, 1e-06
      %v3215 = vrsqrt.pop %v3211
      %v3216 = vrsqrt.pop %v3212
      %v3217 = vrsqrt.pop %v3213
      %v3218 = vrsqrt.pop %v3214
      %v3219 = vmul.f32 %v3187, %v3215
      %v3220 = vmul.f32 %v3188, %v3216
      %v3221 = vmul.f32 %v3189, %v3217
      %v3222 = vmul.f32 %v3190, %v3218
      %v3223 = vlaneseq
      %v3224 = vshrl.u32 %v3223, 7
      %v3225 = vsub.s32 2, %v3224
      %v3226 = vrot.slane %v1156, %v3225
      %v3227 = vmul.f32 %v3219, %v3226
      %v3228 = vmul.f32 %v3220, %v3226
      %v3229 = vmul.f32 %v3221, %v3226
      %v3230 = vmul.f32 %v3222, %v3226
      %v3231 = vlaneseq
      %v3232 = vshrl.u32 %v3231, 7
      %v3233 = vsub.s32 3, %v3232
      %v3234 = vrot.slane %v1156, %v3233
      %v3235 = vadd.f32 %v3227, %v3234
      %v3236 = vadd.f32 %v3228, %v3234
      %v3237 = vadd.f32 %v3229, %v3234
      %v3238 = vadd.f32 %v3230, %v3234
      %v3239 = vpack.c.bf16 %v3236, %v3235
      %v3240 = vpack.c.bf16 %v3238, %v3237
      %v3241 = vld [vmem:[%s1084] sm:$0xf]
      %v3242 = vld [vmem:[%s1084 + $0x4] sm:$0xf]
      %v3243 = vld [vmem:[%s1084 + $0x8] sm:$0xf]
      %v3244 = vld [vmem:[%s1084 + $0xc] sm:$0xf]
      %v3245 = vld [vmem:[%s1084 + $0x10] sm:$0xf]
      %v3246 = vld [vmem:[%s1084 + $0x14] sm:$0xf]
      %v3247 = vld [vmem:[%s1084 + $0x18] sm:$0xf]
      %v3248 = vld [vmem:[%s1084 + $0x1c] sm:$0xf]
      %v3249 = vld [vmem:[%s1097] sm:$0x1]
      %v3251 = vlaneseq
      %v3252 = vshrl.u32 %v3251, 7
      %v3253 = vsub.s32 0, %v3252
      %v3254 = vrot.slane %v3249, %v3253
      %v3264 = vunpack.c.l.b16 %v3241
      %v3265 = vunpack.c.l.b16 %v3242
      %v3266 = vunpack.c.l.b16 %v3243
      %v3267 = vunpack.c.l.b16 %v3244
      %v3268 = vunpack.c.l.b16 %v3245
      %v3269 = vunpack.c.l.b16 %v3246
      %v3270 = vunpack.c.l.b16 %v3247
      %v3271 = vunpack.c.l.b16 %v3248
      %v3272 = vpack.c.b16 %v3265, %v3264
      %v3273 = vpack.c.b16 %v3267, %v3266
      %v3274 = vpack.c.b16 %v3269, %v3268
      %v3275 = vpack.c.b16 %v3271, %v3270
      %v3281 = vsel %vm1157, %v3239, 0
      %v3284 = vsel %vm1157, %v3240, 0
      %3286 = vmatprep.subr.bf16.mxu0 0
      %3287 = vmatpush1.bf16.msra.mxu0 %v3272
      %3288 = vmatprep.subr.bf16.mxu0 0
      %3289 = vmatpush1.bf16.msra.mxu0 %v3273
      %3290 = vmatprep.subr.bf16.mxu0 0
      %3291 = vmatpush1.bf16.msra.mxu0 %v3274
      %3292 = vmatprep.subr.bf16.mxu0 0
      %3293 = vmatpush1.bf16.msra.mxu0 %v3275
      %3294 = vmatprep.subr.bf16.mxu0 0
      %3295 = vmatpush1.bf16.msra.mxu0 0
      %3296 = vmatprep.subr.bf16.mxu0 0
      %3297 = vmatpush1.bf16.msra.mxu0 0
      %3298 = vmatprep.subr.bf16.mxu0 0
      %3299 = vmatpush1.bf16.msra.mxu0 0
      %3300 = vmatprep.subr.bf16.mxu0 0
      %3301 = vmatpush1.bf16.msra.mxu0 0
      %3302 = vmatprep.subr.bf16.mxu0 0
      %3303 = vmatpush1.bf16.msra.mxu0 0
      %3304 = vmatprep.subr.bf16.mxu0 0
      %3305 = vmatpush1.bf16.msra.mxu0 0
      %3306 = vmatprep.subr.bf16.mxu0 0
      %3307 = vmatpush1.bf16.msra.mxu0 0
      %3308 = vmatprep.subr.bf16.mxu0 0
      %3309 = vmatpush1.bf16.msra.mxu0 0
      %3310 = vmatprep.subr.bf16.mxu0 0
      %3311 = vmatpush1.bf16.msra.mxu0 0
      %3312 = vmatprep.subr.bf16.mxu0 0
      %3313 = vmatpush1.bf16.msra.mxu0 0
      %3314 = vmatprep.subr.bf16.mxu0 0
      %3315 = vmatpush1.bf16.msra.mxu0 0
      %3316 = vmatprep.subr.bf16.mxu0 0
      %3317 = vmatpush1.bf16.msra.mxu0 0
      %3318 = vmatprep.mubr.bf16.mxu0 0
      %3319 = vmatmul.mubr.bf16.gmra.mrb[0].mxu0 %v3281
      %v3320 = vpop.f32.mrb[0].mxu0
      %v3321 = vadd.f32 %v3254, %v3320
      %v3322 = vpop.f32.mrb[0].mxu0
      %v3323 = vpop.f32.mrb[0].mxu0
      %v3324 = vadd.f32 %v3254, %v3323
      %v3325 = vpop.f32.mrb[0].mxu0
      %3326 = vmatprep.mubr.bf16.mxu0 0
      %3327 = vmatmul.mubr.bf16.gmra.mrb[0].mxu0 %v3284
      %v3328 = vpop.f32.mrb[0].mxu0
      %v3329 = vadd.f32 %v3254, %v3328
      %v3330 = vpop.f32.mrb[0].mxu0
      %v3331 = vpop.f32.mrb[0].mxu0
      %v3332 = vadd.f32 %v3254, %v3331
      %v3333 = vpop.f32.mrb[0].mxu0
      %3334 = vdwg.mxu0
      %v3336 = vsel %vm1157, %v3321, 0
      %v3339 = vsel %vm1157, %v3324, 0
      %v3342 = vsel %vm1157, %v3329, 0
      %v3345 = vsel %vm1157, %v3332, 0
      %3347 = vmatprep.subr.mxu0 0.0
      %3348 = vmatpush1.msra.mxu0 %v1148
      %3349 = vmatprep.subr.mxu0 0.0
      %3350 = vmatpush1.msra.mxu0 %v1149
      %3351 = vmatprep.subr.mxu0 0.0
      %3352 = vmatpush1.msra.mxu0 %v1150
      %3353 = vmatprep.subr.mxu0 0.0
      %3354 = vmatpush1.msra.mxu0 %v1151
      %3355 = vmatprep.subr.mxu0 0.0
      %3356 = vmatpush1.msra.mxu0 %v1152
      %3357 = vmatprep.subr.mxu0 0.0
      %3358 = vmatpush1.msra.mxu0 %v1153
      %3359 = vmatprep.subr.mxu0 0.0
      %3360 = vmatpush1.msra.mxu0 %v1154
      %3361 = vmatprep.subr.mxu0 0.0
      %3362 = vmatpush1.msra.mxu0 %v1155
      %3363 = vmatprep.subr.mxu0 0.0
      %3364 = vmatpush1.msra.mxu0 0.0
      %3365 = vmatprep.subr.mxu0 0.0
      %3366 = vmatpush1.msra.mxu0 0.0
      %3367 = vmatprep.subr.mxu0 0.0
      %3368 = vmatpush1.msra.mxu0 0.0
      %3369 = vmatprep.subr.mxu0 0.0
      %3370 = vmatpush1.msra.mxu0 0.0
      %3371 = vmatprep.subr.mxu0 0.0
      %3372 = vmatpush1.msra.mxu0 0.0
      %3373 = vmatprep.subr.mxu0 0.0
      %3374 = vmatpush1.msra.mxu0 0.0
      %3375 = vmatprep.subr.mxu0 0.0
      %3376 = vmatpush1.msra.mxu0 0.0
      %3377 = vmatprep.subr.mxu0 0.0
      %3378 = vmatpush1.msra.mxu0 0.0
      %3379 = vmatprep.subr.mxu0 0.0
      %3380 = vmatpush1.msra.mxu0 0.0
      %3381 = vmatprep.subr.mxu0 0.0
      %3382 = vmatpush1.msra.mxu0 0.0
      %3383 = vmatprep.subr.mxu0 0.0
      %3384 = vmatpush1.msra.mxu0 0.0
      %3385 = vmatprep.subr.mxu0 0.0
      %3386 = vmatpush1.msra.mxu0 0.0
      %3387 = vmatprep.subr.mxu0 0.0
      %3388 = vmatpush1.msra.mxu0 0.0
      %3389 = vmatprep.subr.mxu0 0.0
      %3390 = vmatpush1.msra.mxu0 0.0
      %3391 = vmatprep.subr.mxu0 0.0
      %3392 = vmatpush1.msra.mxu0 0.0
      %3393 = vmatprep.subr.mxu0 0.0
      %3394 = vmatpush1.msra.mxu0 0.0
      %3395 = vmatprep.subr.mxu0 0.0
      %3396 = vmatpush1.msra.mxu0 0.0
      %3397 = vmatprep.subr.mxu0 0.0
      %3398 = vmatpush1.msra.mxu0 0.0
      %3399 = vmatprep.subr.mxu0 0.0
      %3400 = vmatpush1.msra.mxu0 0.0
      %3401 = vmatprep.subr.mxu0 0.0
      %3402 = vmatpush1.msra.mxu0 0.0
      %3403 = vmatprep.subr.mxu0 0.0
      %3404 = vmatpush1.msra.mxu0 0.0
      %3405 = vmatprep.subr.mxu0 0.0
      %3406 = vmatpush1.msra.mxu0 0.0
      %3407 = vmatprep.subr.mxu0 0.0
      %3408 = vmatpush1.msra.mxu0 0.0
      %3409 = vmatprep.subr.mxu0 0.0
      %3410 = vmatpush1.msra.mxu0 0.0
      %3411 = vmatprep.mubr.f32.mxu0 0.0
      %3412 = vmatmul.mubr.f32.gmra.mrb[0].mxu0 %v3336
      %v3413 = vpop.f32.mrb[0].mxu0
      %v3414 = vadd.f32 0.0, %v3413
      %v3415 = vpop.f32.mrb[0].mxu0
      %3416 = vmatprep.mubr.f32.mxu0 0.0
      %3417 = vmatmul.mubr.f32.gmra.mrb[0].mxu0 %v3339
      %v3418 = vpop.f32.mrb[0].mxu0
      %v3419 = vadd.f32 0.0, %v3418
      %v3420 = vpop.f32.mrb[0].mxu0
      %3421 = vmatprep.mubr.f32.mxu0 0.0
      %3422 = vmatmul.mubr.f32.gmra.mrb[0].mxu0 %v3342
      %v3423 = vpop.f32.mrb[0].mxu0
      %v3424 = vadd.f32 0.0, %v3423
      %v3425 = vpop.f32.mrb[0].mxu0
      %3426 = vmatprep.mubr.f32.mxu0 0.0
      %3427 = vmatmul.mubr.f32.gmra.mrb[0].mxu0 %v3345
      %v3428 = vpop.f32.mrb[0].mxu0
      %v3429 = vadd.f32 0.0, %v3428
      %v3430 = vpop.f32.mrb[0].mxu0
      %3431 = vdwg.mxu0
      %v3432 = vmul.f32 %v3321, %v1140
      %v3433 = vmul.f32 %v3324, %v1141
      %v3434 = vmul.f32 %v3329, %v1142
      %v3435 = vmul.f32 %v3332, %v1143
      %v3436 = vmul.f32 %v3414, %v1144
      %v3437 = vmul.f32 %v3419, %v1145
      %v3438 = vmul.f32 %v3424, %v1146
      %v3439 = vmul.f32 %v3429, %v1147
      %v3440 = vadd.f32 %v3432, %v3436
      %v3441 = vadd.f32 %v3433, %v3437
      %v3442 = vadd.f32 %v3434, %v3438
      %v3443 = vadd.f32 %v3435, %v3439
      %v3444 = vmul.f32 %v3440, 0.25
      %v3445 = vmul.f32 %v3441, 0.25
      %v3446 = vmul.f32 %v3442, 0.25
      %v3447 = vmul.f32 %v3443, 0.25
      %v3448 = vpack.c.bf16 %v3168, %v3167
      %v3449 = vpack.c.bf16 %v3170, %v3169
      %v3450 = vld [vmem:[%s1089] sm:$0xf]
      %v3451 = vld [vmem:[%s1089 + $0x4] sm:$0xf]
      %v3452 = vld [vmem:[%s1089 + $0x8] sm:$0xf]
      %v3453 = vld [vmem:[%s1089 + $0xc] sm:$0xf]
      %v3454 = vld [vmem:[%s1089 + $0x10] sm:$0xf]
      %v3455 = vld [vmem:[%s1089 + $0x14] sm:$0xf]
      %v3456 = vld [vmem:[%s1089 + $0x18] sm:$0xf]
      %v3457 = vld [vmem:[%s1089 + $0x1c] sm:$0xf]
      %v3458 = vld [vmem:[%s1100] sm:$0x1]
      %v3460 = vlaneseq
      %v3461 = vshrl.u32 %v3460, 7
      %v3462 = vsub.s32 0, %v3461
      %v3463 = vrot.slane %v3458, %v3462
      %v3473 = vunpack.c.l.b16 %v3450
      %v3474 = vunpack.c.l.b16 %v3451
      %v3475 = vunpack.c.l.b16 %v3452
      %v3476 = vunpack.c.l.b16 %v3453
      %v3477 = vunpack.c.l.b16 %v3454
      %v3478 = vunpack.c.l.b16 %v3455
      %v3479 = vunpack.c.l.b16 %v3456
      %v3480 = vunpack.c.l.b16 %v3457
      %v3481 = vpack.c.b16 %v3474, %v3473
      %v3482 = vpack.c.b16 %v3476, %v3475
      %v3483 = vpack.c.b16 %v3478, %v3477
      %v3484 = vpack.c.b16 %v3480, %v3479
      %v3490 = vsel %vm1157, %v3448, 0
      %v3493 = vsel %vm1157, %v3449, 0
      %3495 = vmatprep.subr.bf16.mxu0 0
      %3496 = vmatpush1.bf16.msra.mxu0 %v3481
      %3497 = vmatprep.subr.bf16.mxu0 0
      %3498 = vmatpush1.bf16.msra.mxu0 %v3482
      %3499 = vmatprep.subr.bf16.mxu0 0
      %3500 = vmatpush1.bf16.msra.mxu0 %v3483
      %3501 = vmatprep.subr.bf16.mxu0 0
      %3502 = vmatpush1.bf16.msra.mxu0 %v3484
      %3503 = vmatprep.subr.bf16.mxu0 0
      %3504 = vmatpush1.bf16.msra.mxu0 0
      %3505 = vmatprep.subr.bf16.mxu0 0
      %3506 = vmatpush1.bf16.msra.mxu0 0
      %3507 = vmatprep.subr.bf16.mxu0 0
      %3508 = vmatpush1.bf16.msra.mxu0 0
      %3509 = vmatprep.subr.bf16.mxu0 0
      %3510 = vmatpush1.bf16.msra.mxu0 0
      %3511 = vmatprep.subr.bf16.mxu0 0
      %3512 = vmatpush1.bf16.msra.mxu0 0
      %3513 = vmatprep.subr.bf16.mxu0 0
      %3514 = vmatpush1.bf16.msra.mxu0 0
      %3515 = vmatprep.subr.bf16.mxu0 0
      %3516 = vmatpush1.bf16.msra.mxu0 0
      %3517 = vmatprep.subr.bf16.mxu0 0
      %3518 = vmatpush1.bf16.msra.mxu0 0
      %3519 = vmatprep.subr.bf16.mxu0 0
      %3520 = vmatpush1.bf16.msra.mxu0 0
      %3521 = vmatprep.subr.bf16.mxu0 0
      %3522 = vmatpush1.bf16.msra.mxu0 0
      %3523 = vmatprep.subr.bf16.mxu0 0
      %3524 = vmatpush1.bf16.msra.mxu0 0
      %3525 = vmatprep.subr.bf16.mxu0 0
      %3526 = vmatpush1.bf16.msra.mxu0 0
      %3527 = vmatprep.mubr.bf16.mxu0 0
      %3528 = vmatmul.mubr.bf16.gmra.mrb[0].mxu0 %v3490
      %v3529 = vpop.f32.mrb[0].mxu0
      %v3530 = vadd.f32 %v3463, %v3529
      %v3531 = vpop.f32.mrb[0].mxu0
      %v3532 = vpop.f32.mrb[0].mxu0
      %v3533 = vadd.f32 %v3463, %v3532
      %v3534 = vpop.f32.mrb[0].mxu0
      %3535 = vmatprep.mubr.bf16.mxu0 0
      %3536 = vmatmul.mubr.bf16.gmra.mrb[0].mxu0 %v3493
      %v3537 = vpop.f32.mrb[0].mxu0
      %v3538 = vadd.f32 %v3463, %v3537
      %v3539 = vpop.f32.mrb[0].mxu0
      %v3540 = vpop.f32.mrb[0].mxu0
      %v3541 = vadd.f32 %v3463, %v3540
      %v3542 = vpop.f32.mrb[0].mxu0
      %3543 = vdwg.mxu0
      %v3545 = vsel %vm1157, %v3530, 0
      %v3548 = vsel %vm1157, %v3533, 0
      %v3551 = vsel %vm1157, %v3538, 0
      %v3554 = vsel %vm1157, %v3541, 0
      %3556 = vmatprep.subr.mxu0 0.0
      %3557 = vmatpush1.msra.mxu0 %v1148
      %3558 = vmatprep.subr.mxu0 0.0
      %3559 = vmatpush1.msra.mxu0 %v1149
      %3560 = vmatprep.subr.mxu0 0.0
      %3561 = vmatpush1.msra.mxu0 %v1150
      %3562 = vmatprep.subr.mxu0 0.0
      %3563 = vmatpush1.msra.mxu0 %v1151
      %3564 = vmatprep.subr.mxu0 0.0
      %3565 = vmatpush1.msra.mxu0 %v1152
      %3566 = vmatprep.subr.mxu0 0.0
      %3567 = vmatpush1.msra.mxu0 %v1153
      %3568 = vmatprep.subr.mxu0 0.0
      %3569 = vmatpush1.msra.mxu0 %v1154
      %3570 = vmatprep.subr.mxu0 0.0
      %3571 = vmatpush1.msra.mxu0 %v1155
      %3572 = vmatprep.subr.mxu0 0.0
      %3573 = vmatpush1.msra.mxu0 0.0
      %3574 = vmatprep.subr.mxu0 0.0
      %3575 = vmatpush1.msra.mxu0 0.0
      %3576 = vmatprep.subr.mxu0 0.0
      %3577 = vmatpush1.msra.mxu0 0.0
      %3578 = vmatprep.subr.mxu0 0.0
      %3579 = vmatpush1.msra.mxu0 0.0
      %3580 = vmatprep.subr.mxu0 0.0
      %3581 = vmatpush1.msra.mxu0 0.0
      %3582 = vmatprep.subr.mxu0 0.0
      %3583 = vmatpush1.msra.mxu0 0.0
      %3584 = vmatprep.subr.mxu0 0.0
      %3585 = vmatpush1.msra.mxu0 0.0
      %3586 = vmatprep.subr.mxu0 0.0
      %3587 = vmatpush1.msra.mxu0 0.0
      %3588 = vmatprep.subr.mxu0 0.0
      %3589 = vmatpush1.msra.mxu0 0.0
      %3590 = vmatprep.subr.mxu0 0.0
      %3591 = vmatpush1.msra.mxu0 0.0
      %3592 = vmatprep.subr.mxu0 0.0
      %3593 = vmatpush1.msra.mxu0 0.0
      %3594 = vmatprep.subr.mxu0 0.0
      %3595 = vmatpush1.msra.mxu0 0.0
      %3596 = vmatprep.subr.mxu0 0.0
      %3597 = vmatpush1.msra.mxu0 0.0
      %3598 = vmatprep.subr.mxu0 0.0
      %3599 = vmatpush1.msra.mxu0 0.0
      %3600 = vmatprep.subr.mxu0 0.0
      %3601 = vmatpush1.msra.mxu0 0.0
      %3602 = vmatprep.subr.mxu0 0.0
      %3603 = vmatpush1.msra.mxu0 0.0
      %3604 = vmatprep.subr.mxu0 0.0
      %3605 = vmatpush1.msra.mxu0 0.0
      %3606 = vmatprep.subr.mxu0 0.0
      %3607 = vmatpush1.msra.mxu0 0.0
      %3608 = vmatprep.subr.mxu0 0.0
      %3609 = vmatpush1.msra.mxu0 0.0
      %3610 = vmatprep.subr.mxu0 0.0
      %3611 = vmatpush1.msra.mxu0 0.0
      %3612 = vmatprep.subr.mxu0 0.0
      %3613 = vmatpush1.msra.mxu0 0.0
      %3614 = vmatprep.subr.mxu0 0.0
      %3615 = vmatpush1.msra.mxu0 0.0
      %3616 = vmatprep.subr.mxu0 0.0
      %3617 = vmatpush1.msra.mxu0 0.0
      %3618 = vmatprep.subr.mxu0 0.0
      %3619 = vmatpush1.msra.mxu0 0.0
      %3620 = vmatprep.mubr.f32.mxu0 0.0
      %3621 = vmatmul.mubr.f32.gmra.mrb[0].mxu0 %v3545
      %v3622 = vpop.f32.mrb[0].mxu0
      %v3623 = vadd.f32 0.0, %v3622
      %v3624 = vpop.f32.mrb[0].mxu0
      %3625 = vmatprep.mubr.f32.mxu0 0.0
      %3626 = vmatmul.mubr.f32.gmra.mrb[0].mxu0 %v3548
      %v3627 = vpop.f32.mrb[0].mxu0
      %v3628 = vadd.f32 0.0, %v3627
      %v3629 = vpop.f32.mrb[0].mxu0
      %3630 = vmatprep.mubr.f32.mxu0 0.0
      %3631 = vmatmul.mubr.f32.gmra.mrb[0].mxu0 %v3551
      %v3632 = vpop.f32.mrb[0].mxu0
      %v3633 = vadd.f32 0.0, %v3632
      %v3634 = vpop.f32.mrb[0].mxu0
      %3635 = vmatprep.mubr.f32.mxu0 0.0
      %3636 = vmatmul.mubr.f32.gmra.mrb[0].mxu0 %v3554
      %v3637 = vpop.f32.mrb[0].mxu0
      %v3638 = vadd.f32 0.0, %v3637
      %v3639 = vpop.f32.mrb[0].mxu0
      %3640 = vdwg.mxu0
      %v3641 = vmul.f32 %v3530, %v1140
      %v3642 = vmul.f32 %v3533, %v1141
      %v3643 = vmul.f32 %v3538, %v1142
      %v3644 = vmul.f32 %v3541, %v1143
      %v3645 = vmul.f32 %v3623, %v1144
      %v3646 = vmul.f32 %v3628, %v1145
      %v3647 = vmul.f32 %v3633, %v1146
      %v3648 = vmul.f32 %v3638, %v1147
      %v3649 = vadd.f32 %v3641, %v3645
      %v3650 = vadd.f32 %v3642, %v3646
      %v3651 = vadd.f32 %v3643, %v3647
      %v3652 = vadd.f32 %v3644, %v3648
      %v3653 = vld [vmem:[%s1094] sm:$0xf]
      %v3654 = vld [vmem:[%s1094 + $0x4] sm:$0xf]
      %v3655 = vld [vmem:[%s1094 + $0x8] sm:$0xf]
      %v3656 = vld [vmem:[%s1094 + $0xc] sm:$0xf]
      %v3657 = vld [vmem:[%s1094 + $0x10] sm:$0xf]
      %v3658 = vld [vmem:[%s1094 + $0x14] sm:$0xf]
      %v3659 = vld [vmem:[%s1094 + $0x18] sm:$0xf]
      %v3660 = vld [vmem:[%s1094 + $0x1c] sm:$0xf]
      %v3661 = vld [vmem:[%s1103] sm:$0x1]
      %v3663 = vlaneseq
      %v3664 = vshrl.u32 %v3663, 7
      %v3665 = vsub.s32 0, %v3664
      %v3666 = vrot.slane %v3661, %v3665
      %v3676 = vunpack.c.l.b16 %v3653
      %v3677 = vunpack.c.l.b16 %v3654
      %v3678 = vunpack.c.l.b16 %v3655
      %v3679 = vunpack.c.l.b16 %v3656
      %v3680 = vunpack.c.l.b16 %v3657
      %v3681 = vunpack.c.l.b16 %v3658
      %v3682 = vunpack.c.l.b16 %v3659
      %v3683 = vunpack.c.l.b16 %v3660
      %v3684 = vpack.c.b16 %v3677, %v3676
      %v3685 = vpack.c.b16 %v3679, %v3678
      %v3686 = vpack.c.b16 %v3681, %v3680
      %v3687 = vpack.c.b16 %v3683, %v3682
      %3692 = vmatprep.subr.bf16.mxu0 0
      %3693 = vmatpush1.bf16.msra.mxu0 %v3684
      %3694 = vmatprep.subr.bf16.mxu0 0
      %3695 = vmatpush1.bf16.msra.mxu0 %v3685
      %3696 = vmatprep.subr.bf16.mxu0 0
      %3697 = vmatpush1.bf16.msra.mxu0 %v3686
      %3698 = vmatprep.subr.bf16.mxu0 0
      %3699 = vmatpush1.bf16.msra.mxu0 %v3687
      %3700 = vmatprep.subr.bf16.mxu0 0
      %3701 = vmatpush1.bf16.msra.mxu0 0
      %3702 = vmatprep.subr.bf16.mxu0 0
      %3703 = vmatpush1.bf16.msra.mxu0 0
      %3704 = vmatprep.subr.bf16.mxu0 0
      %3705 = vmatpush1.bf16.msra.mxu0 0
      %3706 = vmatprep.subr.bf16.mxu0 0
      %3707 = vmatpush1.bf16.msra.mxu0 0
      %3708 = vmatprep.subr.bf16.mxu0 0
      %3709 = vmatpush1.bf16.msra.mxu0 0
      %3710 = vmatprep.subr.bf16.mxu0 0
      %3711 = vmatpush1.bf16.msra.mxu0 0
      %3712 = vmatprep.subr.bf16.mxu0 0
      %3713 = vmatpush1.bf16.msra.mxu0 0
      %3714 = vmatprep.subr.bf16.mxu0 0
      %3715 = vmatpush1.bf16.msra.mxu0 0
      %3716 = vmatprep.subr.bf16.mxu0 0
      %3717 = vmatpush1.bf16.msra.mxu0 0
      %3718 = vmatprep.subr.bf16.mxu0 0
      %3719 = vmatpush1.bf16.msra.mxu0 0
      %3720 = vmatprep.subr.bf16.mxu0 0
      %3721 = vmatpush1.bf16.msra.mxu0 0
      %3722 = vmatprep.subr.bf16.mxu0 0
      %3723 = vmatpush1.bf16.msra.mxu0 0
      %3724 = vmatprep.mubr.bf16.mxu0 0
      %3725 = vmatmul.mubr.bf16.gmra.mrb[0].mxu0 %v3490
      %v3726 = vpop.f32.mrb[0].mxu0
      %v3727 = vadd.f32 %v3666, %v3726
      %v3728 = vpop.f32.mrb[0].mxu0
      %v3729 = vpop.f32.mrb[0].mxu0
      %v3730 = vadd.f32 %v3666, %v3729
      %v3731 = vpop.f32.mrb[0].mxu0
      %3732 = vmatprep.mubr.bf16.mxu0 0
      %3733 = vmatmul.mubr.bf16.gmra.mrb[0].mxu0 %v3493
      %v3734 = vpop.f32.mrb[0].mxu0
      %v3735 = vadd.f32 %v3666, %v3734
      %v3736 = vpop.f32.mrb[0].mxu0
      %v3737 = vpop.f32.mrb[0].mxu0
      %v3738 = vadd.f32 %v3666, %v3737
      %v3739 = vpop.f32.mrb[0].mxu0
      %3740 = vdwg.mxu0
      %v3741 = vld [vmem:[%s1108] sm:$0xf]
      %v3742 = vld [vmem:[%s1108 + $0x4] sm:$0xf]
      %v3743 = vld [vmem:[%s1108 + $0x8] sm:$0xf]
      %v3744 = vld [vmem:[%s1108 + $0xc] sm:$0xf]
      %v3745 = vld [vmem:[%s1108 + $0x10] sm:$0xf]
      %v3746 = vld [vmem:[%s1108 + $0x14] sm:$0xf]
      %v3747 = vld [vmem:[%s1108 + $0x18] sm:$0xf]
      %v3748 = vld [vmem:[%s1108 + $0x1c] sm:$0xf]
      %v3749 = vpack.c.bf16 %v3445, %v3444
      %v3750 = vpack.c.bf16 %v3650, %v3649
      %v3751 = vpack.c.bf16 %v3730, %v3727
      %v3753 = vsel %vm1732, %v3749, 0
      %v3756 = vsel %vm1732, %v3750, 0
      %3758 = vmatprep.subr.bf16.mxu0 0
      %3759 = vmatpush1.bf16.xpose.msra.mxu0 %v3756
      %3760 = vmatprep.subr.bf16.mxu0 0
      %3761 = vmatpush1.bf16.xpose.msra.mxu0 0
      %3762 = vmatprep.subr.bf16.mxu0 0
      %3763 = vmatpush1.bf16.xpose.msra.mxu0 0
      %3764 = vmatprep.subr.bf16.mxu0 0
      %3765 = vmatpush1.bf16.xpose.msra.mxu0 0
      %3766 = vmatprep.subr.bf16.mxu0 0
      %3767 = vmatpush1.bf16.xpose.msra.mxu0 0
      %3768 = vmatprep.subr.bf16.mxu0 0
      %3769 = vmatpush1.bf16.xpose.msra.mxu0 0
      %3770 = vmatprep.subr.bf16.mxu0 0
      %3771 = vmatpush1.bf16.xpose.msra.mxu0 0
      %3772 = vmatprep.subr.bf16.mxu0 0
      %3773 = vmatpush1.bf16.xpose.msra.mxu0 0
      %3774 = vmatprep.subr.bf16.mxu0 0
      %3775 = vmatpush1.bf16.xpose.msra.mxu0 0
      %3776 = vmatprep.subr.bf16.mxu0 0
      %3777 = vmatpush1.bf16.xpose.msra.mxu0 0
      %3778 = vmatprep.subr.bf16.mxu0 0
      %3779 = vmatpush1.bf16.xpose.msra.mxu0 0
      %3780 = vmatprep.subr.bf16.mxu0 0
      %3781 = vmatpush1.bf16.xpose.msra.mxu0 0
      %3782 = vmatprep.subr.bf16.mxu0 0
      %3783 = vmatpush1.bf16.xpose.msra.mxu0 0
      %3784 = vmatprep.subr.bf16.mxu0 0
      %3785 = vmatpush1.bf16.xpose.msra.mxu0 0
      %3786 = vmatprep.subr.bf16.mxu0 0
      %3787 = vmatpush1.bf16.xpose.msra.mxu0 0
      %3788 = vmatprep.subr.bf16.mxu0 0
      %3789 = vmatpush1.bf16.xpose.msra.mxu0 0
      %3790 = vmatprep.mubr.bf16.mxu0 0
      %3791 = vmatmul.mubr.bf16.gmra.mrb[0].mxu0 %v3753
      %v3792 = vpop.f32.mrb[0].mxu0
      %v3793 = vadd.f32 0.0, %v3792
      %v3794 = vpop.f32.mrb[0].mxu0
      %v3795 = vpop.f32.mrb[0].mxu0
      %v3796 = vadd.f32 0.0, %v3795
      %v3797 = vpop.f32.mrb[0].mxu0
      %3798 = vdwg.mxu0
      %v3799 = vsel %vm1732, %v3793, -inf
      %3800 = vmax.xlane.f32.xlu0 %v3799
      %v3801 = vpop.xlane.xlu0 %3800
      %v3802 = vsel %vm1732, %v3796, -inf
      %3803 = vmax.xlane.f32.xlu0 %v3802
      %v3804 = vpop.xlane.xlu0 %3803
      %v3805 = vsub.f32 %v3793, %v3801
      %v3806 = vsub.f32 %v3796, %v3804
      %v3807 = vmul.f32 %v3805, 1.442695
      %v3808 = vpow.pop %v3807
      %v3809 = vmul.f32 %v3806, 1.442695
      %v3810 = vpow.pop %v3809
      %v3811 = vsel %vm1732, %v3808, 0.0
      %3812 = vadd.xlane.f32.xlu0 %v3811
      %v3813 = vpop.xlane.xlu0 %3812
      %v3814 = vsel %vm1732, %v3810, 0.0
      %3815 = vadd.xlane.f32.xlu0 %v3814
      %v3816 = vpop.xlane.xlu0 %3815
      %v3817 = vrcp.pop %v3813
      %v3818 = vrcp.pop %v3816
      %v3819 = vmul.f32 %v3808, %v3817
      %v3820 = vmul.f32 %v3810, %v3818
      %v3821 = vpack.c.bf16 %v3820, %v3819
      %v3823 = vsel %vm1732, %v3821, 0
      %3825 = vmatprep.subr.bf16.mxu0 0
      %3826 = vmatpush1.bf16.msra.mxu0 %v3751
      %3827 = vmatprep.subr.bf16.mxu0 0
      %3828 = vmatpush1.bf16.msra.mxu0 0
      %3829 = vmatprep.subr.bf16.mxu0 0
      %3830 = vmatpush1.bf16.msra.mxu0 0
      %3831 = vmatprep.subr.bf16.mxu0 0
      %3832 = vmatpush1.bf16.msra.mxu0 0
      %3833 = vmatprep.subr.bf16.mxu0 0
      %3834 = vmatpush1.bf16.msra.mxu0 0
      %3835 = vmatprep.subr.bf16.mxu0 0
      %3836 = vmatpush1.bf16.msra.mxu0 0
      %3837 = vmatprep.subr.bf16.mxu0 0
      %3838 = vmatpush1.bf16.msra.mxu0 0
      %3839 = vmatprep.subr.bf16.mxu0 0
      %3840 = vmatpush1.bf16.msra.mxu0 0
      %3841 = vmatprep.subr.bf16.mxu0 0
      %3842 = vmatpush1.bf16.msra.mxu0 0
      %3843 = vmatprep.subr.bf16.mxu0 0
      %3844 = vmatpush1.bf16.msra.mxu0 0
      %3845 = vmatprep.subr.bf16.mxu0 0
      %3846 = vmatpush1.bf16.msra.mxu0 0
      %3847 = vmatprep.subr.bf16.mxu0 0
      %3848 = vmatpush1.bf16.msra.mxu0 0
      %3849 = vmatprep.subr.bf16.mxu0 0
      %3850 = vmatpush1.bf16.msra.mxu0 0
      %3851 = vmatprep.subr.bf16.mxu0 0
      %3852 = vmatpush1.bf16.msra.mxu0 0
      %3853 = vmatprep.subr.bf16.mxu0 0
      %3854 = vmatpush1.bf16.msra.mxu0 0
      %3855 = vmatprep.subr.bf16.mxu0 0
      %3856 = vmatpush1.bf16.msra.mxu0 0
      %3857 = vmatprep.mubr.bf16.mxu0 0
      %3858 = vmatmul.mubr.bf16.gmra.mrb[0].mxu0 %v3823
      %v3859 = vpop.f32.mrb[0].mxu0
      %v3860 = vadd.f32 0.0, %v3859
      %v3861 = vpop.f32.mrb[0].mxu0
      %v3862 = vpop.f32.mrb[0].mxu0
      %v3863 = vadd.f32 0.0, %v3862
      %v3864 = vpop.f32.mrb[0].mxu0
      %3865 = vdwg.mxu0
      %v3866 = vpack.c.bf16 %v3863, %v3860
      %3868 = vrot.lane.b32.xlu0 %v3749, 112
      %v3869 = vpop.permute.xlu0 %3868
      %3871 = vrot.lane.b32.xlu0 %v3750, 112
      %v3872 = vpop.permute.xlu0 %3871
      %v3874 = vsel %vm1732, %v3869, 0
      %v3877 = vsel %vm1732, %v3872, 0
      %3879 = vmatprep.subr.bf16.mxu0 0
      %3880 = vmatpush1.bf16.xpose.msra.mxu0 %v3877
      %3881 = vmatprep.subr.bf16.mxu0 0
      %3882 = vmatpush1.bf16.xpose.msra.mxu0 0
      %3883 = vmatprep.subr.bf16.mxu0 0
      %3884 = vmatpush1.bf16.xpose.msra.mxu0 0
      %3885 = vmatprep.subr.bf16.mxu0 0
      %3886 = vmatpush1.bf16.xpose.msra.mxu0 0
      %3887 = vmatprep.subr.bf16.mxu0 0
      %3888 = vmatpush1.bf16.xpose.msra.mxu0 0
      %3889 = vmatprep.subr.bf16.mxu0 0
      %3890 = vmatpush1.bf16.xpose.msra.mxu0 0
      %3891 = vmatprep.subr.bf16.mxu0 0
      %3892 = vmatpush1.bf16.xpose.msra.mxu0 0
      %3893 = vmatprep.subr.bf16.mxu0 0
      %3894 = vmatpush1.bf16.xpose.msra.mxu0 0
      %3895 = vmatprep.subr.bf16.mxu0 0
      %3896 = vmatpush1.bf16.xpose.msra.mxu0 0
      %3897 = vmatprep.subr.bf16.mxu0 0
      %3898 = vmatpush1.bf16.xpose.msra.mxu0 0
      %3899 = vmatprep.subr.bf16.mxu0 0
      %3900 = vmatpush1.bf16.xpose.msra.mxu0 0
      %3901 = vmatprep.subr.bf16.mxu0 0
      %3902 = vmatpush1.bf16.xpose.msra.mxu0 0
      %3903 = vmatprep.subr.bf16.mxu0 0
      %3904 = vmatpush1.bf16.xpose.msra.mxu0 0
      %3905 = vmatprep.subr.bf16.mxu0 0
      %3906 = vmatpush1.bf16.xpose.msra.mxu0 0
      %3907 = vmatprep.subr.bf16.mxu0 0
      %3908 = vmatpush1.bf16.xpose.msra.mxu0 0
      %3909 = vmatprep.subr.bf16.mxu0 0
      %3910 = vmatpush1.bf16.xpose.msra.mxu0 0
      %3911 = vmatprep.mubr.bf16.mxu0 0
      %3912 = vmatmul.mubr.bf16.gmra.mrb[0].mxu0 %v3874
      %v3913 = vpop.f32.mrb[0].mxu0
      %v3914 = vadd.f32 0.0, %v3913
      %v3915 = vpop.f32.mrb[0].mxu0
      %v3916 = vpop.f32.mrb[0].mxu0
      %v3917 = vadd.f32 0.0, %v3916
      %v3918 = vpop.f32.mrb[0].mxu0
      %3919 = vdwg.mxu0
      %v3920 = vsel %vm1732, %v3914, -inf
      %3921 = vmax.xlane.f32.xlu0 %v3920
      %v3922 = vpop.xlane.xlu0 %3921
      %v3923 = vsel %vm1732, %v3917, -inf
      %3924 = vmax.xlane.f32.xlu0 %v3923
      %v3925 = vpop.xlane.xlu0 %3924
      %v3926 = vsub.f32 %v3914, %v3922
      %v3927 = vsub.f32 %v3917, %v3925
      %v3928 = vmul.f32 %v3926, 1.442695
      %v3929 = vpow.pop %v3928
      %v3930 = vmul.f32 %v3927, 1.442695
      %v3931 = vpow.pop %v3930
      %v3932 = vsel %vm1732, %v3929, 0.0
      %3933 = vadd.xlane.f32.xlu0 %v3932
      %v3934 = vpop.xlane.xlu0 %3933
      %v3935 = vsel %vm1732, %v3931, 0.0
      %3936 = vadd.xlane.f32.xlu0 %v3935
      %v3937 = vpop.xlane.xlu0 %3936
      %v3938 = vrcp.pop %v3934
      %v3939 = vrcp.pop %v3937
      %v3940 = vmul.f32 %v3929, %v3938
      %v3941 = vmul.f32 %v3931, %v3939
      %v3942 = vpack.c.bf16 %v3941, %v3940
      %3944 = vrot.lane.b32.xlu0 %v3751, 112
      %v3945 = vpop.permute.xlu0 %3944
      %v3948 = vsel %vm1732, %v3942, 0
      %3950 = vmatprep.subr.bf16.mxu0 0
      %3951 = vmatpush1.bf16.msra.mxu0 %v3945
      %3952 = vmatprep.subr.bf16.mxu0 0
      %3953 = vmatpush1.bf16.msra.mxu0 0
      %3954 = vmatprep.subr.bf16.mxu0 0
      %3955 = vmatpush1.bf16.msra.mxu0 0
      %3956 = vmatprep.subr.bf16.mxu0 0
      %3957 = vmatpush1.bf16.msra.mxu0 0
      %3958 = vmatprep.subr.bf16.mxu0 0
      %3959 = vmatpush1.bf16.msra.mxu0 0
      %3960 = vmatprep.subr.bf16.mxu0 0
      %3961 = vmatpush1.bf16.msra.mxu0 0
      %3962 = vmatprep.subr.bf16.mxu0 0
      %3963 = vmatpush1.bf16.msra.mxu0 0
      %3964 = vmatprep.subr.bf16.mxu0 0
      %3965 = vmatpush1.bf16.msra.mxu0 0
      %3966 = vmatprep.subr.bf16.mxu0 0
      %3967 = vmatpush1.bf16.msra.mxu0 0
      %3968 = vmatprep.subr.bf16.mxu0 0
      %3969 = vmatpush1.bf16.msra.mxu0 0
      %3970 = vmatprep.subr.bf16.mxu0 0
      %3971 = vmatpush1.bf16.msra.mxu0 0
      %3972 = vmatprep.subr.bf16.mxu0 0
      %3973 = vmatpush1.bf16.msra.mxu0 0
      %3974 = vmatprep.subr.bf16.mxu0 0
      %3975 = vmatpush1.bf16.msra.mxu0 0
      %3976 = vmatprep.subr.bf16.mxu0 0
      %3977 = vmatpush1.bf16.msra.mxu0 0
      %3978 = vmatprep.subr.bf16.mxu0 0
      %3979 = vmatpush1.bf16.msra.mxu0 0
      %3980 = vmatprep.subr.bf16.mxu0 0
      %3981 = vmatpush1.bf16.msra.mxu0 0
      %3982 = vmatprep.mubr.bf16.mxu0 0
      %3983 = vmatmul.mubr.bf16.gmra.mrb[0].mxu0 %v3948
      %v3984 = vpop.f32.mrb[0].mxu0
      %v3985 = vadd.f32 0.0, %v3984
      %v3986 = vpop.f32.mrb[0].mxu0
      %v3987 = vpop.f32.mrb[0].mxu0
      %v3988 = vadd.f32 0.0, %v3987
      %v3989 = vpop.f32.mrb[0].mxu0
      %3990 = vdwg.mxu0
      %v3991 = vpack.c.bf16 %v3988, %v3985
      %v3994 = vunpack.c.l.b16 %v3743
      %v3995 = vunpack.c.l.b16 %v3744
      %v3996 = vpack.c.b16 %v3995, %v3994
      %v3999 = vsel %vm1732, %v3991, 0
      %4001 = vmatprep.subr.bf16.mxu0 0
      %4002 = vmatpush1.bf16.msra.mxu0 %v3996
      %4003 = vmatprep.subr.bf16.mxu0 0
      %4004 = vmatpush1.bf16.msra.mxu0 0
      %4005 = vmatprep.subr.bf16.mxu0 0
      %4006 = vmatpush1.bf16.msra.mxu0 0
      %4007 = vmatprep.subr.bf16.mxu0 0
      %4008 = vmatpush1.bf16.msra.mxu0 0
      %4009 = vmatprep.subr.bf16.mxu0 0
      %4010 = vmatpush1.bf16.msra.mxu0 0
      %4011 = vmatprep.subr.bf16.mxu0 0
      %4012 = vmatpush1.bf16.msra.mxu0 0
      %4013 = vmatprep.subr.bf16.mxu0 0
      %4014 = vmatpush1.bf16.msra.mxu0 0
      %4015 = vmatprep.subr.bf16.mxu0 0
      %4016 = vmatpush1.bf16.msra.mxu0 0
      %4017 = vmatprep.subr.bf16.mxu0 0
      %4018 = vmatpush1.bf16.msra.mxu0 0
      %4019 = vmatprep.subr.bf16.mxu0 0
      %4020 = vmatpush1.bf16.msra.mxu0 0
      %4021 = vmatprep.subr.bf16.mxu0 0
      %4022 = vmatpush1.bf16.msra.mxu0 0
      %4023 = vmatprep.subr.bf16.mxu0 0
      %4024 = vmatpush1.bf16.msra.mxu0 0
      %4025 = vmatprep.subr.bf16.mxu0 0
      %4026 = vmatpush1.bf16.msra.mxu0 0
      %4027 = vmatprep.subr.bf16.mxu0 0
      %4028 = vmatpush1.bf16.msra.mxu0 0
      %4029 = vmatprep.subr.bf16.mxu0 0
      %4030 = vmatpush1.bf16.msra.mxu0 0
      %4031 = vmatprep.subr.bf16.mxu0 0
      %4032 = vmatpush1.bf16.msra.mxu0 0
      %4033 = vmatprep.mubr.bf16.mxu0 0
      %4034 = vmatmul.mubr.bf16.gmra.mrb[0].mxu0 %v3999
      %v4035 = vpop.f32.mrb[0].mxu0
      %v4036 = vadd.f32 0.0, %v4035
      %v4037 = vpop.f32.mrb[0].mxu0
      %v4038 = vpop.f32.mrb[0].mxu0
      %v4039 = vadd.f32 0.0, %v4038
      %v4040 = vpop.f32.mrb[0].mxu0
      %4041 = vdwg.mxu0
      %v4044 = vunpack.c.l.b16 %v3741
      %v4045 = vunpack.c.l.b16 %v3742
      %v4046 = vpack.c.b16 %v4045, %v4044
      %v4049 = vsel %vm1732, %v3866, 0
      %4051 = vmatprep.subr.bf16.mxu0 0
      %4052 = vmatpush1.bf16.msra.mxu0 %v4046
      %4053 = vmatprep.subr.bf16.mxu0 0
      %4054 = vmatpush1.bf16.msra.mxu0 0
      %4055 = vmatprep.subr.bf16.mxu0 0
      %4056 = vmatpush1.bf16.msra.mxu0 0
      %4057 = vmatprep.subr.bf16.mxu0 0
      %4058 = vmatpush1.bf16.msra.mxu0 0
      %4059 = vmatprep.subr.bf16.mxu0 0
      %4060 = vmatpush1.bf16.msra.mxu0 0
      %4061 = vmatprep.subr.bf16.mxu0 0
      %4062 = vmatpush1.bf16.msra.mxu0 0
      %4063 = vmatprep.subr.bf16.mxu0 0
      %4064 = vmatpush1.bf16.msra.mxu0 0
      %4065 = vmatprep.subr.bf16.mxu0 0
      %4066 = vmatpush1.bf16.msra.mxu0 0
      %4067 = vmatprep.subr.bf16.mxu0 0
      %4068 = vmatpush1.bf16.msra.mxu0 0
      %4069 = vmatprep.subr.bf16.mxu0 0
      %4070 = vmatpush1.bf16.msra.mxu0 0
      %4071 = vmatprep.subr.bf16.mxu0 0
      %4072 = vmatpush1.bf16.msra.mxu0 0
      %4073 = vmatprep.subr.bf16.mxu0 0
      %4074 = vmatpush1.bf16.msra.mxu0 0
      %4075 = vmatprep.subr.bf16.mxu0 0
      %4076 = vmatpush1.bf16.msra.mxu0 0
      %4077 = vmatprep.subr.bf16.mxu0 0
      %4078 = vmatpush1.bf16.msra.mxu0 0
      %4079 = vmatprep.subr.bf16.mxu0 0
      %4080 = vmatpush1.bf16.msra.mxu0 0
      %4081 = vmatprep.subr.bf16.mxu0 0
      %4082 = vmatpush1.bf16.msra.mxu0 0
      %4083 = vmatprep.mubr.bf16.mxu0 0
      %4084 = vmatmul.mubr.bf16.gmra.mrb[0].mxu0 %v4049
      %v4085 = vpop.f32.mrb[0].mxu0
      %v4086 = vadd.f32 %v4036, %v4085
      %v4087 = vpop.f32.mrb[0].mxu0
      %v4088 = vpop.f32.mrb[0].mxu0
      %v4089 = vadd.f32 %v4039, %v4088
      %v4090 = vpop.f32.mrb[0].mxu0
      %4091 = vdwg.mxu0
      %4092 = vrot.lane.b32.xlu0 %v3749, 96
      %v4093 = vpop.permute.xlu0 %4092
      %4094 = vrot.lane.b32.xlu0 %v3750, 96
      %v4095 = vpop.permute.xlu0 %4094
      %v4097 = vsel %vm1732, %v4093, 0
      %v4100 = vsel %vm1732, %v4095, 0
      %4102 = vmatprep.subr.bf16.mxu0 0
      %4103 = vmatpush1.bf16.xpose.msra.mxu0 %v4100
      %4104 = vmatprep.subr.bf16.mxu0 0
      %4105 = vmatpush1.bf16.xpose.msra.mxu0 0
      %4106 = vmatprep.subr.bf16.mxu0 0
      %4107 = vmatpush1.bf16.xpose.msra.mxu0 0
      %4108 = vmatprep.subr.bf16.mxu0 0
      %4109 = vmatpush1.bf16.xpose.msra.mxu0 0
      %4110 = vmatprep.subr.bf16.mxu0 0
      %4111 = vmatpush1.bf16.xpose.msra.mxu0 0
      %4112 = vmatprep.subr.bf16.mxu0 0
      %4113 = vmatpush1.bf16.xpose.msra.mxu0 0
      %4114 = vmatprep.subr.bf16.mxu0 0
      %4115 = vmatpush1.bf16.xpose.msra.mxu0 0
      %4116 = vmatprep.subr.bf16.mxu0 0
      %4117 = vmatpush1.bf16.xpose.msra.mxu0 0
      %4118 = vmatprep.subr.bf16.mxu0 0
      %4119 = vmatpush1.bf16.xpose.msra.mxu0 0
      %4120 = vmatprep.subr.bf16.mxu0 0
      %4121 = vmatpush1.bf16.xpose.msra.mxu0 0
      %4122 = vmatprep.subr.bf16.mxu0 0
      %4123 = vmatpush1.bf16.xpose.msra.mxu0 0
      %4124 = vmatprep.subr.bf16.mxu0 0
      %4125 = vmatpush1.bf16.xpose.msra.mxu0 0
      %4126 = vmatprep.subr.bf16.mxu0 0
      %4127 = vmatpush1.bf16.xpose.msra.mxu0 0
      %4128 = vmatprep.subr.bf16.mxu0 0
      %4129 = vmatpush1.bf16.xpose.msra.mxu0 0
      %4130 = vmatprep.subr.bf16.mxu0 0
      %4131 = vmatpush1.bf16.xpose.msra.mxu0 0
      %4132 = vmatprep.subr.bf16.mxu0 0
      %4133 = vmatpush1.bf16.xpose.msra.mxu0 0
      %4134 = vmatprep.mubr.bf16.mxu0 0
      %4135 = vmatmul.mubr.bf16.gmra.mrb[0].mxu0 %v4097
      %v4136 = vpop.f32.mrb[0].mxu0
      %v4137 = vadd.f32 0.0, %v4136
      %v4138 = vpop.f32.mrb[0].mxu0
      %v4139 = vpop.f32.mrb[0].mxu0
      %v4140 = vadd.f32 0.0, %v4139
      %v4141 = vpop.f32.mrb[0].mxu0
      %4142 = vdwg.mxu0
      %v4143 = vsel %vm1732, %v4137, -inf
      %4144 = vmax.xlane.f32.xlu0 %v4143
      %v4145 = vpop.xlane.xlu0 %4144
      %v4146 = vsel %vm1732, %v4140, -inf
      %4147 = vmax.xlane.f32.xlu0 %v4146
      %v4148 = vpop.xlane.xlu0 %4147
      %v4149 = vsub.f32 %v4137, %v4145
      %v4150 = vsub.f32 %v4140, %v4148
      %v4151 = vmul.f32 %v4149, 1.442695
      %v4152 = vpow.pop %v4151
      %v4153 = vmul.f32 %v4150, 1.442695
      %v4154 = vpow.pop %v4153
      %v4155 = vsel %vm1732, %v4152, 0.0
      %4156 = vadd.xlane.f32.xlu0 %v4155
      %v4157 = vpop.xlane.xlu0 %4156
      %v4158 = vsel %vm1732, %v4154, 0.0
      %4159 = vadd.xlane.f32.xlu0 %v4158
      %v4160 = vpop.xlane.xlu0 %4159
      %v4161 = vrcp.pop %v4157
      %v4162 = vrcp.pop %v4160
      %v4163 = vmul.f32 %v4152, %v4161
      %v4164 = vmul.f32 %v4154, %v4162
      %v4165 = vpack.c.bf16 %v4164, %v4163
      %4166 = vrot.lane.b32.xlu0 %v3751, 96
      %v4167 = vpop.permute.xlu0 %4166
      %v4170 = vsel %vm1732, %v4165, 0
      %4172 = vmatprep.subr.bf16.mxu0 0
      %4173 = vmatpush1.bf16.msra.mxu0 %v4167
      %4174 = vmatprep.subr.bf16.mxu0 0
      %4175 = vmatpush1.bf16.msra.mxu0 0
      %4176 = vmatprep.subr.bf16.mxu0 0
      %4177 = vmatpush1.bf16.msra.mxu0 0
      %4178 = vmatprep.subr.bf16.mxu0 0
      %4179 = vmatpush1.bf16.msra.mxu0 0
      %4180 = vmatprep.subr.bf16.mxu0 0
      %4181 = vmatpush1.bf16.msra.mxu0 0
      %4182 = vmatprep.subr.bf16.mxu0 0
      %4183 = vmatpush1.bf16.msra.mxu0 0
      %4184 = vmatprep.subr.bf16.mxu0 0
      %4185 = vmatpush1.bf16.msra.mxu0 0
      %4186 = vmatprep.subr.bf16.mxu0 0
      %4187 = vmatpush1.bf16.msra.mxu0 0
      %4188 = vmatprep.subr.bf16.mxu0 0
      %4189 = vmatpush1.bf16.msra.mxu0 0
      %4190 = vmatprep.subr.bf16.mxu0 0
      %4191 = vmatpush1.bf16.msra.mxu0 0
      %4192 = vmatprep.subr.bf16.mxu0 0
      %4193 = vmatpush1.bf16.msra.mxu0 0
      %4194 = vmatprep.subr.bf16.mxu0 0
      %4195 = vmatpush1.bf16.msra.mxu0 0
      %4196 = vmatprep.subr.bf16.mxu0 0
      %4197 = vmatpush1.bf16.msra.mxu0 0
      %4198 = vmatprep.subr.bf16.mxu0 0
      %4199 = vmatpush1.bf16.msra.mxu0 0
      %4200 = vmatprep.subr.bf16.mxu0 0
      %4201 = vmatpush1.bf16.msra.mxu0 0
      %4202 = vmatprep.subr.bf16.mxu0 0
      %4203 = vmatpush1.bf16.msra.mxu0 0
      %4204 = vmatprep.mubr.bf16.mxu0 0
      %4205 = vmatmul.mubr.bf16.gmra.mrb[0].mxu0 %v4170
      %v4206 = vpop.f32.mrb[0].mxu0
      %v4207 = vadd.f32 0.0, %v4206
      %v4208 = vpop.f32.mrb[0].mxu0
      %v4209 = vpop.f32.mrb[0].mxu0
      %v4210 = vadd.f32 0.0, %v4209
      %v4211 = vpop.f32.mrb[0].mxu0
      %4212 = vdwg.mxu0
      %v4213 = vpack.c.bf16 %v4210, %v4207
      %v4216 = vunpack.c.l.b16 %v3745
      %v4217 = vunpack.c.l.b16 %v3746
      %v4218 = vpack.c.b16 %v4217, %v4216
      %v4221 = vsel %vm1732, %v4213, 0
      %4223 = vmatprep.subr.bf16.mxu0 0
      %4224 = vmatpush1.bf16.msra.mxu0 %v4218
      %4225 = vmatprep.subr.bf16.mxu0 0
      %4226 = vmatpush1.bf16.msra.mxu0 0
      %4227 = vmatprep.subr.bf16.mxu0 0
      %4228 = vmatpush1.bf16.msra.mxu0 0
      %4229 = vmatprep.subr.bf16.mxu0 0
      %4230 = vmatpush1.bf16.msra.mxu0 0
      %4231 = vmatprep.subr.bf16.mxu0 0
      %4232 = vmatpush1.bf16.msra.mxu0 0
      %4233 = vmatprep.subr.bf16.mxu0 0
      %4234 = vmatpush1.bf16.msra.mxu0 0
      %4235 = vmatprep.subr.bf16.mxu0 0
      %4236 = vmatpush1.bf16.msra.mxu0 0
      %4237 = vmatprep.subr.bf16.mxu0 0
      %4238 = vmatpush1.bf16.msra.mxu0 0
      %4239 = vmatprep.subr.bf16.mxu0 0
      %4240 = vmatpush1.bf16.msra.mxu0 0
      %4241 = vmatprep.subr.bf16.mxu0 0
      %4242 = vmatpush1.bf16.msra.mxu0 0
      %4243 = vmatprep.subr.bf16.mxu0 0
      %4244 = vmatpush1.bf16.msra.mxu0 0
      %4245 = vmatprep.subr.bf16.mxu0 0
      %4246 = vmatpush1.bf16.msra.mxu0 0
      %4247 = vmatprep.subr.bf16.mxu0 0
      %4248 = vmatpush1.bf16.msra.mxu0 0
      %4249 = vmatprep.subr.bf16.mxu0 0
      %4250 = vmatpush1.bf16.msra.mxu0 0
      %4251 = vmatprep.subr.bf16.mxu0 0
      %4252 = vmatpush1.bf16.msra.mxu0 0
      %4253 = vmatprep.subr.bf16.mxu0 0
      %4254 = vmatpush1.bf16.msra.mxu0 0
      %4255 = vmatprep.mubr.bf16.mxu0 0
      %4256 = vmatmul.mubr.bf16.gmra.mrb[0].mxu0 %v4221
      %v4257 = vpop.f32.mrb[0].mxu0
      %v4258 = vadd.f32 0.0, %v4257
      %v4259 = vpop.f32.mrb[0].mxu0
      %v4260 = vpop.f32.mrb[0].mxu0
      %v4261 = vadd.f32 0.0, %v4260
      %v4262 = vpop.f32.mrb[0].mxu0
      %4263 = vdwg.mxu0
      %v4264 = vadd.f32 %v4086, %v4258
      %v4265 = vadd.f32 %v4089, %v4261
      %4266 = vrot.lane.b32.xlu0 %v3749, 80
      %v4267 = vpop.permute.xlu0 %4266
      %4268 = vrot.lane.b32.xlu0 %v3750, 80
      %v4269 = vpop.permute.xlu0 %4268
      %v4271 = vsel %vm1732, %v4267, 0
      %v4274 = vsel %vm1732, %v4269, 0
      %4276 = vmatprep.subr.bf16.mxu0 0
      %4277 = vmatpush1.bf16.xpose.msra.mxu0 %v4274
      %4278 = vmatprep.subr.bf16.mxu0 0
      %4279 = vmatpush1.bf16.xpose.msra.mxu0 0
      %4280 = vmatprep.subr.bf16.mxu0 0
      %4281 = vmatpush1.bf16.xpose.msra.mxu0 0
      %4282 = vmatprep.subr.bf16.mxu0 0
      %4283 = vmatpush1.bf16.xpose.msra.mxu0 0
      %4284 = vmatprep.subr.bf16.mxu0 0
      %4285 = vmatpush1.bf16.xpose.msra.mxu0 0
      %4286 = vmatprep.subr.bf16.mxu0 0
      %4287 = vmatpush1.bf16.xpose.msra.mxu0 0
      %4288 = vmatprep.subr.bf16.mxu0 0
      %4289 = vmatpush1.bf16.xpose.msra.mxu0 0
      %4290 = vmatprep.subr.bf16.mxu0 0
      %4291 = vmatpush1.bf16.xpose.msra.mxu0 0
      %4292 = vmatprep.subr.bf16.mxu0 0
      %4293 = vmatpush1.bf16.xpose.msra.mxu0 0
      %4294 = vmatprep.subr.bf16.mxu0 0
      %4295 = vmatpush1.bf16.xpose.msra.mxu0 0
      %4296 = vmatprep.subr.bf16.mxu0 0
      %4297 = vmatpush1.bf16.xpose.msra.mxu0 0
      %4298 = vmatprep.subr.bf16.mxu0 0
      %4299 = vmatpush1.bf16.xpose.msra.mxu0 0
      %4300 = vmatprep.subr.bf16.mxu0 0
      %4301 = vmatpush1.bf16.xpose.msra.mxu0 0
      %4302 = vmatprep.subr.bf16.mxu0 0
      %4303 = vmatpush1.bf16.xpose.msra.mxu0 0
      %4304 = vmatprep.subr.bf16.mxu0 0
      %4305 = vmatpush1.bf16.xpose.msra.mxu0 0
      %4306 = vmatprep.subr.bf16.mxu0 0
      %4307 = vmatpush1.bf16.xpose.msra.mxu0 0
      %4308 = vmatprep.mubr.bf16.mxu0 0
      %4309 = vmatmul.mubr.bf16.gmra.mrb[0].mxu0 %v4271
      %v4310 = vpop.f32.mrb[0].mxu0
      %v4311 = vadd.f32 0.0, %v4310
      %v4312 = vpop.f32.mrb[0].mxu0
      %v4313 = vpop.f32.mrb[0].mxu0
      %v4314 = vadd.f32 0.0, %v4313
      %v4315 = vpop.f32.mrb[0].mxu0
      %4316 = vdwg.mxu0
      %v4317 = vsel %vm1732, %v4311, -inf
      %4318 = vmax.xlane.f32.xlu0 %v4317
      %v4319 = vpop.xlane.xlu0 %4318
      %v4320 = vsel %vm1732, %v4314, -inf
      %4321 = vmax.xlane.f32.xlu0 %v4320
      %v4322 = vpop.xlane.xlu0 %4321
      %v4323 = vsub.f32 %v4311, %v4319
      %v4324 = vsub.f32 %v4314, %v4322
      %v4325 = vmul.f32 %v4323, 1.442695
      %v4326 = vpow.pop %v4325
      %v4327 = vmul.f32 %v4324, 1.442695
      %v4328 = vpow.pop %v4327
      %v4329 = vsel %vm1732, %v4326, 0.0
      %4330 = vadd.xlane.f32.xlu0 %v4329
      %v4331 = vpop.xlane.xlu0 %4330
      %v4332 = vsel %vm1732, %v4328, 0.0
      %4333 = vadd.xlane.f32.xlu0 %v4332
      %v4334 = vpop.xlane.xlu0 %4333
      %v4335 = vrcp.pop %v4331
      %v4336 = vrcp.pop %v4334
      %v4337 = vmul.f32 %v4326, %v4335
      %v4338 = vmul.f32 %v4328, %v4336
      %v4339 = vpack.c.bf16 %v4338, %v4337
      %4340 = vrot.lane.b32.xlu0 %v3751, 80
      %v4341 = vpop.permute.xlu0 %4340
      %v4344 = vsel %vm1732, %v4339, 0
      %4346 = vmatprep.subr.bf16.mxu0 0
      %4347 = vmatpush1.bf16.msra.mxu0 %v4341
      %4348 = vmatprep.subr.bf16.mxu0 0
      %4349 = vmatpush1.bf16.msra.mxu0 0
      %4350 = vmatprep.subr.bf16.mxu0 0
      %4351 = vmatpush1.bf16.msra.mxu0 0
      %4352 = vmatprep.subr.bf16.mxu0 0
      %4353 = vmatpush1.bf16.msra.mxu0 0
      %4354 = vmatprep.subr.bf16.mxu0 0
      %4355 = vmatpush1.bf16.msra.mxu0 0
      %4356 = vmatprep.subr.bf16.mxu0 0
      %4357 = vmatpush1.bf16.msra.mxu0 0
      %4358 = vmatprep.subr.bf16.mxu0 0
      %4359 = vmatpush1.bf16.msra.mxu0 0
      %4360 = vmatprep.subr.bf16.mxu0 0
      %4361 = vmatpush1.bf16.msra.mxu0 0
      %4362 = vmatprep.subr.bf16.mxu0 0
      %4363 = vmatpush1.bf16.msra.mxu0 0
      %4364 = vmatprep.subr.bf16.mxu0 0
      %4365 = vmatpush1.bf16.msra.mxu0 0
      %4366 = vmatprep.subr.bf16.mxu0 0
      %4367 = vmatpush1.bf16.msra.mxu0 0
      %4368 = vmatprep.subr.bf16.mxu0 0
      %4369 = vmatpush1.bf16.msra.mxu0 0
      %4370 = vmatprep.subr.bf16.mxu0 0
      %4371 = vmatpush1.bf16.msra.mxu0 0
      %4372 = vmatprep.subr.bf16.mxu0 0
      %4373 = vmatpush1.bf16.msra.mxu0 0
      %4374 = vmatprep.subr.bf16.mxu0 0
      %4375 = vmatpush1.bf16.msra.mxu0 0
      %4376 = vmatprep.subr.bf16.mxu0 0
      %4377 = vmatpush1.bf16.msra.mxu0 0
      %4378 = vmatprep.mubr.bf16.mxu0 0
      %4379 = vmatmul.mubr.bf16.gmra.mrb[0].mxu0 %v4344
      %v4380 = vpop.f32.mrb[0].mxu0
      %v4381 = vadd.f32 0.0, %v4380
      %v4382 = vpop.f32.mrb[0].mxu0
      %v4383 = vpop.f32.mrb[0].mxu0
      %v4384 = vadd.f32 0.0, %v4383
      %v4385 = vpop.f32.mrb[0].mxu0
      %4386 = vdwg.mxu0
      %v4387 = vpack.c.bf16 %v4384, %v4381
      %v4390 = vunpack.c.l.b16 %v3747
      %v4391 = vunpack.c.l.b16 %v3748
      %v4392 = vpack.c.b16 %v4391, %v4390
      %v4395 = vsel %vm1732, %v4387, 0
      %4397 = vmatprep.subr.bf16.mxu0 0
      %4398 = vmatpush1.bf16.msra.mxu0 %v4392
      %4399 = vmatprep.subr.bf16.mxu0 0
      %4400 = vmatpush1.bf16.msra.mxu0 0
      %4401 = vmatprep.subr.bf16.mxu0 0
      %4402 = vmatpush1.bf16.msra.mxu0 0
      %4403 = vmatprep.subr.bf16.mxu0 0
      %4404 = vmatpush1.bf16.msra.mxu0 0
      %4405 = vmatprep.subr.bf16.mxu0 0
      %4406 = vmatpush1.bf16.msra.mxu0 0
      %4407 = vmatprep.subr.bf16.mxu0 0
      %4408 = vmatpush1.bf16.msra.mxu0 0
      %4409 = vmatprep.subr.bf16.mxu0 0
      %4410 = vmatpush1.bf16.msra.mxu0 0
      %4411 = vmatprep.subr.bf16.mxu0 0
      %4412 = vmatpush1.bf16.msra.mxu0 0
      %4413 = vmatprep.subr.bf16.mxu0 0
      %4414 = vmatpush1.bf16.msra.mxu0 0
      %4415 = vmatprep.subr.bf16.mxu0 0
      %4416 = vmatpush1.bf16.msra.mxu0 0
      %4417 = vmatprep.subr.bf16.mxu0 0
      %4418 = vmatpush1.bf16.msra.mxu0 0
      %4419 = vmatprep.subr.bf16.mxu0 0
      %4420 = vmatpush1.bf16.msra.mxu0 0
      %4421 = vmatprep.subr.bf16.mxu0 0
      %4422 = vmatpush1.bf16.msra.mxu0 0
      %4423 = vmatprep.subr.bf16.mxu0 0
      %4424 = vmatpush1.bf16.msra.mxu0 0
      %4425 = vmatprep.subr.bf16.mxu0 0
      %4426 = vmatpush1.bf16.msra.mxu0 0
      %4427 = vmatprep.subr.bf16.mxu0 0
      %4428 = vmatpush1.bf16.msra.mxu0 0
      %4429 = vmatprep.mubr.bf16.mxu0 0
      %4430 = vmatmul.mubr.bf16.gmra.mrb[0].mxu0 %v4395
      %v4431 = vpop.f32.mrb[0].mxu0
      %v4432 = vadd.f32 0.0, %v4431
      %v4433 = vpop.f32.mrb[0].mxu0
      %v4434 = vpop.f32.mrb[0].mxu0
      %v4435 = vadd.f32 0.0, %v4434
      %v4436 = vpop.f32.mrb[0].mxu0
      %4437 = vdwg.mxu0
      %v4438 = vadd.f32 %v4264, %v4432
      %v4439 = vadd.f32 %v4265, %v4435
      %v4440 = vpack.c.bf16 %v3447, %v3446
      %v4441 = vpack.c.bf16 %v3652, %v3651
      %v4442 = vpack.c.bf16 %v3738, %v3735
      %v4444 = vsel %vm1732, %v4440, 0
      %v4447 = vsel %vm1732, %v4441, 0
      %4449 = vmatprep.subr.bf16.mxu0 0
      %4450 = vmatpush1.bf16.xpose.msra.mxu0 %v4447
      %4451 = vmatprep.subr.bf16.mxu0 0
      %4452 = vmatpush1.bf16.xpose.msra.mxu0 0
      %4453 = vmatprep.subr.bf16.mxu0 0
      %4454 = vmatpush1.bf16.xpose.msra.mxu0 0
      %4455 = vmatprep.subr.bf16.mxu0 0
      %4456 = vmatpush1.bf16.xpose.msra.mxu0 0
      %4457 = vmatprep.subr.bf16.mxu0 0
      %4458 = vmatpush1.bf16.xpose.msra.mxu0 0
      %4459 = vmatprep.subr.bf16.mxu0 0
      %4460 = vmatpush1.bf16.xpose.msra.mxu0 0
      %4461 = vmatprep.subr.bf16.mxu0 0
      %4462 = vmatpush1.bf16.xpose.msra.mxu0 0
      %4463 = vmatprep.subr.bf16.mxu0 0
      %4464 = vmatpush1.bf16.xpose.msra.mxu0 0
      %4465 = vmatprep.subr.bf16.mxu0 0
      %4466 = vmatpush1.bf16.xpose.msra.mxu0 0
      %4467 = vmatprep.subr.bf16.mxu0 0
      %4468 = vmatpush1.bf16.xpose.msra.mxu0 0
      %4469 = vmatprep.subr.bf16.mxu0 0
      %4470 = vmatpush1.bf16.xpose.msra.mxu0 0
      %4471 = vmatprep.subr.bf16.mxu0 0
      %4472 = vmatpush1.bf16.xpose.msra.mxu0 0
      %4473 = vmatprep.subr.bf16.mxu0 0
      %4474 = vmatpush1.bf16.xpose.msra.mxu0 0
      %4475 = vmatprep.subr.bf16.mxu0 0
      %4476 = vmatpush1.bf16.xpose.msra.mxu0 0
      %4477 = vmatprep.subr.bf16.mxu0 0
      %4478 = vmatpush1.bf16.xpose.msra.mxu0 0
      %4479 = vmatprep.subr.bf16.mxu0 0
      %4480 = vmatpush1.bf16.xpose.msra.mxu0 0
      %4481 = vmatprep.mubr.bf16.mxu0 0
      %4482 = vmatmul.mubr.bf16.gmra.mrb[0].mxu0 %v4444
      %v4483 = vpop.f32.mrb[0].mxu0
      %v4484 = vadd.f32 0.0, %v4483
      %v4485 = vpop.f32.mrb[0].mxu0
      %v4486 = vpop.f32.mrb[0].mxu0
      %v4487 = vadd.f32 0.0, %v4486
      %v4488 = vpop.f32.mrb[0].mxu0
      %4489 = vdwg.mxu0
      %v4490 = vsel %vm1732, %v4484, -inf
      %4491 = vmax.xlane.f32.xlu0 %v4490
      %v4492 = vpop.xlane.xlu0 %4491
      %v4493 = vsel %vm1732, %v4487, -inf
      %4494 = vmax.xlane.f32.xlu0 %v4493
      %v4495 = vpop.xlane.xlu0 %4494
      %v4496 = vsub.f32 %v4484, %v4492
      %v4497 = vsub.f32 %v4487, %v4495
      %v4498 = vmul.f32 %v4496, 1.442695
      %v4499 = vpow.pop %v4498
      %v4500 = vmul.f32 %v4497, 1.442695
      %v4501 = vpow.pop %v4500
      %v4502 = vsel %vm1732, %v4499, 0.0
      %4503 = vadd.xlane.f32.xlu0 %v4502
      %v4504 = vpop.xlane.xlu0 %4503
      %v4505 = vsel %vm1732, %v4501, 0.0
      %4506 = vadd.xlane.f32.xlu0 %v4505
      %v4507 = vpop.xlane.xlu0 %4506
      %v4508 = vrcp.pop %v4504
      %v4509 = vrcp.pop %v4507
      %v4510 = vmul.f32 %v4499, %v4508
      %v4511 = vmul.f32 %v4501, %v4509
      %v4512 = vpack.c.bf16 %v4511, %v4510
      %v4514 = vsel %vm1732, %v4512, 0
      %4516 = vmatprep.subr.bf16.mxu0 0
      %4517 = vmatpush1.bf16.msra.mxu0 %v4442
      %4518 = vmatprep.subr.bf16.mxu0 0
      %4519 = vmatpush1.bf16.msra.mxu0 0
      %4520 = vmatprep.subr.bf16.mxu0 0
      %4521 = vmatpush1.bf16.msra.mxu0 0
      %4522 = vmatprep.subr.bf16.mxu0 0
      %4523 = vmatpush1.bf16.msra.mxu0 0
      %4524 = vmatprep.subr.bf16.mxu0 0
      %4525 = vmatpush1.bf16.msra.mxu0 0
      %4526 = vmatprep.subr.bf16.mxu0 0
      %4527 = vmatpush1.bf16.msra.mxu0 0
      %4528 = vmatprep.subr.bf16.mxu0 0
      %4529 = vmatpush1.bf16.msra.mxu0 0
      %4530 = vmatprep.subr.bf16.mxu0 0
      %4531 = vmatpush1.bf16.msra.mxu0 0
      %4532 = vmatprep.subr.bf16.mxu0 0
      %4533 = vmatpush1.bf16.msra.mxu0 0
      %4534 = vmatprep.subr.bf16.mxu0 0
      %4535 = vmatpush1.bf16.msra.mxu0 0
      %4536 = vmatprep.subr.bf16.mxu0 0
      %4537 = vmatpush1.bf16.msra.mxu0 0
      %4538 = vmatprep.subr.bf16.mxu0 0
      %4539 = vmatpush1.bf16.msra.mxu0 0
      %4540 = vmatprep.subr.bf16.mxu0 0
      %4541 = vmatpush1.bf16.msra.mxu0 0
      %4542 = vmatprep.subr.bf16.mxu0 0
      %4543 = vmatpush1.bf16.msra.mxu0 0
      %4544 = vmatprep.subr.bf16.mxu0 0
      %4545 = vmatpush1.bf16.msra.mxu0 0
      %4546 = vmatprep.subr.bf16.mxu0 0
      %4547 = vmatpush1.bf16.msra.mxu0 0
      %4548 = vmatprep.mubr.bf16.mxu0 0
      %4549 = vmatmul.mubr.bf16.gmra.mrb[0].mxu0 %v4514
      %v4550 = vpop.f32.mrb[0].mxu0
      %v4551 = vadd.f32 0.0, %v4550
      %v4552 = vpop.f32.mrb[0].mxu0
      %v4553 = vpop.f32.mrb[0].mxu0
      %v4554 = vadd.f32 0.0, %v4553
      %v4555 = vpop.f32.mrb[0].mxu0
      %4556 = vdwg.mxu0
      %v4557 = vpack.c.bf16 %v4554, %v4551
      %4559 = vrot.lane.b32.xlu0 %v4440, 112
      %v4560 = vpop.permute.xlu0 %4559
      %4562 = vrot.lane.b32.xlu0 %v4441, 112
      %v4563 = vpop.permute.xlu0 %4562
      %v4565 = vsel %vm1732, %v4560, 0
      %v4568 = vsel %vm1732, %v4563, 0
      %4570 = vmatprep.subr.bf16.mxu0 0
      %4571 = vmatpush1.bf16.xpose.msra.mxu0 %v4568
      %4572 = vmatprep.subr.bf16.mxu0 0
      %4573 = vmatpush1.bf16.xpose.msra.mxu0 0
      %4574 = vmatprep.subr.bf16.mxu0 0
      %4575 = vmatpush1.bf16.xpose.msra.mxu0 0
      %4576 = vmatprep.subr.bf16.mxu0 0
      %4577 = vmatpush1.bf16.xpose.msra.mxu0 0
      %4578 = vmatprep.subr.bf16.mxu0 0
      %4579 = vmatpush1.bf16.xpose.msra.mxu0 0
      %4580 = vmatprep.subr.bf16.mxu0 0
      %4581 = vmatpush1.bf16.xpose.msra.mxu0 0
      %4582 = vmatprep.subr.bf16.mxu0 0
      %4583 = vmatpush1.bf16.xpose.msra.mxu0 0
      %4584 = vmatprep.subr.bf16.mxu0 0
      %4585 = vmatpush1.bf16.xpose.msra.mxu0 0
      %4586 = vmatprep.subr.bf16.mxu0 0
      %4587 = vmatpush1.bf16.xpose.msra.mxu0 0
      %4588 = vmatprep.subr.bf16.mxu0 0
      %4589 = vmatpush1.bf16.xpose.msra.mxu0 0
      %4590 = vmatprep.subr.bf16.mxu0 0
      %4591 = vmatpush1.bf16.xpose.msra.mxu0 0
      %4592 = vmatprep.subr.bf16.mxu0 0
      %4593 = vmatpush1.bf16.xpose.msra.mxu0 0
      %4594 = vmatprep.subr.bf16.mxu0 0
      %4595 = vmatpush1.bf16.xpose.msra.mxu0 0
      %4596 = vmatprep.subr.bf16.mxu0 0
      %4597 = vmatpush1.bf16.xpose.msra.mxu0 0
      %4598 = vmatprep.subr.bf16.mxu0 0
      %4599 = vmatpush1.bf16.xpose.msra.mxu0 0
      %4600 = vmatprep.subr.bf16.mxu0 0
      %4601 = vmatpush1.bf16.xpose.msra.mxu0 0
      %4602 = vmatprep.mubr.bf16.mxu0 0
      %4603 = vmatmul.mubr.bf16.gmra.mrb[0].mxu0 %v4565
      %v4604 = vpop.f32.mrb[0].mxu0
      %v4605 = vadd.f32 0.0, %v4604
      %v4606 = vpop.f32.mrb[0].mxu0
      %v4607 = vpop.f32.mrb[0].mxu0
      %v4608 = vadd.f32 0.0, %v4607
      %v4609 = vpop.f32.mrb[0].mxu0
      %4610 = vdwg.mxu0
      %v4611 = vsel %vm1732, %v4605, -inf
      %4612 = vmax.xlane.f32.xlu0 %v4611
      %v4613 = vpop.xlane.xlu0 %4612
      %v4614 = vsel %vm1732, %v4608, -inf
      %4615 = vmax.xlane.f32.xlu0 %v4614
      %v4616 = vpop.xlane.xlu0 %4615
      %v4617 = vsub.f32 %v4605, %v4613
      %v4618 = vsub.f32 %v4608, %v4616
      %v4619 = vmul.f32 %v4617, 1.442695
      %v4620 = vpow.pop %v4619
      %v4621 = vmul.f32 %v4618, 1.442695
      %v4622 = vpow.pop %v4621
      %v4623 = vsel %vm1732, %v4620, 0.0
      %4624 = vadd.xlane.f32.xlu0 %v4623
      %v4625 = vpop.xlane.xlu0 %4624
      %v4626 = vsel %vm1732, %v4622, 0.0
      %4627 = vadd.xlane.f32.xlu0 %v4626
      %v4628 = vpop.xlane.xlu0 %4627
      %v4629 = vrcp.pop %v4625
      %v4630 = vrcp.pop %v4628
      %v4631 = vmul.f32 %v4620, %v4629
      %v4632 = vmul.f32 %v4622, %v4630
      %v4633 = vpack.c.bf16 %v4632, %v4631
      %4635 = vrot.lane.b32.xlu0 %v4442, 112
      %v4636 = vpop.permute.xlu0 %4635
      %v4639 = vsel %vm1732, %v4633, 0
      %4641 = vmatprep.subr.bf16.mxu0 0
      %4642 = vmatpush1.bf16.msra.mxu0 %v4636
      %4643 = vmatprep.subr.bf16.mxu0 0
      %4644 = vmatpush1.bf16.msra.mxu0 0
      %4645 = vmatprep.subr.bf16.mxu0 0
      %4646 = vmatpush1.bf16.msra.mxu0 0
      %4647 = vmatprep.subr.bf16.mxu0 0
      %4648 = vmatpush1.bf16.msra.mxu0 0
      %4649 = vmatprep.subr.bf16.mxu0 0
      %4650 = vmatpush1.bf16.msra.mxu0 0
      %4651 = vmatprep.subr.bf16.mxu0 0
      %4652 = vmatpush1.bf16.msra.mxu0 0
      %4653 = vmatprep.subr.bf16.mxu0 0
      %4654 = vmatpush1.bf16.msra.mxu0 0
      %4655 = vmatprep.subr.bf16.mxu0 0
      %4656 = vmatpush1.bf16.msra.mxu0 0
      %4657 = vmatprep.subr.bf16.mxu0 0
      %4658 = vmatpush1.bf16.msra.mxu0 0
      %4659 = vmatprep.subr.bf16.mxu0 0
      %4660 = vmatpush1.bf16.msra.mxu0 0
      %4661 = vmatprep.subr.bf16.mxu0 0
      %4662 = vmatpush1.bf16.msra.mxu0 0
      %4663 = vmatprep.subr.bf16.mxu0 0
      %4664 = vmatpush1.bf16.msra.mxu0 0
      %4665 = vmatprep.subr.bf16.mxu0 0
      %4666 = vmatpush1.bf16.msra.mxu0 0
      %4667 = vmatprep.subr.bf16.mxu0 0
      %4668 = vmatpush1.bf16.msra.mxu0 0
      %4669 = vmatprep.subr.bf16.mxu0 0
      %4670 = vmatpush1.bf16.msra.mxu0 0
      %4671 = vmatprep.subr.bf16.mxu0 0
      %4672 = vmatpush1.bf16.msra.mxu0 0
      %4673 = vmatprep.mubr.bf16.mxu0 0
      %4674 = vmatmul.mubr.bf16.gmra.mrb[0].mxu0 %v4639
      %v4675 = vpop.f32.mrb[0].mxu0
      %v4676 = vadd.f32 0.0, %v4675
      %v4677 = vpop.f32.mrb[0].mxu0
      %v4678 = vpop.f32.mrb[0].mxu0
      %v4679 = vadd.f32 0.0, %v4678
      %v4680 = vpop.f32.mrb[0].mxu0
      %4681 = vdwg.mxu0
      %v4682 = vpack.c.bf16 %v4679, %v4676
      %v4684 = vsel %vm1732, %v4682, 0
      %4686 = vmatprep.subr.bf16.mxu0 0
      %4687 = vmatpush1.bf16.msra.mxu0 %v3996
      %4688 = vmatprep.subr.bf16.mxu0 0
      %4689 = vmatpush1.bf16.msra.mxu0 0
      %4690 = vmatprep.subr.bf16.mxu0 0
      %4691 = vmatpush1.bf16.msra.mxu0 0
      %4692 = vmatprep.subr.bf16.mxu0 0
      %4693 = vmatpush1.bf16.msra.mxu0 0
      %4694 = vmatprep.subr.bf16.mxu0 0
      %4695 = vmatpush1.bf16.msra.mxu0 0
      %4696 = vmatprep.subr.bf16.mxu0 0
      %4697 = vmatpush1.bf16.msra.mxu0 0
      %4698 = vmatprep.subr.bf16.mxu0 0
      %4699 = vmatpush1.bf16.msra.mxu0 0
      %4700 = vmatprep.subr.bf16.mxu0 0
      %4701 = vmatpush1.bf16.msra.mxu0 0
      %4702 = vmatprep.subr.bf16.mxu0 0
      %4703 = vmatpush1.bf16.msra.mxu0 0
      %4704 = vmatprep.subr.bf16.mxu0 0
      %4705 = vmatpush1.bf16.msra.mxu0 0
      %4706 = vmatprep.subr.bf16.mxu0 0
      %4707 = vmatpush1.bf16.msra.mxu0 0
      %4708 = vmatprep.subr.bf16.mxu0 0
      %4709 = vmatpush1.bf16.msra.mxu0 0
      %4710 = vmatprep.subr.bf16.mxu0 0
      %4711 = vmatpush1.bf16.msra.mxu0 0
      %4712 = vmatprep.subr.bf16.mxu0 0
      %4713 = vmatpush1.bf16.msra.mxu0 0
      %4714 = vmatprep.subr.bf16.mxu0 0
      %4715 = vmatpush1.bf16.msra.mxu0 0
      %4716 = vmatprep.subr.bf16.mxu0 0
      %4717 = vmatpush1.bf16.msra.mxu0 0
      %4718 = vmatprep.mubr.bf16.mxu0 0
      %4719 = vmatmul.mubr.bf16.gmra.mrb[0].mxu0 %v4684
      %v4720 = vpop.f32.mrb[0].mxu0
      %v4721 = vadd.f32 0.0, %v4720
      %v4722 = vpop.f32.mrb[0].mxu0
      %v4723 = vpop.f32.mrb[0].mxu0
      %v4724 = vadd.f32 0.0, %v4723
      %v4725 = vpop.f32.mrb[0].mxu0
      %4726 = vdwg.mxu0
      %v4728 = vsel %vm1732, %v4557, 0
      %4730 = vmatprep.subr.bf16.mxu0 0
      %4731 = vmatpush1.bf16.msra.mxu0 %v4046
      %4732 = vmatprep.subr.bf16.mxu0 0
      %4733 = vmatpush1.bf16.msra.mxu0 0
      %4734 = vmatprep.subr.bf16.mxu0 0
      %4735 = vmatpush1.bf16.msra.mxu0 0
      %4736 = vmatprep.subr.bf16.mxu0 0
      %4737 = vmatpush1.bf16.msra.mxu0 0
      %4738 = vmatprep.subr.bf16.mxu0 0
      %4739 = vmatpush1.bf16.msra.mxu0 0
      %4740 = vmatprep.subr.bf16.mxu0 0
      %4741 = vmatpush1.bf16.msra.mxu0 0
      %4742 = vmatprep.subr.bf16.mxu0 0
      %4743 = vmatpush1.bf16.msra.mxu0 0
      %4744 = vmatprep.subr.bf16.mxu0 0
      %4745 = vmatpush1.bf16.msra.mxu0 0
      %4746 = vmatprep.subr.bf16.mxu0 0
      %4747 = vmatpush1.bf16.msra.mxu0 0
      %4748 = vmatprep.subr.bf16.mxu0 0
      %4749 = vmatpush1.bf16.msra.mxu0 0
      %4750 = vmatprep.subr.bf16.mxu0 0
      %4751 = vmatpush1.bf16.msra.mxu0 0
      %4752 = vmatprep.subr.bf16.mxu0 0
      %4753 = vmatpush1.bf16.msra.mxu0 0
      %4754 = vmatprep.subr.bf16.mxu0 0
      %4755 = vmatpush1.bf16.msra.mxu0 0
      %4756 = vmatprep.subr.bf16.mxu0 0
      %4757 = vmatpush1.bf16.msra.mxu0 0
      %4758 = vmatprep.subr.bf16.mxu0 0
      %4759 = vmatpush1.bf16.msra.mxu0 0
      %4760 = vmatprep.subr.bf16.mxu0 0
      %4761 = vmatpush1.bf16.msra.mxu0 0
      %4762 = vmatprep.mubr.bf16.mxu0 0
      %4763 = vmatmul.mubr.bf16.gmra.mrb[0].mxu0 %v4728
      %v4764 = vpop.f32.mrb[0].mxu0
      %v4765 = vadd.f32 %v4721, %v4764
      %v4766 = vpop.f32.mrb[0].mxu0
      %v4767 = vpop.f32.mrb[0].mxu0
      %v4768 = vadd.f32 %v4724, %v4767
      %v4769 = vpop.f32.mrb[0].mxu0
      %4770 = vdwg.mxu0
      %4771 = vrot.lane.b32.xlu0 %v4440, 96
      %v4772 = vpop.permute.xlu0 %4771
      %4773 = vrot.lane.b32.xlu0 %v4441, 96
      %v4774 = vpop.permute.xlu0 %4773
      %v4776 = vsel %vm1732, %v4772, 0
      %v4779 = vsel %vm1732, %v4774, 0
      %4781 = vmatprep.subr.bf16.mxu0 0
      %4782 = vmatpush1.bf16.xpose.msra.mxu0 %v4779
      %4783 = vmatprep.subr.bf16.mxu0 0
      %4784 = vmatpush1.bf16.xpose.msra.mxu0 0
      %4785 = vmatprep.subr.bf16.mxu0 0
      %4786 = vmatpush1.bf16.xpose.msra.mxu0 0
      %4787 = vmatprep.subr.bf16.mxu0 0
      %4788 = vmatpush1.bf16.xpose.msra.mxu0 0
      %4789 = vmatprep.subr.bf16.mxu0 0
      %4790 = vmatpush1.bf16.xpose.msra.mxu0 0
      %4791 = vmatprep.subr.bf16.mxu0 0
      %4792 = vmatpush1.bf16.xpose.msra.mxu0 0
      %4793 = vmatprep.subr.bf16.mxu0 0
      %4794 = vmatpush1.bf16.xpose.msra.mxu0 0
      %4795 = vmatprep.subr.bf16.mxu0 0
      %4796 = vmatpush1.bf16.xpose.msra.mxu0 0
      %4797 = vmatprep.subr.bf16.mxu0 0
      %4798 = vmatpush1.bf16.xpose.msra.mxu0 0
      %4799 = vmatprep.subr.bf16.mxu0 0
      %4800 = vmatpush1.bf16.xpose.msra.mxu0 0
      %4801 = vmatprep.subr.bf16.mxu0 0
      %4802 = vmatpush1.bf16.xpose.msra.mxu0 0
      %4803 = vmatprep.subr.bf16.mxu0 0
      %4804 = vmatpush1.bf16.xpose.msra.mxu0 0
      %4805 = vmatprep.subr.bf16.mxu0 0
      %4806 = vmatpush1.bf16.xpose.msra.mxu0 0
      %4807 = vmatprep.subr.bf16.mxu0 0
      %4808 = vmatpush1.bf16.xpose.msra.mxu0 0
      %4809 = vmatprep.subr.bf16.mxu0 0
      %4810 = vmatpush1.bf16.xpose.msra.mxu0 0
      %4811 = vmatprep.subr.bf16.mxu0 0
      %4812 = vmatpush1.bf16.xpose.msra.mxu0 0
      %4813 = vmatprep.mubr.bf16.mxu0 0
      %4814 = vmatmul.mubr.bf16.gmra.mrb[0].mxu0 %v4776
      %v4815 = vpop.f32.mrb[0].mxu0
      %v4816 = vadd.f32 0.0, %v4815
      %v4817 = vpop.f32.mrb[0].mxu0
      %v4818 = vpop.f32.mrb[0].mxu0
      %v4819 = vadd.f32 0.0, %v4818
      %v4820 = vpop.f32.mrb[0].mxu0
      %4821 = vdwg.mxu0
      %v4822 = vsel %vm1732, %v4816, -inf
      %4823 = vmax.xlane.f32.xlu0 %v4822
      %v4824 = vpop.xlane.xlu0 %4823
      %v4825 = vsel %vm1732, %v4819, -inf
      %4826 = vmax.xlane.f32.xlu0 %v4825
      %v4827 = vpop.xlane.xlu0 %4826
      %v4828 = vsub.f32 %v4816, %v4824
      %v4829 = vsub.f32 %v4819, %v4827
      %v4830 = vmul.f32 %v4828, 1.442695
      %v4831 = vpow.pop %v4830
      %v4832 = vmul.f32 %v4829, 1.442695
      %v4833 = vpow.pop %v4832
      %v4834 = vsel %vm1732, %v4831, 0.0
      %4835 = vadd.xlane.f32.xlu0 %v4834
      %v4836 = vpop.xlane.xlu0 %4835
      %v4837 = vsel %vm1732, %v4833, 0.0
      %4838 = vadd.xlane.f32.xlu0 %v4837
      %v4839 = vpop.xlane.xlu0 %4838
      %v4840 = vrcp.pop %v4836
      %v4841 = vrcp.pop %v4839
      %v4842 = vmul.f32 %v4831, %v4840
      %v4843 = vmul.f32 %v4833, %v4841
      %v4844 = vpack.c.bf16 %v4843, %v4842
      %4845 = vrot.lane.b32.xlu0 %v4442, 96
      %v4846 = vpop.permute.xlu0 %4845
      %v4849 = vsel %vm1732, %v4844, 0
      %4851 = vmatprep.subr.bf16.mxu0 0
      %4852 = vmatpush1.bf16.msra.mxu0 %v4846
      %4853 = vmatprep.subr.bf16.mxu0 0
      %4854 = vmatpush1.bf16.msra.mxu0 0
      %4855 = vmatprep.subr.bf16.mxu0 0
      %4856 = vmatpush1.bf16.msra.mxu0 0
      %4857 = vmatprep.subr.bf16.mxu0 0
      %4858 = vmatpush1.bf16.msra.mxu0 0
      %4859 = vmatprep.subr.bf16.mxu0 0
      %4860 = vmatpush1.bf16.msra.mxu0 0
      %4861 = vmatprep.subr.bf16.mxu0 0
      %4862 = vmatpush1.bf16.msra.mxu0 0
      %4863 = vmatprep.subr.bf16.mxu0 0
      %4864 = vmatpush1.bf16.msra.mxu0 0
      %4865 = vmatprep.subr.bf16.mxu0 0
      %4866 = vmatpush1.bf16.msra.mxu0 0
      %4867 = vmatprep.subr.bf16.mxu0 0
      %4868 = vmatpush1.bf16.msra.mxu0 0
      %4869 = vmatprep.subr.bf16.mxu0 0
      %4870 = vmatpush1.bf16.msra.mxu0 0
      %4871 = vmatprep.subr.bf16.mxu0 0
      %4872 = vmatpush1.bf16.msra.mxu0 0
      %4873 = vmatprep.subr.bf16.mxu0 0
      %4874 = vmatpush1.bf16.msra.mxu0 0
      %4875 = vmatprep.subr.bf16.mxu0 0
      %4876 = vmatpush1.bf16.msra.mxu0 0
      %4877 = vmatprep.subr.bf16.mxu0 0
      %4878 = vmatpush1.bf16.msra.mxu0 0
      %4879 = vmatprep.subr.bf16.mxu0 0
      %4880 = vmatpush1.bf16.msra.mxu0 0
      %4881 = vmatprep.subr.bf16.mxu0 0
      %4882 = vmatpush1.bf16.msra.mxu0 0
      %4883 = vmatprep.mubr.bf16.mxu0 0
      %4884 = vmatmul.mubr.bf16.gmra.mrb[0].mxu0 %v4849
      %v4885 = vpop.f32.mrb[0].mxu0
      %v4886 = vadd.f32 0.0, %v4885
      %v4887 = vpop.f32.mrb[0].mxu0
      %v4888 = vpop.f32.mrb[0].mxu0
      %v4889 = vadd.f32 0.0, %v4888
      %v4890 = vpop.f32.mrb[0].mxu0
      %4891 = vdwg.mxu0
      %v4892 = vpack.c.bf16 %v4889, %v4886
      %v4894 = vsel %vm1732, %v4892, 0
      %4896 = vmatprep.subr.bf16.mxu0 0
      %4897 = vmatpush1.bf16.msra.mxu0 %v4218
      %4898 = vmatprep.subr.bf16.mxu0 0
      %4899 = vmatpush1.bf16.msra.mxu0 0
      %4900 = vmatprep.subr.bf16.mxu0 0
      %4901 = vmatpush1.bf16.msra.mxu0 0
      %4902 = vmatprep.subr.bf16.mxu0 0
      %4903 = vmatpush1.bf16.msra.mxu0 0
      %4904 = vmatprep.subr.bf16.mxu0 0
      %4905 = vmatpush1.bf16.msra.mxu0 0
      %4906 = vmatprep.subr.bf16.mxu0 0
      %4907 = vmatpush1.bf16.msra.mxu0 0
      %4908 = vmatprep.subr.bf16.mxu0 0
      %4909 = vmatpush1.bf16.msra.mxu0 0
      %4910 = vmatprep.subr.bf16.mxu0 0
      %4911 = vmatpush1.bf16.msra.mxu0 0
      %4912 = vmatprep.subr.bf16.mxu0 0
      %4913 = vmatpush1.bf16.msra.mxu0 0
      %4914 = vmatprep.subr.bf16.mxu0 0
      %4915 = vmatpush1.bf16.msra.mxu0 0
      %4916 = vmatprep.subr.bf16.mxu0 0
      %4917 = vmatpush1.bf16.msra.mxu0 0
      %4918 = vmatprep.subr.bf16.mxu0 0
      %4919 = vmatpush1.bf16.msra.mxu0 0
      %4920 = vmatprep.subr.bf16.mxu0 0
      %4921 = vmatpush1.bf16.msra.mxu0 0
      %4922 = vmatprep.subr.bf16.mxu0 0
      %4923 = vmatpush1.bf16.msra.mxu0 0
      %4924 = vmatprep.subr.bf16.mxu0 0
      %4925 = vmatpush1.bf16.msra.mxu0 0
      %4926 = vmatprep.subr.bf16.mxu0 0
      %4927 = vmatpush1.bf16.msra.mxu0 0
      %4928 = vmatprep.mubr.bf16.mxu0 0
      %4929 = vmatmul.mubr.bf16.gmra.mrb[0].mxu0 %v4894
      %v4930 = vpop.f32.mrb[0].mxu0
      %v4931 = vadd.f32 0.0, %v4930
      %v4932 = vpop.f32.mrb[0].mxu0
      %v4933 = vpop.f32.mrb[0].mxu0
      %v4934 = vadd.f32 0.0, %v4933
      %v4935 = vpop.f32.mrb[0].mxu0
      %4936 = vdwg.mxu0
      %v4937 = vadd.f32 %v4765, %v4931
      %v4938 = vadd.f32 %v4768, %v4934
      %4939 = vrot.lane.b32.xlu0 %v4440, 80
      %v4940 = vpop.permute.xlu0 %4939
      %4941 = vrot.lane.b32.xlu0 %v4441, 80
      %v4942 = vpop.permute.xlu0 %4941
      %v4944 = vsel %vm1732, %v4940, 0
      %v4947 = vsel %vm1732, %v4942, 0
      %4949 = vmatprep.subr.bf16.mxu0 0
      %4950 = vmatpush1.bf16.xpose.msra.mxu0 %v4947
      %4951 = vmatprep.subr.bf16.mxu0 0
      %4952 = vmatpush1.bf16.xpose.msra.mxu0 0
      %4953 = vmatprep.subr.bf16.mxu0 0
      %4954 = vmatpush1.bf16.xpose.msra.mxu0 0
      %4955 = vmatprep.subr.bf16.mxu0 0
      %4956 = vmatpush1.bf16.xpose.msra.mxu0 0
      %4957 = vmatprep.subr.bf16.mxu0 0
      %4958 = vmatpush1.bf16.xpose.msra.mxu0 0
      %4959 = vmatprep.subr.bf16.mxu0 0
      %4960 = vmatpush1.bf16.xpose.msra.mxu0 0
      %4961 = vmatprep.subr.bf16.mxu0 0
      %4962 = vmatpush1.bf16.xpose.msra.mxu0 0
      %4963 = vmatprep.subr.bf16.mxu0 0
      %4964 = vmatpush1.bf16.xpose.msra.mxu0 0
      %4965 = vmatprep.subr.bf16.mxu0 0
      %4966 = vmatpush1.bf16.xpose.msra.mxu0 0
      %4967 = vmatprep.subr.bf16.mxu0 0
      %4968 = vmatpush1.bf16.xpose.msra.mxu0 0
      %4969 = vmatprep.subr.bf16.mxu0 0
      %4970 = vmatpush1.bf16.xpose.msra.mxu0 0
      %4971 = vmatprep.subr.bf16.mxu0 0
      %4972 = vmatpush1.bf16.xpose.msra.mxu0 0
      %4973 = vmatprep.subr.bf16.mxu0 0
      %4974 = vmatpush1.bf16.xpose.msra.mxu0 0
      %4975 = vmatprep.subr.bf16.mxu0 0
      %4976 = vmatpush1.bf16.xpose.msra.mxu0 0
      %4977 = vmatprep.subr.bf16.mxu0 0
      %4978 = vmatpush1.bf16.xpose.msra.mxu0 0
      %4979 = vmatprep.subr.bf16.mxu0 0
      %4980 = vmatpush1.bf16.xpose.msra.mxu0 0
      %4981 = vmatprep.mubr.bf16.mxu0 0
      %4982 = vmatmul.mubr.bf16.gmra.mrb[0].mxu0 %v4944
      %v4983 = vpop.f32.mrb[0].mxu0
      %v4984 = vadd.f32 0.0, %v4983
      %v4985 = vpop.f32.mrb[0].mxu0
      %v4986 = vpop.f32.mrb[0].mxu0
      %v4987 = vadd.f32 0.0, %v4986
      %v4988 = vpop.f32.mrb[0].mxu0
      %4989 = vdwg.mxu0
      %v4990 = vsel %vm1732, %v4984, -inf
      %4991 = vmax.xlane.f32.xlu0 %v4990
      %v4992 = vpop.xlane.xlu0 %4991
      %v4993 = vsel %vm1732, %v4987, -inf
      %4994 = vmax.xlane.f32.xlu0 %v4993
      %v4995 = vpop.xlane.xlu0 %4994
      %v4996 = vsub.f32 %v4984, %v4992
      %v4997 = vsub.f32 %v4987, %v4995
      %v4998 = vmul.f32 %v4996, 1.442695
      %v4999 = vpow.pop %v4998
      %v5000 = vmul.f32 %v4997, 1.442695
      %v5001 = vpow.pop %v5000
      %v5002 = vsel %vm1732, %v4999, 0.0
      %5003 = vadd.xlane.f32.xlu0 %v5002
      %v5004 = vpop.xlane.xlu0 %5003
      %v5005 = vsel %vm1732, %v5001, 0.0
      %5006 = vadd.xlane.f32.xlu0 %v5005
      %v5007 = vpop.xlane.xlu0 %5006
      %v5008 = vrcp.pop %v5004
      %v5009 = vrcp.pop %v5007
      %v5010 = vmul.f32 %v4999, %v5008
      %v5011 = vmul.f32 %v5001, %v5009
      %v5012 = vpack.c.bf16 %v5011, %v5010
      %5013 = vrot.lane.b32.xlu0 %v4442, 80
      %v5014 = vpop.permute.xlu0 %5013
      %v5017 = vsel %vm1732, %v5012, 0
      %5019 = vmatprep.subr.bf16.mxu0 0
      %5020 = vmatpush1.bf16.msra.mxu0 %v5014
      %5021 = vmatprep.subr.bf16.mxu0 0
      %5022 = vmatpush1.bf16.msra.mxu0 0
      %5023 = vmatprep.subr.bf16.mxu0 0
      %5024 = vmatpush1.bf16.msra.mxu0 0
      %5025 = vmatprep.subr.bf16.mxu0 0
      %5026 = vmatpush1.bf16.msra.mxu0 0
      %5027 = vmatprep.subr.bf16.mxu0 0
      %5028 = vmatpush1.bf16.msra.mxu0 0
      %5029 = vmatprep.subr.bf16.mxu0 0
      %5030 = vmatpush1.bf16.msra.mxu0 0
      %5031 = vmatprep.subr.bf16.mxu0 0
      %5032 = vmatpush1.bf16.msra.mxu0 0
      %5033 = vmatprep.subr.bf16.mxu0 0
      %5034 = vmatpush1.bf16.msra.mxu0 0
      %5035 = vmatprep.subr.bf16.mxu0 0
      %5036 = vmatpush1.bf16.msra.mxu0 0
      %5037 = vmatprep.subr.bf16.mxu0 0
      %5038 = vmatpush1.bf16.msra.mxu0 0
      %5039 = vmatprep.subr.bf16.mxu0 0
      %5040 = vmatpush1.bf16.msra.mxu0 0
      %5041 = vmatprep.subr.bf16.mxu0 0
      %5042 = vmatpush1.bf16.msra.mxu0 0
      %5043 = vmatprep.subr.bf16.mxu0 0
      %5044 = vmatpush1.bf16.msra.mxu0 0
      %5045 = vmatprep.subr.bf16.mxu0 0
      %5046 = vmatpush1.bf16.msra.mxu0 0
      %5047 = vmatprep.subr.bf16.mxu0 0
      %5048 = vmatpush1.bf16.msra.mxu0 0
      %5049 = vmatprep.subr.bf16.mxu0 0
      %5050 = vmatpush1.bf16.msra.mxu0 0
      %5051 = vmatprep.mubr.bf16.mxu0 0
      %5052 = vmatmul.mubr.bf16.gmra.mrb[0].mxu0 %v5017
      %v5053 = vpop.f32.mrb[0].mxu0
      %v5054 = vadd.f32 0.0, %v5053
      %v5055 = vpop.f32.mrb[0].mxu0
      %v5056 = vpop.f32.mrb[0].mxu0
      %v5057 = vadd.f32 0.0, %v5056
      %v5058 = vpop.f32.mrb[0].mxu0
      %5059 = vdwg.mxu0
      %v5060 = vpack.c.bf16 %v5057, %v5054
      %v5062 = vsel %vm1732, %v5060, 0
      %5064 = vmatprep.subr.bf16.mxu0 0
      %5065 = vmatpush1.bf16.msra.mxu0 %v4392
      %5066 = vmatprep.subr.bf16.mxu0 0
      %5067 = vmatpush1.bf16.msra.mxu0 0
      %5068 = vmatprep.subr.bf16.mxu0 0
      %5069 = vmatpush1.bf16.msra.mxu0 0
      %5070 = vmatprep.subr.bf16.mxu0 0
      %5071 = vmatpush1.bf16.msra.mxu0 0
      %5072 = vmatprep.subr.bf16.mxu0 0
      %5073 = vmatpush1.bf16.msra.mxu0 0
      %5074 = vmatprep.subr.bf16.mxu0 0
      %5075 = vmatpush1.bf16.msra.mxu0 0
      %5076 = vmatprep.subr.bf16.mxu0 0
      %5077 = vmatpush1.bf16.msra.mxu0 0
      %5078 = vmatprep.subr.bf16.mxu0 0
      %5079 = vmatpush1.bf16.msra.mxu0 0
      %5080 = vmatprep.subr.bf16.mxu0 0
      %5081 = vmatpush1.bf16.msra.mxu0 0
      %5082 = vmatprep.subr.bf16.mxu0 0
      %5083 = vmatpush1.bf16.msra.mxu0 0
      %5084 = vmatprep.subr.bf16.mxu0 0
      %5085 = vmatpush1.bf16.msra.mxu0 0
      %5086 = vmatprep.subr.bf16.mxu0 0
      %5087 = vmatpush1.bf16.msra.mxu0 0
      %5088 = vmatprep.subr.bf16.mxu0 0
      %5089 = vmatpush1.bf16.msra.mxu0 0
      %5090 = vmatprep.subr.bf16.mxu0 0
      %5091 = vmatpush1.bf16.msra.mxu0 0
      %5092 = vmatprep.subr.bf16.mxu0 0
      %5093 = vmatpush1.bf16.msra.mxu0 0
      %5094 = vmatprep.subr.bf16.mxu0 0
      %5095 = vmatpush1.bf16.msra.mxu0 0
      %5096 = vmatprep.mubr.bf16.mxu0 0
      %5097 = vmatmul.mubr.bf16.gmra.mrb[0].mxu0 %v5062
      %v5098 = vpop.f32.mrb[0].mxu0
      %v5099 = vadd.f32 0.0, %v5098
      %v5100 = vpop.f32.mrb[0].mxu0
      %v5101 = vpop.f32.mrb[0].mxu0
      %v5102 = vadd.f32 0.0, %v5101
      %v5103 = vpop.f32.mrb[0].mxu0
      %5104 = vdwg.mxu0
      %v5105 = vadd.f32 %v4937, %v5099
      %v5106 = vadd.f32 %v4938, %v5102
      %v5107 = vld [vmem:[%s1111] sm:$0x1]
      %v5109 = vlaneseq
      %v5110 = vshrl.u32 %v5109, 7
      %v5111 = vsub.s32 0, %v5110
      %v5112 = vrot.slane %v5107, %v5111
      %v5114 = vadd.f32 %v4438, %v5112
      %v5115 = vadd.f32 %v4439, %v5112
      %v5116 = vadd.f32 %v5105, %v5112
      %v5117 = vadd.f32 %v5106, %v5112
      %v5118 = vadd.f32 %v3099, %v5114
      %v5119 = vadd.f32 %v3100, %v5115
      %v5120 = vadd.f32 %v3101, %v5116
      %v5121 = vadd.f32 %v3102, %v5117
      %v5122 = vsel %vm1157, %v5118, 0.0
      %5123 = vadd.xlane.f32.xlu0 %v5122
      %v5124 = vpop.xlane.xlu0 %5123
      %v5125 = vsel %vm1157, %v5119, 0.0
      %5126 = vadd.xlane.f32.xlu0 %v5125
      %v5127 = vpop.xlane.xlu0 %5126
      %v5128 = vsel %vm1157, %v5120, 0.0
      %5129 = vadd.xlane.f32.xlu0 %v5128
      %v5130 = vpop.xlane.xlu0 %5129
      %v5131 = vsel %vm1157, %v5121, 0.0
      %5132 = vadd.xlane.f32.xlu0 %v5131
      %v5133 = vpop.xlane.xlu0 %5132
      %v5134 = vmul.f32 %v5124, %v1170
      %v5135 = vmul.f32 %v5127, %v1170
      %v5136 = vmul.f32 %v5130, %v1170
      %v5137 = vmul.f32 %v5133, %v1170
      %v5138 = vsub.f32 %v5118, %v5134
      %v5139 = vsub.f32 %v5119, %v5135
      %v5140 = vsub.f32 %v5120, %v5136
      %v5141 = vsub.f32 %v5121, %v5137
      %v5142 = vmul.f32 %v5138, %v5138
      %v5143 = vmul.f32 %v5139, %v5139
      %v5144 = vmul.f32 %v5140, %v5140
      %v5145 = vmul.f32 %v5141, %v5141
      %v5146 = vsel %vm1157, %v5142, 0.0
      %5147 = vadd.xlane.f32.xlu0 %v5146
      %v5148 = vpop.xlane.xlu0 %5147
      %v5149 = vsel %vm1157, %v5143, 0.0
      %5150 = vadd.xlane.f32.xlu0 %v5149
      %v5151 = vpop.xlane.xlu0 %5150
      %v5152 = vsel %vm1157, %v5144, 0.0
      %5153 = vadd.xlane.f32.xlu0 %v5152
      %v5154 = vpop.xlane.xlu0 %5153
      %v5155 = vsel %vm1157, %v5145, 0.0
      %5156 = vadd.xlane.f32.xlu0 %v5155
      %v5157 = vpop.xlane.xlu0 %5156
      %v5158 = vmul.f32 %v5148, %v1170
      %v5159 = vmul.f32 %v5151, %v1170
      %v5160 = vmul.f32 %v5154, %v1170
      %v5161 = vmul.f32 %v5157, %v1170
      %v5162 = vadd.f32 %v5158, 1e-06
      %v5163 = vadd.f32 %v5159, 1e-06
      %v5164 = vadd.f32 %v5160, 1e-06
      %v5165 = vadd.f32 %v5161, 1e-06
      %v5166 = vrsqrt.pop %v5162
      %v5167 = vrsqrt.pop %v5163
      %v5168 = vrsqrt.pop %v5164
      %v5169 = vrsqrt.pop %v5165
      %v5170 = vmul.f32 %v5138, %v5166
      %v5171 = vmul.f32 %v5139, %v5167
      %v5172 = vmul.f32 %v5140, %v5168
      %v5173 = vmul.f32 %v5141, %v5169
      %v5174 = vlaneseq
      %v5175 = vshrl.u32 %v5174, 7
      %v5176 = vsub.s32 4, %v5175
      %v5177 = vrot.slane %v1156, %v5176
      %v5178 = vmul.f32 %v5170, %v5177
      %v5179 = vmul.f32 %v5171, %v5177
      %v5180 = vmul.f32 %v5172, %v5177
      %v5181 = vmul.f32 %v5173, %v5177
      %v5182 = vlaneseq
      %v5183 = vshrl.u32 %v5182, 7
      %v5184 = vsub.s32 5, %v5183
      %v5185 = vrot.slane %v1156, %v5184
      %v5186 = vadd.f32 %v5178, %v5185
      %v5187 = vadd.f32 %v5179, %v5185
      %v5188 = vadd.f32 %v5180, %v5185
      %v5189 = vadd.f32 %v5181, %v5185
      %v5190 = vpack.c.bf16 %v5187, %v5186
      %v5191 = vpack.c.bf16 %v5189, %v5188
      %v5192 = vld [vmem:[%s1116] sm:$0xff]
      %v5193 = vld [vmem:[%s1116 + $0x8] sm:$0xff]
      %v5194 = vld [vmem:[%s1116 + $0x10] sm:$0xff]
      %v5195 = vld [vmem:[%s1116 + $0x18] sm:$0xff]
      %v5196 = vld [vmem:[%s1116 + $0x20] sm:$0xff]
      %v5197 = vld [vmem:[%s1116 + $0x28] sm:$0xff]
      %v5198 = vld [vmem:[%s1116 + $0x30] sm:$0xff]
      %v5199 = vld [vmem:[%s1116 + $0x38] sm:$0xff]
      %v5200 = vld [vmem:[%s1120] sm:$0x3]
      %v5202 = vlaneseq
      %v5203 = vshrl.u32 %v5202, 7
      %v5204 = vsub.s32 0, %v5203
      %v5205 = vrot.slane %v5200, %v5204
      %v5206 = vlaneseq
      %v5207 = vshrl.u32 %v5206, 7
      %v5208 = vsub.s32 1, %v5207
      %v5209 = vrot.slane %v5200, %v5208
      %v5220 = vunpack.c.l.b16 %v5192
      %v5221 = vunpack.c.h.b16 %v5192
      %v5222 = vunpack.c.l.b16 %v5193
      %v5223 = vunpack.c.h.b16 %v5193
      %v5224 = vunpack.c.l.b16 %v5194
      %v5225 = vunpack.c.h.b16 %v5194
      %v5226 = vunpack.c.l.b16 %v5195
      %v5227 = vunpack.c.h.b16 %v5195
      %v5228 = vunpack.c.l.b16 %v5196
      %v5229 = vunpack.c.h.b16 %v5196
      %v5230 = vunpack.c.l.b16 %v5197
      %v5231 = vunpack.c.h.b16 %v5197
      %v5232 = vunpack.c.l.b16 %v5198
      %v5233 = vunpack.c.h.b16 %v5198
      %v5234 = vunpack.c.l.b16 %v5199
      %v5235 = vunpack.c.h.b16 %v5199
      %v5236 = vpack.c.b16 %v5222, %v5220
      %v5237 = vpack.c.b16 %v5223, %v5221
      %v5238 = vpack.c.b16 %v5226, %v5224
      %v5239 = vpack.c.b16 %v5227, %v5225
      %v5240 = vpack.c.b16 %v5230, %v5228
      %v5241 = vpack.c.b16 %v5231, %v5229
      %v5242 = vpack.c.b16 %v5234, %v5232
      %v5243 = vpack.c.b16 %v5235, %v5233
      %v5253 = vsel %vm1157, %v5190, 0
      %v5256 = vsel %vm1157, %v5191, 0
      %5258 = vmatprep.subr.bf16.mxu0 %v5237
      %5259 = vmatpush1.bf16.msra.mxu0 %v5236
      %5260 = vmatprep.subr.bf16.mxu0 %v5239
      %5261 = vmatpush1.bf16.msra.mxu0 %v5238
      %5262 = vmatprep.subr.bf16.mxu0 %v5241
      %5263 = vmatpush1.bf16.msra.mxu0 %v5240
      %5264 = vmatprep.subr.bf16.mxu0 %v5243
      %5265 = vmatpush1.bf16.msra.mxu0 %v5242
      %5266 = vmatprep.subr.bf16.mxu0 0
      %5267 = vmatpush1.bf16.msra.mxu0 0
      %5268 = vmatprep.subr.bf16.mxu0 0
      %5269 = vmatpush1.bf16.msra.mxu0 0
      %5270 = vmatprep.subr.bf16.mxu0 0
      %5271 = vmatpush1.bf16.msra.mxu0 0
      %5272 = vmatprep.subr.bf16.mxu0 0
      %5273 = vmatpush1.bf16.msra.mxu0 0
      %5274 = vmatprep.subr.bf16.mxu0 0
      %5275 = vmatpush1.bf16.msra.mxu0 0
      %5276 = vmatprep.subr.bf16.mxu0 0
      %5277 = vmatpush1.bf16.msra.mxu0 0
      %5278 = vmatprep.subr.bf16.mxu0 0
      %5279 = vmatpush1.bf16.msra.mxu0 0
      %5280 = vmatprep.subr.bf16.mxu0 0
      %5281 = vmatpush1.bf16.msra.mxu0 0
      %5282 = vmatprep.subr.bf16.mxu0 0
      %5283 = vmatpush1.bf16.msra.mxu0 0
      %5284 = vmatprep.subr.bf16.mxu0 0
      %5285 = vmatpush1.bf16.msra.mxu0 0
      %5286 = vmatprep.subr.bf16.mxu0 0
      %5287 = vmatpush1.bf16.msra.mxu0 0
      %5288 = vmatprep.subr.bf16.mxu0 0
      %5289 = vmatpush1.bf16.msra.mxu0 0
      %5290 = vmatprep.mubr.bf16.mxu0 0
      %5291 = vmatmul.mubr.bf16.gmra.mrb[0].mxu0 %v5253
      %v5292 = vpop.f32.mrb[0].mxu0
      %v5293 = vadd.f32 %v5205, %v5292
      %v5294 = vpop.f32.mrb[0].mxu0
      %v5295 = vadd.f32 %v5209, %v5294
      %v5296 = vpop.f32.mrb[0].mxu0
      %v5297 = vadd.f32 %v5205, %v5296
      %v5298 = vpop.f32.mrb[0].mxu0
      %v5299 = vadd.f32 %v5209, %v5298
      %5300 = vmatprep.mubr.bf16.mxu0 0
      %5301 = vmatmul.mubr.bf16.gmra.mrb[0].mxu0 %v5256
      %v5302 = vpop.f32.mrb[0].mxu0
      %v5303 = vadd.f32 %v5205, %v5302
      %v5304 = vpop.f32.mrb[0].mxu0
      %v5305 = vadd.f32 %v5209, %v5304
      %v5306 = vpop.f32.mrb[0].mxu0
      %v5307 = vadd.f32 %v5205, %v5306
      %v5308 = vpop.f32.mrb[0].mxu0
      %v5309 = vadd.f32 %v5209, %v5308
      %5310 = vdwg.mxu0
      %5311 = vst.msk [vmem:[%s1125] sm:$0xff] %vm1157, %v5118
      %5312 = vst.msk [vmem:[%s1125 + $0x8] sm:$0xff] %vm1157, %v5119
      %5313 = vst.msk [vmem:[%s1125 + $0x10] sm:$0xff] %vm1157, %v5120
      %5314 = vst.msk [vmem:[%s1125 + $0x18] sm:$0xff] %vm1157, %v5121
      %5315 = vst [vmem:[%s1130] sm:$0xff] %v5293
      %5316 = vst [vmem:[%s1130 + $0x8] sm:$0xff] %v5295
      %5317 = vst [vmem:[%s1130 + $0x10] sm:$0xff] %v5297
      %5318 = vst [vmem:[%s1130 + $0x18] sm:$0xff] %v5299
      %5319 = vst [vmem:[%s1130 + $0x20] sm:$0xff] %v5303
      %5320 = vst [vmem:[%s1130 + $0x28] sm:$0xff] %v5305
      %5321 = vst [vmem:[%s1130 + $0x30] sm:$0xff] %v5307
      %5322 = vst [vmem:[%s1130 + $0x38] sm:$0xff] %v5309
      %p5323 = scmp.lt.s32.totalorder %s37, 1
      %s5324 = scalar_select %p5323, %s37, 1
      %s5325 = smul.addr %s5324, 4
      %s5326 = smul.addr %s5325, 8
      %s5327 = scalar_lea.vmem %s24, %s5326
      %p5328 = scmp.lt.s32.totalorder %s37, 1
      %s5329 = scalar_select %p5328, %s37, 1
      %s5330 = smul.addr %s5329, 8
      %s5331 = smul.addr %s5330, 8
      %s5332 = scalar_lea.vmem %s25, %s5331
      // Predicated region
      $region117: #{dust3r_decoder.27} parent=115 // pred_check
        %p5333 = pneg %p666
      $region118: #{dust3r_decoder.27} parent=115 // pred_check_branch
        %5335 = sbr.rel (%p5333) target = $region120
      $region119: #{dust3r_decoder.27} parent=115 // pred_region
        _
      $region120: #{dust3r_decoder.27} parent=115 // pred_fallthru
        _
      // Predicated region
      $region121: #{dust3r_decoder.27} parent=115 // pred_check
        %p5336 = pneg %p692
      $region122: #{dust3r_decoder.27} parent=115 // pred_check_branch
        %5338 = sbr.rel (%p5336) target = $region124
      $region123: #{dust3r_decoder.27} parent=115 // pred_region
        _
      $region124: #{dust3r_decoder.27} parent=115 // pred_fallthru
        _
    $region116: #{dust3r_decoder.27} parent=5 // pred_fallthru
      _
    %p5339 = scmp.le.s32.totalorder 2, %s32
    // Predicated region
    $region125: #{dust3r_decoder.27} parent=5 // pred_check
      %p5340 = pneg %p5339
    $region126: #{dust3r_decoder.27} parent=5 // pred_check_branch
      %5342 = sbr.rel (%p5340) target = $region128
    $region127: #{dust3r_decoder.27} parent=5 // pred_region
      %s5343 = ssub.s32 %s32, 2
      // Predicated region
      $region129: #{dust3r_decoder.27} parent=127 // pred_check
        %p5344 = pneg %p672
      $region130: #{dust3r_decoder.27} parent=127 // pred_check_branch
        %5346 = sbr.rel (%p5344) target = $region132
      $region131: #{dust3r_decoder.27} parent=127 // pred_region
        %p5347 = scmp.lt.s32.totalorder %s38, 1
        %s5348 = scalar_select %p5347, %s38, 1
        %s5349 = smul.addr %s5348, 4
        %s5350 = smul.addr %s5349, 8
        %s5351 = scalar_lea.vmem %s24, %s5350
      $region132: #{dust3r_decoder.27} parent=127 // pred_fallthru
        _
      // Predicated region
      $region133: #{dust3r_decoder.27} parent=127 // pred_check
        %p5352 = pneg %p698
      $region134: #{dust3r_decoder.27} parent=127 // pred_check_branch
        %5354 = sbr.rel (%p5352) target = $region136
      $region135: #{dust3r_decoder.27} parent=127 // pred_region
        %p5355 = scmp.lt.s32.totalorder %s38, 1
        %s5356 = scalar_select %p5355, %s38, 1
        %s5357 = smul.addr %s5356, 8
        %s5358 = smul.addr %s5357, 8
        %s5359 = scalar_lea.vmem %s25, %s5358
      $region136: #{dust3r_decoder.27} parent=127 // pred_fallthru
        _
    $region128: #{dust3r_decoder.27} parent=5 // pred_fallthru
      _
  $region6: #{dust3r_decoder.27} parent=0 // loop_footer
    %s36 = sadd.s32 1, %s32
  $region7: #{dust3r_decoder.27} parent=0 // loop_footer_branch
    %31 = sbr.rel target = $region3
  $region8: #{dust3r_decoder.27} parent=0 // loop_exit
    _

</llo_original>
